<compile_context>
chip_gen: v5e
topology: v5e:2x2
jax: 0.10.0
libtpu: 0.0.40
codegen_flags: <defaults>
</compile_context>

<pallas_src>
import functools

import jax
import jax.numpy as jnp
from jax import lax
from jax.experimental import pallas as pl
from jax.experimental.pallas import tpu as pltpu


def _attn_kernel(xq_ref, xkv_ref, wq_ref, wk_ref, wv_ref, wo_ref, bo_ref,
                 o_ref, *, heads, dim_key, dim_value, scale):
    # xq_ref : (1, dim, tq)  channel-major query tile of x
    # xkv_ref: (1, dim, N)   channel-major full spatial extent (keys / values)
    # wq/wk  : (heads*dim_key, dim)     wv: (heads*dim_value, dim)
    # wo_ref : (heads, dim, dim_value)  per-head slices of the output 1x1 conv
    # bo_ref : (dim, 1)
    # o_ref  : (1, dim, tq)
    x_q = xq_ref[0].astype(jnp.float32)      # (dim, tq)
    x_kv = xkv_ref[0].astype(jnp.float32)    # (dim, N)

    wq = wq_ref[...].astype(jnp.float32)
    wk = wk_ref[...].astype(jnp.float32)
    wv = wv_ref[...].astype(jnp.float32)

    # 1x1-conv projections as channel-major matmuls: (C_out, dim) @ (dim, n).
    q_all = jnp.dot(wq, x_q, preferred_element_type=jnp.float32)    # (H*Dk, tq)
    k_all = jnp.dot(wk, x_kv, preferred_element_type=jnp.float32)   # (H*Dk, N)
    v_all = jnp.dot(wv, x_kv, preferred_element_type=jnp.float32)   # (H*Dv, N)

    dim = bo_ref.shape[0]
    tq = x_q.shape[-1]
    acc = jnp.zeros((dim, tq), dtype=jnp.float32)

    for h in range(heads):  # heads is small; statically unrolled
        qh = q_all[h * dim_key:(h + 1) * dim_key, :]         # (Dk, tq)
        kh = k_all[h * dim_key:(h + 1) * dim_key, :]         # (Dk, N)
        vh = v_all[h * dim_value:(h + 1) * dim_value, :]     # (Dv, N)

        # dots[t, j] = scale * sum_d q[d, t] * k[d, j]
        dots = jnp.dot(qh.T, kh, preferred_element_type=jnp.float32) * scale  # (tq, N)

        # Softmax over keys (last/lane axis); exp + reciprocal use the EUP.
        m = jnp.max(dots, axis=-1, keepdims=True)
        p = jnp.exp(dots - m)
        attn = p / jnp.sum(p, axis=-1, keepdims=True)

        # out[dv, t] = sum_j v[dv, j] * attn[t, j]  (contract last dims of both)
        out_h = lax.dot_general(vh, attn, (((1,), (1,)), ((), ())),
                                preferred_element_type=jnp.float32)  # (Dv, tq)

        # Fold in this head's slice of the output 1x1 conv (channel-major).
        acc = acc + jnp.dot(wo_ref[h].astype(jnp.float32), out_h,
                            preferred_element_type=jnp.float32)      # (dim, tq)

    acc = acc + bo_ref[...].astype(jnp.float32)   # broadcast (dim, 1)
    o_ref[0] = acc.astype(o_ref.dtype)


def _pick_query_tile(n):
    # Lane-dense query tiles (multiples of 128) so output stores are unmasked
    # and the grid has >= 2 steps per batch when possible.
    for cand in (512, 256, 128):
        if n % cand == 0 and cand < n:
            return cand
    return n


def scalable_self_attention_pallas(x, wq, wk, wv, wo, bo, *,
                                   heads, dim_key, dim_value, tq=None):
    """x: (B, dim, H, W) NCHW. wq/wk: (heads*dim_key, dim), wv: (heads*dim_value, dim),
    wo: (dim, heads*dim_value), bo: (dim,)."""
    B, dim, H, W = x.shape
    N = H * W
    hdk = heads * dim_key
    hdv = heads * dim_value
    scale = float(dim_key) ** -0.5

    # Free reshapes only (no transpose passes): channel-major, N on lanes.
    x_cm = x.reshape(B, dim, N)
    wo3 = jnp.transpose(wo.reshape(dim, heads, dim_value), (1, 0, 2))  # (heads, dim, Dv)
    bo2 = bo.reshape(dim, 1)

    if tq is None:
        tq = _pick_query_tile(N)
    assert N % tq == 0
    n_qt = N // tq

    kernel = functools.partial(_attn_kernel, heads=heads, dim_key=dim_key,
                               dim_value=dim_value, scale=scale)

    # Advisory cost estimate (documents the bandwidth/compute profile for XLA).
    flops = int(2 * B * N * dim * (2 * hdk + hdv)
                + 2 * B * heads * N * N * (dim_key + dim_value)
                + 2 * B * N * hdv * dim)
    bytes_accessed = int(4 * (2 * B * dim * N
                              + wq.size + wk.size + wv.size + wo.size + bo.size))
    cost = pl.CostEstimate(flops=flops,
                           transcendentals=int(B * heads * N * N),
                           bytes_accessed=bytes_accessed)

    out_cm = pl.pallas_call(
        kernel,
        out_shape=jax.ShapeDtypeStruct((B, dim, N), x.dtype),
        grid_spec=pltpu.PrefetchScalarGridSpec(
            num_scalar_prefetch=0,
            grid=(B, n_qt),
            in_specs=[
                pl.BlockSpec((1, dim, tq), lambda b, qi: (b, 0, qi)),    # x, query tile
                pl.BlockSpec((1, dim, N), lambda b, qi: (b, 0, 0)),      # x, full (K/V)
                pl.BlockSpec((hdk, dim), lambda b, qi: (0, 0)),          # Wq (resident)
                pl.BlockSpec((hdk, dim), lambda b, qi: (0, 0)),          # Wk (resident)
                pl.BlockSpec((hdv, dim), lambda b, qi: (0, 0)),          # Wv (resident)
                pl.BlockSpec((heads, dim, dim_value), lambda b, qi: (0, 0, 0)),  # Wo
                pl.BlockSpec((dim, 1), lambda b, qi: (0, 0)),            # b_out
            ],
            out_specs=pl.BlockSpec((1, dim, tq), lambda b, qi: (b, 0, qi)),
        ),
        compiler_params=pltpu.CompilerParams(
            dimension_semantics=("parallel", "parallel")),
        cost_estimate=cost,
    )(x_cm, x_cm, wq, wk, wv, wo3, bo2)

    return out_cm.reshape(B, dim, H, W)


def scalable_self_attention_reference(x, wq, wk, wv, wo, bo, *,
                                      heads, dim_key, dim_value):
    B, dim, H, W = x.shape
    N = H * W
    scale = float(dim_key) ** -0.5
    xf = x.reshape(B, dim, N).astype(jnp.float32)

    def proj(w, d):
        p = jnp.einsum('oc,bcn->bon', w.astype(jnp.float32), xf)
        return p.reshape(B, heads, d, N).transpose(0, 1, 3, 2)   # (B, h, N, d)

    q = proj(wq, dim_key)
    k = proj(wk, dim_key)
    v = proj(wv, dim_value)
    dots = jnp.einsum('bhqd,bhkd->bhqk', q, k) * scale
    attn = jax.nn.softmax(dots, axis=-1)
    out = jnp.einsum('bhqk,bhkd->bhqd', attn, v)                  # (B, h, N, dv)
    out = out.transpose(0, 1, 3, 2).reshape(B, heads * dim_value, N)
    y = jnp.einsum('co,bon->bcn', wo.astype(jnp.float32), out)
    y = y + bo.astype(jnp.float32)[None, :, None]
    return y.reshape(B, dim, H, W).astype(x.dtype)


if __name__ == "__main__":
    # Shapes implied by the module defaults: dim=4 input channels, heads=8,
    # dim_key=dim_value=32, reduction_factor=1, dropout=0.0 (eval -> identity).
    B, dim, H, W = 2, 4, 16, 16
    heads, dim_key, dim_value = 8, 32, 32

    key = jax.random.PRNGKey(0)
    kx, kq, kk, kv, ko, kb = jax.random.split(key, 6)

    x = jax.random.normal(kx, (B, dim, H, W), dtype=jnp.float32)

    # PyTorch conv weights (C_out, C_in, 1, 1), stored as (C_out, C_in) matrices.
    wq = jax.random.normal(kq, (heads * dim_key, dim), dtype=jnp.float32) * (dim ** -0.5)
    wk = jax.random.normal(kk, (heads * dim_key, dim), dtype=jnp.float32) * (dim ** -0.5)
    wv = jax.random.normal(kv, (heads * dim_value, dim), dtype=jnp.float32) * (dim ** -0.5)
    wo = jax.random.normal(ko, (dim, heads * dim_value), dtype=jnp.float32) * ((heads * dim_value) ** -0.5)
    bo = jax.random.normal(kb, (dim,), dtype=jnp.float32) * 0.1

    out = scalable_self_attention_pallas(
        x, wq, wk, wv, wo, bo, heads=heads, dim_key=dim_key, dim_value=dim_value)
    out = jax.block_until_ready(out)

    ref = scalable_self_attention_reference(
        x, wq, wk, wv, wo, bo, heads=heads, dim_key=dim_key, dim_value=dim_value)

    assert out.shape == (B, dim, H, W)
    assert jnp.allclose(out, ref, atol=1e-4, rtol=1e-4), "mismatch vs reference"

    print("KERNEL_OK")
</pallas_src>

<mosaic_0001>
module attributes {stable_mosaic.version = 11 : i64} {
  func.func @_attn_kernel(%arg0: i32, %arg1: i32, %arg2: memref<1x4x128xf32, #tpu.memory_space<vmem>>, %arg3: memref<1x4x256xf32, #tpu.memory_space<vmem>>, %arg4: memref<256x4xf32, #tpu.memory_space<vmem>>, %arg5: memref<256x4xf32, #tpu.memory_space<vmem>>, %arg6: memref<256x4xf32, #tpu.memory_space<vmem>>, %arg7: memref<8x4x32xf32, #tpu.memory_space<vmem>>, %arg8: memref<4x1xf32, #tpu.memory_space<vmem>>, %arg9: memref<1x4x128xf32, #tpu.memory_space<vmem>>) attributes {dimension_semantics = [#tpu.dimension_semantics<parallel>, #tpu.dimension_semantics<parallel>], iteration_bounds = array<i64: 2, 2>, scalar_prefetch = 0 : i64, scratch_operands = 0 : i64, tpu.core_type = #tpu.core_type<tc>, window_params = [{transform_indices = @transform_0, window_bounds = array<i64: 1, 4, 128>}, {transform_indices = @transform_1, window_bounds = array<i64: 1, 4, 256>}, {pipeline_mode = #tpu.pipeline_mode<synchronous>, transform_indices = @transform_2, window_bounds = array<i64: 256, 4>}, {pipeline_mode = #tpu.pipeline_mode<synchronous>, transform_indices = @transform_3, window_bounds = array<i64: 256, 4>}, {pipeline_mode = #tpu.pipeline_mode<synchronous>, transform_indices = @transform_4, window_bounds = array<i64: 256, 4>}, {pipeline_mode = #tpu.pipeline_mode<synchronous>, transform_indices = @transform_5, window_bounds = array<i64: 8, 4, 32>}, {pipeline_mode = #tpu.pipeline_mode<synchronous>, transform_indices = @transform_6, window_bounds = array<i64: 4, 1>}, {transform_indices = @transform_7, window_bounds = array<i64: 1, 4, 128>}]} {
    %c0 = arith.constant 0 : index
    %c0_0 = arith.constant 0 : index
    %c0_1 = arith.constant 0 : index
    %0 = vector.load %arg2[%c0, %c0_0, %c0_1] : memref<1x4x128xf32, #tpu.memory_space<vmem>>, vector<1x4x128xf32>
    %1 = vector.shape_cast %0 : vector<1x4x128xf32> to vector<4x128xf32>
    %c0_2 = arith.constant 0 : index
    %c0_3 = arith.constant 0 : index
    %c0_4 = arith.constant 0 : index
    %2 = vector.load %arg3[%c0_2, %c0_3, %c0_4] : memref<1x4x256xf32, #tpu.memory_space<vmem>>, vector<1x4x256xf32>
    %3 = vector.shape_cast %2 : vector<1x4x256xf32> to vector<4x256xf32>
    %c0_5 = arith.constant 0 : index
    %c0_6 = arith.constant 0 : index
    %4 = vector.load %arg4[%c0_5, %c0_6] : memref<256x4xf32, #tpu.memory_space<vmem>>, vector<256x4xf32>
    %c0_7 = arith.constant 0 : index
    %c0_8 = arith.constant 0 : index
    %5 = vector.load %arg5[%c0_7, %c0_8] : memref<256x4xf32, #tpu.memory_space<vmem>>, vector<256x4xf32>
    %c0_9 = arith.constant 0 : index
    %c0_10 = arith.constant 0 : index
    %6 = vector.load %arg6[%c0_9, %c0_10] : memref<256x4xf32, #tpu.memory_space<vmem>>, vector<256x4xf32>
    %cst = arith.constant dense<0.000000e+00> : vector<256x128xf32>
    %7 = tpu.matmul %4, %1, %cst {dimension_numbers = #tpu.dot_dimension_numbers<[1], [0], [0], [1], [0, 0, 1, 1], [], []>} : vector<256x4xf32>, vector<4x128xf32>, vector<256x128xf32> -> vector<256x128xf32>
    %cst_11 = arith.constant dense<0.000000e+00> : vector<256x256xf32>
    %8 = tpu.matmul %5, %3, %cst_11 {dimension_numbers = #tpu.dot_dimension_numbers<[1], [0], [0], [1], [0, 0, 1, 1], [], []>} : vector<256x4xf32>, vector<4x256xf32>, vector<256x256xf32> -> vector<256x256xf32>
    %cst_12 = arith.constant dense<0.000000e+00> : vector<256x256xf32>
    %9 = tpu.matmul %6, %3, %cst_12 {dimension_numbers = #tpu.dot_dimension_numbers<[1], [0], [0], [1], [0, 0, 1, 1], [], []>} : vector<256x4xf32>, vector<4x256xf32>, vector<256x256xf32> -> vector<256x256xf32>
    %cst_13 = arith.constant 0.000000e+00 : f32
    %10 = vector.broadcast %cst_13 : f32 to vector<4x128xf32>
    %11 = vector.extract_strided_slice %7 {offsets = [0, 0], sizes = [32, 128], strides = [1, 1]} : vector<256x128xf32> to vector<32x128xf32>
    %12 = vector.extract_strided_slice %8 {offsets = [0, 0], sizes = [32, 256], strides = [1, 1]} : vector<256x256xf32> to vector<32x256xf32>
    %13 = vector.extract_strided_slice %9 {offsets = [0, 0], sizes = [32, 256], strides = [1, 1]} : vector<256x256xf32> to vector<32x256xf32>
    %14 = tpu.transpose %11, [1, 0] : vector<32x128xf32> -> vector<128x32xf32>
    %cst_14 = arith.constant dense<0.000000e+00> : vector<128x256xf32>
    %15 = tpu.matmul %14, %12, %cst_14 {dimension_numbers = #tpu.dot_dimension_numbers<[1], [0], [0], [1], [0, 0, 1, 1], [], []>} : vector<128x32xf32>, vector<32x256xf32>, vector<128x256xf32> -> vector<128x256xf32>
    %cst_15 = arith.constant 0.176776692 : f32
    %16 = vector.broadcast %cst_15 : f32 to vector<128x256xf32>
    %17 = arith.mulf %15, %16 : vector<128x256xf32>
    %cst_16 = arith.constant dense<0xFF800000> : vector<128xf32>
    %18 = vector.multi_reduction <maximumf>, %17, %cst_16 [1] : vector<128x256xf32> to vector<128xf32>
    %19 = vector.shape_cast %18 : vector<128xf32> to vector<128x1xf32>
    %20 = vector.broadcast %19 : vector<128x1xf32> to vector<128x256xf32>
    %21 = arith.subf %17, %20 : vector<128x256xf32>
    %22 = math.exp %21 : vector<128x256xf32>
    %cst_17 = arith.constant dense<0.000000e+00> : vector<128xf32>
    %23 = vector.multi_reduction <add>, %22, %cst_17 [1] : vector<128x256xf32> to vector<128xf32>
    %24 = vector.shape_cast %23 : vector<128xf32> to vector<128x1xf32>
    %25 = vector.broadcast %24 : vector<128x1xf32> to vector<128x256xf32>
    %26 = arith.divf %22, %25 : vector<128x256xf32>
    %cst_18 = arith.constant dense<0.000000e+00> : vector<32x128xf32>
    %27 = tpu.matmul %13, %26, %cst_18 {dimension_numbers = #tpu.dot_dimension_numbers<[1], [1], [0], [0], [0, 0, 1, 0], [], []>} : vector<32x256xf32>, vector<128x256xf32>, vector<32x128xf32> -> vector<32x128xf32>
    %c0_19 = arith.constant 0 : index
    %c0_20 = arith.constant 0 : index
    %c0_21 = arith.constant 0 : index
    %28 = vector.load %arg7[%c0_19, %c0_20, %c0_21] : memref<8x4x32xf32, #tpu.memory_space<vmem>>, vector<1x4x32xf32>
    %29 = vector.shape_cast %28 : vector<1x4x32xf32> to vector<4x32xf32>
    %cst_22 = arith.constant dense<0.000000e+00> : vector<4x128xf32>
    %30 = tpu.matmul %29, %27, %cst_22 {dimension_numbers = #tpu.dot_dimension_numbers<[1], [0], [0], [1], [0, 0, 1, 1], [], []>} : vector<4x32xf32>, vector<32x128xf32>, vector<4x128xf32> -> vector<4x128xf32>
    %31 = arith.addf %10, %30 : vector<4x128xf32>
    %32 = vector.extract_strided_slice %7 {offsets = [32, 0], sizes = [32, 128], strides = [1, 1]} : vector<256x128xf32> to vector<32x128xf32>
    %33 = vector.extract_strided_slice %8 {offsets = [32, 0], sizes = [32, 256], strides = [1, 1]} : vector<256x256xf32> to vector<32x256xf32>
    %34 = vector.extract_strided_slice %9 {offsets = [32, 0], sizes = [32, 256], strides = [1, 1]} : vector<256x256xf32> to vector<32x256xf32>
    %35 = tpu.transpose %32, [1, 0] : vector<32x128xf32> -> vector<128x32xf32>
    %cst_23 = arith.constant dense<0.000000e+00> : vector<128x256xf32>
    %36 = tpu.matmul %35, %33, %cst_23 {dimension_numbers = #tpu.dot_dimension_numbers<[1], [0], [0], [1], [0, 0, 1, 1], [], []>} : vector<128x32xf32>, vector<32x256xf32>, vector<128x256xf32> -> vector<128x256xf32>
    %cst_24 = arith.constant 0.176776692 : f32
    %37 = vector.broadcast %cst_24 : f32 to vector<128x256xf32>
    %38 = arith.mulf %36, %37 : vector<128x256xf32>
    %cst_25 = arith.constant dense<0xFF800000> : vector<128xf32>
    %39 = vector.multi_reduction <maximumf>, %38, %cst_25 [1] : vector<128x256xf32> to vector<128xf32>
    %40 = vector.shape_cast %39 : vector<128xf32> to vector<128x1xf32>
    %41 = vector.broadcast %40 : vector<128x1xf32> to vector<128x256xf32>
    %42 = arith.subf %38, %41 : vector<128x256xf32>
    %43 = math.exp %42 : vector<128x256xf32>
    %cst_26 = arith.constant dense<0.000000e+00> : vector<128xf32>
    %44 = vector.multi_reduction <add>, %43, %cst_26 [1] : vector<128x256xf32> to vector<128xf32>
    %45 = vector.shape_cast %44 : vector<128xf32> to vector<128x1xf32>
    %46 = vector.broadcast %45 : vector<128x1xf32> to vector<128x256xf32>
    %47 = arith.divf %43, %46 : vector<128x256xf32>
    %cst_27 = arith.constant dense<0.000000e+00> : vector<32x128xf32>
    %48 = tpu.matmul %34, %47, %cst_27 {dimension_numbers = #tpu.dot_dimension_numbers<[1], [1], [0], [0], [0, 0, 1, 0], [], []>} : vector<32x256xf32>, vector<128x256xf32>, vector<32x128xf32> -> vector<32x128xf32>
    %c1 = arith.constant 1 : index
    %c0_28 = arith.constant 0 : index
    %c0_29 = arith.constant 0 : index
    %49 = vector.load %arg7[%c1, %c0_28, %c0_29] : memref<8x4x32xf32, #tpu.memory_space<vmem>>, vector<1x4x32xf32>
    %50 = vector.shape_cast %49 : vector<1x4x32xf32> to vector<4x32xf32>
    %cst_30 = arith.constant dense<0.000000e+00> : vector<4x128xf32>
    %51 = tpu.matmul %50, %48, %cst_30 {dimension_numbers = #tpu.dot_dimension_numbers<[1], [0], [0], [1], [0, 0, 1, 1], [], []>} : vector<4x32xf32>, vector<32x128xf32>, vector<4x128xf32> -> vector<4x128xf32>
    %52 = arith.addf %31, %51 : vector<4x128xf32>
    %53 = vector.extract_strided_slice %7 {offsets = [64, 0], sizes = [32, 128], strides = [1, 1]} : vector<256x128xf32> to vector<32x128xf32>
    %54 = vector.extract_strided_slice %8 {offsets = [64, 0], sizes = [32, 256], strides = [1, 1]} : vector<256x256xf32> to vector<32x256xf32>
    %55 = vector.extract_strided_slice %9 {offsets = [64, 0], sizes = [32, 256], strides = [1, 1]} : vector<256x256xf32> to vector<32x256xf32>
    %56 = tpu.transpose %53, [1, 0] : vector<32x128xf32> -> vector<128x32xf32>
    %cst_31 = arith.constant dense<0.000000e+00> : vector<128x256xf32>
    %57 = tpu.matmul %56, %54, %cst_31 {dimension_numbers = #tpu.dot_dimension_numbers<[1], [0], [0], [1], [0, 0, 1, 1], [], []>} : vector<128x32xf32>, vector<32x256xf32>, vector<128x256xf32> -> vector<128x256xf32>
    %cst_32 = arith.constant 0.176776692 : f32
    %58 = vector.broadcast %cst_32 : f32 to vector<128x256xf32>
    %59 = arith.mulf %57, %58 : vector<128x256xf32>
    %cst_33 = arith.constant dense<0xFF800000> : vector<128xf32>
    %60 = vector.multi_reduction <maximumf>, %59, %cst_33 [1] : vector<128x256xf32> to vector<128xf32>
    %61 = vector.shape_cast %60 : vector<128xf32> to vector<128x1xf32>
    %62 = vector.broadcast %61 : vector<128x1xf32> to vector<128x256xf32>
    %63 = arith.subf %59, %62 : vector<128x256xf32>
    %64 = math.exp %63 : vector<128x256xf32>
    %cst_34 = arith.constant dense<0.000000e+00> : vector<128xf32>
    %65 = vector.multi_reduction <add>, %64, %cst_34 [1] : vector<128x256xf32> to vector<128xf32>
    %66 = vector.shape_cast %65 : vector<128xf32> to vector<128x1xf32>
    %67 = vector.broadcast %66 : vector<128x1xf32> to vector<128x256xf32>
    %68 = arith.divf %64, %67 : vector<128x256xf32>
    %cst_35 = arith.constant dense<0.000000e+00> : vector<32x128xf32>
    %69 = tpu.matmul %55, %68, %cst_35 {dimension_numbers = #tpu.dot_dimension_numbers<[1], [1], [0], [0], [0, 0, 1, 0], [], []>} : vector<32x256xf32>, vector<128x256xf32>, vector<32x128xf32> -> vector<32x128xf32>
    %c2 = arith.constant 2 : index
    %c0_36 = arith.constant 0 : index
    %c0_37 = arith.constant 0 : index
    %70 = vector.load %arg7[%c2, %c0_36, %c0_37] : memref<8x4x32xf32, #tpu.memory_space<vmem>>, vector<1x4x32xf32>
    %71 = vector.shape_cast %70 : vector<1x4x32xf32> to vector<4x32xf32>
    %cst_38 = arith.constant dense<0.000000e+00> : vector<4x128xf32>
    %72 = tpu.matmul %71, %69, %cst_38 {dimension_numbers = #tpu.dot_dimension_numbers<[1], [0], [0], [1], [0, 0, 1, 1], [], []>} : vector<4x32xf32>, vector<32x128xf32>, vector<4x128xf32> -> vector<4x128xf32>
    %73 = arith.addf %52, %72 : vector<4x128xf32>
    %74 = vector.extract_strided_slice %7 {offsets = [96, 0], sizes = [32, 128], strides = [1, 1]} : vector<256x128xf32> to vector<32x128xf32>
    %75 = vector.extract_strided_slice %8 {offsets = [96, 0], sizes = [32, 256], strides = [1, 1]} : vector<256x256xf32> to vector<32x256xf32>
    %76 = vector.extract_strided_slice %9 {offsets = [96, 0], sizes = [32, 256], strides = [1, 1]} : vector<256x256xf32> to vector<32x256xf32>
    %77 = tpu.transpose %74, [1, 0] : vector<32x128xf32> -> vector<128x32xf32>
    %cst_39 = arith.constant dense<0.000000e+00> : vector<128x256xf32>
    %78 = tpu.matmul %77, %75, %cst_39 {dimension_numbers = #tpu.dot_dimension_numbers<[1], [0], [0], [1], [0, 0, 1, 1], [], []>} : vector<128x32xf32>, vector<32x256xf32>, vector<128x256xf32> -> vector<128x256xf32>
    %cst_40 = arith.constant 0.176776692 : f32
    %79 = vector.broadcast %cst_40 : f32 to vector<128x256xf32>
    %80 = arith.mulf %78, %79 : vector<128x256xf32>
    %cst_41 = arith.constant dense<0xFF800000> : vector<128xf32>
    %81 = vector.multi_reduction <maximumf>, %80, %cst_41 [1] : vector<128x256xf32> to vector<128xf32>
    %82 = vector.shape_cast %81 : vector<128xf32> to vector<128x1xf32>
    %83 = vector.broadcast %82 : vector<128x1xf32> to vector<128x256xf32>
    %84 = arith.subf %80, %83 : vector<128x256xf32>
    %85 = math.exp %84 : vector<128x256xf32>
    %cst_42 = arith.constant dense<0.000000e+00> : vector<128xf32>
    %86 = vector.multi_reduction <add>, %85, %cst_42 [1] : vector<128x256xf32> to vector<128xf32>
    %87 = vector.shape_cast %86 : vector<128xf32> to vector<128x1xf32>
    %88 = vector.broadcast %87 : vector<128x1xf32> to vector<128x256xf32>
    %89 = arith.divf %85, %88 : vector<128x256xf32>
    %cst_43 = arith.constant dense<0.000000e+00> : vector<32x128xf32>
    %90 = tpu.matmul %76, %89, %cst_43 {dimension_numbers = #tpu.dot_dimension_numbers<[1], [1], [0], [0], [0, 0, 1, 0], [], []>} : vector<32x256xf32>, vector<128x256xf32>, vector<32x128xf32> -> vector<32x128xf32>
    %c3 = arith.constant 3 : index
    %c0_44 = arith.constant 0 : index
    %c0_45 = arith.constant 0 : index
    %91 = vector.load %arg7[%c3, %c0_44, %c0_45] : memref<8x4x32xf32, #tpu.memory_space<vmem>>, vector<1x4x32xf32>
    %92 = vector.shape_cast %91 : vector<1x4x32xf32> to vector<4x32xf32>
    %cst_46 = arith.constant dense<0.000000e+00> : vector<4x128xf32>
    %93 = tpu.matmul %92, %90, %cst_46 {dimension_numbers = #tpu.dot_dimension_numbers<[1], [0], [0], [1], [0, 0, 1, 1], [], []>} : vector<4x32xf32>, vector<32x128xf32>, vector<4x128xf32> -> vector<4x128xf32>
    %94 = arith.addf %73, %93 : vector<4x128xf32>
    %95 = vector.extract_strided_slice %7 {offsets = [128, 0], sizes = [32, 128], strides = [1, 1]} : vector<256x128xf32> to vector<32x128xf32>
    %96 = vector.extract_strided_slice %8 {offsets = [128, 0], sizes = [32, 256], strides = [1, 1]} : vector<256x256xf32> to vector<32x256xf32>
    %97 = vector.extract_strided_slice %9 {offsets = [128, 0], sizes = [32, 256], strides = [1, 1]} : vector<256x256xf32> to vector<32x256xf32>
    %98 = tpu.transpose %95, [1, 0] : vector<32x128xf32> -> vector<128x32xf32>
    %cst_47 = arith.constant dense<0.000000e+00> : vector<128x256xf32>
    %99 = tpu.matmul %98, %96, %cst_47 {dimension_numbers = #tpu.dot_dimension_numbers<[1], [0], [0], [1], [0, 0, 1, 1], [], []>} : vector<128x32xf32>, vector<32x256xf32>, vector<128x256xf32> -> vector<128x256xf32>
    %cst_48 = arith.constant 0.176776692 : f32
    %100 = vector.broadcast %cst_48 : f32 to vector<128x256xf32>
    %101 = arith.mulf %99, %100 : vector<128x256xf32>
    %cst_49 = arith.constant dense<0xFF800000> : vector<128xf32>
    %102 = vector.multi_reduction <maximumf>, %101, %cst_49 [1] : vector<128x256xf32> to vector<128xf32>
    %103 = vector.shape_cast %102 : vector<128xf32> to vector<128x1xf32>
    %104 = vector.broadcast %103 : vector<128x1xf32> to vector<128x256xf32>
    %105 = arith.subf %101, %104 : vector<128x256xf32>
    %106 = math.exp %105 : vector<128x256xf32>
    %cst_50 = arith.constant dense<0.000000e+00> : vector<128xf32>
    %107 = vector.multi_reduction <add>, %106, %cst_50 [1] : vector<128x256xf32> to vector<128xf32>
    %108 = vector.shape_cast %107 : vector<128xf32> to vector<128x1xf32>
    %109 = vector.broadcast %108 : vector<128x1xf32> to vector<128x256xf32>
    %110 = arith.divf %106, %109 : vector<128x256xf32>
    %cst_51 = arith.constant dense<0.000000e+00> : vector<32x128xf32>
    %111 = tpu.matmul %97, %110, %cst_51 {dimension_numbers = #tpu.dot_dimension_numbers<[1], [1], [0], [0], [0, 0, 1, 0], [], []>} : vector<32x256xf32>, vector<128x256xf32>, vector<32x128xf32> -> vector<32x128xf32>
    %c4 = arith.constant 4 : index
    %c0_52 = arith.constant 0 : index
    %c0_53 = arith.constant 0 : index
    %112 = vector.load %arg7[%c4, %c0_52, %c0_53] : memref<8x4x32xf32, #tpu.memory_space<vmem>>, vector<1x4x32xf32>
    %113 = vector.shape_cast %112 : vector<1x4x32xf32> to vector<4x32xf32>
    %cst_54 = arith.constant dense<0.000000e+00> : vector<4x128xf32>
    %114 = tpu.matmul %113, %111, %cst_54 {dimension_numbers = #tpu.dot_dimension_numbers<[1], [0], [0], [1], [0, 0, 1, 1], [], []>} : vector<4x32xf32>, vector<32x128xf32>, vector<4x128xf32> -> vector<4x128xf32>
    %115 = arith.addf %94, %114 : vector<4x128xf32>
    %116 = vector.extract_strided_slice %7 {offsets = [160, 0], sizes = [32, 128], strides = [1, 1]} : vector<256x128xf32> to vector<32x128xf32>
    %117 = vector.extract_strided_slice %8 {offsets = [160, 0], sizes = [32, 256], strides = [1, 1]} : vector<256x256xf32> to vector<32x256xf32>
    %118 = vector.extract_strided_slice %9 {offsets = [160, 0], sizes = [32, 256], strides = [1, 1]} : vector<256x256xf32> to vector<32x256xf32>
    %119 = tpu.transpose %116, [1, 0] : vector<32x128xf32> -> vector<128x32xf32>
    %cst_55 = arith.constant dense<0.000000e+00> : vector<128x256xf32>
    %120 = tpu.matmul %119, %117, %cst_55 {dimension_numbers = #tpu.dot_dimension_numbers<[1], [0], [0], [1], [0, 0, 1, 1], [], []>} : vector<128x32xf32>, vector<32x256xf32>, vector<128x256xf32> -> vector<128x256xf32>
    %cst_56 = arith.constant 0.176776692 : f32
    %121 = vector.broadcast %cst_56 : f32 to vector<128x256xf32>
    %122 = arith.mulf %120, %121 : vector<128x256xf32>
    %cst_57 = arith.constant dense<0xFF800000> : vector<128xf32>
    %123 = vector.multi_reduction <maximumf>, %122, %cst_57 [1] : vector<128x256xf32> to vector<128xf32>
    %124 = vector.shape_cast %123 : vector<128xf32> to vector<128x1xf32>
    %125 = vector.broadcast %124 : vector<128x1xf32> to vector<128x256xf32>
    %126 = arith.subf %122, %125 : vector<128x256xf32>
    %127 = math.exp %126 : vector<128x256xf32>
    %cst_58 = arith.constant dense<0.000000e+00> : vector<128xf32>
    %128 = vector.multi_reduction <add>, %127, %cst_58 [1] : vector<128x256xf32> to vector<128xf32>
    %129 = vector.shape_cast %128 : vector<128xf32> to vector<128x1xf32>
    %130 = vector.broadcast %129 : vector<128x1xf32> to vector<128x256xf32>
    %131 = arith.divf %127, %130 : vector<128x256xf32>
    %cst_59 = arith.constant dense<0.000000e+00> : vector<32x128xf32>
    %132 = tpu.matmul %118, %131, %cst_59 {dimension_numbers = #tpu.dot_dimension_numbers<[1], [1], [0], [0], [0, 0, 1, 0], [], []>} : vector<32x256xf32>, vector<128x256xf32>, vector<32x128xf32> -> vector<32x128xf32>
    %c5 = arith.constant 5 : index
    %c0_60 = arith.constant 0 : index
    %c0_61 = arith.constant 0 : index
    %133 = vector.load %arg7[%c5, %c0_60, %c0_61] : memref<8x4x32xf32, #tpu.memory_space<vmem>>, vector<1x4x32xf32>
    %134 = vector.shape_cast %133 : vector<1x4x32xf32> to vector<4x32xf32>
    %cst_62 = arith.constant dense<0.000000e+00> : vector<4x128xf32>
    %135 = tpu.matmul %134, %132, %cst_62 {dimension_numbers = #tpu.dot_dimension_numbers<[1], [0], [0], [1], [0, 0, 1, 1], [], []>} : vector<4x32xf32>, vector<32x128xf32>, vector<4x128xf32> -> vector<4x128xf32>
    %136 = arith.addf %115, %135 : vector<4x128xf32>
    %137 = vector.extract_strided_slice %7 {offsets = [192, 0], sizes = [32, 128], strides = [1, 1]} : vector<256x128xf32> to vector<32x128xf32>
    %138 = vector.extract_strided_slice %8 {offsets = [192, 0], sizes = [32, 256], strides = [1, 1]} : vector<256x256xf32> to vector<32x256xf32>
    %139 = vector.extract_strided_slice %9 {offsets = [192, 0], sizes = [32, 256], strides = [1, 1]} : vector<256x256xf32> to vector<32x256xf32>
    %140 = tpu.transpose %137, [1, 0] : vector<32x128xf32> -> vector<128x32xf32>
    %cst_63 = arith.constant dense<0.000000e+00> : vector<128x256xf32>
    %141 = tpu.matmul %140, %138, %cst_63 {dimension_numbers = #tpu.dot_dimension_numbers<[1], [0], [0], [1], [0, 0, 1, 1], [], []>} : vector<128x32xf32>, vector<32x256xf32>, vector<128x256xf32> -> vector<128x256xf32>
    %cst_64 = arith.constant 0.176776692 : f32
    %142 = vector.broadcast %cst_64 : f32 to vector<128x256xf32>
    %143 = arith.mulf %141, %142 : vector<128x256xf32>
    %cst_65 = arith.constant dense<0xFF800000> : vector<128xf32>
    %144 = vector.multi_reduction <maximumf>, %143, %cst_65 [1] : vector<128x256xf32> to vector<128xf32>
    %145 = vector.shape_cast %144 : vector<128xf32> to vector<128x1xf32>
    %146 = vector.broadcast %145 : vector<128x1xf32> to vector<128x256xf32>
    %147 = arith.subf %143, %146 : vector<128x256xf32>
    %148 = math.exp %147 : vector<128x256xf32>
    %cst_66 = arith.constant dense<0.000000e+00> : vector<128xf32>
    %149 = vector.multi_reduction <add>, %148, %cst_66 [1] : vector<128x256xf32> to vector<128xf32>
    %150 = vector.shape_cast %149 : vector<128xf32> to vector<128x1xf32>
    %151 = vector.broadcast %150 : vector<128x1xf32> to vector<128x256xf32>
    %152 = arith.divf %148, %151 : vector<128x256xf32>
    %cst_67 = arith.constant dense<0.000000e+00> : vector<32x128xf32>
    %153 = tpu.matmul %139, %152, %cst_67 {dimension_numbers = #tpu.dot_dimension_numbers<[1], [1], [0], [0], [0, 0, 1, 0], [], []>} : vector<32x256xf32>, vector<128x256xf32>, vector<32x128xf32> -> vector<32x128xf32>
    %c6 = arith.constant 6 : index
    %c0_68 = arith.constant 0 : index
    %c0_69 = arith.constant 0 : index
    %154 = vector.load %arg7[%c6, %c0_68, %c0_69] : memref<8x4x32xf32, #tpu.memory_space<vmem>>, vector<1x4x32xf32>
    %155 = vector.shape_cast %154 : vector<1x4x32xf32> to vector<4x32xf32>
    %cst_70 = arith.constant dense<0.000000e+00> : vector<4x128xf32>
    %156 = tpu.matmul %155, %153, %cst_70 {dimension_numbers = #tpu.dot_dimension_numbers<[1], [0], [0], [1], [0, 0, 1, 1], [], []>} : vector<4x32xf32>, vector<32x128xf32>, vector<4x128xf32> -> vector<4x128xf32>
    %157 = arith.addf %136, %156 : vector<4x128xf32>
    %158 = vector.extract_strided_slice %7 {offsets = [224, 0], sizes = [32, 128], strides = [1, 1]} : vector<256x128xf32> to vector<32x128xf32>
    %159 = vector.extract_strided_slice %8 {offsets = [224, 0], sizes = [32, 256], strides = [1, 1]} : vector<256x256xf32> to vector<32x256xf32>
    %160 = vector.extract_strided_slice %9 {offsets = [224, 0], sizes = [32, 256], strides = [1, 1]} : vector<256x256xf32> to vector<32x256xf32>
    %161 = tpu.transpose %158, [1, 0] : vector<32x128xf32> -> vector<128x32xf32>
    %cst_71 = arith.constant dense<0.000000e+00> : vector<128x256xf32>
    %162 = tpu.matmul %161, %159, %cst_71 {dimension_numbers = #tpu.dot_dimension_numbers<[1], [0], [0], [1], [0, 0, 1, 1], [], []>} : vector<128x32xf32>, vector<32x256xf32>, vector<128x256xf32> -> vector<128x256xf32>
    %cst_72 = arith.constant 0.176776692 : f32
    %163 = vector.broadcast %cst_72 : f32 to vector<128x256xf32>
    %164 = arith.mulf %162, %163 : vector<128x256xf32>
    %cst_73 = arith.constant dense<0xFF800000> : vector<128xf32>
    %165 = vector.multi_reduction <maximumf>, %164, %cst_73 [1] : vector<128x256xf32> to vector<128xf32>
    %166 = vector.shape_cast %165 : vector<128xf32> to vector<128x1xf32>
    %167 = vector.broadcast %166 : vector<128x1xf32> to vector<128x256xf32>
    %168 = arith.subf %164, %167 : vector<128x256xf32>
    %169 = math.exp %168 : vector<128x256xf32>
    %cst_74 = arith.constant dense<0.000000e+00> : vector<128xf32>
    %170 = vector.multi_reduction <add>, %169, %cst_74 [1] : vector<128x256xf32> to vector<128xf32>
    %171 = vector.shape_cast %170 : vector<128xf32> to vector<128x1xf32>
    %172 = vector.broadcast %171 : vector<128x1xf32> to vector<128x256xf32>
    %173 = arith.divf %169, %172 : vector<128x256xf32>
    %cst_75 = arith.constant dense<0.000000e+00> : vector<32x128xf32>
    %174 = tpu.matmul %160, %173, %cst_75 {dimension_numbers = #tpu.dot_dimension_numbers<[1], [1], [0], [0], [0, 0, 1, 0], [], []>} : vector<32x256xf32>, vector<128x256xf32>, vector<32x128xf32> -> vector<32x128xf32>
    %c7 = arith.constant 7 : index
    %c0_76 = arith.constant 0 : index
    %c0_77 = arith.constant 0 : index
    %175 = vector.load %arg7[%c7, %c0_76, %c0_77] : memref<8x4x32xf32, #tpu.memory_space<vmem>>, vector<1x4x32xf32>
    %176 = vector.shape_cast %175 : vector<1x4x32xf32> to vector<4x32xf32>
    %cst_78 = arith.constant dense<0.000000e+00> : vector<4x128xf32>
    %177 = tpu.matmul %176, %174, %cst_78 {dimension_numbers = #tpu.dot_dimension_numbers<[1], [0], [0], [1], [0, 0, 1, 1], [], []>} : vector<4x32xf32>, vector<32x128xf32>, vector<4x128xf32> -> vector<4x128xf32>
    %178 = arith.addf %157, %177 : vector<4x128xf32>
    %c0_79 = arith.constant 0 : index
    %c0_80 = arith.constant 0 : index
    %179 = vector.load %arg8[%c0_79, %c0_80] : memref<4x1xf32, #tpu.memory_space<vmem>>, vector<4x1xf32>
    %180 = vector.broadcast %179 : vector<4x1xf32> to vector<4x128xf32>
    %181 = arith.addf %178, %180 : vector<4x128xf32>
    %c0_81 = arith.constant 0 : index
    %c0_82 = arith.constant 0 : index
    %c0_83 = arith.constant 0 : index
    %182 = vector.load %arg9[%c0_81, %c0_82, %c0_83] : memref<1x4x128xf32, #tpu.memory_space<vmem>>, vector<1x4x128xf32>
    %183 = vector.shape_cast %182 : vector<1x4x128xf32> to vector<4x128xf32>
    %184 = vector.shape_cast %181 : vector<4x128xf32> to vector<1x4x128xf32>
    tpu.vector_store %arg9[%c0_81, %c0_82, %c0_83], %184 {strides = array<i32>} : memref<1x4x128xf32, #tpu.memory_space<vmem>>, vector<1x4x128xf32>,
    return
  }
  func.func @transform_0(%arg0: i32, %arg1: i32) -> (i32, i32, i32) {
    %c0_i32 = arith.constant 0 : i32
    %c0_i32_0 = arith.constant 0 : i32
    return %arg0, %c0_i32, %arg1 : i32, i32, i32
  }
  func.func @transform_1(%arg0: i32, %arg1: i32) -> (i32, i32, i32) {
    %c0_i32 = arith.constant 0 : i32
    %c0_i32_0 = arith.constant 0 : i32
    %c0_i32_1 = arith.constant 0 : i32
    return %arg0, %c0_i32, %c0_i32_0 : i32, i32, i32
  }
  func.func @transform_2(%arg0: i32, %arg1: i32) -> (i32, i32) {
    %c0_i32 = arith.constant 0 : i32
    %c0_i32_0 = arith.constant 0 : i32
    %c0_i32_1 = arith.constant 0 : i32
    return %c0_i32, %c0_i32_0 : i32, i32
  }
  func.func @transform_3(%arg0: i32, %arg1: i32) -> (i32, i32) {
    %c0_i32 = arith.constant 0 : i32
    %c0_i32_0 = arith.constant 0 : i32
    %c0_i32_1 = arith.constant 0 : i32
    return %c0_i32, %c0_i32_0 : i32, i32
  }
  func.func @transform_4(%arg0: i32, %arg1: i32) -> (i32, i32) {
    %c0_i32 = arith.constant 0 : i32
    %c0_i32_0 = arith.constant 0 : i32
    %c0_i32_1 = arith.constant 0 : i32
    return %c0_i32, %c0_i32_0 : i32, i32
  }
  func.func @transform_5(%arg0: i32, %arg1: i32) -> (i32, i32, i32) {
    %c0_i32 = arith.constant 0 : i32
    %c0_i32_0 = arith.constant 0 : i32
    %c0_i32_1 = arith.constant 0 : i32
    %c0_i32_2 = arith.constant 0 : i32
    return %c0_i32, %c0_i32_0, %c0_i32_1 : i32, i32, i32
  }
  func.func @transform_6(%arg0: i32, %arg1: i32) -> (i32, i32) {
    %c0_i32 = arith.constant 0 : i32
    %c0_i32_0 = arith.constant 0 : i32
    %c0_i32_1 = arith.constant 0 : i32
    return %c0_i32, %c0_i32_0 : i32, i32
  }
  func.func @transform_7(%arg0: i32, %arg1: i32) -> (i32, i32, i32) {
    %c0_i32 = arith.constant 0 : i32
    %c0_i32_0 = arith.constant 0 : i32
    return %arg0, %c0_i32, %arg1 : i32, i32, i32
  }
}

</mosaic_0001>

<llo_original>
// kernel: tpu_custom_call.1
$region0: #{tpu_custom_call.1}
  #allocation0 [shape = 'u32[]', space=smem, size = 0x4, offset = 0x4, fixed_abs, tag = 'smem constant byte address 0x4 - core index']
  #allocation1 [shape = 'u32[72,128]{1,0:T(1,128)}', space=vmem, size = 0x9000, scoped, tag = 'internal scratch']
  %s0 = inlined_call_operand.vmem [shape: f32[2,4,256], index: 0, kind: input, shape index: {}]
  %s1 = inlined_call_operand.vmem [shape: f32[2,4,256], index: 1, kind: input, shape index: {}]
  %s2 = inlined_call_operand.vmem [shape: f32[256,4], index: 2, kind: input, shape index: {}]
  %s3 = inlined_call_operand.vmem [shape: f32[256,4], index: 3, kind: input, shape index: {}]
  %s4 = inlined_call_operand.vmem [shape: f32[256,4], index: 4, kind: input, shape index: {}]
  %s5 = inlined_call_operand.vmem [shape: f32[8,4,32], index: 5, kind: input, shape index: {}]
  %s6 = inlined_call_operand.vmem [shape: f32[4,1], index: 6, kind: input, shape index: {}]
  %s7 = inlined_call_operand.hbm [shape: f32[2,4,256], index: 7, kind: output, shape index: {}]
  %s8 = sld [smem:[#allocation0]]
  $region61: #{tpu_custom_call.1} parent=0
    _
  %s10 = ssub.s32 1, %s8
  %s11 = scalar_select 0, %s10, %s8
  $region1: #{tpu_custom_call.1} parent=0
    #allocation2 [shape = 'u8[4096]{0}', space=vmem, size = 0x1000, scoped, tag = 'output window, operand 0']
    #allocation3 [shape = 's32[2]{0}', space=sflag, size = 0x8, scoped, tag = 'scoped memory for tpu_custom_call.1']
    %12 = vsyncpa [#allocation3], 0
    %s13 = scalar_lea.sflag [#allocation3], 1
    %14 = vsyncpa %s13, 0
    loop: start=0, step=1, limit=6
    $region2: #{tpu_custom_call.1} parent=1 // loop_pre_header
      _
    $region3: #{tpu_custom_call.1} parent=1 // loop_header
      %s16 = sphi 0, %s20
      %p17 = scmp.ge.s32.totalorder %s16, 6
      %s23 = sphi 0, %s35
      %s24 = sphi 0, %s31
      %s25 = sphi 0, %s23
      %s26 = sphi 0, %s24
      %s27 = sphi 0, %s25
      %s28 = sphi 0, %s26
      %s40 = sphi 0, %s42
      %s43 = sphi 0, %s40
      %s44 = sphi 0, %s43
      %s60 = sphi 0, %s44
      %s66 = sphi 0, %s68
      %s69 = sphi 0, %s66
      %s70 = sphi 0, %s69
      %s86 = sphi 0, %s70
      %s90 = sphi 0, %s90
      %s92 = sphi 0, %s90
      %s93 = sphi 0, %s92
      %s107 = sphi 0, %s93
      %s111 = sphi 0, %s111
      %s113 = sphi 0, %s111
      %s114 = sphi 0, %s113
      %s128 = sphi 0, %s114
      %s132 = sphi 0, %s132
      %s134 = sphi 0, %s132
      %s135 = sphi 0, %s134
      %s149 = sphi 0, %s135
      %s153 = sphi 0, %s153
      %s155 = sphi 0, %s153
      %s156 = sphi 0, %s155
      %s170 = sphi 0, %s156
      %s174 = sphi 0, %s174
      %s176 = sphi 0, %s174
      %s177 = sphi 0, %s176
      %s191 = sphi 0, %s177
      %s199 = sphi 0, %s201
      %s202 = sphi 0, %s199
      %s203 = sphi 0, %s202
      %s219 = sphi 0, %s203
    $region4: #{tpu_custom_call.1} parent=1 // loop_header_branch
      %19 = sbr.rel (%p17) target = $region8
    $region5: #{tpu_custom_call.1} parent=1 // loop_body
      %s21 = ssub.s32 %s16, 1
      %s22 = ssub.s32 %s16, 2
      %s29 = sadd.s32 1, %s24
      %p30 = scmp.ge.s32.totalorder %s29, 2
      %s31 = scalar_select %p30, 0, %s29
      %s32 = sadd.s32 1, %s23
      %s33 = scalar_select %p30, %s32, %s23
      %p34 = scmp.ge.s32.totalorder %s33, 2
      %s35 = scalar_select %p34, 0, %s33
      %s36 = ssub.s32 %s23, %s35
      %s37 = ssub.s32 %s24, %s31
      %s38 = sor.u32 %s36, %s37
      %p39 = scmp.eq.s32.totalorder %s38, 0
      %s41 = sadd.s32 %s40, 1
      %s42 = scalar_select %p39, %s40, %s41
      %p45 = pneg %p39
      %p46 = scmp.eq.s32.totalorder %s16, 3
      %p47 = por %p45, %p46
      %p48 = scmp.ne.s32.totalorder %s40, %s43
      %p49 = scmp.eq.s32.totalorder %s16, 0
      %p50 = por %p48, %p49
      %p51 = scmp.ne.s32.totalorder %s40, %s43
      %p52 = scmp.eq.s32.totalorder %s21, 3
      %p53 = por %p51, %p52
      %p54 = scmp.ne.s32.totalorder %s43, %s44
      %p55 = scmp.eq.s32.totalorder %s21, 0
      %p56 = por %p54, %p55
      %p57 = scmp.ne.s32.totalorder %s43, %s44
      %p58 = scmp.eq.s32.totalorder %s22, 3
      %p59 = por %p57, %p58
      %p61 = scmp.ne.s32.totalorder %s44, %s60
      %p62 = scmp.eq.s32.totalorder %s22, 0
      %p63 = por %p61, %p62
      %s64 = ssub.s32 %s23, %s35
      %p65 = scmp.eq.s32.totalorder %s64, 0
      %s67 = sadd.s32 %s66, 1
      %s68 = scalar_select %p65, %s66, %s67
      %p71 = pneg %p65
      %p72 = scmp.eq.s32.totalorder %s16, 3
      %p73 = por %p71, %p72
      %p74 = scmp.ne.s32.totalorder %s66, %s69
      %p75 = scmp.eq.s32.totalorder %s16, 0
      %p76 = por %p74, %p75
      %p77 = scmp.ne.s32.totalorder %s66, %s69
      %p78 = scmp.eq.s32.totalorder %s21, 3
      %p79 = por %p77, %p78
      %p80 = scmp.ne.s32.totalorder %s69, %s70
      %p81 = scmp.eq.s32.totalorder %s21, 0
      %p82 = por %p80, %p81
      %p83 = scmp.ne.s32.totalorder %s69, %s70
      %p84 = scmp.eq.s32.totalorder %s22, 3
      %p85 = por %p83, %p84
      %p87 = scmp.ne.s32.totalorder %s70, %s86
      %p88 = scmp.eq.s32.totalorder %s22, 0
      %p89 = por %p87, %p88
      %s91 = sadd.s32 %s90, 1
      %p94 = scmp.eq.s32.totalorder %s16, 3
      %p95 = scmp.ne.s32.totalorder %s90, %s92
      %p96 = scmp.eq.s32.totalorder %s16, 0
      %p97 = por %p95, %p96
      %p98 = scmp.ne.s32.totalorder %s90, %s92
      %p99 = scmp.eq.s32.totalorder %s21, 3
      %p100 = por %p98, %p99
      %p101 = scmp.ne.s32.totalorder %s92, %s93
      %p102 = scmp.eq.s32.totalorder %s21, 0
      %p103 = por %p101, %p102
      %p104 = scmp.ne.s32.totalorder %s92, %s93
      %p105 = scmp.eq.s32.totalorder %s22, 3
      %p106 = por %p104, %p105
      %p108 = scmp.ne.s32.totalorder %s93, %s107
      %p109 = scmp.eq.s32.totalorder %s22, 0
      %p110 = por %p108, %p109
      %s112 = sadd.s32 %s111, 1
      %p115 = scmp.eq.s32.totalorder %s16, 3
      %p116 = scmp.ne.s32.totalorder %s111, %s113
      %p117 = scmp.eq.s32.totalorder %s16, 0
      %p118 = por %p116, %p117
      %p119 = scmp.ne.s32.totalorder %s111, %s113
      %p120 = scmp.eq.s32.totalorder %s21, 3
      %p121 = por %p119, %p120
      %p122 = scmp.ne.s32.totalorder %s113, %s114
      %p123 = scmp.eq.s32.totalorder %s21, 0
      %p124 = por %p122, %p123
      %p125 = scmp.ne.s32.totalorder %s113, %s114
      %p126 = scmp.eq.s32.totalorder %s22, 3
      %p127 = por %p125, %p126
      %p129 = scmp.ne.s32.totalorder %s114, %s128
      %p130 = scmp.eq.s32.totalorder %s22, 0
      %p131 = por %p129, %p130
      %s133 = sadd.s32 %s132, 1
      %p136 = scmp.eq.s32.totalorder %s16, 3
      %p137 = scmp.ne.s32.totalorder %s132, %s134
      %p138 = scmp.eq.s32.totalorder %s16, 0
      %p139 = por %p137, %p138
      %p140 = scmp.ne.s32.totalorder %s132, %s134
      %p141 = scmp.eq.s32.totalorder %s21, 3
      %p142 = por %p140, %p141
      %p143 = scmp.ne.s32.totalorder %s134, %s135
      %p144 = scmp.eq.s32.totalorder %s21, 0
      %p145 = por %p143, %p144
      %p146 = scmp.ne.s32.totalorder %s134, %s135
      %p147 = scmp.eq.s32.totalorder %s22, 3
      %p148 = por %p146, %p147
      %p150 = scmp.ne.s32.totalorder %s135, %s149
      %p151 = scmp.eq.s32.totalorder %s22, 0
      %p152 = por %p150, %p151
      %s154 = sadd.s32 %s153, 1
      %p157 = scmp.eq.s32.totalorder %s16, 3
      %p158 = scmp.ne.s32.totalorder %s153, %s155
      %p159 = scmp.eq.s32.totalorder %s16, 0
      %p160 = por %p158, %p159
      %p161 = scmp.ne.s32.totalorder %s153, %s155
      %p162 = scmp.eq.s32.totalorder %s21, 3
      %p163 = por %p161, %p162
      %p164 = scmp.ne.s32.totalorder %s155, %s156
      %p165 = scmp.eq.s32.totalorder %s21, 0
      %p166 = por %p164, %p165
      %p167 = scmp.ne.s32.totalorder %s155, %s156
      %p168 = scmp.eq.s32.totalorder %s22, 3
      %p169 = por %p167, %p168
      %p171 = scmp.ne.s32.totalorder %s156, %s170
      %p172 = scmp.eq.s32.totalorder %s22, 0
      %p173 = por %p171, %p172
      %s175 = sadd.s32 %s174, 1
      %p178 = scmp.eq.s32.totalorder %s16, 3
      %p179 = scmp.ne.s32.totalorder %s174, %s176
      %p180 = scmp.eq.s32.totalorder %s16, 0
      %p181 = por %p179, %p180
      %p182 = scmp.ne.s32.totalorder %s174, %s176
      %p183 = scmp.eq.s32.totalorder %s21, 3
      %p184 = por %p182, %p183
      %p185 = scmp.ne.s32.totalorder %s176, %s177
      %p186 = scmp.eq.s32.totalorder %s21, 0
      %p187 = por %p185, %p186
      %p188 = scmp.ne.s32.totalorder %s176, %s177
      %p189 = scmp.eq.s32.totalorder %s22, 3
      %p190 = por %p188, %p189
      %p192 = scmp.ne.s32.totalorder %s177, %s191
      %p193 = scmp.eq.s32.totalorder %s22, 0
      %p194 = por %p192, %p193
      %s195 = ssub.s32 %s23, %s35
      %s196 = ssub.s32 %s24, %s31
      %s197 = sor.u32 %s195, %s196
      %p198 = scmp.eq.s32.totalorder %s197, 0
      %s200 = sadd.s32 %s199, 1
      %s201 = scalar_select %p198, %s199, %s200
      %p204 = pneg %p198
      %p205 = scmp.eq.s32.totalorder %s16, 3
      %p206 = por %p204, %p205
      %p207 = scmp.ne.s32.totalorder %s199, %s202
      %p208 = scmp.eq.s32.totalorder %s16, 0
      %p209 = por %p207, %p208
      %p210 = scmp.ne.s32.totalorder %s199, %s202
      %p211 = scmp.eq.s32.totalorder %s21, 3
      %p212 = por %p210, %p211
      %p213 = scmp.ne.s32.totalorder %s202, %s203
      %p214 = scmp.eq.s32.totalorder %s21, 0
      %p215 = por %p213, %p214
      %p216 = scmp.ne.s32.totalorder %s202, %s203
      %p217 = scmp.eq.s32.totalorder %s22, 3
      %p218 = por %p216, %p217
      %p220 = scmp.ne.s32.totalorder %s203, %s219
      %p221 = scmp.eq.s32.totalorder %s22, 0
      %p222 = por %p220, %p221
      %p223 = scmp.le.s32.totalorder 1, %s16
      %p224 = scmp.lt.s32.totalorder %s16, 5
      %p225 = pnand %p223, %p224
      %p226 = pneg %p225
      // Predicated region
      $region9: #{tpu_custom_call.1} parent=5 // pred_check
        _
      $region10: #{tpu_custom_call.1} parent=5 // pred_check_branch
        %228 = sbr.rel (%p225) target = $region12
      $region11: #{tpu_custom_call.1} parent=5 // pred_region
        %s229 = ssub.s32 %s16, 1
        // Predicated region
        $region13: #{tpu_custom_call.1} parent=11 // pred_check
          %p230 = pneg %p103
        $region14: #{tpu_custom_call.1} parent=11 // pred_check_branch
          %232 = sbr.rel (%p230) target = $region16
        $region15: #{tpu_custom_call.1} parent=11 // pred_region
          _
        $region16: #{tpu_custom_call.1} parent=11 // pred_fallthru
          _
        // Predicated region
        $region17: #{tpu_custom_call.1} parent=11 // pred_check
          %p233 = pneg %p124
        $region18: #{tpu_custom_call.1} parent=11 // pred_check_branch
          %235 = sbr.rel (%p233) target = $region20
        $region19: #{tpu_custom_call.1} parent=11 // pred_region
          _
        $region20: #{tpu_custom_call.1} parent=11 // pred_fallthru
          _
        // Predicated region
        $region21: #{tpu_custom_call.1} parent=11 // pred_check
          %p236 = pneg %p145
        $region22: #{tpu_custom_call.1} parent=11 // pred_check_branch
          %238 = sbr.rel (%p236) target = $region24
        $region23: #{tpu_custom_call.1} parent=11 // pred_region
          _
        $region24: #{tpu_custom_call.1} parent=11 // pred_fallthru
          _
        // Predicated region
        $region25: #{tpu_custom_call.1} parent=11 // pred_check
          %p239 = pneg %p166
        $region26: #{tpu_custom_call.1} parent=11 // pred_check_branch
          %241 = sbr.rel (%p239) target = $region28
        $region27: #{tpu_custom_call.1} parent=11 // pred_region
          _
        $region28: #{tpu_custom_call.1} parent=11 // pred_fallthru
          _
        // Predicated region
        $region29: #{tpu_custom_call.1} parent=11 // pred_check
          %p242 = pneg %p187
        $region30: #{tpu_custom_call.1} parent=11 // pred_check_branch
          %244 = sbr.rel (%p242) target = $region32
        $region31: #{tpu_custom_call.1} parent=11 // pred_region
          _
        $region32: #{tpu_custom_call.1} parent=11 // pred_fallthru
          _
      $region12: #{tpu_custom_call.1} parent=5 // pred_fallthru
        _
      %p245 = scmp.lt.s32.totalorder %s16, 4
      // Predicated region
      $region33: #{tpu_custom_call.1} parent=5 // pred_check
        %p246 = pneg %p245
      $region34: #{tpu_custom_call.1} parent=5 // pred_check_branch
        %248 = sbr.rel (%p246) target = $region36
      $region35: #{tpu_custom_call.1} parent=5 // pred_region
        // Predicated region
        $region37: #{tpu_custom_call.1} parent=35 // pred_check
          %p249 = pneg %p50
        $region38: #{tpu_custom_call.1} parent=35 // pred_check_branch
          %251 = sbr.rel (%p249) target = $region40
        $region39: #{tpu_custom_call.1} parent=35 // pred_region
          %p252 = scmp.lt.s32.totalorder %s23, 1
          %s253 = scalar_select %p252, %s23, 1
          %p254 = scmp.lt.s32.totalorder %s24, 1
          %s255 = scalar_select %p254, %s24, 1
          %s256 = smul.addr %s253, 2
          %s257 = sadd.s32 %s255, %s256
          %s258 = smul.addr %s257, 4
          %s259 = scalar_lea.vmem %s0, %s258
        $region40: #{tpu_custom_call.1} parent=35 // pred_fallthru
          _
        // Predicated region
        $region41: #{tpu_custom_call.1} parent=35 // pred_check
          %p260 = pneg %p76
        $region42: #{tpu_custom_call.1} parent=35 // pred_check_branch
          %262 = sbr.rel (%p260) target = $region44
        $region43: #{tpu_custom_call.1} parent=35 // pred_region
          %p263 = scmp.lt.s32.totalorder %s23, 1
          %s264 = scalar_select %p263, %s23, 1
          %s265 = smul.addr %s264, 2
          %s266 = smul.addr %s265, 4
          %s267 = scalar_lea.vmem %s1, %s266
        $region44: #{tpu_custom_call.1} parent=35 // pred_fallthru
          _
      $region36: #{tpu_custom_call.1} parent=5 // pred_fallthru
        _
      %p268 = scmp.le.s32.totalorder 1, %s16
      %p269 = scmp.lt.s32.totalorder %s16, 5
      %p270 = pnand %p268, %p269
      %p271 = pneg %p270
      // Predicated region
      $region45: #{tpu_custom_call.1} parent=5 // pred_check
        _
      $region46: #{tpu_custom_call.1} parent=5 // pred_check_branch
        %273 = sbr.rel (%p270) target = $region48
      $region47: #{tpu_custom_call.1} parent=5 // pred_region
        %s274 = ssub.s32 %s16, 1
        %p275 = scmp.lt.s32.totalorder %s25, 1
        %s276 = scalar_select %p275, %s25, 1
        %p277 = scmp.lt.s32.totalorder %s26, 1
        %s278 = scalar_select %p277, %s26, 1
        %s279 = smul.addr %s276, 2
        %s280 = sadd.s32 %s278, %s279
        %s281 = smul.addr %s280, 4
        %s282 = scalar_lea.vmem %s0, %s281
        %p283 = pneg %p56
        %p284 = pneg %p53
        %p285 = scmp.lt.s32.totalorder %s25, 1
        %s286 = scalar_select %p285, %s25, 1
        %s287 = smul.addr %s286, 2
        %s288 = smul.addr %s287, 4
        %s289 = scalar_lea.vmem %s1, %s288
        %p290 = pneg %p82
        %p291 = pneg %p79
        %p292 = pneg %p103
        %p293 = pneg %p100
        %p294 = pneg %p124
        %p295 = pneg %p121
        %p296 = pneg %p145
        %p297 = pneg %p142
        %p298 = pneg %p166
        %p299 = pneg %p163
        %p300 = pneg %p187
        %p301 = pneg %p184
        %p302 = pneg %p215
        %p303 = pneg %p212
        %s304 = sand.u32 %s202, 1
        %s305 = scalar_lea.sflag [#allocation3], %s304
        %s306 = sand.u32 %s202, 1
        %s307 = smul.addr %s306, 4
        %s308 = scalar_lea.vmem [#allocation2], %s307
        %p309 = scmp.lt.s32.totalorder %s25, 1
        %s310 = scalar_select %p309, %s25, 1
        %p311 = scmp.lt.s32.totalorder %s26, 1
        %s312 = scalar_select %p311, %s26, 1
        %s313 = smul.addr %s310, 2
        %s314 = sadd.s32 %s312, %s313
        %s315 = smul.addr %s314, 4
        %s316 = scalar_lea.vmem %s0, %s315
        %p317 = scmp.lt.s32.totalorder %s25, 1
        %s318 = scalar_select %p317, %s25, 1
        %s319 = smul.addr %s318, 2
        %s320 = smul.addr %s319, 4
        %s321 = scalar_lea.vmem %s1, %s320
        %v322 = vld [vmem:[%s316] sm:$0xf]
        %v323 = vld [vmem:[%s321] sm:$0xff]
        %v324 = vld [vmem:[%s2] sm:$0xff]
        %v325 = vld [vmem:[%s2 + $0x8] sm:$0xff]
        %v326 = vld [vmem:[%s2 + $0x10] sm:$0xff]
        %v327 = vld [vmem:[%s2 + $0x18] sm:$0xff]
        %v328 = vld [vmem:[%s2 + $0x20] sm:$0xff]
        %v329 = vld [vmem:[%s2 + $0x28] sm:$0xff]
        %v330 = vld [vmem:[%s2 + $0x30] sm:$0xff]
        %v331 = vld [vmem:[%s2 + $0x38] sm:$0xff]
        %v332 = vld [vmem:[%s2 + $0x40] sm:$0xff]
        %v333 = vld [vmem:[%s2 + $0x48] sm:$0xff]
        %v334 = vld [vmem:[%s2 + $0x50] sm:$0xff]
        %v335 = vld [vmem:[%s2 + $0x58] sm:$0xff]
        %v336 = vld [vmem:[%s2 + $0x60] sm:$0xff]
        %v337 = vld [vmem:[%s2 + $0x68] sm:$0xff]
        %v338 = vld [vmem:[%s2 + $0x70] sm:$0xff]
        %v339 = vld [vmem:[%s2 + $0x78] sm:$0xff]
        %v340 = vld [vmem:[%s2 + $0x80] sm:$0xff]
        %v341 = vld [vmem:[%s2 + $0x88] sm:$0xff]
        %v342 = vld [vmem:[%s2 + $0x90] sm:$0xff]
        %v343 = vld [vmem:[%s2 + $0x98] sm:$0xff]
        %v344 = vld [vmem:[%s2 + $0xa0] sm:$0xff]
        %v345 = vld [vmem:[%s2 + $0xa8] sm:$0xff]
        %v346 = vld [vmem:[%s2 + $0xb0] sm:$0xff]
        %v347 = vld [vmem:[%s2 + $0xb8] sm:$0xff]
        %v348 = vld [vmem:[%s2 + $0xc0] sm:$0xff]
        %v349 = vld [vmem:[%s2 + $0xc8] sm:$0xff]
        %v350 = vld [vmem:[%s2 + $0xd0] sm:$0xff]
        %v351 = vld [vmem:[%s2 + $0xd8] sm:$0xff]
        %v352 = vld [vmem:[%s2 + $0xe0] sm:$0xff]
        %v353 = vld [vmem:[%s2 + $0xe8] sm:$0xff]
        %v354 = vld [vmem:[%s2 + $0xf0] sm:$0xff]
        %v355 = vld [vmem:[%s2 + $0xf8] sm:$0xff]
        %v356 = vld [vmem:[%s3] sm:$0xff]
        %v357 = vld [vmem:[%s3 + $0x8] sm:$0xff]
        %v358 = vld [vmem:[%s3 + $0x10] sm:$0xff]
        %v359 = vld [vmem:[%s3 + $0x18] sm:$0xff]
        %v360 = vld [vmem:[%s3 + $0x20] sm:$0xff]
        %v361 = vld [vmem:[%s3 + $0x28] sm:$0xff]
        %v362 = vld [vmem:[%s3 + $0x30] sm:$0xff]
        %v363 = vld [vmem:[%s3 + $0x38] sm:$0xff]
        %v364 = vld [vmem:[%s3 + $0x40] sm:$0xff]
        %v365 = vld [vmem:[%s3 + $0x48] sm:$0xff]
        %v366 = vld [vmem:[%s3 + $0x50] sm:$0xff]
        %v367 = vld [vmem:[%s3 + $0x58] sm:$0xff]
        %v368 = vld [vmem:[%s3 + $0x60] sm:$0xff]
        %v369 = vld [vmem:[%s3 + $0x68] sm:$0xff]
        %v370 = vld [vmem:[%s3 + $0x70] sm:$0xff]
        %v371 = vld [vmem:[%s3 + $0x78] sm:$0xff]
        %v372 = vld [vmem:[%s3 + $0x80] sm:$0xff]
        %v373 = vld [vmem:[%s3 + $0x88] sm:$0xff]
        %v374 = vld [vmem:[%s3 + $0x90] sm:$0xff]
        %v375 = vld [vmem:[%s3 + $0x98] sm:$0xff]
        %v376 = vld [vmem:[%s3 + $0xa0] sm:$0xff]
        %v377 = vld [vmem:[%s3 + $0xa8] sm:$0xff]
        %v378 = vld [vmem:[%s3 + $0xb0] sm:$0xff]
        %v379 = vld [vmem:[%s3 + $0xb8] sm:$0xff]
        %v380 = vld [vmem:[%s3 + $0xc0] sm:$0xff]
        %v381 = vld [vmem:[%s3 + $0xc8] sm:$0xff]
        %v382 = vld [vmem:[%s3 + $0xd0] sm:$0xff]
        %v383 = vld [vmem:[%s3 + $0xd8] sm:$0xff]
        %v384 = vld [vmem:[%s3 + $0xe0] sm:$0xff]
        %v385 = vld [vmem:[%s3 + $0xe8] sm:$0xff]
        %v386 = vld [vmem:[%s3 + $0xf0] sm:$0xff]
        %v387 = vld [vmem:[%s3 + $0xf8] sm:$0xff]
        %v388 = vld [vmem:[%s4] sm:$0xff]
        %v389 = vld [vmem:[%s4 + $0x8] sm:$0xff]
        %v390 = vld [vmem:[%s4 + $0x10] sm:$0xff]
        %v391 = vld [vmem:[%s4 + $0x18] sm:$0xff]
        %v392 = vld [vmem:[%s4 + $0x20] sm:$0xff]
        %v393 = vld [vmem:[%s4 + $0x28] sm:$0xff]
        %v394 = vld [vmem:[%s4 + $0x30] sm:$0xff]
        %v395 = vld [vmem:[%s4 + $0x38] sm:$0xff]
        %v396 = vld [vmem:[%s4 + $0x40] sm:$0xff]
        %v397 = vld [vmem:[%s4 + $0x48] sm:$0xff]
        %v398 = vld [vmem:[%s4 + $0x50] sm:$0xff]
        %v399 = vld [vmem:[%s4 + $0x58] sm:$0xff]
        %v400 = vld [vmem:[%s4 + $0x60] sm:$0xff]
        %v401 = vld [vmem:[%s4 + $0x68] sm:$0xff]
        %v402 = vld [vmem:[%s4 + $0x70] sm:$0xff]
        %v403 = vld [vmem:[%s4 + $0x78] sm:$0xff]
        %v404 = vld [vmem:[%s4 + $0x80] sm:$0xff]
        %v405 = vld [vmem:[%s4 + $0x88] sm:$0xff]
        %v406 = vld [vmem:[%s4 + $0x90] sm:$0xff]
        %v407 = vld [vmem:[%s4 + $0x98] sm:$0xff]
        %v408 = vld [vmem:[%s4 + $0xa0] sm:$0xff]
        %v409 = vld [vmem:[%s4 + $0xa8] sm:$0xff]
        %v410 = vld [vmem:[%s4 + $0xb0] sm:$0xff]
        %v411 = vld [vmem:[%s4 + $0xb8] sm:$0xff]
        %v412 = vld [vmem:[%s4 + $0xc0] sm:$0xff]
        %v413 = vld [vmem:[%s4 + $0xc8] sm:$0xff]
        %v414 = vld [vmem:[%s4 + $0xd0] sm:$0xff]
        %v415 = vld [vmem:[%s4 + $0xd8] sm:$0xff]
        %v416 = vld [vmem:[%s4 + $0xe0] sm:$0xff]
        %v417 = vld [vmem:[%s4 + $0xe8] sm:$0xff]
        %v418 = vld [vmem:[%s4 + $0xf0] sm:$0xff]
        %v419 = vld [vmem:[%s4 + $0xf8] sm:$0xff]
        %vm420 = vcmask 31744
        %v422 = vsel %vm420, %v324, 0
        %v425 = vsel %vm420, %v325, 0
        %v428 = vsel %vm420, %v326, 0
        %v431 = vsel %vm420, %v327, 0
        %v434 = vsel %vm420, %v328, 0
        %v437 = vsel %vm420, %v329, 0
        %v440 = vsel %vm420, %v330, 0
        %v443 = vsel %vm420, %v331, 0
        %v446 = vsel %vm420, %v332, 0
        %v449 = vsel %vm420, %v333, 0
        %v452 = vsel %vm420, %v334, 0
        %v455 = vsel %vm420, %v335, 0
        %v458 = vsel %vm420, %v336, 0
        %v461 = vsel %vm420, %v337, 0
        %v464 = vsel %vm420, %v338, 0
        %v467 = vsel %vm420, %v339, 0
        %v470 = vsel %vm420, %v340, 0
        %v473 = vsel %vm420, %v341, 0
        %v476 = vsel %vm420, %v342, 0
        %v479 = vsel %vm420, %v343, 0
        %v482 = vsel %vm420, %v344, 0
        %v485 = vsel %vm420, %v345, 0
        %v488 = vsel %vm420, %v346, 0
        %v491 = vsel %vm420, %v347, 0
        %v494 = vsel %vm420, %v348, 0
        %v497 = vsel %vm420, %v349, 0
        %v500 = vsel %vm420, %v350, 0
        %v503 = vsel %vm420, %v351, 0
        %v506 = vsel %vm420, %v352, 0
        %v509 = vsel %vm420, %v353, 0
        %v512 = vsel %vm420, %v354, 0
        %v515 = vsel %vm420, %v355, 0
        %vm517 = vcmask 1043456
        %v519 = vsel %vm517, %v322, 0
        %521 = vmatpush.msra.mxu0 0.0
        %522 = vmatpush.msra.mxu0 0.0
        %523 = vmatpush.msra.mxu0 0.0
        %524 = vmatpush.msra.mxu0 0.0
        %525 = vmatpush.msra.mxu0 0.0
        %526 = vmatpush.msra.mxu0 0.0
        %527 = vmatpush.msra.mxu0 0.0
        %528 = vmatpush.msra.mxu0 0.0
        %529 = vmatpush.msra.mxu0 0.0
        %530 = vmatpush.msra.mxu0 0.0
        %531 = vmatpush.msra.mxu0 0.0
        %532 = vmatpush.msra.mxu0 0.0
        %533 = vmatpush.msra.mxu0 0.0
        %534 = vmatpush.msra.mxu0 0.0
        %535 = vmatpush.msra.mxu0 0.0
        %536 = vmatpush.msra.mxu0 %v519
        %537 = vmatmul.f32.gmra.mxu0 %v422
        %v538 = vpop.f32.mrf.mxu0
        %v539 = vadd.f32 0.0, %v538
        %540 = vmatmul.f32.gmra.mxu0 %v425
        %v541 = vpop.f32.mrf.mxu0
        %v542 = vadd.f32 0.0, %v541
        %543 = vmatmul.f32.gmra.mxu0 %v428
        %v544 = vpop.f32.mrf.mxu0
        %v545 = vadd.f32 0.0, %v544
        %546 = vmatmul.f32.gmra.mxu0 %v431
        %v547 = vpop.f32.mrf.mxu0
        %v548 = vadd.f32 0.0, %v547
        %549 = vmatmul.f32.gmra.mxu0 %v434
        %v550 = vpop.f32.mrf.mxu0
        %v551 = vadd.f32 0.0, %v550
        %552 = vmatmul.f32.gmra.mxu0 %v437
        %v553 = vpop.f32.mrf.mxu0
        %v554 = vadd.f32 0.0, %v553
        %555 = vmatmul.f32.gmra.mxu0 %v440
        %v556 = vpop.f32.mrf.mxu0
        %v557 = vadd.f32 0.0, %v556
        %558 = vmatmul.f32.gmra.mxu0 %v443
        %v559 = vpop.f32.mrf.mxu0
        %v560 = vadd.f32 0.0, %v559
        %561 = vmatmul.f32.gmra.mxu0 %v446
        %v562 = vpop.f32.mrf.mxu0
        %v563 = vadd.f32 0.0, %v562
        %564 = vmatmul.f32.gmra.mxu0 %v449
        %v565 = vpop.f32.mrf.mxu0
        %v566 = vadd.f32 0.0, %v565
        %567 = vmatmul.f32.gmra.mxu0 %v452
        %v568 = vpop.f32.mrf.mxu0
        %v569 = vadd.f32 0.0, %v568
        %570 = vmatmul.f32.gmra.mxu0 %v455
        %v571 = vpop.f32.mrf.mxu0
        %v572 = vadd.f32 0.0, %v571
        %573 = vmatmul.f32.gmra.mxu0 %v458
        %v574 = vpop.f32.mrf.mxu0
        %v575 = vadd.f32 0.0, %v574
        %576 = vmatmul.f32.gmra.mxu0 %v461
        %v577 = vpop.f32.mrf.mxu0
        %v578 = vadd.f32 0.0, %v577
        %579 = vmatmul.f32.gmra.mxu0 %v464
        %v580 = vpop.f32.mrf.mxu0
        %v581 = vadd.f32 0.0, %v580
        %582 = vmatmul.f32.gmra.mxu0 %v467
        %v583 = vpop.f32.mrf.mxu0
        %v584 = vadd.f32 0.0, %v583
        %585 = vmatmul.f32.gmra.mxu0 %v470
        %v586 = vpop.f32.mrf.mxu0
        %v587 = vadd.f32 0.0, %v586
        %588 = vmatmul.f32.gmra.mxu0 %v473
        %v589 = vpop.f32.mrf.mxu0
        %v590 = vadd.f32 0.0, %v589
        %591 = vmatmul.f32.gmra.mxu0 %v476
        %v592 = vpop.f32.mrf.mxu0
        %v593 = vadd.f32 0.0, %v592
        %594 = vmatmul.f32.gmra.mxu0 %v479
        %v595 = vpop.f32.mrf.mxu0
        %v596 = vadd.f32 0.0, %v595
        %597 = vmatmul.f32.gmra.mxu0 %v482
        %v598 = vpop.f32.mrf.mxu0
        %v599 = vadd.f32 0.0, %v598
        %600 = vmatmul.f32.gmra.mxu0 %v485
        %v601 = vpop.f32.mrf.mxu0
        %v602 = vadd.f32 0.0, %v601
        %603 = vmatmul.f32.gmra.mxu0 %v488
        %v604 = vpop.f32.mrf.mxu0
        %v605 = vadd.f32 0.0, %v604
        %606 = vmatmul.f32.gmra.mxu0 %v491
        %v607 = vpop.f32.mrf.mxu0
        %v608 = vadd.f32 0.0, %v607
        %609 = vmatmul.f32.gmra.mxu0 %v494
        %v610 = vpop.f32.mrf.mxu0
        %v611 = vadd.f32 0.0, %v610
        %612 = vmatmul.f32.gmra.mxu0 %v497
        %v613 = vpop.f32.mrf.mxu0
        %v614 = vadd.f32 0.0, %v613
        %615 = vmatmul.f32.gmra.mxu0 %v500
        %v616 = vpop.f32.mrf.mxu0
        %v617 = vadd.f32 0.0, %v616
        %618 = vmatmul.f32.gmra.mxu0 %v503
        %v619 = vpop.f32.mrf.mxu0
        %v620 = vadd.f32 0.0, %v619
        %621 = vmatmul.f32.gmra.mxu0 %v506
        %v622 = vpop.f32.mrf.mxu0
        %v623 = vadd.f32 0.0, %v622
        %624 = vmatmul.f32.gmra.mxu0 %v509
        %v625 = vpop.f32.mrf.mxu0
        %v626 = vadd.f32 0.0, %v625
        %627 = vmatmul.f32.gmra.mxu0 %v512
        %v628 = vpop.f32.mrf.mxu0
        %v629 = vadd.f32 0.0, %v628
        %630 = vmatmul.f32.gmra.mxu0 %v515
        %v631 = vpop.f32.mrf.mxu0
        %v632 = vadd.f32 0.0, %v631
        %633 = vdwg.mxu0
        %635 = vst [vmem:[#allocation1] ss:$2 sm:$0xff] %v323
        %v636 = vld.sshfl [vmem:[#allocation1] sm:$0xff pattern:$0x75316420]
        %v637 = vld.sshfl [vmem:[#allocation1 + $0x8] sm:$0xff pattern:$0x75316420]
        %v639 = vsel %vm420, %v356, 0
        %v642 = vsel %vm420, %v357, 0
        %v645 = vsel %vm420, %v358, 0
        %v648 = vsel %vm420, %v359, 0
        %v651 = vsel %vm420, %v360, 0
        %v654 = vsel %vm420, %v361, 0
        %v657 = vsel %vm420, %v362, 0
        %v660 = vsel %vm420, %v363, 0
        %v663 = vsel %vm420, %v364, 0
        %v666 = vsel %vm420, %v365, 0
        %v669 = vsel %vm420, %v366, 0
        %v672 = vsel %vm420, %v367, 0
        %v675 = vsel %vm420, %v368, 0
        %v678 = vsel %vm420, %v369, 0
        %v681 = vsel %vm420, %v370, 0
        %v684 = vsel %vm420, %v371, 0
        %v687 = vsel %vm420, %v372, 0
        %v690 = vsel %vm420, %v373, 0
        %v693 = vsel %vm420, %v374, 0
        %v696 = vsel %vm420, %v375, 0
        %v699 = vsel %vm420, %v376, 0
        %v702 = vsel %vm420, %v377, 0
        %v705 = vsel %vm420, %v378, 0
        %v708 = vsel %vm420, %v379, 0
        %v711 = vsel %vm420, %v380, 0
        %v714 = vsel %vm420, %v381, 0
        %v717 = vsel %vm420, %v382, 0
        %v720 = vsel %vm420, %v383, 0
        %v723 = vsel %vm420, %v384, 0
        %v726 = vsel %vm420, %v385, 0
        %v729 = vsel %vm420, %v386, 0
        %v732 = vsel %vm420, %v387, 0
        %v734 = vsel %vm517, %v636, 0
        %v736 = vsel %vm517, %v637, 0
        %738 = vmatpush.msra.mxu0 0.0
        %739 = vmatpush.msra.mxu0 0.0
        %740 = vmatpush.msra.mxu0 0.0
        %741 = vmatpush.msra.mxu0 0.0
        %742 = vmatpush.msra.mxu0 0.0
        %743 = vmatpush.msra.mxu0 0.0
        %744 = vmatpush.msra.mxu0 0.0
        %745 = vmatpush.msra.mxu0 0.0
        %746 = vmatpush.msra.mxu0 0.0
        %747 = vmatpush.msra.mxu0 0.0
        %748 = vmatpush.msra.mxu0 0.0
        %749 = vmatpush.msra.mxu0 0.0
        %750 = vmatpush.msra.mxu0 0.0
        %751 = vmatpush.msra.mxu0 0.0
        %752 = vmatpush.msra.mxu0 0.0
        %753 = vmatpush.msra.mxu0 %v734
        %754 = vmatmul.f32.gmra.mxu0 %v639
        %v755 = vpop.f32.mrf.mxu0
        %v756 = vadd.f32 0.0, %v755
        %757 = vmatmul.f32.gmra.mxu0 %v642
        %v758 = vpop.f32.mrf.mxu0
        %v759 = vadd.f32 0.0, %v758
        %760 = vmatmul.f32.gmra.mxu0 %v645
        %v761 = vpop.f32.mrf.mxu0
        %v762 = vadd.f32 0.0, %v761
        %763 = vmatmul.f32.gmra.mxu0 %v648
        %v764 = vpop.f32.mrf.mxu0
        %v765 = vadd.f32 0.0, %v764
        %766 = vmatmul.f32.gmra.mxu0 %v651
        %v767 = vpop.f32.mrf.mxu0
        %v768 = vadd.f32 0.0, %v767
        %769 = vmatmul.f32.gmra.mxu0 %v654
        %v770 = vpop.f32.mrf.mxu0
        %v771 = vadd.f32 0.0, %v770
        %772 = vmatmul.f32.gmra.mxu0 %v657
        %v773 = vpop.f32.mrf.mxu0
        %v774 = vadd.f32 0.0, %v773
        %775 = vmatmul.f32.gmra.mxu0 %v660
        %v776 = vpop.f32.mrf.mxu0
        %v777 = vadd.f32 0.0, %v776
        %778 = vmatmul.f32.gmra.mxu0 %v663
        %v779 = vpop.f32.mrf.mxu0
        %v780 = vadd.f32 0.0, %v779
        %781 = vmatmul.f32.gmra.mxu0 %v666
        %v782 = vpop.f32.mrf.mxu0
        %v783 = vadd.f32 0.0, %v782
        %784 = vmatmul.f32.gmra.mxu0 %v669
        %v785 = vpop.f32.mrf.mxu0
        %v786 = vadd.f32 0.0, %v785
        %787 = vmatmul.f32.gmra.mxu0 %v672
        %v788 = vpop.f32.mrf.mxu0
        %v789 = vadd.f32 0.0, %v788
        %790 = vmatmul.f32.gmra.mxu0 %v675
        %v791 = vpop.f32.mrf.mxu0
        %v792 = vadd.f32 0.0, %v791
        %793 = vmatmul.f32.gmra.mxu0 %v678
        %v794 = vpop.f32.mrf.mxu0
        %v795 = vadd.f32 0.0, %v794
        %796 = vmatmul.f32.gmra.mxu0 %v681
        %v797 = vpop.f32.mrf.mxu0
        %v798 = vadd.f32 0.0, %v797
        %799 = vmatmul.f32.gmra.mxu0 %v684
        %v800 = vpop.f32.mrf.mxu0
        %v801 = vadd.f32 0.0, %v800
        %802 = vmatmul.f32.gmra.mxu0 %v687
        %v803 = vpop.f32.mrf.mxu0
        %v804 = vadd.f32 0.0, %v803
        %805 = vmatmul.f32.gmra.mxu0 %v690
        %v806 = vpop.f32.mrf.mxu0
        %v807 = vadd.f32 0.0, %v806
        %808 = vmatmul.f32.gmra.mxu0 %v693
        %v809 = vpop.f32.mrf.mxu0
        %v810 = vadd.f32 0.0, %v809
        %811 = vmatmul.f32.gmra.mxu0 %v696
        %v812 = vpop.f32.mrf.mxu0
        %v813 = vadd.f32 0.0, %v812
        %814 = vmatmul.f32.gmra.mxu0 %v699
        %v815 = vpop.f32.mrf.mxu0
        %v816 = vadd.f32 0.0, %v815
        %817 = vmatmul.f32.gmra.mxu0 %v702
        %v818 = vpop.f32.mrf.mxu0
        %v819 = vadd.f32 0.0, %v818
        %820 = vmatmul.f32.gmra.mxu0 %v705
        %v821 = vpop.f32.mrf.mxu0
        %v822 = vadd.f32 0.0, %v821
        %823 = vmatmul.f32.gmra.mxu0 %v708
        %v824 = vpop.f32.mrf.mxu0
        %v825 = vadd.f32 0.0, %v824
        %826 = vmatmul.f32.gmra.mxu0 %v711
        %v827 = vpop.f32.mrf.mxu0
        %v828 = vadd.f32 0.0, %v827
        %829 = vmatmul.f32.gmra.mxu0 %v714
        %v830 = vpop.f32.mrf.mxu0
        %v831 = vadd.f32 0.0, %v830
        %832 = vmatmul.f32.gmra.mxu0 %v717
        %v833 = vpop.f32.mrf.mxu0
        %v834 = vadd.f32 0.0, %v833
        %835 = vmatmul.f32.gmra.mxu0 %v720
        %v836 = vpop.f32.mrf.mxu0
        %v837 = vadd.f32 0.0, %v836
        %838 = vmatmul.f32.gmra.mxu0 %v723
        %v839 = vpop.f32.mrf.mxu0
        %v840 = vadd.f32 0.0, %v839
        %841 = vmatmul.f32.gmra.mxu0 %v726
        %v842 = vpop.f32.mrf.mxu0
        %v843 = vadd.f32 0.0, %v842
        %844 = vmatmul.f32.gmra.mxu0 %v729
        %v845 = vpop.f32.mrf.mxu0
        %v846 = vadd.f32 0.0, %v845
        %847 = vmatmul.f32.gmra.mxu0 %v732
        %v848 = vpop.f32.mrf.mxu0
        %v849 = vadd.f32 0.0, %v848
        %850 = vdwg.mxu0
        %851 = vmatpush.msra.mxu0 0.0
        %852 = vmatpush.msra.mxu0 0.0
        %853 = vmatpush.msra.mxu0 0.0
        %854 = vmatpush.msra.mxu0 0.0
        %855 = vmatpush.msra.mxu0 0.0
        %856 = vmatpush.msra.mxu0 0.0
        %857 = vmatpush.msra.mxu0 0.0
        %858 = vmatpush.msra.mxu0 0.0
        %859 = vmatpush.msra.mxu0 0.0
        %860 = vmatpush.msra.mxu0 0.0
        %861 = vmatpush.msra.mxu0 0.0
        %862 = vmatpush.msra.mxu0 0.0
        %863 = vmatpush.msra.mxu0 0.0
        %864 = vmatpush.msra.mxu0 0.0
        %865 = vmatpush.msra.mxu0 0.0
        %866 = vmatpush.msra.mxu0 %v736
        %867 = vmatmul.f32.gmra.mxu0 %v639
        %v868 = vpop.f32.mrf.mxu0
        %v869 = vadd.f32 0.0, %v868
        %870 = vmatmul.f32.gmra.mxu0 %v642
        %v871 = vpop.f32.mrf.mxu0
        %v872 = vadd.f32 0.0, %v871
        %873 = vmatmul.f32.gmra.mxu0 %v645
        %v874 = vpop.f32.mrf.mxu0
        %v875 = vadd.f32 0.0, %v874
        %876 = vmatmul.f32.gmra.mxu0 %v648
        %v877 = vpop.f32.mrf.mxu0
        %v878 = vadd.f32 0.0, %v877
        %879 = vmatmul.f32.gmra.mxu0 %v651
        %v880 = vpop.f32.mrf.mxu0
        %v881 = vadd.f32 0.0, %v880
        %882 = vmatmul.f32.gmra.mxu0 %v654
        %v883 = vpop.f32.mrf.mxu0
        %v884 = vadd.f32 0.0, %v883
        %885 = vmatmul.f32.gmra.mxu0 %v657
        %v886 = vpop.f32.mrf.mxu0
        %v887 = vadd.f32 0.0, %v886
        %888 = vmatmul.f32.gmra.mxu0 %v660
        %v889 = vpop.f32.mrf.mxu0
        %v890 = vadd.f32 0.0, %v889
        %891 = vmatmul.f32.gmra.mxu0 %v663
        %v892 = vpop.f32.mrf.mxu0
        %v893 = vadd.f32 0.0, %v892
        %894 = vmatmul.f32.gmra.mxu0 %v666
        %v895 = vpop.f32.mrf.mxu0
        %v896 = vadd.f32 0.0, %v895
        %897 = vmatmul.f32.gmra.mxu0 %v669
        %v898 = vpop.f32.mrf.mxu0
        %v899 = vadd.f32 0.0, %v898
        %900 = vmatmul.f32.gmra.mxu0 %v672
        %v901 = vpop.f32.mrf.mxu0
        %v902 = vadd.f32 0.0, %v901
        %903 = vmatmul.f32.gmra.mxu0 %v675
        %v904 = vpop.f32.mrf.mxu0
        %v905 = vadd.f32 0.0, %v904
        %906 = vmatmul.f32.gmra.mxu0 %v678
        %v907 = vpop.f32.mrf.mxu0
        %v908 = vadd.f32 0.0, %v907
        %909 = vmatmul.f32.gmra.mxu0 %v681
        %v910 = vpop.f32.mrf.mxu0
        %v911 = vadd.f32 0.0, %v910
        %912 = vmatmul.f32.gmra.mxu0 %v684
        %v913 = vpop.f32.mrf.mxu0
        %v914 = vadd.f32 0.0, %v913
        %915 = vmatmul.f32.gmra.mxu0 %v687
        %v916 = vpop.f32.mrf.mxu0
        %v917 = vadd.f32 0.0, %v916
        %918 = vmatmul.f32.gmra.mxu0 %v690
        %v919 = vpop.f32.mrf.mxu0
        %v920 = vadd.f32 0.0, %v919
        %921 = vmatmul.f32.gmra.mxu0 %v693
        %v922 = vpop.f32.mrf.mxu0
        %v923 = vadd.f32 0.0, %v922
        %924 = vmatmul.f32.gmra.mxu0 %v696
        %v925 = vpop.f32.mrf.mxu0
        %v926 = vadd.f32 0.0, %v925
        %927 = vmatmul.f32.gmra.mxu0 %v699
        %v928 = vpop.f32.mrf.mxu0
        %v929 = vadd.f32 0.0, %v928
        %930 = vmatmul.f32.gmra.mxu0 %v702
        %v931 = vpop.f32.mrf.mxu0
        %v932 = vadd.f32 0.0, %v931
        %933 = vmatmul.f32.gmra.mxu0 %v705
        %v934 = vpop.f32.mrf.mxu0
        %v935 = vadd.f32 0.0, %v934
        %936 = vmatmul.f32.gmra.mxu0 %v708
        %v937 = vpop.f32.mrf.mxu0
        %v938 = vadd.f32 0.0, %v937
        %939 = vmatmul.f32.gmra.mxu0 %v711
        %v940 = vpop.f32.mrf.mxu0
        %v941 = vadd.f32 0.0, %v940
        %942 = vmatmul.f32.gmra.mxu0 %v714
        %v943 = vpop.f32.mrf.mxu0
        %v944 = vadd.f32 0.0, %v943
        %945 = vmatmul.f32.gmra.mxu0 %v717
        %v946 = vpop.f32.mrf.mxu0
        %v947 = vadd.f32 0.0, %v946
        %948 = vmatmul.f32.gmra.mxu0 %v720
        %v949 = vpop.f32.mrf.mxu0
        %v950 = vadd.f32 0.0, %v949
        %951 = vmatmul.f32.gmra.mxu0 %v723
        %v952 = vpop.f32.mrf.mxu0
        %v953 = vadd.f32 0.0, %v952
        %954 = vmatmul.f32.gmra.mxu0 %v726
        %v955 = vpop.f32.mrf.mxu0
        %v956 = vadd.f32 0.0, %v955
        %957 = vmatmul.f32.gmra.mxu0 %v729
        %v958 = vpop.f32.mrf.mxu0
        %v959 = vadd.f32 0.0, %v958
        %960 = vmatmul.f32.gmra.mxu0 %v732
        %v961 = vpop.f32.mrf.mxu0
        %v962 = vadd.f32 0.0, %v961
        %963 = vdwg.mxu0
        %964 = vst [vmem:[#allocation1] ss:$2 sm:$0xff] %v323
        %v965 = vld.sshfl [vmem:[#allocation1] sm:$0xff pattern:$0x75316420]
        %v966 = vld.sshfl [vmem:[#allocation1 + $0x8] sm:$0xff pattern:$0x75316420]
        %v968 = vsel %vm420, %v388, 0
        %v971 = vsel %vm420, %v389, 0
        %v974 = vsel %vm420, %v390, 0
        %v977 = vsel %vm420, %v391, 0
        %v980 = vsel %vm420, %v392, 0
        %v983 = vsel %vm420, %v393, 0
        %v986 = vsel %vm420, %v394, 0
        %v989 = vsel %vm420, %v395, 0
        %v992 = vsel %vm420, %v396, 0
        %v995 = vsel %vm420, %v397, 0
        %v998 = vsel %vm420, %v398, 0
        %v1001 = vsel %vm420, %v399, 0
        %v1004 = vsel %vm420, %v400, 0
        %v1007 = vsel %vm420, %v401, 0
        %v1010 = vsel %vm420, %v402, 0
        %v1013 = vsel %vm420, %v403, 0
        %v1016 = vsel %vm420, %v404, 0
        %v1019 = vsel %vm420, %v405, 0
        %v1022 = vsel %vm420, %v406, 0
        %v1025 = vsel %vm420, %v407, 0
        %v1028 = vsel %vm420, %v408, 0
        %v1031 = vsel %vm420, %v409, 0
        %v1034 = vsel %vm420, %v410, 0
        %v1037 = vsel %vm420, %v411, 0
        %v1040 = vsel %vm420, %v412, 0
        %v1043 = vsel %vm420, %v413, 0
        %v1046 = vsel %vm420, %v414, 0
        %v1049 = vsel %vm420, %v415, 0
        %v1052 = vsel %vm420, %v416, 0
        %v1055 = vsel %vm420, %v417, 0
        %v1058 = vsel %vm420, %v418, 0
        %v1061 = vsel %vm420, %v419, 0
        %v1063 = vsel %vm517, %v965, 0
        %v1065 = vsel %vm517, %v966, 0
        %1067 = vmatpush.msra.mxu0 0.0
        %1068 = vmatpush.msra.mxu0 0.0
        %1069 = vmatpush.msra.mxu0 0.0
        %1070 = vmatpush.msra.mxu0 0.0
        %1071 = vmatpush.msra.mxu0 0.0
        %1072 = vmatpush.msra.mxu0 0.0
        %1073 = vmatpush.msra.mxu0 0.0
        %1074 = vmatpush.msra.mxu0 0.0
        %1075 = vmatpush.msra.mxu0 0.0
        %1076 = vmatpush.msra.mxu0 0.0
        %1077 = vmatpush.msra.mxu0 0.0
        %1078 = vmatpush.msra.mxu0 0.0
        %1079 = vmatpush.msra.mxu0 0.0
        %1080 = vmatpush.msra.mxu0 0.0
        %1081 = vmatpush.msra.mxu0 0.0
        %1082 = vmatpush.msra.mxu0 %v1063
        %1083 = vmatmul.f32.gmra.mxu0 %v968
        %v1084 = vpop.f32.mrf.mxu0
        %v1085 = vadd.f32 0.0, %v1084
        %1086 = vmatmul.f32.gmra.mxu0 %v971
        %v1087 = vpop.f32.mrf.mxu0
        %v1088 = vadd.f32 0.0, %v1087
        %1089 = vmatmul.f32.gmra.mxu0 %v974
        %v1090 = vpop.f32.mrf.mxu0
        %v1091 = vadd.f32 0.0, %v1090
        %1092 = vmatmul.f32.gmra.mxu0 %v977
        %v1093 = vpop.f32.mrf.mxu0
        %v1094 = vadd.f32 0.0, %v1093
        %1095 = vmatmul.f32.gmra.mxu0 %v980
        %v1096 = vpop.f32.mrf.mxu0
        %v1097 = vadd.f32 0.0, %v1096
        %1098 = vmatmul.f32.gmra.mxu0 %v983
        %v1099 = vpop.f32.mrf.mxu0
        %v1100 = vadd.f32 0.0, %v1099
        %1101 = vmatmul.f32.gmra.mxu0 %v986
        %v1102 = vpop.f32.mrf.mxu0
        %v1103 = vadd.f32 0.0, %v1102
        %1104 = vmatmul.f32.gmra.mxu0 %v989
        %v1105 = vpop.f32.mrf.mxu0
        %v1106 = vadd.f32 0.0, %v1105
        %1107 = vmatmul.f32.gmra.mxu0 %v992
        %v1108 = vpop.f32.mrf.mxu0
        %v1109 = vadd.f32 0.0, %v1108
        %1110 = vmatmul.f32.gmra.mxu0 %v995
        %v1111 = vpop.f32.mrf.mxu0
        %v1112 = vadd.f32 0.0, %v1111
        %1113 = vmatmul.f32.gmra.mxu0 %v998
        %v1114 = vpop.f32.mrf.mxu0
        %v1115 = vadd.f32 0.0, %v1114
        %1116 = vmatmul.f32.gmra.mxu0 %v1001
        %v1117 = vpop.f32.mrf.mxu0
        %v1118 = vadd.f32 0.0, %v1117
        %1119 = vmatmul.f32.gmra.mxu0 %v1004
        %v1120 = vpop.f32.mrf.mxu0
        %v1121 = vadd.f32 0.0, %v1120
        %1122 = vmatmul.f32.gmra.mxu0 %v1007
        %v1123 = vpop.f32.mrf.mxu0
        %v1124 = vadd.f32 0.0, %v1123
        %1125 = vmatmul.f32.gmra.mxu0 %v1010
        %v1126 = vpop.f32.mrf.mxu0
        %v1127 = vadd.f32 0.0, %v1126
        %1128 = vmatmul.f32.gmra.mxu0 %v1013
        %v1129 = vpop.f32.mrf.mxu0
        %v1130 = vadd.f32 0.0, %v1129
        %1131 = vmatmul.f32.gmra.mxu0 %v1016
        %v1132 = vpop.f32.mrf.mxu0
        %v1133 = vadd.f32 0.0, %v1132
        %1134 = vmatmul.f32.gmra.mxu0 %v1019
        %v1135 = vpop.f32.mrf.mxu0
        %v1136 = vadd.f32 0.0, %v1135
        %1137 = vmatmul.f32.gmra.mxu0 %v1022
        %v1138 = vpop.f32.mrf.mxu0
        %v1139 = vadd.f32 0.0, %v1138
        %1140 = vmatmul.f32.gmra.mxu0 %v1025
        %v1141 = vpop.f32.mrf.mxu0
        %v1142 = vadd.f32 0.0, %v1141
        %1143 = vmatmul.f32.gmra.mxu0 %v1028
        %v1144 = vpop.f32.mrf.mxu0
        %v1145 = vadd.f32 0.0, %v1144
        %1146 = vmatmul.f32.gmra.mxu0 %v1031
        %v1147 = vpop.f32.mrf.mxu0
        %v1148 = vadd.f32 0.0, %v1147
        %1149 = vmatmul.f32.gmra.mxu0 %v1034
        %v1150 = vpop.f32.mrf.mxu0
        %v1151 = vadd.f32 0.0, %v1150
        %1152 = vmatmul.f32.gmra.mxu0 %v1037
        %v1153 = vpop.f32.mrf.mxu0
        %v1154 = vadd.f32 0.0, %v1153
        %1155 = vmatmul.f32.gmra.mxu0 %v1040
        %v1156 = vpop.f32.mrf.mxu0
        %v1157 = vadd.f32 0.0, %v1156
        %1158 = vmatmul.f32.gmra.mxu0 %v1043
        %v1159 = vpop.f32.mrf.mxu0
        %v1160 = vadd.f32 0.0, %v1159
        %1161 = vmatmul.f32.gmra.mxu0 %v1046
        %v1162 = vpop.f32.mrf.mxu0
        %v1163 = vadd.f32 0.0, %v1162
        %1164 = vmatmul.f32.gmra.mxu0 %v1049
        %v1165 = vpop.f32.mrf.mxu0
        %v1166 = vadd.f32 0.0, %v1165
        %1167 = vmatmul.f32.gmra.mxu0 %v1052
        %v1168 = vpop.f32.mrf.mxu0
        %v1169 = vadd.f32 0.0, %v1168
        %1170 = vmatmul.f32.gmra.mxu0 %v1055
        %v1171 = vpop.f32.mrf.mxu0
        %v1172 = vadd.f32 0.0, %v1171
        %1173 = vmatmul.f32.gmra.mxu0 %v1058
        %v1174 = vpop.f32.mrf.mxu0
        %v1175 = vadd.f32 0.0, %v1174
        %1176 = vmatmul.f32.gmra.mxu0 %v1061
        %v1177 = vpop.f32.mrf.mxu0
        %v1178 = vadd.f32 0.0, %v1177
        %1179 = vdwg.mxu0
        %1180 = vmatpush.msra.mxu0 0.0
        %1181 = vmatpush.msra.mxu0 0.0
        %1182 = vmatpush.msra.mxu0 0.0
        %1183 = vmatpush.msra.mxu0 0.0
        %1184 = vmatpush.msra.mxu0 0.0
        %1185 = vmatpush.msra.mxu0 0.0
        %1186 = vmatpush.msra.mxu0 0.0
        %1187 = vmatpush.msra.mxu0 0.0
        %1188 = vmatpush.msra.mxu0 0.0
        %1189 = vmatpush.msra.mxu0 0.0
        %1190 = vmatpush.msra.mxu0 0.0
        %1191 = vmatpush.msra.mxu0 0.0
        %1192 = vmatpush.msra.mxu0 0.0
        %1193 = vmatpush.msra.mxu0 0.0
        %1194 = vmatpush.msra.mxu0 0.0
        %1195 = vmatpush.msra.mxu0 %v1065
        %1196 = vmatmul.f32.gmra.mxu0 %v968
        %v1197 = vpop.f32.mrf.mxu0
        %v1198 = vadd.f32 0.0, %v1197
        %1199 = vmatmul.f32.gmra.mxu0 %v971
        %v1200 = vpop.f32.mrf.mxu0
        %v1201 = vadd.f32 0.0, %v1200
        %1202 = vmatmul.f32.gmra.mxu0 %v974
        %v1203 = vpop.f32.mrf.mxu0
        %v1204 = vadd.f32 0.0, %v1203
        %1205 = vmatmul.f32.gmra.mxu0 %v977
        %v1206 = vpop.f32.mrf.mxu0
        %v1207 = vadd.f32 0.0, %v1206
        %1208 = vmatmul.f32.gmra.mxu0 %v980
        %v1209 = vpop.f32.mrf.mxu0
        %v1210 = vadd.f32 0.0, %v1209
        %1211 = vmatmul.f32.gmra.mxu0 %v983
        %v1212 = vpop.f32.mrf.mxu0
        %v1213 = vadd.f32 0.0, %v1212
        %1214 = vmatmul.f32.gmra.mxu0 %v986
        %v1215 = vpop.f32.mrf.mxu0
        %v1216 = vadd.f32 0.0, %v1215
        %1217 = vmatmul.f32.gmra.mxu0 %v989
        %v1218 = vpop.f32.mrf.mxu0
        %v1219 = vadd.f32 0.0, %v1218
        %1220 = vmatmul.f32.gmra.mxu0 %v992
        %v1221 = vpop.f32.mrf.mxu0
        %v1222 = vadd.f32 0.0, %v1221
        %1223 = vmatmul.f32.gmra.mxu0 %v995
        %v1224 = vpop.f32.mrf.mxu0
        %v1225 = vadd.f32 0.0, %v1224
        %1226 = vmatmul.f32.gmra.mxu0 %v998
        %v1227 = vpop.f32.mrf.mxu0
        %v1228 = vadd.f32 0.0, %v1227
        %1229 = vmatmul.f32.gmra.mxu0 %v1001
        %v1230 = vpop.f32.mrf.mxu0
        %v1231 = vadd.f32 0.0, %v1230
        %1232 = vmatmul.f32.gmra.mxu0 %v1004
        %v1233 = vpop.f32.mrf.mxu0
        %v1234 = vadd.f32 0.0, %v1233
        %1235 = vmatmul.f32.gmra.mxu0 %v1007
        %v1236 = vpop.f32.mrf.mxu0
        %v1237 = vadd.f32 0.0, %v1236
        %1238 = vmatmul.f32.gmra.mxu0 %v1010
        %v1239 = vpop.f32.mrf.mxu0
        %v1240 = vadd.f32 0.0, %v1239
        %1241 = vmatmul.f32.gmra.mxu0 %v1013
        %v1242 = vpop.f32.mrf.mxu0
        %v1243 = vadd.f32 0.0, %v1242
        %1244 = vmatmul.f32.gmra.mxu0 %v1016
        %v1245 = vpop.f32.mrf.mxu0
        %v1246 = vadd.f32 0.0, %v1245
        %1247 = vmatmul.f32.gmra.mxu0 %v1019
        %v1248 = vpop.f32.mrf.mxu0
        %v1249 = vadd.f32 0.0, %v1248
        %1250 = vmatmul.f32.gmra.mxu0 %v1022
        %v1251 = vpop.f32.mrf.mxu0
        %v1252 = vadd.f32 0.0, %v1251
        %1253 = vmatmul.f32.gmra.mxu0 %v1025
        %v1254 = vpop.f32.mrf.mxu0
        %v1255 = vadd.f32 0.0, %v1254
        %1256 = vmatmul.f32.gmra.mxu0 %v1028
        %v1257 = vpop.f32.mrf.mxu0
        %v1258 = vadd.f32 0.0, %v1257
        %1259 = vmatmul.f32.gmra.mxu0 %v1031
        %v1260 = vpop.f32.mrf.mxu0
        %v1261 = vadd.f32 0.0, %v1260
        %1262 = vmatmul.f32.gmra.mxu0 %v1034
        %v1263 = vpop.f32.mrf.mxu0
        %v1264 = vadd.f32 0.0, %v1263
        %1265 = vmatmul.f32.gmra.mxu0 %v1037
        %v1266 = vpop.f32.mrf.mxu0
        %v1267 = vadd.f32 0.0, %v1266
        %1268 = vmatmul.f32.gmra.mxu0 %v1040
        %v1269 = vpop.f32.mrf.mxu0
        %v1270 = vadd.f32 0.0, %v1269
        %1271 = vmatmul.f32.gmra.mxu0 %v1043
        %v1272 = vpop.f32.mrf.mxu0
        %v1273 = vadd.f32 0.0, %v1272
        %1274 = vmatmul.f32.gmra.mxu0 %v1046
        %v1275 = vpop.f32.mrf.mxu0
        %v1276 = vadd.f32 0.0, %v1275
        %1277 = vmatmul.f32.gmra.mxu0 %v1049
        %v1278 = vpop.f32.mrf.mxu0
        %v1279 = vadd.f32 0.0, %v1278
        %1280 = vmatmul.f32.gmra.mxu0 %v1052
        %v1281 = vpop.f32.mrf.mxu0
        %v1282 = vadd.f32 0.0, %v1281
        %1283 = vmatmul.f32.gmra.mxu0 %v1055
        %v1284 = vpop.f32.mrf.mxu0
        %v1285 = vadd.f32 0.0, %v1284
        %1286 = vmatmul.f32.gmra.mxu0 %v1058
        %v1287 = vpop.f32.mrf.mxu0
        %v1288 = vadd.f32 0.0, %v1287
        %1289 = vmatmul.f32.gmra.mxu0 %v1061
        %v1290 = vpop.f32.mrf.mxu0
        %v1291 = vadd.f32 0.0, %v1290
        %1292 = vdwg.mxu0
        %1293 = vxpose.xlu0.b32.start [1/16] %v539, 128
        %1294 = vxpose.xlu0.b32.cont [2/16] %v542, 128
        %1295 = vxpose.xlu0.b32.cont [3/16] %v545, 128
        %1296 = vxpose.xlu0.b32.cont [4/16] %v548, 128
        %1297 = vxpose.xlu0.b32.cont [5/16] 0.0, 128
        %1298 = vxpose.xlu0.b32.cont [6/16] 0.0, 128
        %1299 = vxpose.xlu0.b32.cont [7/16] 0.0, 128
        %1300 = vxpose.xlu0.b32.cont [8/16] 0.0, 128
        %1301 = vxpose.xlu0.b32.cont [9/16] 0.0, 128
        %1302 = vxpose.xlu0.b32.cont [10/16] 0.0, 128
        %1303 = vxpose.xlu0.b32.cont [11/16] 0.0, 128
        %1304 = vxpose.xlu0.b32.cont [12/16] 0.0, 128
        %1305 = vxpose.xlu0.b32.cont [13/16] 0.0, 128
        %1306 = vxpose.xlu0.b32.cont [14/16] 0.0, 128
        %1307 = vxpose.xlu0.b32.cont [15/16] 0.0, 128
        %1308 = vxpose.xlu0.b32.end [16/16] 0.0, 128
        %v1309 = vpop.trf.xlu0
        %v1310 = vpop.trf.xlu0
        %v1311 = vpop.trf.xlu0
        %v1312 = vpop.trf.xlu0
        %v1313 = vpop.trf.xlu0
        %v1314 = vpop.trf.xlu0
        %v1315 = vpop.trf.xlu0
        %v1316 = vpop.trf.xlu0
        %v1317 = vpop.trf.xlu0
        %v1318 = vpop.trf.xlu0
        %v1319 = vpop.trf.xlu0
        %v1320 = vpop.trf.xlu0
        %v1321 = vpop.trf.xlu0
        %v1322 = vpop.trf.xlu0
        %v1323 = vpop.trf.xlu0
        %v1324 = vpop.trf.xlu0
        %vm1325 = vcmask 261120
        %v1327 = vsel %vm1325, %v1309, 0
        %v1330 = vsel %vm1325, %v1310, 0
        %v1333 = vsel %vm1325, %v1311, 0
        %v1336 = vsel %vm1325, %v1312, 0
        %v1339 = vsel %vm1325, %v1313, 0
        %v1342 = vsel %vm1325, %v1314, 0
        %v1345 = vsel %vm1325, %v1315, 0
        %v1348 = vsel %vm1325, %v1316, 0
        %v1351 = vsel %vm1325, %v1317, 0
        %v1354 = vsel %vm1325, %v1318, 0
        %v1357 = vsel %vm1325, %v1319, 0
        %v1360 = vsel %vm1325, %v1320, 0
        %v1363 = vsel %vm1325, %v1321, 0
        %v1366 = vsel %vm1325, %v1322, 0
        %v1369 = vsel %vm1325, %v1323, 0
        %v1372 = vsel %vm1325, %v1324, 0
        %1374 = vmatpush.msra.mxu0 0.0
        %1375 = vmatpush.msra.mxu0 0.0
        %1376 = vmatpush.msra.mxu0 0.0
        %1377 = vmatpush.msra.mxu0 0.0
        %1378 = vmatpush.msra.mxu0 0.0
        %1379 = vmatpush.msra.mxu0 0.0
        %1380 = vmatpush.msra.mxu0 0.0
        %1381 = vmatpush.msra.mxu0 0.0
        %1382 = vmatpush.msra.mxu0 0.0
        %1383 = vmatpush.msra.mxu0 0.0
        %1384 = vmatpush.msra.mxu0 0.0
        %1385 = vmatpush.msra.mxu0 0.0
        %1386 = vmatpush.msra.mxu0 %v765
        %1387 = vmatpush.msra.mxu0 %v762
        %1388 = vmatpush.msra.mxu0 %v759
        %1389 = vmatpush.msra.mxu0 %v756
        %1390 = vmatmul.f32.gmra.mxu0 %v1327
        %v1391 = vpop.f32.mrf.mxu0
        %v1392 = vadd.f32 0.0, %v1391
        %1393 = vmatmul.f32.gmra.mxu0 %v1330
        %v1394 = vpop.f32.mrf.mxu0
        %v1395 = vadd.f32 0.0, %v1394
        %1396 = vmatmul.f32.gmra.mxu0 %v1333
        %v1397 = vpop.f32.mrf.mxu0
        %v1398 = vadd.f32 0.0, %v1397
        %1399 = vmatmul.f32.gmra.mxu0 %v1336
        %v1400 = vpop.f32.mrf.mxu0
        %v1401 = vadd.f32 0.0, %v1400
        %1402 = vmatmul.f32.gmra.mxu0 %v1339
        %v1403 = vpop.f32.mrf.mxu0
        %v1404 = vadd.f32 0.0, %v1403
        %1405 = vmatmul.f32.gmra.mxu0 %v1342
        %v1406 = vpop.f32.mrf.mxu0
        %v1407 = vadd.f32 0.0, %v1406
        %1408 = vmatmul.f32.gmra.mxu0 %v1345
        %v1409 = vpop.f32.mrf.mxu0
        %v1410 = vadd.f32 0.0, %v1409
        %1411 = vmatmul.f32.gmra.mxu0 %v1348
        %v1412 = vpop.f32.mrf.mxu0
        %v1413 = vadd.f32 0.0, %v1412
        %1414 = vmatmul.f32.gmra.mxu0 %v1351
        %v1415 = vpop.f32.mrf.mxu0
        %v1416 = vadd.f32 0.0, %v1415
        %1417 = vmatmul.f32.gmra.mxu0 %v1354
        %v1418 = vpop.f32.mrf.mxu0
        %v1419 = vadd.f32 0.0, %v1418
        %1420 = vmatmul.f32.gmra.mxu0 %v1357
        %v1421 = vpop.f32.mrf.mxu0
        %v1422 = vadd.f32 0.0, %v1421
        %1423 = vmatmul.f32.gmra.mxu0 %v1360
        %v1424 = vpop.f32.mrf.mxu0
        %v1425 = vadd.f32 0.0, %v1424
        %1426 = vmatmul.f32.gmra.mxu0 %v1363
        %v1427 = vpop.f32.mrf.mxu0
        %v1428 = vadd.f32 0.0, %v1427
        %1429 = vmatmul.f32.gmra.mxu0 %v1366
        %v1430 = vpop.f32.mrf.mxu0
        %v1431 = vadd.f32 0.0, %v1430
        %1432 = vmatmul.f32.gmra.mxu0 %v1369
        %v1433 = vpop.f32.mrf.mxu0
        %v1434 = vadd.f32 0.0, %v1433
        %1435 = vmatmul.f32.gmra.mxu0 %v1372
        %v1436 = vpop.f32.mrf.mxu0
        %v1437 = vadd.f32 0.0, %v1436
        %1438 = vdwg.mxu0
        %1439 = vmatpush.msra.mxu0 0.0
        %1440 = vmatpush.msra.mxu0 0.0
        %1441 = vmatpush.msra.mxu0 0.0
        %1442 = vmatpush.msra.mxu0 0.0
        %1443 = vmatpush.msra.mxu0 0.0
        %1444 = vmatpush.msra.mxu0 0.0
        %1445 = vmatpush.msra.mxu0 0.0
        %1446 = vmatpush.msra.mxu0 0.0
        %1447 = vmatpush.msra.mxu0 0.0
        %1448 = vmatpush.msra.mxu0 0.0
        %1449 = vmatpush.msra.mxu0 0.0
        %1450 = vmatpush.msra.mxu0 0.0
        %1451 = vmatpush.msra.mxu0 %v878
        %1452 = vmatpush.msra.mxu0 %v875
        %1453 = vmatpush.msra.mxu0 %v872
        %1454 = vmatpush.msra.mxu0 %v869
        %1455 = vmatmul.f32.gmra.mxu0 %v1327
        %v1456 = vpop.f32.mrf.mxu0
        %v1457 = vadd.f32 0.0, %v1456
        %1458 = vmatmul.f32.gmra.mxu0 %v1330
        %v1459 = vpop.f32.mrf.mxu0
        %v1460 = vadd.f32 0.0, %v1459
        %1461 = vmatmul.f32.gmra.mxu0 %v1333
        %v1462 = vpop.f32.mrf.mxu0
        %v1463 = vadd.f32 0.0, %v1462
        %1464 = vmatmul.f32.gmra.mxu0 %v1336
        %v1465 = vpop.f32.mrf.mxu0
        %v1466 = vadd.f32 0.0, %v1465
        %1467 = vmatmul.f32.gmra.mxu0 %v1339
        %v1468 = vpop.f32.mrf.mxu0
        %v1469 = vadd.f32 0.0, %v1468
        %1470 = vmatmul.f32.gmra.mxu0 %v1342
        %v1471 = vpop.f32.mrf.mxu0
        %v1472 = vadd.f32 0.0, %v1471
        %1473 = vmatmul.f32.gmra.mxu0 %v1345
        %v1474 = vpop.f32.mrf.mxu0
        %v1475 = vadd.f32 0.0, %v1474
        %1476 = vmatmul.f32.gmra.mxu0 %v1348
        %v1477 = vpop.f32.mrf.mxu0
        %v1478 = vadd.f32 0.0, %v1477
        %1479 = vmatmul.f32.gmra.mxu0 %v1351
        %v1480 = vpop.f32.mrf.mxu0
        %v1481 = vadd.f32 0.0, %v1480
        %1482 = vmatmul.f32.gmra.mxu0 %v1354
        %v1483 = vpop.f32.mrf.mxu0
        %v1484 = vadd.f32 0.0, %v1483
        %1485 = vmatmul.f32.gmra.mxu0 %v1357
        %v1486 = vpop.f32.mrf.mxu0
        %v1487 = vadd.f32 0.0, %v1486
        %1488 = vmatmul.f32.gmra.mxu0 %v1360
        %v1489 = vpop.f32.mrf.mxu0
        %v1490 = vadd.f32 0.0, %v1489
        %1491 = vmatmul.f32.gmra.mxu0 %v1363
        %v1492 = vpop.f32.mrf.mxu0
        %v1493 = vadd.f32 0.0, %v1492
        %1494 = vmatmul.f32.gmra.mxu0 %v1366
        %v1495 = vpop.f32.mrf.mxu0
        %v1496 = vadd.f32 0.0, %v1495
        %1497 = vmatmul.f32.gmra.mxu0 %v1369
        %v1498 = vpop.f32.mrf.mxu0
        %v1499 = vadd.f32 0.0, %v1498
        %1500 = vmatmul.f32.gmra.mxu0 %v1372
        %v1501 = vpop.f32.mrf.mxu0
        %v1502 = vadd.f32 0.0, %v1501
        %1503 = vdwg.mxu0
        %v1504 = vmul.f32 %v1392, 0.17677669
        %v1505 = vmul.f32 %v1457, 0.17677669
        %v1506 = vmul.f32 %v1395, 0.17677669
        %v1507 = vmul.f32 %v1460, 0.17677669
        %v1508 = vmul.f32 %v1398, 0.17677669
        %v1509 = vmul.f32 %v1463, 0.17677669
        %v1510 = vmul.f32 %v1401, 0.17677669
        %v1511 = vmul.f32 %v1466, 0.17677669
        %v1512 = vmul.f32 %v1404, 0.17677669
        %v1513 = vmul.f32 %v1469, 0.17677669
        %v1514 = vmul.f32 %v1407, 0.17677669
        %v1515 = vmul.f32 %v1472, 0.17677669
        %v1516 = vmul.f32 %v1410, 0.17677669
        %v1517 = vmul.f32 %v1475, 0.17677669
        %v1518 = vmul.f32 %v1413, 0.17677669
        %v1519 = vmul.f32 %v1478, 0.17677669
        %v1520 = vmul.f32 %v1416, 0.17677669
        %v1521 = vmul.f32 %v1481, 0.17677669
        %v1522 = vmul.f32 %v1419, 0.17677669
        %v1523 = vmul.f32 %v1484, 0.17677669
        %v1524 = vmul.f32 %v1422, 0.17677669
        %v1525 = vmul.f32 %v1487, 0.17677669
        %v1526 = vmul.f32 %v1425, 0.17677669
        %v1527 = vmul.f32 %v1490, 0.17677669
        %v1528 = vmul.f32 %v1428, 0.17677669
        %v1529 = vmul.f32 %v1493, 0.17677669
        %v1530 = vmul.f32 %v1431, 0.17677669
        %v1531 = vmul.f32 %v1496, 0.17677669
        %v1532 = vmul.f32 %v1434, 0.17677669
        %v1533 = vmul.f32 %v1499, 0.17677669
        %v1534 = vmul.f32 %v1437, 0.17677669
        %v1535 = vmul.f32 %v1502, 0.17677669
        %v1536 = vmax.f32 %v1504, %v1505
        %1537 = vmax.xlane.f32.xlu0 %v1536
        %v1538 = vpop.xlane.xlu0 %1537
        %v1539 = vmax.f32 %v1506, %v1507
        %1540 = vmax.xlane.f32.xlu0 %v1539
        %v1541 = vpop.xlane.xlu0 %1540
        %v1542 = vmax.f32 %v1508, %v1509
        %1543 = vmax.xlane.f32.xlu0 %v1542
        %v1544 = vpop.xlane.xlu0 %1543
        %v1545 = vmax.f32 %v1510, %v1511
        %1546 = vmax.xlane.f32.xlu0 %v1545
        %v1547 = vpop.xlane.xlu0 %1546
        %v1548 = vmax.f32 %v1512, %v1513
        %1549 = vmax.xlane.f32.xlu0 %v1548
        %v1550 = vpop.xlane.xlu0 %1549
        %v1551 = vmax.f32 %v1514, %v1515
        %1552 = vmax.xlane.f32.xlu0 %v1551
        %v1553 = vpop.xlane.xlu0 %1552
        %v1554 = vmax.f32 %v1516, %v1517
        %1555 = vmax.xlane.f32.xlu0 %v1554
        %v1556 = vpop.xlane.xlu0 %1555
        %v1557 = vmax.f32 %v1518, %v1519
        %1558 = vmax.xlane.f32.xlu0 %v1557
        %v1559 = vpop.xlane.xlu0 %1558
        %v1560 = vmax.f32 %v1520, %v1521
        %1561 = vmax.xlane.f32.xlu0 %v1560
        %v1562 = vpop.xlane.xlu0 %1561
        %v1563 = vmax.f32 %v1522, %v1523
        %1564 = vmax.xlane.f32.xlu0 %v1563
        %v1565 = vpop.xlane.xlu0 %1564
        %v1566 = vmax.f32 %v1524, %v1525
        %1567 = vmax.xlane.f32.xlu0 %v1566
        %v1568 = vpop.xlane.xlu0 %1567
        %v1569 = vmax.f32 %v1526, %v1527
        %1570 = vmax.xlane.f32.xlu0 %v1569
        %v1571 = vpop.xlane.xlu0 %1570
        %v1572 = vmax.f32 %v1528, %v1529
        %1573 = vmax.xlane.f32.xlu0 %v1572
        %v1574 = vpop.xlane.xlu0 %1573
        %v1575 = vmax.f32 %v1530, %v1531
        %1576 = vmax.xlane.f32.xlu0 %v1575
        %v1577 = vpop.xlane.xlu0 %1576
        %v1578 = vmax.f32 %v1532, %v1533
        %1579 = vmax.xlane.f32.xlu0 %v1578
        %v1580 = vpop.xlane.xlu0 %1579
        %v1581 = vmax.f32 %v1534, %v1535
        %1582 = vmax.xlane.f32.xlu0 %v1581
        %v1583 = vpop.xlane.xlu0 %1582
        %v1584 = vsub.f32 %v1504, %v1538
        %v1585 = vsub.f32 %v1505, %v1538
        %v1586 = vsub.f32 %v1506, %v1541
        %v1587 = vsub.f32 %v1507, %v1541
        %v1588 = vsub.f32 %v1508, %v1544
        %v1589 = vsub.f32 %v1509, %v1544
        %v1590 = vsub.f32 %v1510, %v1547
        %v1591 = vsub.f32 %v1511, %v1547
        %v1592 = vsub.f32 %v1512, %v1550
        %v1593 = vsub.f32 %v1513, %v1550
        %v1594 = vsub.f32 %v1514, %v1553
        %v1595 = vsub.f32 %v1515, %v1553
        %v1596 = vsub.f32 %v1516, %v1556
        %v1597 = vsub.f32 %v1517, %v1556
        %v1598 = vsub.f32 %v1518, %v1559
        %v1599 = vsub.f32 %v1519, %v1559
        %v1600 = vsub.f32 %v1520, %v1562
        %v1601 = vsub.f32 %v1521, %v1562
        %v1602 = vsub.f32 %v1522, %v1565
        %v1603 = vsub.f32 %v1523, %v1565
        %v1604 = vsub.f32 %v1524, %v1568
        %v1605 = vsub.f32 %v1525, %v1568
        %v1606 = vsub.f32 %v1526, %v1571
        %v1607 = vsub.f32 %v1527, %v1571
        %v1608 = vsub.f32 %v1528, %v1574
        %v1609 = vsub.f32 %v1529, %v1574
        %v1610 = vsub.f32 %v1530, %v1577
        %v1611 = vsub.f32 %v1531, %v1577
        %v1612 = vsub.f32 %v1532, %v1580
        %v1613 = vsub.f32 %v1533, %v1580
        %v1614 = vsub.f32 %v1534, %v1583
        %v1615 = vsub.f32 %v1535, %v1583
        %v1616 = vmul.f32 %v1584, 1.442695
        %v1617 = vpow.pop %v1616
        %v1618 = vmul.f32 %v1585, 1.442695
        %v1619 = vpow.pop %v1618
        %v1620 = vmul.f32 %v1586, 1.442695
        %v1621 = vpow.pop %v1620
        %v1622 = vmul.f32 %v1587, 1.442695
        %v1623 = vpow.pop %v1622
        %v1624 = vmul.f32 %v1588, 1.442695
        %v1625 = vpow.pop %v1624
        %v1626 = vmul.f32 %v1589, 1.442695
        %v1627 = vpow.pop %v1626
        %v1628 = vmul.f32 %v1590, 1.442695
        %v1629 = vpow.pop %v1628
        %v1630 = vmul.f32 %v1591, 1.442695
        %v1631 = vpow.pop %v1630
        %v1632 = vmul.f32 %v1592, 1.442695
        %v1633 = vpow.pop %v1632
        %v1634 = vmul.f32 %v1593, 1.442695
        %v1635 = vpow.pop %v1634
        %v1636 = vmul.f32 %v1594, 1.442695
        %v1637 = vpow.pop %v1636
        %v1638 = vmul.f32 %v1595, 1.442695
        %v1639 = vpow.pop %v1638
        %v1640 = vmul.f32 %v1596, 1.442695
        %v1641 = vpow.pop %v1640
        %v1642 = vmul.f32 %v1597, 1.442695
        %v1643 = vpow.pop %v1642
        %v1644 = vmul.f32 %v1598, 1.442695
        %v1645 = vpow.pop %v1644
        %v1646 = vmul.f32 %v1599, 1.442695
        %v1647 = vpow.pop %v1646
        %v1648 = vmul.f32 %v1600, 1.442695
        %v1649 = vpow.pop %v1648
        %v1650 = vmul.f32 %v1601, 1.442695
        %v1651 = vpow.pop %v1650
        %v1652 = vmul.f32 %v1602, 1.442695
        %v1653 = vpow.pop %v1652
        %v1654 = vmul.f32 %v1603, 1.442695
        %v1655 = vpow.pop %v1654
        %v1656 = vmul.f32 %v1604, 1.442695
        %v1657 = vpow.pop %v1656
        %v1658 = vmul.f32 %v1605, 1.442695
        %v1659 = vpow.pop %v1658
        %v1660 = vmul.f32 %v1606, 1.442695
        %v1661 = vpow.pop %v1660
        %v1662 = vmul.f32 %v1607, 1.442695
        %v1663 = vpow.pop %v1662
        %v1664 = vmul.f32 %v1608, 1.442695
        %v1665 = vpow.pop %v1664
        %v1666 = vmul.f32 %v1609, 1.442695
        %v1667 = vpow.pop %v1666
        %v1668 = vmul.f32 %v1610, 1.442695
        %v1669 = vpow.pop %v1668
        %v1670 = vmul.f32 %v1611, 1.442695
        %v1671 = vpow.pop %v1670
        %v1672 = vmul.f32 %v1612, 1.442695
        %v1673 = vpow.pop %v1672
        %v1674 = vmul.f32 %v1613, 1.442695
        %v1675 = vpow.pop %v1674
        %v1676 = vmul.f32 %v1614, 1.442695
        %v1677 = vpow.pop %v1676
        %v1678 = vmul.f32 %v1615, 1.442695
        %v1679 = vpow.pop %v1678
        %v1680 = vadd.f32 %v1617, %v1619
        %1681 = vadd.xlane.f32.xlu0 %v1680
        %v1682 = vpop.xlane.xlu0 %1681
        %v1683 = vadd.f32 %v1621, %v1623
        %1684 = vadd.xlane.f32.xlu0 %v1683
        %v1685 = vpop.xlane.xlu0 %1684
        %v1686 = vadd.f32 %v1625, %v1627
        %1687 = vadd.xlane.f32.xlu0 %v1686
        %v1688 = vpop.xlane.xlu0 %1687
        %v1689 = vadd.f32 %v1629, %v1631
        %1690 = vadd.xlane.f32.xlu0 %v1689
        %v1691 = vpop.xlane.xlu0 %1690
        %v1692 = vadd.f32 %v1633, %v1635
        %1693 = vadd.xlane.f32.xlu0 %v1692
        %v1694 = vpop.xlane.xlu0 %1693
        %v1695 = vadd.f32 %v1637, %v1639
        %1696 = vadd.xlane.f32.xlu0 %v1695
        %v1697 = vpop.xlane.xlu0 %1696
        %v1698 = vadd.f32 %v1641, %v1643
        %1699 = vadd.xlane.f32.xlu0 %v1698
        %v1700 = vpop.xlane.xlu0 %1699
        %v1701 = vadd.f32 %v1645, %v1647
        %1702 = vadd.xlane.f32.xlu0 %v1701
        %v1703 = vpop.xlane.xlu0 %1702
        %v1704 = vadd.f32 %v1649, %v1651
        %1705 = vadd.xlane.f32.xlu0 %v1704
        %v1706 = vpop.xlane.xlu0 %1705
        %v1707 = vadd.f32 %v1653, %v1655
        %1708 = vadd.xlane.f32.xlu0 %v1707
        %v1709 = vpop.xlane.xlu0 %1708
        %v1710 = vadd.f32 %v1657, %v1659
        %1711 = vadd.xlane.f32.xlu0 %v1710
        %v1712 = vpop.xlane.xlu0 %1711
        %v1713 = vadd.f32 %v1661, %v1663
        %1714 = vadd.xlane.f32.xlu0 %v1713
        %v1715 = vpop.xlane.xlu0 %1714
        %v1716 = vadd.f32 %v1665, %v1667
        %1717 = vadd.xlane.f32.xlu0 %v1716
        %v1718 = vpop.xlane.xlu0 %1717
        %v1719 = vadd.f32 %v1669, %v1671
        %1720 = vadd.xlane.f32.xlu0 %v1719
        %v1721 = vpop.xlane.xlu0 %1720
        %v1722 = vadd.f32 %v1673, %v1675
        %1723 = vadd.xlane.f32.xlu0 %v1722
        %v1724 = vpop.xlane.xlu0 %1723
        %v1725 = vadd.f32 %v1677, %v1679
        %1726 = vadd.xlane.f32.xlu0 %v1725
        %v1727 = vpop.xlane.xlu0 %1726
        %v1728 = vrcp.pop %v1682
        %v1729 = vmul.f32 %v1682, %v1728
        %v1730 = vsub.f32 1.0, %v1729
        %v1731 = vmul.f32 %v1728, %v1730
        %v1732 = vadd.f32 %v1728, %v1731
        %vm1733 = vweird.f32 %v1682
        %vm1734 = vweird.f32 %v1728
        %vm1735 = vmor %vm1733, %vm1734
        %v1736 = vsel %vm1735, %v1728, %v1732
        %v1737 = vand.u32 2147483647, %v1682
        %vm1738 = vcmp.eq.f32.partialorder %v1737, 8.507059e+37
        %v1739 = vand.u32 %v1682, 2147483648
        %v1740 = vor.u32 1.1754944e-38, %v1739
        %v1741 = vsel %vm1738, %v1740, %v1736
        %v1742 = vmul.f32 %v1617, %v1741
        %v1743 = vmul.f32 %v1619, %v1741
        %v1744 = vrcp.pop %v1685
        %v1745 = vmul.f32 %v1685, %v1744
        %v1746 = vsub.f32 1.0, %v1745
        %v1747 = vmul.f32 %v1744, %v1746
        %v1748 = vadd.f32 %v1744, %v1747
        %vm1749 = vweird.f32 %v1685
        %vm1750 = vweird.f32 %v1744
        %vm1751 = vmor %vm1749, %vm1750
        %v1752 = vsel %vm1751, %v1744, %v1748
        %v1753 = vand.u32 2147483647, %v1685
        %vm1754 = vcmp.eq.f32.partialorder %v1753, 8.507059e+37
        %v1755 = vand.u32 %v1685, 2147483648
        %v1756 = vor.u32 1.1754944e-38, %v1755
        %v1757 = vsel %vm1754, %v1756, %v1752
        %v1758 = vmul.f32 %v1621, %v1757
        %v1759 = vmul.f32 %v1623, %v1757
        %v1760 = vrcp.pop %v1688
        %v1761 = vmul.f32 %v1688, %v1760
        %v1762 = vsub.f32 1.0, %v1761
        %v1763 = vmul.f32 %v1760, %v1762
        %v1764 = vadd.f32 %v1760, %v1763
        %vm1765 = vweird.f32 %v1688
        %vm1766 = vweird.f32 %v1760
        %vm1767 = vmor %vm1765, %vm1766
        %v1768 = vsel %vm1767, %v1760, %v1764
        %v1769 = vand.u32 2147483647, %v1688
        %vm1770 = vcmp.eq.f32.partialorder %v1769, 8.507059e+37
        %v1771 = vand.u32 %v1688, 2147483648
        %v1772 = vor.u32 1.1754944e-38, %v1771
        %v1773 = vsel %vm1770, %v1772, %v1768
        %v1774 = vmul.f32 %v1625, %v1773
        %v1775 = vmul.f32 %v1627, %v1773
        %v1776 = vrcp.pop %v1691
        %v1777 = vmul.f32 %v1691, %v1776
        %v1778 = vsub.f32 1.0, %v1777
        %v1779 = vmul.f32 %v1776, %v1778
        %v1780 = vadd.f32 %v1776, %v1779
        %vm1781 = vweird.f32 %v1691
        %vm1782 = vweird.f32 %v1776
        %vm1783 = vmor %vm1781, %vm1782
        %v1784 = vsel %vm1783, %v1776, %v1780
        %v1785 = vand.u32 2147483647, %v1691
        %vm1786 = vcmp.eq.f32.partialorder %v1785, 8.507059e+37
        %v1787 = vand.u32 %v1691, 2147483648
        %v1788 = vor.u32 1.1754944e-38, %v1787
        %v1789 = vsel %vm1786, %v1788, %v1784
        %v1790 = vmul.f32 %v1629, %v1789
        %v1791 = vmul.f32 %v1631, %v1789
        %v1792 = vrcp.pop %v1694
        %v1793 = vmul.f32 %v1694, %v1792
        %v1794 = vsub.f32 1.0, %v1793
        %v1795 = vmul.f32 %v1792, %v1794
        %v1796 = vadd.f32 %v1792, %v1795
        %vm1797 = vweird.f32 %v1694
        %vm1798 = vweird.f32 %v1792
        %vm1799 = vmor %vm1797, %vm1798
        %v1800 = vsel %vm1799, %v1792, %v1796
        %v1801 = vand.u32 2147483647, %v1694
        %vm1802 = vcmp.eq.f32.partialorder %v1801, 8.507059e+37
        %v1803 = vand.u32 %v1694, 2147483648
        %v1804 = vor.u32 1.1754944e-38, %v1803
        %v1805 = vsel %vm1802, %v1804, %v1800
        %v1806 = vmul.f32 %v1633, %v1805
        %v1807 = vmul.f32 %v1635, %v1805
        %v1808 = vrcp.pop %v1697
        %v1809 = vmul.f32 %v1697, %v1808
        %v1810 = vsub.f32 1.0, %v1809
        %v1811 = vmul.f32 %v1808, %v1810
        %v1812 = vadd.f32 %v1808, %v1811
        %vm1813 = vweird.f32 %v1697
        %vm1814 = vweird.f32 %v1808
        %vm1815 = vmor %vm1813, %vm1814
        %v1816 = vsel %vm1815, %v1808, %v1812
        %v1817 = vand.u32 2147483647, %v1697
        %vm1818 = vcmp.eq.f32.partialorder %v1817, 8.507059e+37
        %v1819 = vand.u32 %v1697, 2147483648
        %v1820 = vor.u32 1.1754944e-38, %v1819
        %v1821 = vsel %vm1818, %v1820, %v1816
        %v1822 = vmul.f32 %v1637, %v1821
        %v1823 = vmul.f32 %v1639, %v1821
        %v1824 = vrcp.pop %v1700
        %v1825 = vmul.f32 %v1700, %v1824
        %v1826 = vsub.f32 1.0, %v1825
        %v1827 = vmul.f32 %v1824, %v1826
        %v1828 = vadd.f32 %v1824, %v1827
        %vm1829 = vweird.f32 %v1700
        %vm1830 = vweird.f32 %v1824
        %vm1831 = vmor %vm1829, %vm1830
        %v1832 = vsel %vm1831, %v1824, %v1828
        %v1833 = vand.u32 2147483647, %v1700
        %vm1834 = vcmp.eq.f32.partialorder %v1833, 8.507059e+37
        %v1835 = vand.u32 %v1700, 2147483648
        %v1836 = vor.u32 1.1754944e-38, %v1835
        %v1837 = vsel %vm1834, %v1836, %v1832
        %v1838 = vmul.f32 %v1641, %v1837
        %v1839 = vmul.f32 %v1643, %v1837
        %v1840 = vrcp.pop %v1703
        %v1841 = vmul.f32 %v1703, %v1840
        %v1842 = vsub.f32 1.0, %v1841
        %v1843 = vmul.f32 %v1840, %v1842
        %v1844 = vadd.f32 %v1840, %v1843
        %vm1845 = vweird.f32 %v1703
        %vm1846 = vweird.f32 %v1840
        %vm1847 = vmor %vm1845, %vm1846
        %v1848 = vsel %vm1847, %v1840, %v1844
        %v1849 = vand.u32 2147483647, %v1703
        %vm1850 = vcmp.eq.f32.partialorder %v1849, 8.507059e+37
        %v1851 = vand.u32 %v1703, 2147483648
        %v1852 = vor.u32 1.1754944e-38, %v1851
        %v1853 = vsel %vm1850, %v1852, %v1848
        %v1854 = vmul.f32 %v1645, %v1853
        %v1855 = vmul.f32 %v1647, %v1853
        %v1856 = vrcp.pop %v1706
        %v1857 = vmul.f32 %v1706, %v1856
        %v1858 = vsub.f32 1.0, %v1857
        %v1859 = vmul.f32 %v1856, %v1858
        %v1860 = vadd.f32 %v1856, %v1859
        %vm1861 = vweird.f32 %v1706
        %vm1862 = vweird.f32 %v1856
        %vm1863 = vmor %vm1861, %vm1862
        %v1864 = vsel %vm1863, %v1856, %v1860
        %v1865 = vand.u32 2147483647, %v1706
        %vm1866 = vcmp.eq.f32.partialorder %v1865, 8.507059e+37
        %v1867 = vand.u32 %v1706, 2147483648
        %v1868 = vor.u32 1.1754944e-38, %v1867
        %v1869 = vsel %vm1866, %v1868, %v1864
        %v1870 = vmul.f32 %v1649, %v1869
        %v1871 = vmul.f32 %v1651, %v1869
        %v1872 = vrcp.pop %v1709
        %v1873 = vmul.f32 %v1709, %v1872
        %v1874 = vsub.f32 1.0, %v1873
        %v1875 = vmul.f32 %v1872, %v1874
        %v1876 = vadd.f32 %v1872, %v1875
        %vm1877 = vweird.f32 %v1709
        %vm1878 = vweird.f32 %v1872
        %vm1879 = vmor %vm1877, %vm1878
        %v1880 = vsel %vm1879, %v1872, %v1876
        %v1881 = vand.u32 2147483647, %v1709
        %vm1882 = vcmp.eq.f32.partialorder %v1881, 8.507059e+37
        %v1883 = vand.u32 %v1709, 2147483648
        %v1884 = vor.u32 1.1754944e-38, %v1883
        %v1885 = vsel %vm1882, %v1884, %v1880
        %v1886 = vmul.f32 %v1653, %v1885
        %v1887 = vmul.f32 %v1655, %v1885
        %v1888 = vrcp.pop %v1712
        %v1889 = vmul.f32 %v1712, %v1888
        %v1890 = vsub.f32 1.0, %v1889
        %v1891 = vmul.f32 %v1888, %v1890
        %v1892 = vadd.f32 %v1888, %v1891
        %vm1893 = vweird.f32 %v1712
        %vm1894 = vweird.f32 %v1888
        %vm1895 = vmor %vm1893, %vm1894
        %v1896 = vsel %vm1895, %v1888, %v1892
        %v1897 = vand.u32 2147483647, %v1712
        %vm1898 = vcmp.eq.f32.partialorder %v1897, 8.507059e+37
        %v1899 = vand.u32 %v1712, 2147483648
        %v1900 = vor.u32 1.1754944e-38, %v1899
        %v1901 = vsel %vm1898, %v1900, %v1896
        %v1902 = vmul.f32 %v1657, %v1901
        %v1903 = vmul.f32 %v1659, %v1901
        %v1904 = vrcp.pop %v1715
        %v1905 = vmul.f32 %v1715, %v1904
        %v1906 = vsub.f32 1.0, %v1905
        %v1907 = vmul.f32 %v1904, %v1906
        %v1908 = vadd.f32 %v1904, %v1907
        %vm1909 = vweird.f32 %v1715
        %vm1910 = vweird.f32 %v1904
        %vm1911 = vmor %vm1909, %vm1910
        %v1912 = vsel %vm1911, %v1904, %v1908
        %v1913 = vand.u32 2147483647, %v1715
        %vm1914 = vcmp.eq.f32.partialorder %v1913, 8.507059e+37
        %v1915 = vand.u32 %v1715, 2147483648
        %v1916 = vor.u32 1.1754944e-38, %v1915
        %v1917 = vsel %vm1914, %v1916, %v1912
        %v1918 = vmul.f32 %v1661, %v1917
        %v1919 = vmul.f32 %v1663, %v1917
        %v1920 = vrcp.pop %v1718
        %v1921 = vmul.f32 %v1718, %v1920
        %v1922 = vsub.f32 1.0, %v1921
        %v1923 = vmul.f32 %v1920, %v1922
        %v1924 = vadd.f32 %v1920, %v1923
        %vm1925 = vweird.f32 %v1718
        %vm1926 = vweird.f32 %v1920
        %vm1927 = vmor %vm1925, %vm1926
        %v1928 = vsel %vm1927, %v1920, %v1924
        %v1929 = vand.u32 2147483647, %v1718
        %vm1930 = vcmp.eq.f32.partialorder %v1929, 8.507059e+37
        %v1931 = vand.u32 %v1718, 2147483648
        %v1932 = vor.u32 1.1754944e-38, %v1931
        %v1933 = vsel %vm1930, %v1932, %v1928
        %v1934 = vmul.f32 %v1665, %v1933
        %v1935 = vmul.f32 %v1667, %v1933
        %v1936 = vrcp.pop %v1721
        %v1937 = vmul.f32 %v1721, %v1936
        %v1938 = vsub.f32 1.0, %v1937
        %v1939 = vmul.f32 %v1936, %v1938
        %v1940 = vadd.f32 %v1936, %v1939
        %vm1941 = vweird.f32 %v1721
        %vm1942 = vweird.f32 %v1936
        %vm1943 = vmor %vm1941, %vm1942
        %v1944 = vsel %vm1943, %v1936, %v1940
        %v1945 = vand.u32 2147483647, %v1721
        %vm1946 = vcmp.eq.f32.partialorder %v1945, 8.507059e+37
        %v1947 = vand.u32 %v1721, 2147483648
        %v1948 = vor.u32 1.1754944e-38, %v1947
        %v1949 = vsel %vm1946, %v1948, %v1944
        %v1950 = vmul.f32 %v1669, %v1949
        %v1951 = vmul.f32 %v1671, %v1949
        %v1952 = vrcp.pop %v1724
        %v1953 = vmul.f32 %v1724, %v1952
        %v1954 = vsub.f32 1.0, %v1953
        %v1955 = vmul.f32 %v1952, %v1954
        %v1956 = vadd.f32 %v1952, %v1955
        %vm1957 = vweird.f32 %v1724
        %vm1958 = vweird.f32 %v1952
        %vm1959 = vmor %vm1957, %vm1958
        %v1960 = vsel %vm1959, %v1952, %v1956
        %v1961 = vand.u32 2147483647, %v1724
        %vm1962 = vcmp.eq.f32.partialorder %v1961, 8.507059e+37
        %v1963 = vand.u32 %v1724, 2147483648
        %v1964 = vor.u32 1.1754944e-38, %v1963
        %v1965 = vsel %vm1962, %v1964, %v1960
        %v1966 = vmul.f32 %v1673, %v1965
        %v1967 = vmul.f32 %v1675, %v1965
        %v1968 = vrcp.pop %v1727
        %v1969 = vmul.f32 %v1727, %v1968
        %v1970 = vsub.f32 1.0, %v1969
        %v1971 = vmul.f32 %v1968, %v1970
        %v1972 = vadd.f32 %v1968, %v1971
        %vm1973 = vweird.f32 %v1727
        %vm1974 = vweird.f32 %v1968
        %vm1975 = vmor %vm1973, %vm1974
        %v1976 = vsel %vm1975, %v1968, %v1972
        %v1977 = vand.u32 2147483647, %v1727
        %vm1978 = vcmp.eq.f32.partialorder %v1977, 8.507059e+37
        %v1979 = vand.u32 %v1727, 2147483648
        %v1980 = vor.u32 1.1754944e-38, %v1979
        %v1981 = vsel %vm1978, %v1980, %v1976
        %v1982 = vmul.f32 %v1677, %v1981
        %v1983 = vmul.f32 %v1679, %v1981
        %1984 = vmatpush.xpose.msra.mxu0 %v1982
        %1985 = vmatpush.xpose.msra.mxu0 %v1966
        %1986 = vmatpush.xpose.msra.mxu0 %v1950
        %1987 = vmatpush.xpose.msra.mxu0 %v1934
        %1988 = vmatpush.xpose.msra.mxu0 %v1918
        %1989 = vmatpush.xpose.msra.mxu0 %v1902
        %1990 = vmatpush.xpose.msra.mxu0 %v1886
        %1991 = vmatpush.xpose.msra.mxu0 %v1870
        %1992 = vmatpush.xpose.msra.mxu0 %v1854
        %1993 = vmatpush.xpose.msra.mxu0 %v1838
        %1994 = vmatpush.xpose.msra.mxu0 %v1822
        %1995 = vmatpush.xpose.msra.mxu0 %v1806
        %1996 = vmatpush.xpose.msra.mxu0 %v1790
        %1997 = vmatpush.xpose.msra.mxu0 %v1774
        %1998 = vmatpush.xpose.msra.mxu0 %v1758
        %1999 = vmatpush.xpose.msra.mxu0 %v1742
        %2000 = vmatmul.f32.gmra.mxu0 %v1085
        %v2001 = vpop.f32.mrf.mxu0
        %v2002 = vadd.f32 0.0, %v2001
        %2003 = vmatmul.f32.gmra.mxu0 %v1088
        %v2004 = vpop.f32.mrf.mxu0
        %v2005 = vadd.f32 0.0, %v2004
        %2006 = vmatmul.f32.gmra.mxu0 %v1091
        %v2007 = vpop.f32.mrf.mxu0
        %v2008 = vadd.f32 0.0, %v2007
        %2009 = vmatmul.f32.gmra.mxu0 %v1094
        %v2010 = vpop.f32.mrf.mxu0
        %v2011 = vadd.f32 0.0, %v2010
        %2012 = vdwg.mxu0
        %2013 = vmatpush.xpose.msra.mxu0 %v1983
        %2014 = vmatpush.xpose.msra.mxu0 %v1967
        %2015 = vmatpush.xpose.msra.mxu0 %v1951
        %2016 = vmatpush.xpose.msra.mxu0 %v1935
        %2017 = vmatpush.xpose.msra.mxu0 %v1919
        %2018 = vmatpush.xpose.msra.mxu0 %v1903
        %2019 = vmatpush.xpose.msra.mxu0 %v1887
        %2020 = vmatpush.xpose.msra.mxu0 %v1871
        %2021 = vmatpush.xpose.msra.mxu0 %v1855
        %2022 = vmatpush.xpose.msra.mxu0 %v1839
        %2023 = vmatpush.xpose.msra.mxu0 %v1823
        %2024 = vmatpush.xpose.msra.mxu0 %v1807
        %2025 = vmatpush.xpose.msra.mxu0 %v1791
        %2026 = vmatpush.xpose.msra.mxu0 %v1775
        %2027 = vmatpush.xpose.msra.mxu0 %v1759
        %2028 = vmatpush.xpose.msra.mxu0 %v1743
        %2029 = vmatmul.f32.gmra.mxu0 %v1198
        %v2030 = vpop.f32.mrf.mxu0
        %v2031 = vadd.f32 %v2002, %v2030
        %2032 = vmatmul.f32.gmra.mxu0 %v1201
        %v2033 = vpop.f32.mrf.mxu0
        %v2034 = vadd.f32 %v2005, %v2033
        %2035 = vmatmul.f32.gmra.mxu0 %v1204
        %v2036 = vpop.f32.mrf.mxu0
        %v2037 = vadd.f32 %v2008, %v2036
        %2038 = vmatmul.f32.gmra.mxu0 %v1207
        %v2039 = vpop.f32.mrf.mxu0
        %v2040 = vadd.f32 %v2011, %v2039
        %2041 = vdwg.mxu0
        %v2042 = vld [vmem:[%s5] sm:$0xf]
        %2043 = vxpose.xlu0.b32.start [1/16] %v551, 128
        %2044 = vxpose.xlu0.b32.cont [2/16] %v554, 128
        %2045 = vxpose.xlu0.b32.cont [3/16] %v557, 128
        %2046 = vxpose.xlu0.b32.cont [4/16] %v560, 128
        %2047 = vxpose.xlu0.b32.cont [5/16] 0.0, 128
        %2048 = vxpose.xlu0.b32.cont [6/16] 0.0, 128
        %2049 = vxpose.xlu0.b32.cont [7/16] 0.0, 128
        %2050 = vxpose.xlu0.b32.cont [8/16] 0.0, 128
        %2051 = vxpose.xlu0.b32.cont [9/16] 0.0, 128
        %2052 = vxpose.xlu0.b32.cont [10/16] 0.0, 128
        %2053 = vxpose.xlu0.b32.cont [11/16] 0.0, 128
        %2054 = vxpose.xlu0.b32.cont [12/16] 0.0, 128
        %2055 = vxpose.xlu0.b32.cont [13/16] 0.0, 128
        %2056 = vxpose.xlu0.b32.cont [14/16] 0.0, 128
        %2057 = vxpose.xlu0.b32.cont [15/16] 0.0, 128
        %2058 = vxpose.xlu0.b32.end [16/16] 0.0, 128
        %v2059 = vpop.trf.xlu0
        %v2060 = vpop.trf.xlu0
        %v2061 = vpop.trf.xlu0
        %v2062 = vpop.trf.xlu0
        %v2063 = vpop.trf.xlu0
        %v2064 = vpop.trf.xlu0
        %v2065 = vpop.trf.xlu0
        %v2066 = vpop.trf.xlu0
        %v2067 = vpop.trf.xlu0
        %v2068 = vpop.trf.xlu0
        %v2069 = vpop.trf.xlu0
        %v2070 = vpop.trf.xlu0
        %v2071 = vpop.trf.xlu0
        %v2072 = vpop.trf.xlu0
        %v2073 = vpop.trf.xlu0
        %v2074 = vpop.trf.xlu0
        %v2076 = vsel %vm1325, %v2059, 0
        %v2079 = vsel %vm1325, %v2060, 0
        %v2082 = vsel %vm1325, %v2061, 0
        %v2085 = vsel %vm1325, %v2062, 0
        %v2088 = vsel %vm1325, %v2063, 0
        %v2091 = vsel %vm1325, %v2064, 0
        %v2094 = vsel %vm1325, %v2065, 0
        %v2097 = vsel %vm1325, %v2066, 0
        %v2100 = vsel %vm1325, %v2067, 0
        %v2103 = vsel %vm1325, %v2068, 0
        %v2106 = vsel %vm1325, %v2069, 0
        %v2109 = vsel %vm1325, %v2070, 0
        %v2112 = vsel %vm1325, %v2071, 0
        %v2115 = vsel %vm1325, %v2072, 0
        %v2118 = vsel %vm1325, %v2073, 0
        %v2121 = vsel %vm1325, %v2074, 0
        %2123 = vmatpush.msra.mxu0 0.0
        %2124 = vmatpush.msra.mxu0 0.0
        %2125 = vmatpush.msra.mxu0 0.0
        %2126 = vmatpush.msra.mxu0 0.0
        %2127 = vmatpush.msra.mxu0 0.0
        %2128 = vmatpush.msra.mxu0 0.0
        %2129 = vmatpush.msra.mxu0 0.0
        %2130 = vmatpush.msra.mxu0 0.0
        %2131 = vmatpush.msra.mxu0 0.0
        %2132 = vmatpush.msra.mxu0 0.0
        %2133 = vmatpush.msra.mxu0 0.0
        %2134 = vmatpush.msra.mxu0 0.0
        %2135 = vmatpush.msra.mxu0 %v777
        %2136 = vmatpush.msra.mxu0 %v774
        %2137 = vmatpush.msra.mxu0 %v771
        %2138 = vmatpush.msra.mxu0 %v768
        %2139 = vmatmul.f32.gmra.mxu0 %v2076
        %v2140 = vpop.f32.mrf.mxu0
        %v2141 = vadd.f32 0.0, %v2140
        %2142 = vmatmul.f32.gmra.mxu0 %v2079
        %v2143 = vpop.f32.mrf.mxu0
        %v2144 = vadd.f32 0.0, %v2143
        %2145 = vmatmul.f32.gmra.mxu0 %v2082
        %v2146 = vpop.f32.mrf.mxu0
        %v2147 = vadd.f32 0.0, %v2146
        %2148 = vmatmul.f32.gmra.mxu0 %v2085
        %v2149 = vpop.f32.mrf.mxu0
        %v2150 = vadd.f32 0.0, %v2149
        %2151 = vmatmul.f32.gmra.mxu0 %v2088
        %v2152 = vpop.f32.mrf.mxu0
        %v2153 = vadd.f32 0.0, %v2152
        %2154 = vmatmul.f32.gmra.mxu0 %v2091
        %v2155 = vpop.f32.mrf.mxu0
        %v2156 = vadd.f32 0.0, %v2155
        %2157 = vmatmul.f32.gmra.mxu0 %v2094
        %v2158 = vpop.f32.mrf.mxu0
        %v2159 = vadd.f32 0.0, %v2158
        %2160 = vmatmul.f32.gmra.mxu0 %v2097
        %v2161 = vpop.f32.mrf.mxu0
        %v2162 = vadd.f32 0.0, %v2161
        %2163 = vmatmul.f32.gmra.mxu0 %v2100
        %v2164 = vpop.f32.mrf.mxu0
        %v2165 = vadd.f32 0.0, %v2164
        %2166 = vmatmul.f32.gmra.mxu0 %v2103
        %v2167 = vpop.f32.mrf.mxu0
        %v2168 = vadd.f32 0.0, %v2167
        %2169 = vmatmul.f32.gmra.mxu0 %v2106
        %v2170 = vpop.f32.mrf.mxu0
        %v2171 = vadd.f32 0.0, %v2170
        %2172 = vmatmul.f32.gmra.mxu0 %v2109
        %v2173 = vpop.f32.mrf.mxu0
        %v2174 = vadd.f32 0.0, %v2173
        %2175 = vmatmul.f32.gmra.mxu0 %v2112
        %v2176 = vpop.f32.mrf.mxu0
        %v2177 = vadd.f32 0.0, %v2176
        %2178 = vmatmul.f32.gmra.mxu0 %v2115
        %v2179 = vpop.f32.mrf.mxu0
        %v2180 = vadd.f32 0.0, %v2179
        %2181 = vmatmul.f32.gmra.mxu0 %v2118
        %v2182 = vpop.f32.mrf.mxu0
        %v2183 = vadd.f32 0.0, %v2182
        %2184 = vmatmul.f32.gmra.mxu0 %v2121
        %v2185 = vpop.f32.mrf.mxu0
        %v2186 = vadd.f32 0.0, %v2185
        %2187 = vdwg.mxu0
        %2188 = vmatpush.msra.mxu0 0.0
        %2189 = vmatpush.msra.mxu0 0.0
        %2190 = vmatpush.msra.mxu0 0.0
        %2191 = vmatpush.msra.mxu0 0.0
        %2192 = vmatpush.msra.mxu0 0.0
        %2193 = vmatpush.msra.mxu0 0.0
        %2194 = vmatpush.msra.mxu0 0.0
        %2195 = vmatpush.msra.mxu0 0.0
        %2196 = vmatpush.msra.mxu0 0.0
        %2197 = vmatpush.msra.mxu0 0.0
        %2198 = vmatpush.msra.mxu0 0.0
        %2199 = vmatpush.msra.mxu0 0.0
        %2200 = vmatpush.msra.mxu0 %v890
        %2201 = vmatpush.msra.mxu0 %v887
        %2202 = vmatpush.msra.mxu0 %v884
        %2203 = vmatpush.msra.mxu0 %v881
        %2204 = vmatmul.f32.gmra.mxu0 %v2076
        %v2205 = vpop.f32.mrf.mxu0
        %v2206 = vadd.f32 0.0, %v2205
        %2207 = vmatmul.f32.gmra.mxu0 %v2079
        %v2208 = vpop.f32.mrf.mxu0
        %v2209 = vadd.f32 0.0, %v2208
        %2210 = vmatmul.f32.gmra.mxu0 %v2082
        %v2211 = vpop.f32.mrf.mxu0
        %v2212 = vadd.f32 0.0, %v2211
        %2213 = vmatmul.f32.gmra.mxu0 %v2085
        %v2214 = vpop.f32.mrf.mxu0
        %v2215 = vadd.f32 0.0, %v2214
        %2216 = vmatmul.f32.gmra.mxu0 %v2088
        %v2217 = vpop.f32.mrf.mxu0
        %v2218 = vadd.f32 0.0, %v2217
        %2219 = vmatmul.f32.gmra.mxu0 %v2091
        %v2220 = vpop.f32.mrf.mxu0
        %v2221 = vadd.f32 0.0, %v2220
        %2222 = vmatmul.f32.gmra.mxu0 %v2094
        %v2223 = vpop.f32.mrf.mxu0
        %v2224 = vadd.f32 0.0, %v2223
        %2225 = vmatmul.f32.gmra.mxu0 %v2097
        %v2226 = vpop.f32.mrf.mxu0
        %v2227 = vadd.f32 0.0, %v2226
        %2228 = vmatmul.f32.gmra.mxu0 %v2100
        %v2229 = vpop.f32.mrf.mxu0
        %v2230 = vadd.f32 0.0, %v2229
        %2231 = vmatmul.f32.gmra.mxu0 %v2103
        %v2232 = vpop.f32.mrf.mxu0
        %v2233 = vadd.f32 0.0, %v2232
        %2234 = vmatmul.f32.gmra.mxu0 %v2106
        %v2235 = vpop.f32.mrf.mxu0
        %v2236 = vadd.f32 0.0, %v2235
        %2237 = vmatmul.f32.gmra.mxu0 %v2109
        %v2238 = vpop.f32.mrf.mxu0
        %v2239 = vadd.f32 0.0, %v2238
        %2240 = vmatmul.f32.gmra.mxu0 %v2112
        %v2241 = vpop.f32.mrf.mxu0
        %v2242 = vadd.f32 0.0, %v2241
        %2243 = vmatmul.f32.gmra.mxu0 %v2115
        %v2244 = vpop.f32.mrf.mxu0
        %v2245 = vadd.f32 0.0, %v2244
        %2246 = vmatmul.f32.gmra.mxu0 %v2118
        %v2247 = vpop.f32.mrf.mxu0
        %v2248 = vadd.f32 0.0, %v2247
        %2249 = vmatmul.f32.gmra.mxu0 %v2121
        %v2250 = vpop.f32.mrf.mxu0
        %v2251 = vadd.f32 0.0, %v2250
        %2252 = vdwg.mxu0
        %v2253 = vmul.f32 %v2141, 0.17677669
        %v2254 = vmul.f32 %v2206, 0.17677669
        %v2255 = vmul.f32 %v2144, 0.17677669
        %v2256 = vmul.f32 %v2209, 0.17677669
        %v2257 = vmul.f32 %v2147, 0.17677669
        %v2258 = vmul.f32 %v2212, 0.17677669
        %v2259 = vmul.f32 %v2150, 0.17677669
        %v2260 = vmul.f32 %v2215, 0.17677669
        %v2261 = vmul.f32 %v2153, 0.17677669
        %v2262 = vmul.f32 %v2218, 0.17677669
        %v2263 = vmul.f32 %v2156, 0.17677669
        %v2264 = vmul.f32 %v2221, 0.17677669
        %v2265 = vmul.f32 %v2159, 0.17677669
        %v2266 = vmul.f32 %v2224, 0.17677669
        %v2267 = vmul.f32 %v2162, 0.17677669
        %v2268 = vmul.f32 %v2227, 0.17677669
        %v2269 = vmul.f32 %v2165, 0.17677669
        %v2270 = vmul.f32 %v2230, 0.17677669
        %v2271 = vmul.f32 %v2168, 0.17677669
        %v2272 = vmul.f32 %v2233, 0.17677669
        %v2273 = vmul.f32 %v2171, 0.17677669
        %v2274 = vmul.f32 %v2236, 0.17677669
        %v2275 = vmul.f32 %v2174, 0.17677669
        %v2276 = vmul.f32 %v2239, 0.17677669
        %v2277 = vmul.f32 %v2177, 0.17677669
        %v2278 = vmul.f32 %v2242, 0.17677669
        %v2279 = vmul.f32 %v2180, 0.17677669
        %v2280 = vmul.f32 %v2245, 0.17677669
        %v2281 = vmul.f32 %v2183, 0.17677669
        %v2282 = vmul.f32 %v2248, 0.17677669
        %v2283 = vmul.f32 %v2186, 0.17677669
        %v2284 = vmul.f32 %v2251, 0.17677669
        %v2285 = vmax.f32 %v2253, %v2254
        %2286 = vmax.xlane.f32.xlu0 %v2285
        %v2287 = vpop.xlane.xlu0 %2286
        %v2288 = vmax.f32 %v2255, %v2256
        %2289 = vmax.xlane.f32.xlu0 %v2288
        %v2290 = vpop.xlane.xlu0 %2289
        %v2291 = vmax.f32 %v2257, %v2258
        %2292 = vmax.xlane.f32.xlu0 %v2291
        %v2293 = vpop.xlane.xlu0 %2292
        %v2294 = vmax.f32 %v2259, %v2260
        %2295 = vmax.xlane.f32.xlu0 %v2294
        %v2296 = vpop.xlane.xlu0 %2295
        %v2297 = vmax.f32 %v2261, %v2262
        %2298 = vmax.xlane.f32.xlu0 %v2297
        %v2299 = vpop.xlane.xlu0 %2298
        %v2300 = vmax.f32 %v2263, %v2264
        %2301 = vmax.xlane.f32.xlu0 %v2300
        %v2302 = vpop.xlane.xlu0 %2301
        %v2303 = vmax.f32 %v2265, %v2266
        %2304 = vmax.xlane.f32.xlu0 %v2303
        %v2305 = vpop.xlane.xlu0 %2304
        %v2306 = vmax.f32 %v2267, %v2268
        %2307 = vmax.xlane.f32.xlu0 %v2306
        %v2308 = vpop.xlane.xlu0 %2307
        %v2309 = vmax.f32 %v2269, %v2270
        %2310 = vmax.xlane.f32.xlu0 %v2309
        %v2311 = vpop.xlane.xlu0 %2310
        %v2312 = vmax.f32 %v2271, %v2272
        %2313 = vmax.xlane.f32.xlu0 %v2312
        %v2314 = vpop.xlane.xlu0 %2313
        %v2315 = vmax.f32 %v2273, %v2274
        %2316 = vmax.xlane.f32.xlu0 %v2315
        %v2317 = vpop.xlane.xlu0 %2316
        %v2318 = vmax.f32 %v2275, %v2276
        %2319 = vmax.xlane.f32.xlu0 %v2318
        %v2320 = vpop.xlane.xlu0 %2319
        %v2321 = vmax.f32 %v2277, %v2278
        %2322 = vmax.xlane.f32.xlu0 %v2321
        %v2323 = vpop.xlane.xlu0 %2322
        %v2324 = vmax.f32 %v2279, %v2280
        %2325 = vmax.xlane.f32.xlu0 %v2324
        %v2326 = vpop.xlane.xlu0 %2325
        %v2327 = vmax.f32 %v2281, %v2282
        %2328 = vmax.xlane.f32.xlu0 %v2327
        %v2329 = vpop.xlane.xlu0 %2328
        %v2330 = vmax.f32 %v2283, %v2284
        %2331 = vmax.xlane.f32.xlu0 %v2330
        %v2332 = vpop.xlane.xlu0 %2331
        %v2333 = vsub.f32 %v2253, %v2287
        %v2334 = vsub.f32 %v2254, %v2287
        %v2335 = vsub.f32 %v2255, %v2290
        %v2336 = vsub.f32 %v2256, %v2290
        %v2337 = vsub.f32 %v2257, %v2293
        %v2338 = vsub.f32 %v2258, %v2293
        %v2339 = vsub.f32 %v2259, %v2296
        %v2340 = vsub.f32 %v2260, %v2296
        %v2341 = vsub.f32 %v2261, %v2299
        %v2342 = vsub.f32 %v2262, %v2299
        %v2343 = vsub.f32 %v2263, %v2302
        %v2344 = vsub.f32 %v2264, %v2302
        %v2345 = vsub.f32 %v2265, %v2305
        %v2346 = vsub.f32 %v2266, %v2305
        %v2347 = vsub.f32 %v2267, %v2308
        %v2348 = vsub.f32 %v2268, %v2308
        %v2349 = vsub.f32 %v2269, %v2311
        %v2350 = vsub.f32 %v2270, %v2311
        %v2351 = vsub.f32 %v2271, %v2314
        %v2352 = vsub.f32 %v2272, %v2314
        %v2353 = vsub.f32 %v2273, %v2317
        %v2354 = vsub.f32 %v2274, %v2317
        %v2355 = vsub.f32 %v2275, %v2320
        %v2356 = vsub.f32 %v2276, %v2320
        %v2357 = vsub.f32 %v2277, %v2323
        %v2358 = vsub.f32 %v2278, %v2323
        %v2359 = vsub.f32 %v2279, %v2326
        %v2360 = vsub.f32 %v2280, %v2326
        %v2361 = vsub.f32 %v2281, %v2329
        %v2362 = vsub.f32 %v2282, %v2329
        %v2363 = vsub.f32 %v2283, %v2332
        %v2364 = vsub.f32 %v2284, %v2332
        %v2365 = vmul.f32 %v2333, 1.442695
        %v2366 = vpow.pop %v2365
        %v2367 = vmul.f32 %v2334, 1.442695
        %v2368 = vpow.pop %v2367
        %v2369 = vmul.f32 %v2335, 1.442695
        %v2370 = vpow.pop %v2369
        %v2371 = vmul.f32 %v2336, 1.442695
        %v2372 = vpow.pop %v2371
        %v2373 = vmul.f32 %v2337, 1.442695
        %v2374 = vpow.pop %v2373
        %v2375 = vmul.f32 %v2338, 1.442695
        %v2376 = vpow.pop %v2375
        %v2377 = vmul.f32 %v2339, 1.442695
        %v2378 = vpow.pop %v2377
        %v2379 = vmul.f32 %v2340, 1.442695
        %v2380 = vpow.pop %v2379
        %v2381 = vmul.f32 %v2341, 1.442695
        %v2382 = vpow.pop %v2381
        %v2383 = vmul.f32 %v2342, 1.442695
        %v2384 = vpow.pop %v2383
        %v2385 = vmul.f32 %v2343, 1.442695
        %v2386 = vpow.pop %v2385
        %v2387 = vmul.f32 %v2344, 1.442695
        %v2388 = vpow.pop %v2387
        %v2389 = vmul.f32 %v2345, 1.442695
        %v2390 = vpow.pop %v2389
        %v2391 = vmul.f32 %v2346, 1.442695
        %v2392 = vpow.pop %v2391
        %v2393 = vmul.f32 %v2347, 1.442695
        %v2394 = vpow.pop %v2393
        %v2395 = vmul.f32 %v2348, 1.442695
        %v2396 = vpow.pop %v2395
        %v2397 = vmul.f32 %v2349, 1.442695
        %v2398 = vpow.pop %v2397
        %v2399 = vmul.f32 %v2350, 1.442695
        %v2400 = vpow.pop %v2399
        %v2401 = vmul.f32 %v2351, 1.442695
        %v2402 = vpow.pop %v2401
        %v2403 = vmul.f32 %v2352, 1.442695
        %v2404 = vpow.pop %v2403
        %v2405 = vmul.f32 %v2353, 1.442695
        %v2406 = vpow.pop %v2405
        %v2407 = vmul.f32 %v2354, 1.442695
        %v2408 = vpow.pop %v2407
        %v2409 = vmul.f32 %v2355, 1.442695
        %v2410 = vpow.pop %v2409
        %v2411 = vmul.f32 %v2356, 1.442695
        %v2412 = vpow.pop %v2411
        %v2413 = vmul.f32 %v2357, 1.442695
        %v2414 = vpow.pop %v2413
        %v2415 = vmul.f32 %v2358, 1.442695
        %v2416 = vpow.pop %v2415
        %v2417 = vmul.f32 %v2359, 1.442695
        %v2418 = vpow.pop %v2417
        %v2419 = vmul.f32 %v2360, 1.442695
        %v2420 = vpow.pop %v2419
        %v2421 = vmul.f32 %v2361, 1.442695
        %v2422 = vpow.pop %v2421
        %v2423 = vmul.f32 %v2362, 1.442695
        %v2424 = vpow.pop %v2423
        %v2425 = vmul.f32 %v2363, 1.442695
        %v2426 = vpow.pop %v2425
        %v2427 = vmul.f32 %v2364, 1.442695
        %v2428 = vpow.pop %v2427
        %v2429 = vadd.f32 %v2366, %v2368
        %2430 = vadd.xlane.f32.xlu0 %v2429
        %v2431 = vpop.xlane.xlu0 %2430
        %v2432 = vadd.f32 %v2370, %v2372
        %2433 = vadd.xlane.f32.xlu0 %v2432
        %v2434 = vpop.xlane.xlu0 %2433
        %v2435 = vadd.f32 %v2374, %v2376
        %2436 = vadd.xlane.f32.xlu0 %v2435
        %v2437 = vpop.xlane.xlu0 %2436
        %v2438 = vadd.f32 %v2378, %v2380
        %2439 = vadd.xlane.f32.xlu0 %v2438
        %v2440 = vpop.xlane.xlu0 %2439
        %v2441 = vadd.f32 %v2382, %v2384
        %2442 = vadd.xlane.f32.xlu0 %v2441
        %v2443 = vpop.xlane.xlu0 %2442
        %v2444 = vadd.f32 %v2386, %v2388
        %2445 = vadd.xlane.f32.xlu0 %v2444
        %v2446 = vpop.xlane.xlu0 %2445
        %v2447 = vadd.f32 %v2390, %v2392
        %2448 = vadd.xlane.f32.xlu0 %v2447
        %v2449 = vpop.xlane.xlu0 %2448
        %v2450 = vadd.f32 %v2394, %v2396
        %2451 = vadd.xlane.f32.xlu0 %v2450
        %v2452 = vpop.xlane.xlu0 %2451
        %v2453 = vadd.f32 %v2398, %v2400
        %2454 = vadd.xlane.f32.xlu0 %v2453
        %v2455 = vpop.xlane.xlu0 %2454
        %v2456 = vadd.f32 %v2402, %v2404
        %2457 = vadd.xlane.f32.xlu0 %v2456
        %v2458 = vpop.xlane.xlu0 %2457
        %v2459 = vadd.f32 %v2406, %v2408
        %2460 = vadd.xlane.f32.xlu0 %v2459
        %v2461 = vpop.xlane.xlu0 %2460
        %v2462 = vadd.f32 %v2410, %v2412
        %2463 = vadd.xlane.f32.xlu0 %v2462
        %v2464 = vpop.xlane.xlu0 %2463
        %v2465 = vadd.f32 %v2414, %v2416
        %2466 = vadd.xlane.f32.xlu0 %v2465
        %v2467 = vpop.xlane.xlu0 %2466
        %v2468 = vadd.f32 %v2418, %v2420
        %2469 = vadd.xlane.f32.xlu0 %v2468
        %v2470 = vpop.xlane.xlu0 %2469
        %v2471 = vadd.f32 %v2422, %v2424
        %2472 = vadd.xlane.f32.xlu0 %v2471
        %v2473 = vpop.xlane.xlu0 %2472
        %v2474 = vadd.f32 %v2426, %v2428
        %2475 = vadd.xlane.f32.xlu0 %v2474
        %v2476 = vpop.xlane.xlu0 %2475
        %v2477 = vrcp.pop %v2431
        %v2478 = vmul.f32 %v2431, %v2477
        %v2479 = vsub.f32 1.0, %v2478
        %v2480 = vmul.f32 %v2477, %v2479
        %v2481 = vadd.f32 %v2477, %v2480
        %vm2482 = vweird.f32 %v2431
        %vm2483 = vweird.f32 %v2477
        %vm2484 = vmor %vm2482, %vm2483
        %v2485 = vsel %vm2484, %v2477, %v2481
        %v2486 = vand.u32 2147483647, %v2431
        %vm2487 = vcmp.eq.f32.partialorder %v2486, 8.507059e+37
        %v2488 = vand.u32 %v2431, 2147483648
        %v2489 = vor.u32 1.1754944e-38, %v2488
        %v2490 = vsel %vm2487, %v2489, %v2485
        %v2491 = vmul.f32 %v2366, %v2490
        %v2492 = vmul.f32 %v2368, %v2490
        %v2493 = vrcp.pop %v2434
        %v2494 = vmul.f32 %v2434, %v2493
        %v2495 = vsub.f32 1.0, %v2494
        %v2496 = vmul.f32 %v2493, %v2495
        %v2497 = vadd.f32 %v2493, %v2496
        %vm2498 = vweird.f32 %v2434
        %vm2499 = vweird.f32 %v2493
        %vm2500 = vmor %vm2498, %vm2499
        %v2501 = vsel %vm2500, %v2493, %v2497
        %v2502 = vand.u32 2147483647, %v2434
        %vm2503 = vcmp.eq.f32.partialorder %v2502, 8.507059e+37
        %v2504 = vand.u32 %v2434, 2147483648
        %v2505 = vor.u32 1.1754944e-38, %v2504
        %v2506 = vsel %vm2503, %v2505, %v2501
        %v2507 = vmul.f32 %v2370, %v2506
        %v2508 = vmul.f32 %v2372, %v2506
        %v2509 = vrcp.pop %v2437
        %v2510 = vmul.f32 %v2437, %v2509
        %v2511 = vsub.f32 1.0, %v2510
        %v2512 = vmul.f32 %v2509, %v2511
        %v2513 = vadd.f32 %v2509, %v2512
        %vm2514 = vweird.f32 %v2437
        %vm2515 = vweird.f32 %v2509
        %vm2516 = vmor %vm2514, %vm2515
        %v2517 = vsel %vm2516, %v2509, %v2513
        %v2518 = vand.u32 2147483647, %v2437
        %vm2519 = vcmp.eq.f32.partialorder %v2518, 8.507059e+37
        %v2520 = vand.u32 %v2437, 2147483648
        %v2521 = vor.u32 1.1754944e-38, %v2520
        %v2522 = vsel %vm2519, %v2521, %v2517
        %v2523 = vmul.f32 %v2374, %v2522
        %v2524 = vmul.f32 %v2376, %v2522
        %v2525 = vrcp.pop %v2440
        %v2526 = vmul.f32 %v2440, %v2525
        %v2527 = vsub.f32 1.0, %v2526
        %v2528 = vmul.f32 %v2525, %v2527
        %v2529 = vadd.f32 %v2525, %v2528
        %vm2530 = vweird.f32 %v2440
        %vm2531 = vweird.f32 %v2525
        %vm2532 = vmor %vm2530, %vm2531
        %v2533 = vsel %vm2532, %v2525, %v2529
        %v2534 = vand.u32 2147483647, %v2440
        %vm2535 = vcmp.eq.f32.partialorder %v2534, 8.507059e+37
        %v2536 = vand.u32 %v2440, 2147483648
        %v2537 = vor.u32 1.1754944e-38, %v2536
        %v2538 = vsel %vm2535, %v2537, %v2533
        %v2539 = vmul.f32 %v2378, %v2538
        %v2540 = vmul.f32 %v2380, %v2538
        %v2541 = vrcp.pop %v2443
        %v2542 = vmul.f32 %v2443, %v2541
        %v2543 = vsub.f32 1.0, %v2542
        %v2544 = vmul.f32 %v2541, %v2543
        %v2545 = vadd.f32 %v2541, %v2544
        %vm2546 = vweird.f32 %v2443
        %vm2547 = vweird.f32 %v2541
        %vm2548 = vmor %vm2546, %vm2547
        %v2549 = vsel %vm2548, %v2541, %v2545
        %v2550 = vand.u32 2147483647, %v2443
        %vm2551 = vcmp.eq.f32.partialorder %v2550, 8.507059e+37
        %v2552 = vand.u32 %v2443, 2147483648
        %v2553 = vor.u32 1.1754944e-38, %v2552
        %v2554 = vsel %vm2551, %v2553, %v2549
        %v2555 = vmul.f32 %v2382, %v2554
        %v2556 = vmul.f32 %v2384, %v2554
        %v2557 = vrcp.pop %v2446
        %v2558 = vmul.f32 %v2446, %v2557
        %v2559 = vsub.f32 1.0, %v2558
        %v2560 = vmul.f32 %v2557, %v2559
        %v2561 = vadd.f32 %v2557, %v2560
        %vm2562 = vweird.f32 %v2446
        %vm2563 = vweird.f32 %v2557
        %vm2564 = vmor %vm2562, %vm2563
        %v2565 = vsel %vm2564, %v2557, %v2561
        %v2566 = vand.u32 2147483647, %v2446
        %vm2567 = vcmp.eq.f32.partialorder %v2566, 8.507059e+37
        %v2568 = vand.u32 %v2446, 2147483648
        %v2569 = vor.u32 1.1754944e-38, %v2568
        %v2570 = vsel %vm2567, %v2569, %v2565
        %v2571 = vmul.f32 %v2386, %v2570
        %v2572 = vmul.f32 %v2388, %v2570
        %v2573 = vrcp.pop %v2449
        %v2574 = vmul.f32 %v2449, %v2573
        %v2575 = vsub.f32 1.0, %v2574
        %v2576 = vmul.f32 %v2573, %v2575
        %v2577 = vadd.f32 %v2573, %v2576
        %vm2578 = vweird.f32 %v2449
        %vm2579 = vweird.f32 %v2573
        %vm2580 = vmor %vm2578, %vm2579
        %v2581 = vsel %vm2580, %v2573, %v2577
        %v2582 = vand.u32 2147483647, %v2449
        %vm2583 = vcmp.eq.f32.partialorder %v2582, 8.507059e+37
        %v2584 = vand.u32 %v2449, 2147483648
        %v2585 = vor.u32 1.1754944e-38, %v2584
        %v2586 = vsel %vm2583, %v2585, %v2581
        %v2587 = vmul.f32 %v2390, %v2586
        %v2588 = vmul.f32 %v2392, %v2586
        %v2589 = vrcp.pop %v2452
        %v2590 = vmul.f32 %v2452, %v2589
        %v2591 = vsub.f32 1.0, %v2590
        %v2592 = vmul.f32 %v2589, %v2591
        %v2593 = vadd.f32 %v2589, %v2592
        %vm2594 = vweird.f32 %v2452
        %vm2595 = vweird.f32 %v2589
        %vm2596 = vmor %vm2594, %vm2595
        %v2597 = vsel %vm2596, %v2589, %v2593
        %v2598 = vand.u32 2147483647, %v2452
        %vm2599 = vcmp.eq.f32.partialorder %v2598, 8.507059e+37
        %v2600 = vand.u32 %v2452, 2147483648
        %v2601 = vor.u32 1.1754944e-38, %v2600
        %v2602 = vsel %vm2599, %v2601, %v2597
        %v2603 = vmul.f32 %v2394, %v2602
        %v2604 = vmul.f32 %v2396, %v2602
        %v2605 = vrcp.pop %v2455
        %v2606 = vmul.f32 %v2455, %v2605
        %v2607 = vsub.f32 1.0, %v2606
        %v2608 = vmul.f32 %v2605, %v2607
        %v2609 = vadd.f32 %v2605, %v2608
        %vm2610 = vweird.f32 %v2455
        %vm2611 = vweird.f32 %v2605
        %vm2612 = vmor %vm2610, %vm2611
        %v2613 = vsel %vm2612, %v2605, %v2609
        %v2614 = vand.u32 2147483647, %v2455
        %vm2615 = vcmp.eq.f32.partialorder %v2614, 8.507059e+37
        %v2616 = vand.u32 %v2455, 2147483648
        %v2617 = vor.u32 1.1754944e-38, %v2616
        %v2618 = vsel %vm2615, %v2617, %v2613
        %v2619 = vmul.f32 %v2398, %v2618
        %v2620 = vmul.f32 %v2400, %v2618
        %v2621 = vrcp.pop %v2458
        %v2622 = vmul.f32 %v2458, %v2621
        %v2623 = vsub.f32 1.0, %v2622
        %v2624 = vmul.f32 %v2621, %v2623
        %v2625 = vadd.f32 %v2621, %v2624
        %vm2626 = vweird.f32 %v2458
        %vm2627 = vweird.f32 %v2621
        %vm2628 = vmor %vm2626, %vm2627
        %v2629 = vsel %vm2628, %v2621, %v2625
        %v2630 = vand.u32 2147483647, %v2458
        %vm2631 = vcmp.eq.f32.partialorder %v2630, 8.507059e+37
        %v2632 = vand.u32 %v2458, 2147483648
        %v2633 = vor.u32 1.1754944e-38, %v2632
        %v2634 = vsel %vm2631, %v2633, %v2629
        %v2635 = vmul.f32 %v2402, %v2634
        %v2636 = vmul.f32 %v2404, %v2634
        %v2637 = vrcp.pop %v2461
        %v2638 = vmul.f32 %v2461, %v2637
        %v2639 = vsub.f32 1.0, %v2638
        %v2640 = vmul.f32 %v2637, %v2639
        %v2641 = vadd.f32 %v2637, %v2640
        %vm2642 = vweird.f32 %v2461
        %vm2643 = vweird.f32 %v2637
        %vm2644 = vmor %vm2642, %vm2643
        %v2645 = vsel %vm2644, %v2637, %v2641
        %v2646 = vand.u32 2147483647, %v2461
        %vm2647 = vcmp.eq.f32.partialorder %v2646, 8.507059e+37
        %v2648 = vand.u32 %v2461, 2147483648
        %v2649 = vor.u32 1.1754944e-38, %v2648
        %v2650 = vsel %vm2647, %v2649, %v2645
        %v2651 = vmul.f32 %v2406, %v2650
        %v2652 = vmul.f32 %v2408, %v2650
        %v2653 = vrcp.pop %v2464
        %v2654 = vmul.f32 %v2464, %v2653
        %v2655 = vsub.f32 1.0, %v2654
        %v2656 = vmul.f32 %v2653, %v2655
        %v2657 = vadd.f32 %v2653, %v2656
        %vm2658 = vweird.f32 %v2464
        %vm2659 = vweird.f32 %v2653
        %vm2660 = vmor %vm2658, %vm2659
        %v2661 = vsel %vm2660, %v2653, %v2657
        %v2662 = vand.u32 2147483647, %v2464
        %vm2663 = vcmp.eq.f32.partialorder %v2662, 8.507059e+37
        %v2664 = vand.u32 %v2464, 2147483648
        %v2665 = vor.u32 1.1754944e-38, %v2664
        %v2666 = vsel %vm2663, %v2665, %v2661
        %v2667 = vmul.f32 %v2410, %v2666
        %v2668 = vmul.f32 %v2412, %v2666
        %v2669 = vrcp.pop %v2467
        %v2670 = vmul.f32 %v2467, %v2669
        %v2671 = vsub.f32 1.0, %v2670
        %v2672 = vmul.f32 %v2669, %v2671
        %v2673 = vadd.f32 %v2669, %v2672
        %vm2674 = vweird.f32 %v2467
        %vm2675 = vweird.f32 %v2669
        %vm2676 = vmor %vm2674, %vm2675
        %v2677 = vsel %vm2676, %v2669, %v2673
        %v2678 = vand.u32 2147483647, %v2467
        %vm2679 = vcmp.eq.f32.partialorder %v2678, 8.507059e+37
        %v2680 = vand.u32 %v2467, 2147483648
        %v2681 = vor.u32 1.1754944e-38, %v2680
        %v2682 = vsel %vm2679, %v2681, %v2677
        %v2683 = vmul.f32 %v2414, %v2682
        %v2684 = vmul.f32 %v2416, %v2682
        %v2685 = vrcp.pop %v2470
        %v2686 = vmul.f32 %v2470, %v2685
        %v2687 = vsub.f32 1.0, %v2686
        %v2688 = vmul.f32 %v2685, %v2687
        %v2689 = vadd.f32 %v2685, %v2688
        %vm2690 = vweird.f32 %v2470
        %vm2691 = vweird.f32 %v2685
        %vm2692 = vmor %vm2690, %vm2691
        %v2693 = vsel %vm2692, %v2685, %v2689
        %v2694 = vand.u32 2147483647, %v2470
        %vm2695 = vcmp.eq.f32.partialorder %v2694, 8.507059e+37
        %v2696 = vand.u32 %v2470, 2147483648
        %v2697 = vor.u32 1.1754944e-38, %v2696
        %v2698 = vsel %vm2695, %v2697, %v2693
        %v2699 = vmul.f32 %v2418, %v2698
        %v2700 = vmul.f32 %v2420, %v2698
        %v2701 = vrcp.pop %v2473
        %v2702 = vmul.f32 %v2473, %v2701
        %v2703 = vsub.f32 1.0, %v2702
        %v2704 = vmul.f32 %v2701, %v2703
        %v2705 = vadd.f32 %v2701, %v2704
        %vm2706 = vweird.f32 %v2473
        %vm2707 = vweird.f32 %v2701
        %vm2708 = vmor %vm2706, %vm2707
        %v2709 = vsel %vm2708, %v2701, %v2705
        %v2710 = vand.u32 2147483647, %v2473
        %vm2711 = vcmp.eq.f32.partialorder %v2710, 8.507059e+37
        %v2712 = vand.u32 %v2473, 2147483648
        %v2713 = vor.u32 1.1754944e-38, %v2712
        %v2714 = vsel %vm2711, %v2713, %v2709
        %v2715 = vmul.f32 %v2422, %v2714
        %v2716 = vmul.f32 %v2424, %v2714
        %v2717 = vrcp.pop %v2476
        %v2718 = vmul.f32 %v2476, %v2717
        %v2719 = vsub.f32 1.0, %v2718
        %v2720 = vmul.f32 %v2717, %v2719
        %v2721 = vadd.f32 %v2717, %v2720
        %vm2722 = vweird.f32 %v2476
        %vm2723 = vweird.f32 %v2717
        %vm2724 = vmor %vm2722, %vm2723
        %v2725 = vsel %vm2724, %v2717, %v2721
        %v2726 = vand.u32 2147483647, %v2476
        %vm2727 = vcmp.eq.f32.partialorder %v2726, 8.507059e+37
        %v2728 = vand.u32 %v2476, 2147483648
        %v2729 = vor.u32 1.1754944e-38, %v2728
        %v2730 = vsel %vm2727, %v2729, %v2725
        %v2731 = vmul.f32 %v2426, %v2730
        %v2732 = vmul.f32 %v2428, %v2730
        %2733 = vmatpush.xpose.msra.mxu0 %v2731
        %2734 = vmatpush.xpose.msra.mxu0 %v2715
        %2735 = vmatpush.xpose.msra.mxu0 %v2699
        %2736 = vmatpush.xpose.msra.mxu0 %v2683
        %2737 = vmatpush.xpose.msra.mxu0 %v2667
        %2738 = vmatpush.xpose.msra.mxu0 %v2651
        %2739 = vmatpush.xpose.msra.mxu0 %v2635
        %2740 = vmatpush.xpose.msra.mxu0 %v2619
        %2741 = vmatpush.xpose.msra.mxu0 %v2603
        %2742 = vmatpush.xpose.msra.mxu0 %v2587
        %2743 = vmatpush.xpose.msra.mxu0 %v2571
        %2744 = vmatpush.xpose.msra.mxu0 %v2555
        %2745 = vmatpush.xpose.msra.mxu0 %v2539
        %2746 = vmatpush.xpose.msra.mxu0 %v2523
        %2747 = vmatpush.xpose.msra.mxu0 %v2507
        %2748 = vmatpush.xpose.msra.mxu0 %v2491
        %2749 = vmatmul.f32.gmra.mxu0 %v1097
        %v2750 = vpop.f32.mrf.mxu0
        %v2751 = vadd.f32 0.0, %v2750
        %2752 = vmatmul.f32.gmra.mxu0 %v1100
        %v2753 = vpop.f32.mrf.mxu0
        %v2754 = vadd.f32 0.0, %v2753
        %2755 = vmatmul.f32.gmra.mxu0 %v1103
        %v2756 = vpop.f32.mrf.mxu0
        %v2757 = vadd.f32 0.0, %v2756
        %2758 = vmatmul.f32.gmra.mxu0 %v1106
        %v2759 = vpop.f32.mrf.mxu0
        %v2760 = vadd.f32 0.0, %v2759
        %2761 = vdwg.mxu0
        %2762 = vmatpush.xpose.msra.mxu0 %v2732
        %2763 = vmatpush.xpose.msra.mxu0 %v2716
        %2764 = vmatpush.xpose.msra.mxu0 %v2700
        %2765 = vmatpush.xpose.msra.mxu0 %v2684
        %2766 = vmatpush.xpose.msra.mxu0 %v2668
        %2767 = vmatpush.xpose.msra.mxu0 %v2652
        %2768 = vmatpush.xpose.msra.mxu0 %v2636
        %2769 = vmatpush.xpose.msra.mxu0 %v2620
        %2770 = vmatpush.xpose.msra.mxu0 %v2604
        %2771 = vmatpush.xpose.msra.mxu0 %v2588
        %2772 = vmatpush.xpose.msra.mxu0 %v2572
        %2773 = vmatpush.xpose.msra.mxu0 %v2556
        %2774 = vmatpush.xpose.msra.mxu0 %v2540
        %2775 = vmatpush.xpose.msra.mxu0 %v2524
        %2776 = vmatpush.xpose.msra.mxu0 %v2508
        %2777 = vmatpush.xpose.msra.mxu0 %v2492
        %2778 = vmatmul.f32.gmra.mxu0 %v1210
        %v2779 = vpop.f32.mrf.mxu0
        %v2780 = vadd.f32 %v2751, %v2779
        %2781 = vmatmul.f32.gmra.mxu0 %v1213
        %v2782 = vpop.f32.mrf.mxu0
        %v2783 = vadd.f32 %v2754, %v2782
        %2784 = vmatmul.f32.gmra.mxu0 %v1216
        %v2785 = vpop.f32.mrf.mxu0
        %v2786 = vadd.f32 %v2757, %v2785
        %2787 = vmatmul.f32.gmra.mxu0 %v1219
        %v2788 = vpop.f32.mrf.mxu0
        %v2789 = vadd.f32 %v2760, %v2788
        %2790 = vdwg.mxu0
        %s2791 = scalar_lea.vmem %s5, 4
        %v2792 = vld [vmem:[%s2791] sm:$0xf]
        %v2794 = vsel %vm1325, %v2792, 0
        %2796 = vmatpush.msra.mxu0 0.0
        %2797 = vmatpush.msra.mxu0 0.0
        %2798 = vmatpush.msra.mxu0 0.0
        %2799 = vmatpush.msra.mxu0 0.0
        %2800 = vmatpush.msra.mxu0 0.0
        %2801 = vmatpush.msra.mxu0 0.0
        %2802 = vmatpush.msra.mxu0 0.0
        %2803 = vmatpush.msra.mxu0 0.0
        %2804 = vmatpush.msra.mxu0 0.0
        %2805 = vmatpush.msra.mxu0 0.0
        %2806 = vmatpush.msra.mxu0 0.0
        %2807 = vmatpush.msra.mxu0 0.0
        %2808 = vmatpush.msra.mxu0 %v2789
        %2809 = vmatpush.msra.mxu0 %v2786
        %2810 = vmatpush.msra.mxu0 %v2783
        %2811 = vmatpush.msra.mxu0 %v2780
        %2812 = vmatmul.f32.gmra.mxu0 %v2794
        %v2813 = vpop.f32.mrf.mxu0
        %v2814 = vadd.f32 0.0, %v2813
        %2815 = vdwg.mxu0
        %v2817 = vsel %vm1325, %v2042, 0
        %2819 = vmatpush.msra.mxu0 0.0
        %2820 = vmatpush.msra.mxu0 0.0
        %2821 = vmatpush.msra.mxu0 0.0
        %2822 = vmatpush.msra.mxu0 0.0
        %2823 = vmatpush.msra.mxu0 0.0
        %2824 = vmatpush.msra.mxu0 0.0
        %2825 = vmatpush.msra.mxu0 0.0
        %2826 = vmatpush.msra.mxu0 0.0
        %2827 = vmatpush.msra.mxu0 0.0
        %2828 = vmatpush.msra.mxu0 0.0
        %2829 = vmatpush.msra.mxu0 0.0
        %2830 = vmatpush.msra.mxu0 0.0
        %2831 = vmatpush.msra.mxu0 %v2040
        %2832 = vmatpush.msra.mxu0 %v2037
        %2833 = vmatpush.msra.mxu0 %v2034
        %2834 = vmatpush.msra.mxu0 %v2031
        %2835 = vmatmul.f32.gmra.mxu0 %v2817
        %v2836 = vpop.f32.mrf.mxu0
        %v2837 = vadd.f32 %v2814, %v2836
        %2838 = vdwg.mxu0
        %2839 = vxpose.xlu0.b32.start [1/16] %v563, 128
        %2840 = vxpose.xlu0.b32.cont [2/16] %v566, 128
        %2841 = vxpose.xlu0.b32.cont [3/16] %v569, 128
        %2842 = vxpose.xlu0.b32.cont [4/16] %v572, 128
        %2843 = vxpose.xlu0.b32.cont [5/16] 0.0, 128
        %2844 = vxpose.xlu0.b32.cont [6/16] 0.0, 128
        %2845 = vxpose.xlu0.b32.cont [7/16] 0.0, 128
        %2846 = vxpose.xlu0.b32.cont [8/16] 0.0, 128
        %2847 = vxpose.xlu0.b32.cont [9/16] 0.0, 128
        %2848 = vxpose.xlu0.b32.cont [10/16] 0.0, 128
        %2849 = vxpose.xlu0.b32.cont [11/16] 0.0, 128
        %2850 = vxpose.xlu0.b32.cont [12/16] 0.0, 128
        %2851 = vxpose.xlu0.b32.cont [13/16] 0.0, 128
        %2852 = vxpose.xlu0.b32.cont [14/16] 0.0, 128
        %2853 = vxpose.xlu0.b32.cont [15/16] 0.0, 128
        %2854 = vxpose.xlu0.b32.end [16/16] 0.0, 128
        %v2855 = vpop.trf.xlu0
        %v2856 = vpop.trf.xlu0
        %v2857 = vpop.trf.xlu0
        %v2858 = vpop.trf.xlu0
        %v2859 = vpop.trf.xlu0
        %v2860 = vpop.trf.xlu0
        %v2861 = vpop.trf.xlu0
        %v2862 = vpop.trf.xlu0
        %v2863 = vpop.trf.xlu0
        %v2864 = vpop.trf.xlu0
        %v2865 = vpop.trf.xlu0
        %v2866 = vpop.trf.xlu0
        %v2867 = vpop.trf.xlu0
        %v2868 = vpop.trf.xlu0
        %v2869 = vpop.trf.xlu0
        %v2870 = vpop.trf.xlu0
        %v2872 = vsel %vm1325, %v2855, 0
        %v2875 = vsel %vm1325, %v2856, 0
        %v2878 = vsel %vm1325, %v2857, 0
        %v2881 = vsel %vm1325, %v2858, 0
        %v2884 = vsel %vm1325, %v2859, 0
        %v2887 = vsel %vm1325, %v2860, 0
        %v2890 = vsel %vm1325, %v2861, 0
        %v2893 = vsel %vm1325, %v2862, 0
        %v2896 = vsel %vm1325, %v2863, 0
        %v2899 = vsel %vm1325, %v2864, 0
        %v2902 = vsel %vm1325, %v2865, 0
        %v2905 = vsel %vm1325, %v2866, 0
        %v2908 = vsel %vm1325, %v2867, 0
        %v2911 = vsel %vm1325, %v2868, 0
        %v2914 = vsel %vm1325, %v2869, 0
        %v2917 = vsel %vm1325, %v2870, 0
        %2919 = vmatpush.msra.mxu0 0.0
        %2920 = vmatpush.msra.mxu0 0.0
        %2921 = vmatpush.msra.mxu0 0.0
        %2922 = vmatpush.msra.mxu0 0.0
        %2923 = vmatpush.msra.mxu0 0.0
        %2924 = vmatpush.msra.mxu0 0.0
        %2925 = vmatpush.msra.mxu0 0.0
        %2926 = vmatpush.msra.mxu0 0.0
        %2927 = vmatpush.msra.mxu0 0.0
        %2928 = vmatpush.msra.mxu0 0.0
        %2929 = vmatpush.msra.mxu0 0.0
        %2930 = vmatpush.msra.mxu0 0.0
        %2931 = vmatpush.msra.mxu0 %v789
        %2932 = vmatpush.msra.mxu0 %v786
        %2933 = vmatpush.msra.mxu0 %v783
        %2934 = vmatpush.msra.mxu0 %v780
        %2935 = vmatmul.f32.gmra.mxu0 %v2872
        %v2936 = vpop.f32.mrf.mxu0
        %v2937 = vadd.f32 0.0, %v2936
        %2938 = vmatmul.f32.gmra.mxu0 %v2875
        %v2939 = vpop.f32.mrf.mxu0
        %v2940 = vadd.f32 0.0, %v2939
        %2941 = vmatmul.f32.gmra.mxu0 %v2878
        %v2942 = vpop.f32.mrf.mxu0
        %v2943 = vadd.f32 0.0, %v2942
        %2944 = vmatmul.f32.gmra.mxu0 %v2881
        %v2945 = vpop.f32.mrf.mxu0
        %v2946 = vadd.f32 0.0, %v2945
        %2947 = vmatmul.f32.gmra.mxu0 %v2884
        %v2948 = vpop.f32.mrf.mxu0
        %v2949 = vadd.f32 0.0, %v2948
        %2950 = vmatmul.f32.gmra.mxu0 %v2887
        %v2951 = vpop.f32.mrf.mxu0
        %v2952 = vadd.f32 0.0, %v2951
        %2953 = vmatmul.f32.gmra.mxu0 %v2890
        %v2954 = vpop.f32.mrf.mxu0
        %v2955 = vadd.f32 0.0, %v2954
        %2956 = vmatmul.f32.gmra.mxu0 %v2893
        %v2957 = vpop.f32.mrf.mxu0
        %v2958 = vadd.f32 0.0, %v2957
        %2959 = vmatmul.f32.gmra.mxu0 %v2896
        %v2960 = vpop.f32.mrf.mxu0
        %v2961 = vadd.f32 0.0, %v2960
        %2962 = vmatmul.f32.gmra.mxu0 %v2899
        %v2963 = vpop.f32.mrf.mxu0
        %v2964 = vadd.f32 0.0, %v2963
        %2965 = vmatmul.f32.gmra.mxu0 %v2902
        %v2966 = vpop.f32.mrf.mxu0
        %v2967 = vadd.f32 0.0, %v2966
        %2968 = vmatmul.f32.gmra.mxu0 %v2905
        %v2969 = vpop.f32.mrf.mxu0
        %v2970 = vadd.f32 0.0, %v2969
        %2971 = vmatmul.f32.gmra.mxu0 %v2908
        %v2972 = vpop.f32.mrf.mxu0
        %v2973 = vadd.f32 0.0, %v2972
        %2974 = vmatmul.f32.gmra.mxu0 %v2911
        %v2975 = vpop.f32.mrf.mxu0
        %v2976 = vadd.f32 0.0, %v2975
        %2977 = vmatmul.f32.gmra.mxu0 %v2914
        %v2978 = vpop.f32.mrf.mxu0
        %v2979 = vadd.f32 0.0, %v2978
        %2980 = vmatmul.f32.gmra.mxu0 %v2917
        %v2981 = vpop.f32.mrf.mxu0
        %v2982 = vadd.f32 0.0, %v2981
        %2983 = vdwg.mxu0
        %2984 = vmatpush.msra.mxu0 0.0
        %2985 = vmatpush.msra.mxu0 0.0
        %2986 = vmatpush.msra.mxu0 0.0
        %2987 = vmatpush.msra.mxu0 0.0
        %2988 = vmatpush.msra.mxu0 0.0
        %2989 = vmatpush.msra.mxu0 0.0
        %2990 = vmatpush.msra.mxu0 0.0
        %2991 = vmatpush.msra.mxu0 0.0
        %2992 = vmatpush.msra.mxu0 0.0
        %2993 = vmatpush.msra.mxu0 0.0
        %2994 = vmatpush.msra.mxu0 0.0
        %2995 = vmatpush.msra.mxu0 0.0
        %2996 = vmatpush.msra.mxu0 %v902
        %2997 = vmatpush.msra.mxu0 %v899
        %2998 = vmatpush.msra.mxu0 %v896
        %2999 = vmatpush.msra.mxu0 %v893
        %3000 = vmatmul.f32.gmra.mxu0 %v2872
        %v3001 = vpop.f32.mrf.mxu0
        %v3002 = vadd.f32 0.0, %v3001
        %3003 = vmatmul.f32.gmra.mxu0 %v2875
        %v3004 = vpop.f32.mrf.mxu0
        %v3005 = vadd.f32 0.0, %v3004
        %3006 = vmatmul.f32.gmra.mxu0 %v2878
        %v3007 = vpop.f32.mrf.mxu0
        %v3008 = vadd.f32 0.0, %v3007
        %3009 = vmatmul.f32.gmra.mxu0 %v2881
        %v3010 = vpop.f32.mrf.mxu0
        %v3011 = vadd.f32 0.0, %v3010
        %3012 = vmatmul.f32.gmra.mxu0 %v2884
        %v3013 = vpop.f32.mrf.mxu0
        %v3014 = vadd.f32 0.0, %v3013
        %3015 = vmatmul.f32.gmra.mxu0 %v2887
        %v3016 = vpop.f32.mrf.mxu0
        %v3017 = vadd.f32 0.0, %v3016
        %3018 = vmatmul.f32.gmra.mxu0 %v2890
        %v3019 = vpop.f32.mrf.mxu0
        %v3020 = vadd.f32 0.0, %v3019
        %3021 = vmatmul.f32.gmra.mxu0 %v2893
        %v3022 = vpop.f32.mrf.mxu0
        %v3023 = vadd.f32 0.0, %v3022
        %3024 = vmatmul.f32.gmra.mxu0 %v2896
        %v3025 = vpop.f32.mrf.mxu0
        %v3026 = vadd.f32 0.0, %v3025
        %3027 = vmatmul.f32.gmra.mxu0 %v2899
        %v3028 = vpop.f32.mrf.mxu0
        %v3029 = vadd.f32 0.0, %v3028
        %3030 = vmatmul.f32.gmra.mxu0 %v2902
        %v3031 = vpop.f32.mrf.mxu0
        %v3032 = vadd.f32 0.0, %v3031
        %3033 = vmatmul.f32.gmra.mxu0 %v2905
        %v3034 = vpop.f32.mrf.mxu0
        %v3035 = vadd.f32 0.0, %v3034
        %3036 = vmatmul.f32.gmra.mxu0 %v2908
        %v3037 = vpop.f32.mrf.mxu0
        %v3038 = vadd.f32 0.0, %v3037
        %3039 = vmatmul.f32.gmra.mxu0 %v2911
        %v3040 = vpop.f32.mrf.mxu0
        %v3041 = vadd.f32 0.0, %v3040
        %3042 = vmatmul.f32.gmra.mxu0 %v2914
        %v3043 = vpop.f32.mrf.mxu0
        %v3044 = vadd.f32 0.0, %v3043
        %3045 = vmatmul.f32.gmra.mxu0 %v2917
        %v3046 = vpop.f32.mrf.mxu0
        %v3047 = vadd.f32 0.0, %v3046
        %3048 = vdwg.mxu0
        %v3049 = vmul.f32 %v2937, 0.17677669
        %v3050 = vmul.f32 %v3002, 0.17677669
        %v3051 = vmul.f32 %v2940, 0.17677669
        %v3052 = vmul.f32 %v3005, 0.17677669
        %v3053 = vmul.f32 %v2943, 0.17677669
        %v3054 = vmul.f32 %v3008, 0.17677669
        %v3055 = vmul.f32 %v2946, 0.17677669
        %v3056 = vmul.f32 %v3011, 0.17677669
        %v3057 = vmul.f32 %v2949, 0.17677669
        %v3058 = vmul.f32 %v3014, 0.17677669
        %v3059 = vmul.f32 %v2952, 0.17677669
        %v3060 = vmul.f32 %v3017, 0.17677669
        %v3061 = vmul.f32 %v2955, 0.17677669
        %v3062 = vmul.f32 %v3020, 0.17677669
        %v3063 = vmul.f32 %v2958, 0.17677669
        %v3064 = vmul.f32 %v3023, 0.17677669
        %v3065 = vmul.f32 %v2961, 0.17677669
        %v3066 = vmul.f32 %v3026, 0.17677669
        %v3067 = vmul.f32 %v2964, 0.17677669
        %v3068 = vmul.f32 %v3029, 0.17677669
        %v3069 = vmul.f32 %v2967, 0.17677669
        %v3070 = vmul.f32 %v3032, 0.17677669
        %v3071 = vmul.f32 %v2970, 0.17677669
        %v3072 = vmul.f32 %v3035, 0.17677669
        %v3073 = vmul.f32 %v2973, 0.17677669
        %v3074 = vmul.f32 %v3038, 0.17677669
        %v3075 = vmul.f32 %v2976, 0.17677669
        %v3076 = vmul.f32 %v3041, 0.17677669
        %v3077 = vmul.f32 %v2979, 0.17677669
        %v3078 = vmul.f32 %v3044, 0.17677669
        %v3079 = vmul.f32 %v2982, 0.17677669
        %v3080 = vmul.f32 %v3047, 0.17677669
        %v3081 = vmax.f32 %v3049, %v3050
        %3082 = vmax.xlane.f32.xlu0 %v3081
        %v3083 = vpop.xlane.xlu0 %3082
        %v3084 = vmax.f32 %v3051, %v3052
        %3085 = vmax.xlane.f32.xlu0 %v3084
        %v3086 = vpop.xlane.xlu0 %3085
        %v3087 = vmax.f32 %v3053, %v3054
        %3088 = vmax.xlane.f32.xlu0 %v3087
        %v3089 = vpop.xlane.xlu0 %3088
        %v3090 = vmax.f32 %v3055, %v3056
        %3091 = vmax.xlane.f32.xlu0 %v3090
        %v3092 = vpop.xlane.xlu0 %3091
        %v3093 = vmax.f32 %v3057, %v3058
        %3094 = vmax.xlane.f32.xlu0 %v3093
        %v3095 = vpop.xlane.xlu0 %3094
        %v3096 = vmax.f32 %v3059, %v3060
        %3097 = vmax.xlane.f32.xlu0 %v3096
        %v3098 = vpop.xlane.xlu0 %3097
        %v3099 = vmax.f32 %v3061, %v3062
        %3100 = vmax.xlane.f32.xlu0 %v3099
        %v3101 = vpop.xlane.xlu0 %3100
        %v3102 = vmax.f32 %v3063, %v3064
        %3103 = vmax.xlane.f32.xlu0 %v3102
        %v3104 = vpop.xlane.xlu0 %3103
        %v3105 = vmax.f32 %v3065, %v3066
        %3106 = vmax.xlane.f32.xlu0 %v3105
        %v3107 = vpop.xlane.xlu0 %3106
        %v3108 = vmax.f32 %v3067, %v3068
        %3109 = vmax.xlane.f32.xlu0 %v3108
        %v3110 = vpop.xlane.xlu0 %3109
        %v3111 = vmax.f32 %v3069, %v3070
        %3112 = vmax.xlane.f32.xlu0 %v3111
        %v3113 = vpop.xlane.xlu0 %3112
        %v3114 = vmax.f32 %v3071, %v3072
        %3115 = vmax.xlane.f32.xlu0 %v3114
        %v3116 = vpop.xlane.xlu0 %3115
        %v3117 = vmax.f32 %v3073, %v3074
        %3118 = vmax.xlane.f32.xlu0 %v3117
        %v3119 = vpop.xlane.xlu0 %3118
        %v3120 = vmax.f32 %v3075, %v3076
        %3121 = vmax.xlane.f32.xlu0 %v3120
        %v3122 = vpop.xlane.xlu0 %3121
        %v3123 = vmax.f32 %v3077, %v3078
        %3124 = vmax.xlane.f32.xlu0 %v3123
        %v3125 = vpop.xlane.xlu0 %3124
        %v3126 = vmax.f32 %v3079, %v3080
        %3127 = vmax.xlane.f32.xlu0 %v3126
        %v3128 = vpop.xlane.xlu0 %3127
        %v3129 = vsub.f32 %v3049, %v3083
        %v3130 = vsub.f32 %v3050, %v3083
        %v3131 = vsub.f32 %v3051, %v3086
        %v3132 = vsub.f32 %v3052, %v3086
        %v3133 = vsub.f32 %v3053, %v3089
        %v3134 = vsub.f32 %v3054, %v3089
        %v3135 = vsub.f32 %v3055, %v3092
        %v3136 = vsub.f32 %v3056, %v3092
        %v3137 = vsub.f32 %v3057, %v3095
        %v3138 = vsub.f32 %v3058, %v3095
        %v3139 = vsub.f32 %v3059, %v3098
        %v3140 = vsub.f32 %v3060, %v3098
        %v3141 = vsub.f32 %v3061, %v3101
        %v3142 = vsub.f32 %v3062, %v3101
        %v3143 = vsub.f32 %v3063, %v3104
        %v3144 = vsub.f32 %v3064, %v3104
        %v3145 = vsub.f32 %v3065, %v3107
        %v3146 = vsub.f32 %v3066, %v3107
        %v3147 = vsub.f32 %v3067, %v3110
        %v3148 = vsub.f32 %v3068, %v3110
        %v3149 = vsub.f32 %v3069, %v3113
        %v3150 = vsub.f32 %v3070, %v3113
        %v3151 = vsub.f32 %v3071, %v3116
        %v3152 = vsub.f32 %v3072, %v3116
        %v3153 = vsub.f32 %v3073, %v3119
        %v3154 = vsub.f32 %v3074, %v3119
        %v3155 = vsub.f32 %v3075, %v3122
        %v3156 = vsub.f32 %v3076, %v3122
        %v3157 = vsub.f32 %v3077, %v3125
        %v3158 = vsub.f32 %v3078, %v3125
        %v3159 = vsub.f32 %v3079, %v3128
        %v3160 = vsub.f32 %v3080, %v3128
        %v3161 = vmul.f32 %v3129, 1.442695
        %v3162 = vpow.pop %v3161
        %v3163 = vmul.f32 %v3130, 1.442695
        %v3164 = vpow.pop %v3163
        %v3165 = vmul.f32 %v3131, 1.442695
        %v3166 = vpow.pop %v3165
        %v3167 = vmul.f32 %v3132, 1.442695
        %v3168 = vpow.pop %v3167
        %v3169 = vmul.f32 %v3133, 1.442695
        %v3170 = vpow.pop %v3169
        %v3171 = vmul.f32 %v3134, 1.442695
        %v3172 = vpow.pop %v3171
        %v3173 = vmul.f32 %v3135, 1.442695
        %v3174 = vpow.pop %v3173
        %v3175 = vmul.f32 %v3136, 1.442695
        %v3176 = vpow.pop %v3175
        %v3177 = vmul.f32 %v3137, 1.442695
        %v3178 = vpow.pop %v3177
        %v3179 = vmul.f32 %v3138, 1.442695
        %v3180 = vpow.pop %v3179
        %v3181 = vmul.f32 %v3139, 1.442695
        %v3182 = vpow.pop %v3181
        %v3183 = vmul.f32 %v3140, 1.442695
        %v3184 = vpow.pop %v3183
        %v3185 = vmul.f32 %v3141, 1.442695
        %v3186 = vpow.pop %v3185
        %v3187 = vmul.f32 %v3142, 1.442695
        %v3188 = vpow.pop %v3187
        %v3189 = vmul.f32 %v3143, 1.442695
        %v3190 = vpow.pop %v3189
        %v3191 = vmul.f32 %v3144, 1.442695
        %v3192 = vpow.pop %v3191
        %v3193 = vmul.f32 %v3145, 1.442695
        %v3194 = vpow.pop %v3193
        %v3195 = vmul.f32 %v3146, 1.442695
        %v3196 = vpow.pop %v3195
        %v3197 = vmul.f32 %v3147, 1.442695
        %v3198 = vpow.pop %v3197
        %v3199 = vmul.f32 %v3148, 1.442695
        %v3200 = vpow.pop %v3199
        %v3201 = vmul.f32 %v3149, 1.442695
        %v3202 = vpow.pop %v3201
        %v3203 = vmul.f32 %v3150, 1.442695
        %v3204 = vpow.pop %v3203
        %v3205 = vmul.f32 %v3151, 1.442695
        %v3206 = vpow.pop %v3205
        %v3207 = vmul.f32 %v3152, 1.442695
        %v3208 = vpow.pop %v3207
        %v3209 = vmul.f32 %v3153, 1.442695
        %v3210 = vpow.pop %v3209
        %v3211 = vmul.f32 %v3154, 1.442695
        %v3212 = vpow.pop %v3211
        %v3213 = vmul.f32 %v3155, 1.442695
        %v3214 = vpow.pop %v3213
        %v3215 = vmul.f32 %v3156, 1.442695
        %v3216 = vpow.pop %v3215
        %v3217 = vmul.f32 %v3157, 1.442695
        %v3218 = vpow.pop %v3217
        %v3219 = vmul.f32 %v3158, 1.442695
        %v3220 = vpow.pop %v3219
        %v3221 = vmul.f32 %v3159, 1.442695
        %v3222 = vpow.pop %v3221
        %v3223 = vmul.f32 %v3160, 1.442695
        %v3224 = vpow.pop %v3223
        %v3225 = vadd.f32 %v3162, %v3164
        %3226 = vadd.xlane.f32.xlu0 %v3225
        %v3227 = vpop.xlane.xlu0 %3226
        %v3228 = vadd.f32 %v3166, %v3168
        %3229 = vadd.xlane.f32.xlu0 %v3228
        %v3230 = vpop.xlane.xlu0 %3229
        %v3231 = vadd.f32 %v3170, %v3172
        %3232 = vadd.xlane.f32.xlu0 %v3231
        %v3233 = vpop.xlane.xlu0 %3232
        %v3234 = vadd.f32 %v3174, %v3176
        %3235 = vadd.xlane.f32.xlu0 %v3234
        %v3236 = vpop.xlane.xlu0 %3235
        %v3237 = vadd.f32 %v3178, %v3180
        %3238 = vadd.xlane.f32.xlu0 %v3237
        %v3239 = vpop.xlane.xlu0 %3238
        %v3240 = vadd.f32 %v3182, %v3184
        %3241 = vadd.xlane.f32.xlu0 %v3240
        %v3242 = vpop.xlane.xlu0 %3241
        %v3243 = vadd.f32 %v3186, %v3188
        %3244 = vadd.xlane.f32.xlu0 %v3243
        %v3245 = vpop.xlane.xlu0 %3244
        %v3246 = vadd.f32 %v3190, %v3192
        %3247 = vadd.xlane.f32.xlu0 %v3246
        %v3248 = vpop.xlane.xlu0 %3247
        %v3249 = vadd.f32 %v3194, %v3196
        %3250 = vadd.xlane.f32.xlu0 %v3249
        %v3251 = vpop.xlane.xlu0 %3250
        %v3252 = vadd.f32 %v3198, %v3200
        %3253 = vadd.xlane.f32.xlu0 %v3252
        %v3254 = vpop.xlane.xlu0 %3253
        %v3255 = vadd.f32 %v3202, %v3204
        %3256 = vadd.xlane.f32.xlu0 %v3255
        %v3257 = vpop.xlane.xlu0 %3256
        %v3258 = vadd.f32 %v3206, %v3208
        %3259 = vadd.xlane.f32.xlu0 %v3258
        %v3260 = vpop.xlane.xlu0 %3259
        %v3261 = vadd.f32 %v3210, %v3212
        %3262 = vadd.xlane.f32.xlu0 %v3261
        %v3263 = vpop.xlane.xlu0 %3262
        %v3264 = vadd.f32 %v3214, %v3216
        %3265 = vadd.xlane.f32.xlu0 %v3264
        %v3266 = vpop.xlane.xlu0 %3265
        %v3267 = vadd.f32 %v3218, %v3220
        %3268 = vadd.xlane.f32.xlu0 %v3267
        %v3269 = vpop.xlane.xlu0 %3268
        %v3270 = vadd.f32 %v3222, %v3224
        %3271 = vadd.xlane.f32.xlu0 %v3270
        %v3272 = vpop.xlane.xlu0 %3271
        %v3273 = vrcp.pop %v3227
        %v3274 = vmul.f32 %v3227, %v3273
        %v3275 = vsub.f32 1.0, %v3274
        %v3276 = vmul.f32 %v3273, %v3275
        %v3277 = vadd.f32 %v3273, %v3276
        %vm3278 = vweird.f32 %v3227
        %vm3279 = vweird.f32 %v3273
        %vm3280 = vmor %vm3278, %vm3279
        %v3281 = vsel %vm3280, %v3273, %v3277
        %v3282 = vand.u32 2147483647, %v3227
        %vm3283 = vcmp.eq.f32.partialorder %v3282, 8.507059e+37
        %v3284 = vand.u32 %v3227, 2147483648
        %v3285 = vor.u32 1.1754944e-38, %v3284
        %v3286 = vsel %vm3283, %v3285, %v3281
        %v3287 = vmul.f32 %v3162, %v3286
        %v3288 = vmul.f32 %v3164, %v3286
        %v3289 = vrcp.pop %v3230
        %v3290 = vmul.f32 %v3230, %v3289
        %v3291 = vsub.f32 1.0, %v3290
        %v3292 = vmul.f32 %v3289, %v3291
        %v3293 = vadd.f32 %v3289, %v3292
        %vm3294 = vweird.f32 %v3230
        %vm3295 = vweird.f32 %v3289
        %vm3296 = vmor %vm3294, %vm3295
        %v3297 = vsel %vm3296, %v3289, %v3293
        %v3298 = vand.u32 2147483647, %v3230
        %vm3299 = vcmp.eq.f32.partialorder %v3298, 8.507059e+37
        %v3300 = vand.u32 %v3230, 2147483648
        %v3301 = vor.u32 1.1754944e-38, %v3300
        %v3302 = vsel %vm3299, %v3301, %v3297
        %v3303 = vmul.f32 %v3166, %v3302
        %v3304 = vmul.f32 %v3168, %v3302
        %v3305 = vrcp.pop %v3233
        %v3306 = vmul.f32 %v3233, %v3305
        %v3307 = vsub.f32 1.0, %v3306
        %v3308 = vmul.f32 %v3305, %v3307
        %v3309 = vadd.f32 %v3305, %v3308
        %vm3310 = vweird.f32 %v3233
        %vm3311 = vweird.f32 %v3305
        %vm3312 = vmor %vm3310, %vm3311
        %v3313 = vsel %vm3312, %v3305, %v3309
        %v3314 = vand.u32 2147483647, %v3233
        %vm3315 = vcmp.eq.f32.partialorder %v3314, 8.507059e+37
        %v3316 = vand.u32 %v3233, 2147483648
        %v3317 = vor.u32 1.1754944e-38, %v3316
        %v3318 = vsel %vm3315, %v3317, %v3313
        %v3319 = vmul.f32 %v3170, %v3318
        %v3320 = vmul.f32 %v3172, %v3318
        %v3321 = vrcp.pop %v3236
        %v3322 = vmul.f32 %v3236, %v3321
        %v3323 = vsub.f32 1.0, %v3322
        %v3324 = vmul.f32 %v3321, %v3323
        %v3325 = vadd.f32 %v3321, %v3324
        %vm3326 = vweird.f32 %v3236
        %vm3327 = vweird.f32 %v3321
        %vm3328 = vmor %vm3326, %vm3327
        %v3329 = vsel %vm3328, %v3321, %v3325
        %v3330 = vand.u32 2147483647, %v3236
        %vm3331 = vcmp.eq.f32.partialorder %v3330, 8.507059e+37
        %v3332 = vand.u32 %v3236, 2147483648
        %v3333 = vor.u32 1.1754944e-38, %v3332
        %v3334 = vsel %vm3331, %v3333, %v3329
        %v3335 = vmul.f32 %v3174, %v3334
        %v3336 = vmul.f32 %v3176, %v3334
        %v3337 = vrcp.pop %v3239
        %v3338 = vmul.f32 %v3239, %v3337
        %v3339 = vsub.f32 1.0, %v3338
        %v3340 = vmul.f32 %v3337, %v3339
        %v3341 = vadd.f32 %v3337, %v3340
        %vm3342 = vweird.f32 %v3239
        %vm3343 = vweird.f32 %v3337
        %vm3344 = vmor %vm3342, %vm3343
        %v3345 = vsel %vm3344, %v3337, %v3341
        %v3346 = vand.u32 2147483647, %v3239
        %vm3347 = vcmp.eq.f32.partialorder %v3346, 8.507059e+37
        %v3348 = vand.u32 %v3239, 2147483648
        %v3349 = vor.u32 1.1754944e-38, %v3348
        %v3350 = vsel %vm3347, %v3349, %v3345
        %v3351 = vmul.f32 %v3178, %v3350
        %v3352 = vmul.f32 %v3180, %v3350
        %v3353 = vrcp.pop %v3242
        %v3354 = vmul.f32 %v3242, %v3353
        %v3355 = vsub.f32 1.0, %v3354
        %v3356 = vmul.f32 %v3353, %v3355
        %v3357 = vadd.f32 %v3353, %v3356
        %vm3358 = vweird.f32 %v3242
        %vm3359 = vweird.f32 %v3353
        %vm3360 = vmor %vm3358, %vm3359
        %v3361 = vsel %vm3360, %v3353, %v3357
        %v3362 = vand.u32 2147483647, %v3242
        %vm3363 = vcmp.eq.f32.partialorder %v3362, 8.507059e+37
        %v3364 = vand.u32 %v3242, 2147483648
        %v3365 = vor.u32 1.1754944e-38, %v3364
        %v3366 = vsel %vm3363, %v3365, %v3361
        %v3367 = vmul.f32 %v3182, %v3366
        %v3368 = vmul.f32 %v3184, %v3366
        %v3369 = vrcp.pop %v3245
        %v3370 = vmul.f32 %v3245, %v3369
        %v3371 = vsub.f32 1.0, %v3370
        %v3372 = vmul.f32 %v3369, %v3371
        %v3373 = vadd.f32 %v3369, %v3372
        %vm3374 = vweird.f32 %v3245
        %vm3375 = vweird.f32 %v3369
        %vm3376 = vmor %vm3374, %vm3375
        %v3377 = vsel %vm3376, %v3369, %v3373
        %v3378 = vand.u32 2147483647, %v3245
        %vm3379 = vcmp.eq.f32.partialorder %v3378, 8.507059e+37
        %v3380 = vand.u32 %v3245, 2147483648
        %v3381 = vor.u32 1.1754944e-38, %v3380
        %v3382 = vsel %vm3379, %v3381, %v3377
        %v3383 = vmul.f32 %v3186, %v3382
        %v3384 = vmul.f32 %v3188, %v3382
        %v3385 = vrcp.pop %v3248
        %v3386 = vmul.f32 %v3248, %v3385
        %v3387 = vsub.f32 1.0, %v3386
        %v3388 = vmul.f32 %v3385, %v3387
        %v3389 = vadd.f32 %v3385, %v3388
        %vm3390 = vweird.f32 %v3248
        %vm3391 = vweird.f32 %v3385
        %vm3392 = vmor %vm3390, %vm3391
        %v3393 = vsel %vm3392, %v3385, %v3389
        %v3394 = vand.u32 2147483647, %v3248
        %vm3395 = vcmp.eq.f32.partialorder %v3394, 8.507059e+37
        %v3396 = vand.u32 %v3248, 2147483648
        %v3397 = vor.u32 1.1754944e-38, %v3396
        %v3398 = vsel %vm3395, %v3397, %v3393
        %v3399 = vmul.f32 %v3190, %v3398
        %v3400 = vmul.f32 %v3192, %v3398
        %v3401 = vrcp.pop %v3251
        %v3402 = vmul.f32 %v3251, %v3401
        %v3403 = vsub.f32 1.0, %v3402
        %v3404 = vmul.f32 %v3401, %v3403
        %v3405 = vadd.f32 %v3401, %v3404
        %vm3406 = vweird.f32 %v3251
        %vm3407 = vweird.f32 %v3401
        %vm3408 = vmor %vm3406, %vm3407
        %v3409 = vsel %vm3408, %v3401, %v3405
        %v3410 = vand.u32 2147483647, %v3251
        %vm3411 = vcmp.eq.f32.partialorder %v3410, 8.507059e+37
        %v3412 = vand.u32 %v3251, 2147483648
        %v3413 = vor.u32 1.1754944e-38, %v3412
        %v3414 = vsel %vm3411, %v3413, %v3409
        %v3415 = vmul.f32 %v3194, %v3414
        %v3416 = vmul.f32 %v3196, %v3414
        %v3417 = vrcp.pop %v3254
        %v3418 = vmul.f32 %v3254, %v3417
        %v3419 = vsub.f32 1.0, %v3418
        %v3420 = vmul.f32 %v3417, %v3419
        %v3421 = vadd.f32 %v3417, %v3420
        %vm3422 = vweird.f32 %v3254
        %vm3423 = vweird.f32 %v3417
        %vm3424 = vmor %vm3422, %vm3423
        %v3425 = vsel %vm3424, %v3417, %v3421
        %v3426 = vand.u32 2147483647, %v3254
        %vm3427 = vcmp.eq.f32.partialorder %v3426, 8.507059e+37
        %v3428 = vand.u32 %v3254, 2147483648
        %v3429 = vor.u32 1.1754944e-38, %v3428
        %v3430 = vsel %vm3427, %v3429, %v3425
        %v3431 = vmul.f32 %v3198, %v3430
        %v3432 = vmul.f32 %v3200, %v3430
        %v3433 = vrcp.pop %v3257
        %v3434 = vmul.f32 %v3257, %v3433
        %v3435 = vsub.f32 1.0, %v3434
        %v3436 = vmul.f32 %v3433, %v3435
        %v3437 = vadd.f32 %v3433, %v3436
        %vm3438 = vweird.f32 %v3257
        %vm3439 = vweird.f32 %v3433
        %vm3440 = vmor %vm3438, %vm3439
        %v3441 = vsel %vm3440, %v3433, %v3437
        %v3442 = vand.u32 2147483647, %v3257
        %vm3443 = vcmp.eq.f32.partialorder %v3442, 8.507059e+37
        %v3444 = vand.u32 %v3257, 2147483648
        %v3445 = vor.u32 1.1754944e-38, %v3444
        %v3446 = vsel %vm3443, %v3445, %v3441
        %v3447 = vmul.f32 %v3202, %v3446
        %v3448 = vmul.f32 %v3204, %v3446
        %v3449 = vrcp.pop %v3260
        %v3450 = vmul.f32 %v3260, %v3449
        %v3451 = vsub.f32 1.0, %v3450
        %v3452 = vmul.f32 %v3449, %v3451
        %v3453 = vadd.f32 %v3449, %v3452
        %vm3454 = vweird.f32 %v3260
        %vm3455 = vweird.f32 %v3449
        %vm3456 = vmor %vm3454, %vm3455
        %v3457 = vsel %vm3456, %v3449, %v3453
        %v3458 = vand.u32 2147483647, %v3260
        %vm3459 = vcmp.eq.f32.partialorder %v3458, 8.507059e+37
        %v3460 = vand.u32 %v3260, 2147483648
        %v3461 = vor.u32 1.1754944e-38, %v3460
        %v3462 = vsel %vm3459, %v3461, %v3457
        %v3463 = vmul.f32 %v3206, %v3462
        %v3464 = vmul.f32 %v3208, %v3462
        %v3465 = vrcp.pop %v3263
        %v3466 = vmul.f32 %v3263, %v3465
        %v3467 = vsub.f32 1.0, %v3466
        %v3468 = vmul.f32 %v3465, %v3467
        %v3469 = vadd.f32 %v3465, %v3468
        %vm3470 = vweird.f32 %v3263
        %vm3471 = vweird.f32 %v3465
        %vm3472 = vmor %vm3470, %vm3471
        %v3473 = vsel %vm3472, %v3465, %v3469
        %v3474 = vand.u32 2147483647, %v3263
        %vm3475 = vcmp.eq.f32.partialorder %v3474, 8.507059e+37
        %v3476 = vand.u32 %v3263, 2147483648
        %v3477 = vor.u32 1.1754944e-38, %v3476
        %v3478 = vsel %vm3475, %v3477, %v3473
        %v3479 = vmul.f32 %v3210, %v3478
        %v3480 = vmul.f32 %v3212, %v3478
        %v3481 = vrcp.pop %v3266
        %v3482 = vmul.f32 %v3266, %v3481
        %v3483 = vsub.f32 1.0, %v3482
        %v3484 = vmul.f32 %v3481, %v3483
        %v3485 = vadd.f32 %v3481, %v3484
        %vm3486 = vweird.f32 %v3266
        %vm3487 = vweird.f32 %v3481
        %vm3488 = vmor %vm3486, %vm3487
        %v3489 = vsel %vm3488, %v3481, %v3485
        %v3490 = vand.u32 2147483647, %v3266
        %vm3491 = vcmp.eq.f32.partialorder %v3490, 8.507059e+37
        %v3492 = vand.u32 %v3266, 2147483648
        %v3493 = vor.u32 1.1754944e-38, %v3492
        %v3494 = vsel %vm3491, %v3493, %v3489
        %v3495 = vmul.f32 %v3214, %v3494
        %v3496 = vmul.f32 %v3216, %v3494
        %v3497 = vrcp.pop %v3269
        %v3498 = vmul.f32 %v3269, %v3497
        %v3499 = vsub.f32 1.0, %v3498
        %v3500 = vmul.f32 %v3497, %v3499
        %v3501 = vadd.f32 %v3497, %v3500
        %vm3502 = vweird.f32 %v3269
        %vm3503 = vweird.f32 %v3497
        %vm3504 = vmor %vm3502, %vm3503
        %v3505 = vsel %vm3504, %v3497, %v3501
        %v3506 = vand.u32 2147483647, %v3269
        %vm3507 = vcmp.eq.f32.partialorder %v3506, 8.507059e+37
        %v3508 = vand.u32 %v3269, 2147483648
        %v3509 = vor.u32 1.1754944e-38, %v3508
        %v3510 = vsel %vm3507, %v3509, %v3505
        %v3511 = vmul.f32 %v3218, %v3510
        %v3512 = vmul.f32 %v3220, %v3510
        %v3513 = vrcp.pop %v3272
        %v3514 = vmul.f32 %v3272, %v3513
        %v3515 = vsub.f32 1.0, %v3514
        %v3516 = vmul.f32 %v3513, %v3515
        %v3517 = vadd.f32 %v3513, %v3516
        %vm3518 = vweird.f32 %v3272
        %vm3519 = vweird.f32 %v3513
        %vm3520 = vmor %vm3518, %vm3519
        %v3521 = vsel %vm3520, %v3513, %v3517
        %v3522 = vand.u32 2147483647, %v3272
        %vm3523 = vcmp.eq.f32.partialorder %v3522, 8.507059e+37
        %v3524 = vand.u32 %v3272, 2147483648
        %v3525 = vor.u32 1.1754944e-38, %v3524
        %v3526 = vsel %vm3523, %v3525, %v3521
        %v3527 = vmul.f32 %v3222, %v3526
        %v3528 = vmul.f32 %v3224, %v3526
        %3529 = vmatpush.xpose.msra.mxu0 %v3527
        %3530 = vmatpush.xpose.msra.mxu0 %v3511
        %3531 = vmatpush.xpose.msra.mxu0 %v3495
        %3532 = vmatpush.xpose.msra.mxu0 %v3479
        %3533 = vmatpush.xpose.msra.mxu0 %v3463
        %3534 = vmatpush.xpose.msra.mxu0 %v3447
        %3535 = vmatpush.xpose.msra.mxu0 %v3431
        %3536 = vmatpush.xpose.msra.mxu0 %v3415
        %3537 = vmatpush.xpose.msra.mxu0 %v3399
        %3538 = vmatpush.xpose.msra.mxu0 %v3383
        %3539 = vmatpush.xpose.msra.mxu0 %v3367
        %3540 = vmatpush.xpose.msra.mxu0 %v3351
        %3541 = vmatpush.xpose.msra.mxu0 %v3335
        %3542 = vmatpush.xpose.msra.mxu0 %v3319
        %3543 = vmatpush.xpose.msra.mxu0 %v3303
        %3544 = vmatpush.xpose.msra.mxu0 %v3287
        %3545 = vmatmul.f32.gmra.mxu0 %v1109
        %v3546 = vpop.f32.mrf.mxu0
        %v3547 = vadd.f32 0.0, %v3546
        %3548 = vmatmul.f32.gmra.mxu0 %v1112
        %v3549 = vpop.f32.mrf.mxu0
        %v3550 = vadd.f32 0.0, %v3549
        %3551 = vmatmul.f32.gmra.mxu0 %v1115
        %v3552 = vpop.f32.mrf.mxu0
        %v3553 = vadd.f32 0.0, %v3552
        %3554 = vmatmul.f32.gmra.mxu0 %v1118
        %v3555 = vpop.f32.mrf.mxu0
        %v3556 = vadd.f32 0.0, %v3555
        %3557 = vdwg.mxu0
        %3558 = vmatpush.xpose.msra.mxu0 %v3528
        %3559 = vmatpush.xpose.msra.mxu0 %v3512
        %3560 = vmatpush.xpose.msra.mxu0 %v3496
        %3561 = vmatpush.xpose.msra.mxu0 %v3480
        %3562 = vmatpush.xpose.msra.mxu0 %v3464
        %3563 = vmatpush.xpose.msra.mxu0 %v3448
        %3564 = vmatpush.xpose.msra.mxu0 %v3432
        %3565 = vmatpush.xpose.msra.mxu0 %v3416
        %3566 = vmatpush.xpose.msra.mxu0 %v3400
        %3567 = vmatpush.xpose.msra.mxu0 %v3384
        %3568 = vmatpush.xpose.msra.mxu0 %v3368
        %3569 = vmatpush.xpose.msra.mxu0 %v3352
        %3570 = vmatpush.xpose.msra.mxu0 %v3336
        %3571 = vmatpush.xpose.msra.mxu0 %v3320
        %3572 = vmatpush.xpose.msra.mxu0 %v3304
        %3573 = vmatpush.xpose.msra.mxu0 %v3288
        %3574 = vmatmul.f32.gmra.mxu0 %v1222
        %v3575 = vpop.f32.mrf.mxu0
        %v3576 = vadd.f32 %v3547, %v3575
        %3577 = vmatmul.f32.gmra.mxu0 %v1225
        %v3578 = vpop.f32.mrf.mxu0
        %v3579 = vadd.f32 %v3550, %v3578
        %3580 = vmatmul.f32.gmra.mxu0 %v1228
        %v3581 = vpop.f32.mrf.mxu0
        %v3582 = vadd.f32 %v3553, %v3581
        %3583 = vmatmul.f32.gmra.mxu0 %v1231
        %v3584 = vpop.f32.mrf.mxu0
        %v3585 = vadd.f32 %v3556, %v3584
        %3586 = vdwg.mxu0
        %s3587 = scalar_lea.vmem %s5, 8
        %v3588 = vld [vmem:[%s3587] sm:$0xf]
        %v3590 = vsel %vm1325, %v3588, 0
        %3592 = vmatpush.msra.mxu0 0.0
        %3593 = vmatpush.msra.mxu0 0.0
        %3594 = vmatpush.msra.mxu0 0.0
        %3595 = vmatpush.msra.mxu0 0.0
        %3596 = vmatpush.msra.mxu0 0.0
        %3597 = vmatpush.msra.mxu0 0.0
        %3598 = vmatpush.msra.mxu0 0.0
        %3599 = vmatpush.msra.mxu0 0.0
        %3600 = vmatpush.msra.mxu0 0.0
        %3601 = vmatpush.msra.mxu0 0.0
        %3602 = vmatpush.msra.mxu0 0.0
        %3603 = vmatpush.msra.mxu0 0.0
        %3604 = vmatpush.msra.mxu0 %v3585
        %3605 = vmatpush.msra.mxu0 %v3582
        %3606 = vmatpush.msra.mxu0 %v3579
        %3607 = vmatpush.msra.mxu0 %v3576
        %3608 = vmatmul.f32.gmra.mxu0 %v3590
        %v3609 = vpop.f32.mrf.mxu0
        %v3610 = vadd.f32 0.0, %v3609
        %3611 = vdwg.mxu0
        %v3612 = vadd.f32 %v2837, %v3610
        %3613 = vxpose.xlu0.b32.start [1/16] %v575, 128
        %3614 = vxpose.xlu0.b32.cont [2/16] %v578, 128
        %3615 = vxpose.xlu0.b32.cont [3/16] %v581, 128
        %3616 = vxpose.xlu0.b32.cont [4/16] %v584, 128
        %3617 = vxpose.xlu0.b32.cont [5/16] 0.0, 128
        %3618 = vxpose.xlu0.b32.cont [6/16] 0.0, 128
        %3619 = vxpose.xlu0.b32.cont [7/16] 0.0, 128
        %3620 = vxpose.xlu0.b32.cont [8/16] 0.0, 128
        %3621 = vxpose.xlu0.b32.cont [9/16] 0.0, 128
        %3622 = vxpose.xlu0.b32.cont [10/16] 0.0, 128
        %3623 = vxpose.xlu0.b32.cont [11/16] 0.0, 128
        %3624 = vxpose.xlu0.b32.cont [12/16] 0.0, 128
        %3625 = vxpose.xlu0.b32.cont [13/16] 0.0, 128
        %3626 = vxpose.xlu0.b32.cont [14/16] 0.0, 128
        %3627 = vxpose.xlu0.b32.cont [15/16] 0.0, 128
        %3628 = vxpose.xlu0.b32.end [16/16] 0.0, 128
        %v3629 = vpop.trf.xlu0
        %v3630 = vpop.trf.xlu0
        %v3631 = vpop.trf.xlu0
        %v3632 = vpop.trf.xlu0
        %v3633 = vpop.trf.xlu0
        %v3634 = vpop.trf.xlu0
        %v3635 = vpop.trf.xlu0
        %v3636 = vpop.trf.xlu0
        %v3637 = vpop.trf.xlu0
        %v3638 = vpop.trf.xlu0
        %v3639 = vpop.trf.xlu0
        %v3640 = vpop.trf.xlu0
        %v3641 = vpop.trf.xlu0
        %v3642 = vpop.trf.xlu0
        %v3643 = vpop.trf.xlu0
        %v3644 = vpop.trf.xlu0
        %v3646 = vsel %vm1325, %v3629, 0
        %v3649 = vsel %vm1325, %v3630, 0
        %v3652 = vsel %vm1325, %v3631, 0
        %v3655 = vsel %vm1325, %v3632, 0
        %v3658 = vsel %vm1325, %v3633, 0
        %v3661 = vsel %vm1325, %v3634, 0
        %v3664 = vsel %vm1325, %v3635, 0
        %v3667 = vsel %vm1325, %v3636, 0
        %v3670 = vsel %vm1325, %v3637, 0
        %v3673 = vsel %vm1325, %v3638, 0
        %v3676 = vsel %vm1325, %v3639, 0
        %v3679 = vsel %vm1325, %v3640, 0
        %v3682 = vsel %vm1325, %v3641, 0
        %v3685 = vsel %vm1325, %v3642, 0
        %v3688 = vsel %vm1325, %v3643, 0
        %v3691 = vsel %vm1325, %v3644, 0
        %3693 = vmatpush.msra.mxu0 0.0
        %3694 = vmatpush.msra.mxu0 0.0
        %3695 = vmatpush.msra.mxu0 0.0
        %3696 = vmatpush.msra.mxu0 0.0
        %3697 = vmatpush.msra.mxu0 0.0
        %3698 = vmatpush.msra.mxu0 0.0
        %3699 = vmatpush.msra.mxu0 0.0
        %3700 = vmatpush.msra.mxu0 0.0
        %3701 = vmatpush.msra.mxu0 0.0
        %3702 = vmatpush.msra.mxu0 0.0
        %3703 = vmatpush.msra.mxu0 0.0
        %3704 = vmatpush.msra.mxu0 0.0
        %3705 = vmatpush.msra.mxu0 %v801
        %3706 = vmatpush.msra.mxu0 %v798
        %3707 = vmatpush.msra.mxu0 %v795
        %3708 = vmatpush.msra.mxu0 %v792
        %3709 = vmatmul.f32.gmra.mxu0 %v3646
        %v3710 = vpop.f32.mrf.mxu0
        %v3711 = vadd.f32 0.0, %v3710
        %3712 = vmatmul.f32.gmra.mxu0 %v3649
        %v3713 = vpop.f32.mrf.mxu0
        %v3714 = vadd.f32 0.0, %v3713
        %3715 = vmatmul.f32.gmra.mxu0 %v3652
        %v3716 = vpop.f32.mrf.mxu0
        %v3717 = vadd.f32 0.0, %v3716
        %3718 = vmatmul.f32.gmra.mxu0 %v3655
        %v3719 = vpop.f32.mrf.mxu0
        %v3720 = vadd.f32 0.0, %v3719
        %3721 = vmatmul.f32.gmra.mxu0 %v3658
        %v3722 = vpop.f32.mrf.mxu0
        %v3723 = vadd.f32 0.0, %v3722
        %3724 = vmatmul.f32.gmra.mxu0 %v3661
        %v3725 = vpop.f32.mrf.mxu0
        %v3726 = vadd.f32 0.0, %v3725
        %3727 = vmatmul.f32.gmra.mxu0 %v3664
        %v3728 = vpop.f32.mrf.mxu0
        %v3729 = vadd.f32 0.0, %v3728
        %3730 = vmatmul.f32.gmra.mxu0 %v3667
        %v3731 = vpop.f32.mrf.mxu0
        %v3732 = vadd.f32 0.0, %v3731
        %3733 = vmatmul.f32.gmra.mxu0 %v3670
        %v3734 = vpop.f32.mrf.mxu0
        %v3735 = vadd.f32 0.0, %v3734
        %3736 = vmatmul.f32.gmra.mxu0 %v3673
        %v3737 = vpop.f32.mrf.mxu0
        %v3738 = vadd.f32 0.0, %v3737
        %3739 = vmatmul.f32.gmra.mxu0 %v3676
        %v3740 = vpop.f32.mrf.mxu0
        %v3741 = vadd.f32 0.0, %v3740
        %3742 = vmatmul.f32.gmra.mxu0 %v3679
        %v3743 = vpop.f32.mrf.mxu0
        %v3744 = vadd.f32 0.0, %v3743
        %3745 = vmatmul.f32.gmra.mxu0 %v3682
        %v3746 = vpop.f32.mrf.mxu0
        %v3747 = vadd.f32 0.0, %v3746
        %3748 = vmatmul.f32.gmra.mxu0 %v3685
        %v3749 = vpop.f32.mrf.mxu0
        %v3750 = vadd.f32 0.0, %v3749
        %3751 = vmatmul.f32.gmra.mxu0 %v3688
        %v3752 = vpop.f32.mrf.mxu0
        %v3753 = vadd.f32 0.0, %v3752
        %3754 = vmatmul.f32.gmra.mxu0 %v3691
        %v3755 = vpop.f32.mrf.mxu0
        %v3756 = vadd.f32 0.0, %v3755
        %3757 = vdwg.mxu0
        %3758 = vmatpush.msra.mxu0 0.0
        %3759 = vmatpush.msra.mxu0 0.0
        %3760 = vmatpush.msra.mxu0 0.0
        %3761 = vmatpush.msra.mxu0 0.0
        %3762 = vmatpush.msra.mxu0 0.0
        %3763 = vmatpush.msra.mxu0 0.0
        %3764 = vmatpush.msra.mxu0 0.0
        %3765 = vmatpush.msra.mxu0 0.0
        %3766 = vmatpush.msra.mxu0 0.0
        %3767 = vmatpush.msra.mxu0 0.0
        %3768 = vmatpush.msra.mxu0 0.0
        %3769 = vmatpush.msra.mxu0 0.0
        %3770 = vmatpush.msra.mxu0 %v914
        %3771 = vmatpush.msra.mxu0 %v911
        %3772 = vmatpush.msra.mxu0 %v908
        %3773 = vmatpush.msra.mxu0 %v905
        %3774 = vmatmul.f32.gmra.mxu0 %v3646
        %v3775 = vpop.f32.mrf.mxu0
        %v3776 = vadd.f32 0.0, %v3775
        %3777 = vmatmul.f32.gmra.mxu0 %v3649
        %v3778 = vpop.f32.mrf.mxu0
        %v3779 = vadd.f32 0.0, %v3778
        %3780 = vmatmul.f32.gmra.mxu0 %v3652
        %v3781 = vpop.f32.mrf.mxu0
        %v3782 = vadd.f32 0.0, %v3781
        %3783 = vmatmul.f32.gmra.mxu0 %v3655
        %v3784 = vpop.f32.mrf.mxu0
        %v3785 = vadd.f32 0.0, %v3784
        %3786 = vmatmul.f32.gmra.mxu0 %v3658
        %v3787 = vpop.f32.mrf.mxu0
        %v3788 = vadd.f32 0.0, %v3787
        %3789 = vmatmul.f32.gmra.mxu0 %v3661
        %v3790 = vpop.f32.mrf.mxu0
        %v3791 = vadd.f32 0.0, %v3790
        %3792 = vmatmul.f32.gmra.mxu0 %v3664
        %v3793 = vpop.f32.mrf.mxu0
        %v3794 = vadd.f32 0.0, %v3793
        %3795 = vmatmul.f32.gmra.mxu0 %v3667
        %v3796 = vpop.f32.mrf.mxu0
        %v3797 = vadd.f32 0.0, %v3796
        %3798 = vmatmul.f32.gmra.mxu0 %v3670
        %v3799 = vpop.f32.mrf.mxu0
        %v3800 = vadd.f32 0.0, %v3799
        %3801 = vmatmul.f32.gmra.mxu0 %v3673
        %v3802 = vpop.f32.mrf.mxu0
        %v3803 = vadd.f32 0.0, %v3802
        %3804 = vmatmul.f32.gmra.mxu0 %v3676
        %v3805 = vpop.f32.mrf.mxu0
        %v3806 = vadd.f32 0.0, %v3805
        %3807 = vmatmul.f32.gmra.mxu0 %v3679
        %v3808 = vpop.f32.mrf.mxu0
        %v3809 = vadd.f32 0.0, %v3808
        %3810 = vmatmul.f32.gmra.mxu0 %v3682
        %v3811 = vpop.f32.mrf.mxu0
        %v3812 = vadd.f32 0.0, %v3811
        %3813 = vmatmul.f32.gmra.mxu0 %v3685
        %v3814 = vpop.f32.mrf.mxu0
        %v3815 = vadd.f32 0.0, %v3814
        %3816 = vmatmul.f32.gmra.mxu0 %v3688
        %v3817 = vpop.f32.mrf.mxu0
        %v3818 = vadd.f32 0.0, %v3817
        %3819 = vmatmul.f32.gmra.mxu0 %v3691
        %v3820 = vpop.f32.mrf.mxu0
        %v3821 = vadd.f32 0.0, %v3820
        %3822 = vdwg.mxu0
        %v3823 = vmul.f32 %v3711, 0.17677669
        %v3824 = vmul.f32 %v3776, 0.17677669
        %v3825 = vmul.f32 %v3714, 0.17677669
        %v3826 = vmul.f32 %v3779, 0.17677669
        %v3827 = vmul.f32 %v3717, 0.17677669
        %v3828 = vmul.f32 %v3782, 0.17677669
        %v3829 = vmul.f32 %v3720, 0.17677669
        %v3830 = vmul.f32 %v3785, 0.17677669
        %v3831 = vmul.f32 %v3723, 0.17677669
        %v3832 = vmul.f32 %v3788, 0.17677669
        %v3833 = vmul.f32 %v3726, 0.17677669
        %v3834 = vmul.f32 %v3791, 0.17677669
        %v3835 = vmul.f32 %v3729, 0.17677669
        %v3836 = vmul.f32 %v3794, 0.17677669
        %v3837 = vmul.f32 %v3732, 0.17677669
        %v3838 = vmul.f32 %v3797, 0.17677669
        %v3839 = vmul.f32 %v3735, 0.17677669
        %v3840 = vmul.f32 %v3800, 0.17677669
        %v3841 = vmul.f32 %v3738, 0.17677669
        %v3842 = vmul.f32 %v3803, 0.17677669
        %v3843 = vmul.f32 %v3741, 0.17677669
        %v3844 = vmul.f32 %v3806, 0.17677669
        %v3845 = vmul.f32 %v3744, 0.17677669
        %v3846 = vmul.f32 %v3809, 0.17677669
        %v3847 = vmul.f32 %v3747, 0.17677669
        %v3848 = vmul.f32 %v3812, 0.17677669
        %v3849 = vmul.f32 %v3750, 0.17677669
        %v3850 = vmul.f32 %v3815, 0.17677669
        %v3851 = vmul.f32 %v3753, 0.17677669
        %v3852 = vmul.f32 %v3818, 0.17677669
        %v3853 = vmul.f32 %v3756, 0.17677669
        %v3854 = vmul.f32 %v3821, 0.17677669
        %v3855 = vmax.f32 %v3823, %v3824
        %3856 = vmax.xlane.f32.xlu0 %v3855
        %v3857 = vpop.xlane.xlu0 %3856
        %v3858 = vmax.f32 %v3825, %v3826
        %3859 = vmax.xlane.f32.xlu0 %v3858
        %v3860 = vpop.xlane.xlu0 %3859
        %v3861 = vmax.f32 %v3827, %v3828
        %3862 = vmax.xlane.f32.xlu0 %v3861
        %v3863 = vpop.xlane.xlu0 %3862
        %v3864 = vmax.f32 %v3829, %v3830
        %3865 = vmax.xlane.f32.xlu0 %v3864
        %v3866 = vpop.xlane.xlu0 %3865
        %v3867 = vmax.f32 %v3831, %v3832
        %3868 = vmax.xlane.f32.xlu0 %v3867
        %v3869 = vpop.xlane.xlu0 %3868
        %v3870 = vmax.f32 %v3833, %v3834
        %3871 = vmax.xlane.f32.xlu0 %v3870
        %v3872 = vpop.xlane.xlu0 %3871
        %v3873 = vmax.f32 %v3835, %v3836
        %3874 = vmax.xlane.f32.xlu0 %v3873
        %v3875 = vpop.xlane.xlu0 %3874
        %v3876 = vmax.f32 %v3837, %v3838
        %3877 = vmax.xlane.f32.xlu0 %v3876
        %v3878 = vpop.xlane.xlu0 %3877
        %v3879 = vmax.f32 %v3839, %v3840
        %3880 = vmax.xlane.f32.xlu0 %v3879
        %v3881 = vpop.xlane.xlu0 %3880
        %v3882 = vmax.f32 %v3841, %v3842
        %3883 = vmax.xlane.f32.xlu0 %v3882
        %v3884 = vpop.xlane.xlu0 %3883
        %v3885 = vmax.f32 %v3843, %v3844
        %3886 = vmax.xlane.f32.xlu0 %v3885
        %v3887 = vpop.xlane.xlu0 %3886
        %v3888 = vmax.f32 %v3845, %v3846
        %3889 = vmax.xlane.f32.xlu0 %v3888
        %v3890 = vpop.xlane.xlu0 %3889
        %v3891 = vmax.f32 %v3847, %v3848
        %3892 = vmax.xlane.f32.xlu0 %v3891
        %v3893 = vpop.xlane.xlu0 %3892
        %v3894 = vmax.f32 %v3849, %v3850
        %3895 = vmax.xlane.f32.xlu0 %v3894
        %v3896 = vpop.xlane.xlu0 %3895
        %v3897 = vmax.f32 %v3851, %v3852
        %3898 = vmax.xlane.f32.xlu0 %v3897
        %v3899 = vpop.xlane.xlu0 %3898
        %v3900 = vmax.f32 %v3853, %v3854
        %3901 = vmax.xlane.f32.xlu0 %v3900
        %v3902 = vpop.xlane.xlu0 %3901
        %v3903 = vsub.f32 %v3823, %v3857
        %v3904 = vsub.f32 %v3824, %v3857
        %v3905 = vsub.f32 %v3825, %v3860
        %v3906 = vsub.f32 %v3826, %v3860
        %v3907 = vsub.f32 %v3827, %v3863
        %v3908 = vsub.f32 %v3828, %v3863
        %v3909 = vsub.f32 %v3829, %v3866
        %v3910 = vsub.f32 %v3830, %v3866
        %v3911 = vsub.f32 %v3831, %v3869
        %v3912 = vsub.f32 %v3832, %v3869
        %v3913 = vsub.f32 %v3833, %v3872
        %v3914 = vsub.f32 %v3834, %v3872
        %v3915 = vsub.f32 %v3835, %v3875
        %v3916 = vsub.f32 %v3836, %v3875
        %v3917 = vsub.f32 %v3837, %v3878
        %v3918 = vsub.f32 %v3838, %v3878
        %v3919 = vsub.f32 %v3839, %v3881
        %v3920 = vsub.f32 %v3840, %v3881
        %v3921 = vsub.f32 %v3841, %v3884
        %v3922 = vsub.f32 %v3842, %v3884
        %v3923 = vsub.f32 %v3843, %v3887
        %v3924 = vsub.f32 %v3844, %v3887
        %v3925 = vsub.f32 %v3845, %v3890
        %v3926 = vsub.f32 %v3846, %v3890
        %v3927 = vsub.f32 %v3847, %v3893
        %v3928 = vsub.f32 %v3848, %v3893
        %v3929 = vsub.f32 %v3849, %v3896
        %v3930 = vsub.f32 %v3850, %v3896
        %v3931 = vsub.f32 %v3851, %v3899
        %v3932 = vsub.f32 %v3852, %v3899
        %v3933 = vsub.f32 %v3853, %v3902
        %v3934 = vsub.f32 %v3854, %v3902
        %v3935 = vmul.f32 %v3903, 1.442695
        %v3936 = vpow.pop %v3935
        %v3937 = vmul.f32 %v3904, 1.442695
        %v3938 = vpow.pop %v3937
        %v3939 = vmul.f32 %v3905, 1.442695
        %v3940 = vpow.pop %v3939
        %v3941 = vmul.f32 %v3906, 1.442695
        %v3942 = vpow.pop %v3941
        %v3943 = vmul.f32 %v3907, 1.442695
        %v3944 = vpow.pop %v3943
        %v3945 = vmul.f32 %v3908, 1.442695
        %v3946 = vpow.pop %v3945
        %v3947 = vmul.f32 %v3909, 1.442695
        %v3948 = vpow.pop %v3947
        %v3949 = vmul.f32 %v3910, 1.442695
        %v3950 = vpow.pop %v3949
        %v3951 = vmul.f32 %v3911, 1.442695
        %v3952 = vpow.pop %v3951
        %v3953 = vmul.f32 %v3912, 1.442695
        %v3954 = vpow.pop %v3953
        %v3955 = vmul.f32 %v3913, 1.442695
        %v3956 = vpow.pop %v3955
        %v3957 = vmul.f32 %v3914, 1.442695
        %v3958 = vpow.pop %v3957
        %v3959 = vmul.f32 %v3915, 1.442695
        %v3960 = vpow.pop %v3959
        %v3961 = vmul.f32 %v3916, 1.442695
        %v3962 = vpow.pop %v3961
        %v3963 = vmul.f32 %v3917, 1.442695
        %v3964 = vpow.pop %v3963
        %v3965 = vmul.f32 %v3918, 1.442695
        %v3966 = vpow.pop %v3965
        %v3967 = vmul.f32 %v3919, 1.442695
        %v3968 = vpow.pop %v3967
        %v3969 = vmul.f32 %v3920, 1.442695
        %v3970 = vpow.pop %v3969
        %v3971 = vmul.f32 %v3921, 1.442695
        %v3972 = vpow.pop %v3971
        %v3973 = vmul.f32 %v3922, 1.442695
        %v3974 = vpow.pop %v3973
        %v3975 = vmul.f32 %v3923, 1.442695
        %v3976 = vpow.pop %v3975
        %v3977 = vmul.f32 %v3924, 1.442695
        %v3978 = vpow.pop %v3977
        %v3979 = vmul.f32 %v3925, 1.442695
        %v3980 = vpow.pop %v3979
        %v3981 = vmul.f32 %v3926, 1.442695
        %v3982 = vpow.pop %v3981
        %v3983 = vmul.f32 %v3927, 1.442695
        %v3984 = vpow.pop %v3983
        %v3985 = vmul.f32 %v3928, 1.442695
        %v3986 = vpow.pop %v3985
        %v3987 = vmul.f32 %v3929, 1.442695
        %v3988 = vpow.pop %v3987
        %v3989 = vmul.f32 %v3930, 1.442695
        %v3990 = vpow.pop %v3989
        %v3991 = vmul.f32 %v3931, 1.442695
        %v3992 = vpow.pop %v3991
        %v3993 = vmul.f32 %v3932, 1.442695
        %v3994 = vpow.pop %v3993
        %v3995 = vmul.f32 %v3933, 1.442695
        %v3996 = vpow.pop %v3995
        %v3997 = vmul.f32 %v3934, 1.442695
        %v3998 = vpow.pop %v3997
        %v3999 = vadd.f32 %v3936, %v3938
        %4000 = vadd.xlane.f32.xlu0 %v3999
        %v4001 = vpop.xlane.xlu0 %4000
        %v4002 = vadd.f32 %v3940, %v3942
        %4003 = vadd.xlane.f32.xlu0 %v4002
        %v4004 = vpop.xlane.xlu0 %4003
        %v4005 = vadd.f32 %v3944, %v3946
        %4006 = vadd.xlane.f32.xlu0 %v4005
        %v4007 = vpop.xlane.xlu0 %4006
        %v4008 = vadd.f32 %v3948, %v3950
        %4009 = vadd.xlane.f32.xlu0 %v4008
        %v4010 = vpop.xlane.xlu0 %4009
        %v4011 = vadd.f32 %v3952, %v3954
        %4012 = vadd.xlane.f32.xlu0 %v4011
        %v4013 = vpop.xlane.xlu0 %4012
        %v4014 = vadd.f32 %v3956, %v3958
        %4015 = vadd.xlane.f32.xlu0 %v4014
        %v4016 = vpop.xlane.xlu0 %4015
        %v4017 = vadd.f32 %v3960, %v3962
        %4018 = vadd.xlane.f32.xlu0 %v4017
        %v4019 = vpop.xlane.xlu0 %4018
        %v4020 = vadd.f32 %v3964, %v3966
        %4021 = vadd.xlane.f32.xlu0 %v4020
        %v4022 = vpop.xlane.xlu0 %4021
        %v4023 = vadd.f32 %v3968, %v3970
        %4024 = vadd.xlane.f32.xlu0 %v4023
        %v4025 = vpop.xlane.xlu0 %4024
        %v4026 = vadd.f32 %v3972, %v3974
        %4027 = vadd.xlane.f32.xlu0 %v4026
        %v4028 = vpop.xlane.xlu0 %4027
        %v4029 = vadd.f32 %v3976, %v3978
        %4030 = vadd.xlane.f32.xlu0 %v4029
        %v4031 = vpop.xlane.xlu0 %4030
        %v4032 = vadd.f32 %v3980, %v3982
        %4033 = vadd.xlane.f32.xlu0 %v4032
        %v4034 = vpop.xlane.xlu0 %4033
        %v4035 = vadd.f32 %v3984, %v3986
        %4036 = vadd.xlane.f32.xlu0 %v4035
        %v4037 = vpop.xlane.xlu0 %4036
        %v4038 = vadd.f32 %v3988, %v3990
        %4039 = vadd.xlane.f32.xlu0 %v4038
        %v4040 = vpop.xlane.xlu0 %4039
        %v4041 = vadd.f32 %v3992, %v3994
        %4042 = vadd.xlane.f32.xlu0 %v4041
        %v4043 = vpop.xlane.xlu0 %4042
        %v4044 = vadd.f32 %v3996, %v3998
        %4045 = vadd.xlane.f32.xlu0 %v4044
        %v4046 = vpop.xlane.xlu0 %4045
        %v4047 = vrcp.pop %v4001
        %v4048 = vmul.f32 %v4001, %v4047
        %v4049 = vsub.f32 1.0, %v4048
        %v4050 = vmul.f32 %v4047, %v4049
        %v4051 = vadd.f32 %v4047, %v4050
        %vm4052 = vweird.f32 %v4001
        %vm4053 = vweird.f32 %v4047
        %vm4054 = vmor %vm4052, %vm4053
        %v4055 = vsel %vm4054, %v4047, %v4051
        %v4056 = vand.u32 2147483647, %v4001
        %vm4057 = vcmp.eq.f32.partialorder %v4056, 8.507059e+37
        %v4058 = vand.u32 %v4001, 2147483648
        %v4059 = vor.u32 1.1754944e-38, %v4058
        %v4060 = vsel %vm4057, %v4059, %v4055
        %v4061 = vmul.f32 %v3936, %v4060
        %v4062 = vmul.f32 %v3938, %v4060
        %v4063 = vrcp.pop %v4004
        %v4064 = vmul.f32 %v4004, %v4063
        %v4065 = vsub.f32 1.0, %v4064
        %v4066 = vmul.f32 %v4063, %v4065
        %v4067 = vadd.f32 %v4063, %v4066
        %vm4068 = vweird.f32 %v4004
        %vm4069 = vweird.f32 %v4063
        %vm4070 = vmor %vm4068, %vm4069
        %v4071 = vsel %vm4070, %v4063, %v4067
        %v4072 = vand.u32 2147483647, %v4004
        %vm4073 = vcmp.eq.f32.partialorder %v4072, 8.507059e+37
        %v4074 = vand.u32 %v4004, 2147483648
        %v4075 = vor.u32 1.1754944e-38, %v4074
        %v4076 = vsel %vm4073, %v4075, %v4071
        %v4077 = vmul.f32 %v3940, %v4076
        %v4078 = vmul.f32 %v3942, %v4076
        %v4079 = vrcp.pop %v4007
        %v4080 = vmul.f32 %v4007, %v4079
        %v4081 = vsub.f32 1.0, %v4080
        %v4082 = vmul.f32 %v4079, %v4081
        %v4083 = vadd.f32 %v4079, %v4082
        %vm4084 = vweird.f32 %v4007
        %vm4085 = vweird.f32 %v4079
        %vm4086 = vmor %vm4084, %vm4085
        %v4087 = vsel %vm4086, %v4079, %v4083
        %v4088 = vand.u32 2147483647, %v4007
        %vm4089 = vcmp.eq.f32.partialorder %v4088, 8.507059e+37
        %v4090 = vand.u32 %v4007, 2147483648
        %v4091 = vor.u32 1.1754944e-38, %v4090
        %v4092 = vsel %vm4089, %v4091, %v4087
        %v4093 = vmul.f32 %v3944, %v4092
        %v4094 = vmul.f32 %v3946, %v4092
        %v4095 = vrcp.pop %v4010
        %v4096 = vmul.f32 %v4010, %v4095
        %v4097 = vsub.f32 1.0, %v4096
        %v4098 = vmul.f32 %v4095, %v4097
        %v4099 = vadd.f32 %v4095, %v4098
        %vm4100 = vweird.f32 %v4010
        %vm4101 = vweird.f32 %v4095
        %vm4102 = vmor %vm4100, %vm4101
        %v4103 = vsel %vm4102, %v4095, %v4099
        %v4104 = vand.u32 2147483647, %v4010
        %vm4105 = vcmp.eq.f32.partialorder %v4104, 8.507059e+37
        %v4106 = vand.u32 %v4010, 2147483648
        %v4107 = vor.u32 1.1754944e-38, %v4106
        %v4108 = vsel %vm4105, %v4107, %v4103
        %v4109 = vmul.f32 %v3948, %v4108
        %v4110 = vmul.f32 %v3950, %v4108
        %v4111 = vrcp.pop %v4013
        %v4112 = vmul.f32 %v4013, %v4111
        %v4113 = vsub.f32 1.0, %v4112
        %v4114 = vmul.f32 %v4111, %v4113
        %v4115 = vadd.f32 %v4111, %v4114
        %vm4116 = vweird.f32 %v4013
        %vm4117 = vweird.f32 %v4111
        %vm4118 = vmor %vm4116, %vm4117
        %v4119 = vsel %vm4118, %v4111, %v4115
        %v4120 = vand.u32 2147483647, %v4013
        %vm4121 = vcmp.eq.f32.partialorder %v4120, 8.507059e+37
        %v4122 = vand.u32 %v4013, 2147483648
        %v4123 = vor.u32 1.1754944e-38, %v4122
        %v4124 = vsel %vm4121, %v4123, %v4119
        %v4125 = vmul.f32 %v3952, %v4124
        %v4126 = vmul.f32 %v3954, %v4124
        %v4127 = vrcp.pop %v4016
        %v4128 = vmul.f32 %v4016, %v4127
        %v4129 = vsub.f32 1.0, %v4128
        %v4130 = vmul.f32 %v4127, %v4129
        %v4131 = vadd.f32 %v4127, %v4130
        %vm4132 = vweird.f32 %v4016
        %vm4133 = vweird.f32 %v4127
        %vm4134 = vmor %vm4132, %vm4133
        %v4135 = vsel %vm4134, %v4127, %v4131
        %v4136 = vand.u32 2147483647, %v4016
        %vm4137 = vcmp.eq.f32.partialorder %v4136, 8.507059e+37
        %v4138 = vand.u32 %v4016, 2147483648
        %v4139 = vor.u32 1.1754944e-38, %v4138
        %v4140 = vsel %vm4137, %v4139, %v4135
        %v4141 = vmul.f32 %v3956, %v4140
        %v4142 = vmul.f32 %v3958, %v4140
        %v4143 = vrcp.pop %v4019
        %v4144 = vmul.f32 %v4019, %v4143
        %v4145 = vsub.f32 1.0, %v4144
        %v4146 = vmul.f32 %v4143, %v4145
        %v4147 = vadd.f32 %v4143, %v4146
        %vm4148 = vweird.f32 %v4019
        %vm4149 = vweird.f32 %v4143
        %vm4150 = vmor %vm4148, %vm4149
        %v4151 = vsel %vm4150, %v4143, %v4147
        %v4152 = vand.u32 2147483647, %v4019
        %vm4153 = vcmp.eq.f32.partialorder %v4152, 8.507059e+37
        %v4154 = vand.u32 %v4019, 2147483648
        %v4155 = vor.u32 1.1754944e-38, %v4154
        %v4156 = vsel %vm4153, %v4155, %v4151
        %v4157 = vmul.f32 %v3960, %v4156
        %v4158 = vmul.f32 %v3962, %v4156
        %v4159 = vrcp.pop %v4022
        %v4160 = vmul.f32 %v4022, %v4159
        %v4161 = vsub.f32 1.0, %v4160
        %v4162 = vmul.f32 %v4159, %v4161
        %v4163 = vadd.f32 %v4159, %v4162
        %vm4164 = vweird.f32 %v4022
        %vm4165 = vweird.f32 %v4159
        %vm4166 = vmor %vm4164, %vm4165
        %v4167 = vsel %vm4166, %v4159, %v4163
        %v4168 = vand.u32 2147483647, %v4022
        %vm4169 = vcmp.eq.f32.partialorder %v4168, 8.507059e+37
        %v4170 = vand.u32 %v4022, 2147483648
        %v4171 = vor.u32 1.1754944e-38, %v4170
        %v4172 = vsel %vm4169, %v4171, %v4167
        %v4173 = vmul.f32 %v3964, %v4172
        %v4174 = vmul.f32 %v3966, %v4172
        %v4175 = vrcp.pop %v4025
        %v4176 = vmul.f32 %v4025, %v4175
        %v4177 = vsub.f32 1.0, %v4176
        %v4178 = vmul.f32 %v4175, %v4177
        %v4179 = vadd.f32 %v4175, %v4178
        %vm4180 = vweird.f32 %v4025
        %vm4181 = vweird.f32 %v4175
        %vm4182 = vmor %vm4180, %vm4181
        %v4183 = vsel %vm4182, %v4175, %v4179
        %v4184 = vand.u32 2147483647, %v4025
        %vm4185 = vcmp.eq.f32.partialorder %v4184, 8.507059e+37
        %v4186 = vand.u32 %v4025, 2147483648
        %v4187 = vor.u32 1.1754944e-38, %v4186
        %v4188 = vsel %vm4185, %v4187, %v4183
        %v4189 = vmul.f32 %v3968, %v4188
        %v4190 = vmul.f32 %v3970, %v4188
        %v4191 = vrcp.pop %v4028
        %v4192 = vmul.f32 %v4028, %v4191
        %v4193 = vsub.f32 1.0, %v4192
        %v4194 = vmul.f32 %v4191, %v4193
        %v4195 = vadd.f32 %v4191, %v4194
        %vm4196 = vweird.f32 %v4028
        %vm4197 = vweird.f32 %v4191
        %vm4198 = vmor %vm4196, %vm4197
        %v4199 = vsel %vm4198, %v4191, %v4195
        %v4200 = vand.u32 2147483647, %v4028
        %vm4201 = vcmp.eq.f32.partialorder %v4200, 8.507059e+37
        %v4202 = vand.u32 %v4028, 2147483648
        %v4203 = vor.u32 1.1754944e-38, %v4202
        %v4204 = vsel %vm4201, %v4203, %v4199
        %v4205 = vmul.f32 %v3972, %v4204
        %v4206 = vmul.f32 %v3974, %v4204
        %v4207 = vrcp.pop %v4031
        %v4208 = vmul.f32 %v4031, %v4207
        %v4209 = vsub.f32 1.0, %v4208
        %v4210 = vmul.f32 %v4207, %v4209
        %v4211 = vadd.f32 %v4207, %v4210
        %vm4212 = vweird.f32 %v4031
        %vm4213 = vweird.f32 %v4207
        %vm4214 = vmor %vm4212, %vm4213
        %v4215 = vsel %vm4214, %v4207, %v4211
        %v4216 = vand.u32 2147483647, %v4031
        %vm4217 = vcmp.eq.f32.partialorder %v4216, 8.507059e+37
        %v4218 = vand.u32 %v4031, 2147483648
        %v4219 = vor.u32 1.1754944e-38, %v4218
        %v4220 = vsel %vm4217, %v4219, %v4215
        %v4221 = vmul.f32 %v3976, %v4220
        %v4222 = vmul.f32 %v3978, %v4220
        %v4223 = vrcp.pop %v4034
        %v4224 = vmul.f32 %v4034, %v4223
        %v4225 = vsub.f32 1.0, %v4224
        %v4226 = vmul.f32 %v4223, %v4225
        %v4227 = vadd.f32 %v4223, %v4226
        %vm4228 = vweird.f32 %v4034
        %vm4229 = vweird.f32 %v4223
        %vm4230 = vmor %vm4228, %vm4229
        %v4231 = vsel %vm4230, %v4223, %v4227
        %v4232 = vand.u32 2147483647, %v4034
        %vm4233 = vcmp.eq.f32.partialorder %v4232, 8.507059e+37
        %v4234 = vand.u32 %v4034, 2147483648
        %v4235 = vor.u32 1.1754944e-38, %v4234
        %v4236 = vsel %vm4233, %v4235, %v4231
        %v4237 = vmul.f32 %v3980, %v4236
        %v4238 = vmul.f32 %v3982, %v4236
        %v4239 = vrcp.pop %v4037
        %v4240 = vmul.f32 %v4037, %v4239
        %v4241 = vsub.f32 1.0, %v4240
        %v4242 = vmul.f32 %v4239, %v4241
        %v4243 = vadd.f32 %v4239, %v4242
        %vm4244 = vweird.f32 %v4037
        %vm4245 = vweird.f32 %v4239
        %vm4246 = vmor %vm4244, %vm4245
        %v4247 = vsel %vm4246, %v4239, %v4243
        %v4248 = vand.u32 2147483647, %v4037
        %vm4249 = vcmp.eq.f32.partialorder %v4248, 8.507059e+37
        %v4250 = vand.u32 %v4037, 2147483648
        %v4251 = vor.u32 1.1754944e-38, %v4250
        %v4252 = vsel %vm4249, %v4251, %v4247
        %v4253 = vmul.f32 %v3984, %v4252
        %v4254 = vmul.f32 %v3986, %v4252
        %v4255 = vrcp.pop %v4040
        %v4256 = vmul.f32 %v4040, %v4255
        %v4257 = vsub.f32 1.0, %v4256
        %v4258 = vmul.f32 %v4255, %v4257
        %v4259 = vadd.f32 %v4255, %v4258
        %vm4260 = vweird.f32 %v4040
        %vm4261 = vweird.f32 %v4255
        %vm4262 = vmor %vm4260, %vm4261
        %v4263 = vsel %vm4262, %v4255, %v4259
        %v4264 = vand.u32 2147483647, %v4040
        %vm4265 = vcmp.eq.f32.partialorder %v4264, 8.507059e+37
        %v4266 = vand.u32 %v4040, 2147483648
        %v4267 = vor.u32 1.1754944e-38, %v4266
        %v4268 = vsel %vm4265, %v4267, %v4263
        %v4269 = vmul.f32 %v3988, %v4268
        %v4270 = vmul.f32 %v3990, %v4268
        %v4271 = vrcp.pop %v4043
        %v4272 = vmul.f32 %v4043, %v4271
        %v4273 = vsub.f32 1.0, %v4272
        %v4274 = vmul.f32 %v4271, %v4273
        %v4275 = vadd.f32 %v4271, %v4274
        %vm4276 = vweird.f32 %v4043
        %vm4277 = vweird.f32 %v4271
        %vm4278 = vmor %vm4276, %vm4277
        %v4279 = vsel %vm4278, %v4271, %v4275
        %v4280 = vand.u32 2147483647, %v4043
        %vm4281 = vcmp.eq.f32.partialorder %v4280, 8.507059e+37
        %v4282 = vand.u32 %v4043, 2147483648
        %v4283 = vor.u32 1.1754944e-38, %v4282
        %v4284 = vsel %vm4281, %v4283, %v4279
        %v4285 = vmul.f32 %v3992, %v4284
        %v4286 = vmul.f32 %v3994, %v4284
        %v4287 = vrcp.pop %v4046
        %v4288 = vmul.f32 %v4046, %v4287
        %v4289 = vsub.f32 1.0, %v4288
        %v4290 = vmul.f32 %v4287, %v4289
        %v4291 = vadd.f32 %v4287, %v4290
        %vm4292 = vweird.f32 %v4046
        %vm4293 = vweird.f32 %v4287
        %vm4294 = vmor %vm4292, %vm4293
        %v4295 = vsel %vm4294, %v4287, %v4291
        %v4296 = vand.u32 2147483647, %v4046
        %vm4297 = vcmp.eq.f32.partialorder %v4296, 8.507059e+37
        %v4298 = vand.u32 %v4046, 2147483648
        %v4299 = vor.u32 1.1754944e-38, %v4298
        %v4300 = vsel %vm4297, %v4299, %v4295
        %v4301 = vmul.f32 %v3996, %v4300
        %v4302 = vmul.f32 %v3998, %v4300
        %4303 = vmatpush.xpose.msra.mxu0 %v4301
        %4304 = vmatpush.xpose.msra.mxu0 %v4285
        %4305 = vmatpush.xpose.msra.mxu0 %v4269
        %4306 = vmatpush.xpose.msra.mxu0 %v4253
        %4307 = vmatpush.xpose.msra.mxu0 %v4237
        %4308 = vmatpush.xpose.msra.mxu0 %v4221
        %4309 = vmatpush.xpose.msra.mxu0 %v4205
        %4310 = vmatpush.xpose.msra.mxu0 %v4189
        %4311 = vmatpush.xpose.msra.mxu0 %v4173
        %4312 = vmatpush.xpose.msra.mxu0 %v4157
        %4313 = vmatpush.xpose.msra.mxu0 %v4141
        %4314 = vmatpush.xpose.msra.mxu0 %v4125
        %4315 = vmatpush.xpose.msra.mxu0 %v4109
        %4316 = vmatpush.xpose.msra.mxu0 %v4093
        %4317 = vmatpush.xpose.msra.mxu0 %v4077
        %4318 = vmatpush.xpose.msra.mxu0 %v4061
        %4319 = vmatmul.f32.gmra.mxu0 %v1121
        %v4320 = vpop.f32.mrf.mxu0
        %v4321 = vadd.f32 0.0, %v4320
        %4322 = vmatmul.f32.gmra.mxu0 %v1124
        %v4323 = vpop.f32.mrf.mxu0
        %v4324 = vadd.f32 0.0, %v4323
        %4325 = vmatmul.f32.gmra.mxu0 %v1127
        %v4326 = vpop.f32.mrf.mxu0
        %v4327 = vadd.f32 0.0, %v4326
        %4328 = vmatmul.f32.gmra.mxu0 %v1130
        %v4329 = vpop.f32.mrf.mxu0
        %v4330 = vadd.f32 0.0, %v4329
        %4331 = vdwg.mxu0
        %4332 = vmatpush.xpose.msra.mxu0 %v4302
        %4333 = vmatpush.xpose.msra.mxu0 %v4286
        %4334 = vmatpush.xpose.msra.mxu0 %v4270
        %4335 = vmatpush.xpose.msra.mxu0 %v4254
        %4336 = vmatpush.xpose.msra.mxu0 %v4238
        %4337 = vmatpush.xpose.msra.mxu0 %v4222
        %4338 = vmatpush.xpose.msra.mxu0 %v4206
        %4339 = vmatpush.xpose.msra.mxu0 %v4190
        %4340 = vmatpush.xpose.msra.mxu0 %v4174
        %4341 = vmatpush.xpose.msra.mxu0 %v4158
        %4342 = vmatpush.xpose.msra.mxu0 %v4142
        %4343 = vmatpush.xpose.msra.mxu0 %v4126
        %4344 = vmatpush.xpose.msra.mxu0 %v4110
        %4345 = vmatpush.xpose.msra.mxu0 %v4094
        %4346 = vmatpush.xpose.msra.mxu0 %v4078
        %4347 = vmatpush.xpose.msra.mxu0 %v4062
        %4348 = vmatmul.f32.gmra.mxu0 %v1234
        %v4349 = vpop.f32.mrf.mxu0
        %v4350 = vadd.f32 %v4321, %v4349
        %4351 = vmatmul.f32.gmra.mxu0 %v1237
        %v4352 = vpop.f32.mrf.mxu0
        %v4353 = vadd.f32 %v4324, %v4352
        %4354 = vmatmul.f32.gmra.mxu0 %v1240
        %v4355 = vpop.f32.mrf.mxu0
        %v4356 = vadd.f32 %v4327, %v4355
        %4357 = vmatmul.f32.gmra.mxu0 %v1243
        %v4358 = vpop.f32.mrf.mxu0
        %v4359 = vadd.f32 %v4330, %v4358
        %4360 = vdwg.mxu0
        %s4361 = scalar_lea.vmem %s5, 12
        %v4362 = vld [vmem:[%s4361] sm:$0xf]
        %v4364 = vsel %vm1325, %v4362, 0
        %4366 = vmatpush.msra.mxu0 0.0
        %4367 = vmatpush.msra.mxu0 0.0
        %4368 = vmatpush.msra.mxu0 0.0
        %4369 = vmatpush.msra.mxu0 0.0
        %4370 = vmatpush.msra.mxu0 0.0
        %4371 = vmatpush.msra.mxu0 0.0
        %4372 = vmatpush.msra.mxu0 0.0
        %4373 = vmatpush.msra.mxu0 0.0
        %4374 = vmatpush.msra.mxu0 0.0
        %4375 = vmatpush.msra.mxu0 0.0
        %4376 = vmatpush.msra.mxu0 0.0
        %4377 = vmatpush.msra.mxu0 0.0
        %4378 = vmatpush.msra.mxu0 %v4359
        %4379 = vmatpush.msra.mxu0 %v4356
        %4380 = vmatpush.msra.mxu0 %v4353
        %4381 = vmatpush.msra.mxu0 %v4350
        %4382 = vmatmul.f32.gmra.mxu0 %v4364
        %v4383 = vpop.f32.mrf.mxu0
        %v4384 = vadd.f32 0.0, %v4383
        %4385 = vdwg.mxu0
        %v4386 = vadd.f32 %v3612, %v4384
        %4387 = vxpose.xlu0.b32.start [1/16] %v587, 128
        %4388 = vxpose.xlu0.b32.cont [2/16] %v590, 128
        %4389 = vxpose.xlu0.b32.cont [3/16] %v593, 128
        %4390 = vxpose.xlu0.b32.cont [4/16] %v596, 128
        %4391 = vxpose.xlu0.b32.cont [5/16] 0.0, 128
        %4392 = vxpose.xlu0.b32.cont [6/16] 0.0, 128
        %4393 = vxpose.xlu0.b32.cont [7/16] 0.0, 128
        %4394 = vxpose.xlu0.b32.cont [8/16] 0.0, 128
        %4395 = vxpose.xlu0.b32.cont [9/16] 0.0, 128
        %4396 = vxpose.xlu0.b32.cont [10/16] 0.0, 128
        %4397 = vxpose.xlu0.b32.cont [11/16] 0.0, 128
        %4398 = vxpose.xlu0.b32.cont [12/16] 0.0, 128
        %4399 = vxpose.xlu0.b32.cont [13/16] 0.0, 128
        %4400 = vxpose.xlu0.b32.cont [14/16] 0.0, 128
        %4401 = vxpose.xlu0.b32.cont [15/16] 0.0, 128
        %4402 = vxpose.xlu0.b32.end [16/16] 0.0, 128
        %v4403 = vpop.trf.xlu0
        %v4404 = vpop.trf.xlu0
        %v4405 = vpop.trf.xlu0
        %v4406 = vpop.trf.xlu0
        %v4407 = vpop.trf.xlu0
        %v4408 = vpop.trf.xlu0
        %v4409 = vpop.trf.xlu0
        %v4410 = vpop.trf.xlu0
        %v4411 = vpop.trf.xlu0
        %v4412 = vpop.trf.xlu0
        %v4413 = vpop.trf.xlu0
        %v4414 = vpop.trf.xlu0
        %v4415 = vpop.trf.xlu0
        %v4416 = vpop.trf.xlu0
        %v4417 = vpop.trf.xlu0
        %v4418 = vpop.trf.xlu0
        %v4420 = vsel %vm1325, %v4403, 0
        %v4423 = vsel %vm1325, %v4404, 0
        %v4426 = vsel %vm1325, %v4405, 0
        %v4429 = vsel %vm1325, %v4406, 0
        %v4432 = vsel %vm1325, %v4407, 0
        %v4435 = vsel %vm1325, %v4408, 0
        %v4438 = vsel %vm1325, %v4409, 0
        %v4441 = vsel %vm1325, %v4410, 0
        %v4444 = vsel %vm1325, %v4411, 0
        %v4447 = vsel %vm1325, %v4412, 0
        %v4450 = vsel %vm1325, %v4413, 0
        %v4453 = vsel %vm1325, %v4414, 0
        %v4456 = vsel %vm1325, %v4415, 0
        %v4459 = vsel %vm1325, %v4416, 0
        %v4462 = vsel %vm1325, %v4417, 0
        %v4465 = vsel %vm1325, %v4418, 0
        %4467 = vmatpush.msra.mxu0 0.0
        %4468 = vmatpush.msra.mxu0 0.0
        %4469 = vmatpush.msra.mxu0 0.0
        %4470 = vmatpush.msra.mxu0 0.0
        %4471 = vmatpush.msra.mxu0 0.0
        %4472 = vmatpush.msra.mxu0 0.0
        %4473 = vmatpush.msra.mxu0 0.0
        %4474 = vmatpush.msra.mxu0 0.0
        %4475 = vmatpush.msra.mxu0 0.0
        %4476 = vmatpush.msra.mxu0 0.0
        %4477 = vmatpush.msra.mxu0 0.0
        %4478 = vmatpush.msra.mxu0 0.0
        %4479 = vmatpush.msra.mxu0 %v813
        %4480 = vmatpush.msra.mxu0 %v810
        %4481 = vmatpush.msra.mxu0 %v807
        %4482 = vmatpush.msra.mxu0 %v804
        %4483 = vmatmul.f32.gmra.mxu0 %v4420
        %v4484 = vpop.f32.mrf.mxu0
        %v4485 = vadd.f32 0.0, %v4484
        %4486 = vmatmul.f32.gmra.mxu0 %v4423
        %v4487 = vpop.f32.mrf.mxu0
        %v4488 = vadd.f32 0.0, %v4487
        %4489 = vmatmul.f32.gmra.mxu0 %v4426
        %v4490 = vpop.f32.mrf.mxu0
        %v4491 = vadd.f32 0.0, %v4490
        %4492 = vmatmul.f32.gmra.mxu0 %v4429
        %v4493 = vpop.f32.mrf.mxu0
        %v4494 = vadd.f32 0.0, %v4493
        %4495 = vmatmul.f32.gmra.mxu0 %v4432
        %v4496 = vpop.f32.mrf.mxu0
        %v4497 = vadd.f32 0.0, %v4496
        %4498 = vmatmul.f32.gmra.mxu0 %v4435
        %v4499 = vpop.f32.mrf.mxu0
        %v4500 = vadd.f32 0.0, %v4499
        %4501 = vmatmul.f32.gmra.mxu0 %v4438
        %v4502 = vpop.f32.mrf.mxu0
        %v4503 = vadd.f32 0.0, %v4502
        %4504 = vmatmul.f32.gmra.mxu0 %v4441
        %v4505 = vpop.f32.mrf.mxu0
        %v4506 = vadd.f32 0.0, %v4505
        %4507 = vmatmul.f32.gmra.mxu0 %v4444
        %v4508 = vpop.f32.mrf.mxu0
        %v4509 = vadd.f32 0.0, %v4508
        %4510 = vmatmul.f32.gmra.mxu0 %v4447
        %v4511 = vpop.f32.mrf.mxu0
        %v4512 = vadd.f32 0.0, %v4511
        %4513 = vmatmul.f32.gmra.mxu0 %v4450
        %v4514 = vpop.f32.mrf.mxu0
        %v4515 = vadd.f32 0.0, %v4514
        %4516 = vmatmul.f32.gmra.mxu0 %v4453
        %v4517 = vpop.f32.mrf.mxu0
        %v4518 = vadd.f32 0.0, %v4517
        %4519 = vmatmul.f32.gmra.mxu0 %v4456
        %v4520 = vpop.f32.mrf.mxu0
        %v4521 = vadd.f32 0.0, %v4520
        %4522 = vmatmul.f32.gmra.mxu0 %v4459
        %v4523 = vpop.f32.mrf.mxu0
        %v4524 = vadd.f32 0.0, %v4523
        %4525 = vmatmul.f32.gmra.mxu0 %v4462
        %v4526 = vpop.f32.mrf.mxu0
        %v4527 = vadd.f32 0.0, %v4526
        %4528 = vmatmul.f32.gmra.mxu0 %v4465
        %v4529 = vpop.f32.mrf.mxu0
        %v4530 = vadd.f32 0.0, %v4529
        %4531 = vdwg.mxu0
        %4532 = vmatpush.msra.mxu0 0.0
        %4533 = vmatpush.msra.mxu0 0.0
        %4534 = vmatpush.msra.mxu0 0.0
        %4535 = vmatpush.msra.mxu0 0.0
        %4536 = vmatpush.msra.mxu0 0.0
        %4537 = vmatpush.msra.mxu0 0.0
        %4538 = vmatpush.msra.mxu0 0.0
        %4539 = vmatpush.msra.mxu0 0.0
        %4540 = vmatpush.msra.mxu0 0.0
        %4541 = vmatpush.msra.mxu0 0.0
        %4542 = vmatpush.msra.mxu0 0.0
        %4543 = vmatpush.msra.mxu0 0.0
        %4544 = vmatpush.msra.mxu0 %v926
        %4545 = vmatpush.msra.mxu0 %v923
        %4546 = vmatpush.msra.mxu0 %v920
        %4547 = vmatpush.msra.mxu0 %v917
        %4548 = vmatmul.f32.gmra.mxu0 %v4420
        %v4549 = vpop.f32.mrf.mxu0
        %v4550 = vadd.f32 0.0, %v4549
        %4551 = vmatmul.f32.gmra.mxu0 %v4423
        %v4552 = vpop.f32.mrf.mxu0
        %v4553 = vadd.f32 0.0, %v4552
        %4554 = vmatmul.f32.gmra.mxu0 %v4426
        %v4555 = vpop.f32.mrf.mxu0
        %v4556 = vadd.f32 0.0, %v4555
        %4557 = vmatmul.f32.gmra.mxu0 %v4429
        %v4558 = vpop.f32.mrf.mxu0
        %v4559 = vadd.f32 0.0, %v4558
        %4560 = vmatmul.f32.gmra.mxu0 %v4432
        %v4561 = vpop.f32.mrf.mxu0
        %v4562 = vadd.f32 0.0, %v4561
        %4563 = vmatmul.f32.gmra.mxu0 %v4435
        %v4564 = vpop.f32.mrf.mxu0
        %v4565 = vadd.f32 0.0, %v4564
        %4566 = vmatmul.f32.gmra.mxu0 %v4438
        %v4567 = vpop.f32.mrf.mxu0
        %v4568 = vadd.f32 0.0, %v4567
        %4569 = vmatmul.f32.gmra.mxu0 %v4441
        %v4570 = vpop.f32.mrf.mxu0
        %v4571 = vadd.f32 0.0, %v4570
        %4572 = vmatmul.f32.gmra.mxu0 %v4444
        %v4573 = vpop.f32.mrf.mxu0
        %v4574 = vadd.f32 0.0, %v4573
        %4575 = vmatmul.f32.gmra.mxu0 %v4447
        %v4576 = vpop.f32.mrf.mxu0
        %v4577 = vadd.f32 0.0, %v4576
        %4578 = vmatmul.f32.gmra.mxu0 %v4450
        %v4579 = vpop.f32.mrf.mxu0
        %v4580 = vadd.f32 0.0, %v4579
        %4581 = vmatmul.f32.gmra.mxu0 %v4453
        %v4582 = vpop.f32.mrf.mxu0
        %v4583 = vadd.f32 0.0, %v4582
        %4584 = vmatmul.f32.gmra.mxu0 %v4456
        %v4585 = vpop.f32.mrf.mxu0
        %v4586 = vadd.f32 0.0, %v4585
        %4587 = vmatmul.f32.gmra.mxu0 %v4459
        %v4588 = vpop.f32.mrf.mxu0
        %v4589 = vadd.f32 0.0, %v4588
        %4590 = vmatmul.f32.gmra.mxu0 %v4462
        %v4591 = vpop.f32.mrf.mxu0
        %v4592 = vadd.f32 0.0, %v4591
        %4593 = vmatmul.f32.gmra.mxu0 %v4465
        %v4594 = vpop.f32.mrf.mxu0
        %v4595 = vadd.f32 0.0, %v4594
        %4596 = vdwg.mxu0
        %v4597 = vmul.f32 %v4485, 0.17677669
        %v4598 = vmul.f32 %v4550, 0.17677669
        %v4599 = vmul.f32 %v4488, 0.17677669
        %v4600 = vmul.f32 %v4553, 0.17677669
        %v4601 = vmul.f32 %v4491, 0.17677669
        %v4602 = vmul.f32 %v4556, 0.17677669
        %v4603 = vmul.f32 %v4494, 0.17677669
        %v4604 = vmul.f32 %v4559, 0.17677669
        %v4605 = vmul.f32 %v4497, 0.17677669
        %v4606 = vmul.f32 %v4562, 0.17677669
        %v4607 = vmul.f32 %v4500, 0.17677669
        %v4608 = vmul.f32 %v4565, 0.17677669
        %v4609 = vmul.f32 %v4503, 0.17677669
        %v4610 = vmul.f32 %v4568, 0.17677669
        %v4611 = vmul.f32 %v4506, 0.17677669
        %v4612 = vmul.f32 %v4571, 0.17677669
        %v4613 = vmul.f32 %v4509, 0.17677669
        %v4614 = vmul.f32 %v4574, 0.17677669
        %v4615 = vmul.f32 %v4512, 0.17677669
        %v4616 = vmul.f32 %v4577, 0.17677669
        %v4617 = vmul.f32 %v4515, 0.17677669
        %v4618 = vmul.f32 %v4580, 0.17677669
        %v4619 = vmul.f32 %v4518, 0.17677669
        %v4620 = vmul.f32 %v4583, 0.17677669
        %v4621 = vmul.f32 %v4521, 0.17677669
        %v4622 = vmul.f32 %v4586, 0.17677669
        %v4623 = vmul.f32 %v4524, 0.17677669
        %v4624 = vmul.f32 %v4589, 0.17677669
        %v4625 = vmul.f32 %v4527, 0.17677669
        %v4626 = vmul.f32 %v4592, 0.17677669
        %v4627 = vmul.f32 %v4530, 0.17677669
        %v4628 = vmul.f32 %v4595, 0.17677669
        %v4629 = vmax.f32 %v4597, %v4598
        %4630 = vmax.xlane.f32.xlu0 %v4629
        %v4631 = vpop.xlane.xlu0 %4630
        %v4632 = vmax.f32 %v4599, %v4600
        %4633 = vmax.xlane.f32.xlu0 %v4632
        %v4634 = vpop.xlane.xlu0 %4633
        %v4635 = vmax.f32 %v4601, %v4602
        %4636 = vmax.xlane.f32.xlu0 %v4635
        %v4637 = vpop.xlane.xlu0 %4636
        %v4638 = vmax.f32 %v4603, %v4604
        %4639 = vmax.xlane.f32.xlu0 %v4638
        %v4640 = vpop.xlane.xlu0 %4639
        %v4641 = vmax.f32 %v4605, %v4606
        %4642 = vmax.xlane.f32.xlu0 %v4641
        %v4643 = vpop.xlane.xlu0 %4642
        %v4644 = vmax.f32 %v4607, %v4608
        %4645 = vmax.xlane.f32.xlu0 %v4644
        %v4646 = vpop.xlane.xlu0 %4645
        %v4647 = vmax.f32 %v4609, %v4610
        %4648 = vmax.xlane.f32.xlu0 %v4647
        %v4649 = vpop.xlane.xlu0 %4648
        %v4650 = vmax.f32 %v4611, %v4612
        %4651 = vmax.xlane.f32.xlu0 %v4650
        %v4652 = vpop.xlane.xlu0 %4651
        %v4653 = vmax.f32 %v4613, %v4614
        %4654 = vmax.xlane.f32.xlu0 %v4653
        %v4655 = vpop.xlane.xlu0 %4654
        %v4656 = vmax.f32 %v4615, %v4616
        %4657 = vmax.xlane.f32.xlu0 %v4656
        %v4658 = vpop.xlane.xlu0 %4657
        %v4659 = vmax.f32 %v4617, %v4618
        %4660 = vmax.xlane.f32.xlu0 %v4659
        %v4661 = vpop.xlane.xlu0 %4660
        %v4662 = vmax.f32 %v4619, %v4620
        %4663 = vmax.xlane.f32.xlu0 %v4662
        %v4664 = vpop.xlane.xlu0 %4663
        %v4665 = vmax.f32 %v4621, %v4622
        %4666 = vmax.xlane.f32.xlu0 %v4665
        %v4667 = vpop.xlane.xlu0 %4666
        %v4668 = vmax.f32 %v4623, %v4624
        %4669 = vmax.xlane.f32.xlu0 %v4668
        %v4670 = vpop.xlane.xlu0 %4669
        %v4671 = vmax.f32 %v4625, %v4626
        %4672 = vmax.xlane.f32.xlu0 %v4671
        %v4673 = vpop.xlane.xlu0 %4672
        %v4674 = vmax.f32 %v4627, %v4628
        %4675 = vmax.xlane.f32.xlu0 %v4674
        %v4676 = vpop.xlane.xlu0 %4675
        %v4677 = vsub.f32 %v4597, %v4631
        %v4678 = vsub.f32 %v4598, %v4631
        %v4679 = vsub.f32 %v4599, %v4634
        %v4680 = vsub.f32 %v4600, %v4634
        %v4681 = vsub.f32 %v4601, %v4637
        %v4682 = vsub.f32 %v4602, %v4637
        %v4683 = vsub.f32 %v4603, %v4640
        %v4684 = vsub.f32 %v4604, %v4640
        %v4685 = vsub.f32 %v4605, %v4643
        %v4686 = vsub.f32 %v4606, %v4643
        %v4687 = vsub.f32 %v4607, %v4646
        %v4688 = vsub.f32 %v4608, %v4646
        %v4689 = vsub.f32 %v4609, %v4649
        %v4690 = vsub.f32 %v4610, %v4649
        %v4691 = vsub.f32 %v4611, %v4652
        %v4692 = vsub.f32 %v4612, %v4652
        %v4693 = vsub.f32 %v4613, %v4655
        %v4694 = vsub.f32 %v4614, %v4655
        %v4695 = vsub.f32 %v4615, %v4658
        %v4696 = vsub.f32 %v4616, %v4658
        %v4697 = vsub.f32 %v4617, %v4661
        %v4698 = vsub.f32 %v4618, %v4661
        %v4699 = vsub.f32 %v4619, %v4664
        %v4700 = vsub.f32 %v4620, %v4664
        %v4701 = vsub.f32 %v4621, %v4667
        %v4702 = vsub.f32 %v4622, %v4667
        %v4703 = vsub.f32 %v4623, %v4670
        %v4704 = vsub.f32 %v4624, %v4670
        %v4705 = vsub.f32 %v4625, %v4673
        %v4706 = vsub.f32 %v4626, %v4673
        %v4707 = vsub.f32 %v4627, %v4676
        %v4708 = vsub.f32 %v4628, %v4676
        %v4709 = vmul.f32 %v4677, 1.442695
        %v4710 = vpow.pop %v4709
        %v4711 = vmul.f32 %v4678, 1.442695
        %v4712 = vpow.pop %v4711
        %v4713 = vmul.f32 %v4679, 1.442695
        %v4714 = vpow.pop %v4713
        %v4715 = vmul.f32 %v4680, 1.442695
        %v4716 = vpow.pop %v4715
        %v4717 = vmul.f32 %v4681, 1.442695
        %v4718 = vpow.pop %v4717
        %v4719 = vmul.f32 %v4682, 1.442695
        %v4720 = vpow.pop %v4719
        %v4721 = vmul.f32 %v4683, 1.442695
        %v4722 = vpow.pop %v4721
        %v4723 = vmul.f32 %v4684, 1.442695
        %v4724 = vpow.pop %v4723
        %v4725 = vmul.f32 %v4685, 1.442695
        %v4726 = vpow.pop %v4725
        %v4727 = vmul.f32 %v4686, 1.442695
        %v4728 = vpow.pop %v4727
        %v4729 = vmul.f32 %v4687, 1.442695
        %v4730 = vpow.pop %v4729
        %v4731 = vmul.f32 %v4688, 1.442695
        %v4732 = vpow.pop %v4731
        %v4733 = vmul.f32 %v4689, 1.442695
        %v4734 = vpow.pop %v4733
        %v4735 = vmul.f32 %v4690, 1.442695
        %v4736 = vpow.pop %v4735
        %v4737 = vmul.f32 %v4691, 1.442695
        %v4738 = vpow.pop %v4737
        %v4739 = vmul.f32 %v4692, 1.442695
        %v4740 = vpow.pop %v4739
        %v4741 = vmul.f32 %v4693, 1.442695
        %v4742 = vpow.pop %v4741
        %v4743 = vmul.f32 %v4694, 1.442695
        %v4744 = vpow.pop %v4743
        %v4745 = vmul.f32 %v4695, 1.442695
        %v4746 = vpow.pop %v4745
        %v4747 = vmul.f32 %v4696, 1.442695
        %v4748 = vpow.pop %v4747
        %v4749 = vmul.f32 %v4697, 1.442695
        %v4750 = vpow.pop %v4749
        %v4751 = vmul.f32 %v4698, 1.442695
        %v4752 = vpow.pop %v4751
        %v4753 = vmul.f32 %v4699, 1.442695
        %v4754 = vpow.pop %v4753
        %v4755 = vmul.f32 %v4700, 1.442695
        %v4756 = vpow.pop %v4755
        %v4757 = vmul.f32 %v4701, 1.442695
        %v4758 = vpow.pop %v4757
        %v4759 = vmul.f32 %v4702, 1.442695
        %v4760 = vpow.pop %v4759
        %v4761 = vmul.f32 %v4703, 1.442695
        %v4762 = vpow.pop %v4761
        %v4763 = vmul.f32 %v4704, 1.442695
        %v4764 = vpow.pop %v4763
        %v4765 = vmul.f32 %v4705, 1.442695
        %v4766 = vpow.pop %v4765
        %v4767 = vmul.f32 %v4706, 1.442695
        %v4768 = vpow.pop %v4767
        %v4769 = vmul.f32 %v4707, 1.442695
        %v4770 = vpow.pop %v4769
        %v4771 = vmul.f32 %v4708, 1.442695
        %v4772 = vpow.pop %v4771
        %v4773 = vadd.f32 %v4710, %v4712
        %4774 = vadd.xlane.f32.xlu0 %v4773
        %v4775 = vpop.xlane.xlu0 %4774
        %v4776 = vadd.f32 %v4714, %v4716
        %4777 = vadd.xlane.f32.xlu0 %v4776
        %v4778 = vpop.xlane.xlu0 %4777
        %v4779 = vadd.f32 %v4718, %v4720
        %4780 = vadd.xlane.f32.xlu0 %v4779
        %v4781 = vpop.xlane.xlu0 %4780
        %v4782 = vadd.f32 %v4722, %v4724
        %4783 = vadd.xlane.f32.xlu0 %v4782
        %v4784 = vpop.xlane.xlu0 %4783
        %v4785 = vadd.f32 %v4726, %v4728
        %4786 = vadd.xlane.f32.xlu0 %v4785
        %v4787 = vpop.xlane.xlu0 %4786
        %v4788 = vadd.f32 %v4730, %v4732
        %4789 = vadd.xlane.f32.xlu0 %v4788
        %v4790 = vpop.xlane.xlu0 %4789
        %v4791 = vadd.f32 %v4734, %v4736
        %4792 = vadd.xlane.f32.xlu0 %v4791
        %v4793 = vpop.xlane.xlu0 %4792
        %v4794 = vadd.f32 %v4738, %v4740
        %4795 = vadd.xlane.f32.xlu0 %v4794
        %v4796 = vpop.xlane.xlu0 %4795
        %v4797 = vadd.f32 %v4742, %v4744
        %4798 = vadd.xlane.f32.xlu0 %v4797
        %v4799 = vpop.xlane.xlu0 %4798
        %v4800 = vadd.f32 %v4746, %v4748
        %4801 = vadd.xlane.f32.xlu0 %v4800
        %v4802 = vpop.xlane.xlu0 %4801
        %v4803 = vadd.f32 %v4750, %v4752
        %4804 = vadd.xlane.f32.xlu0 %v4803
        %v4805 = vpop.xlane.xlu0 %4804
        %v4806 = vadd.f32 %v4754, %v4756
        %4807 = vadd.xlane.f32.xlu0 %v4806
        %v4808 = vpop.xlane.xlu0 %4807
        %v4809 = vadd.f32 %v4758, %v4760
        %4810 = vadd.xlane.f32.xlu0 %v4809
        %v4811 = vpop.xlane.xlu0 %4810
        %v4812 = vadd.f32 %v4762, %v4764
        %4813 = vadd.xlane.f32.xlu0 %v4812
        %v4814 = vpop.xlane.xlu0 %4813
        %v4815 = vadd.f32 %v4766, %v4768
        %4816 = vadd.xlane.f32.xlu0 %v4815
        %v4817 = vpop.xlane.xlu0 %4816
        %v4818 = vadd.f32 %v4770, %v4772
        %4819 = vadd.xlane.f32.xlu0 %v4818
        %v4820 = vpop.xlane.xlu0 %4819
        %v4821 = vrcp.pop %v4775
        %v4822 = vmul.f32 %v4775, %v4821
        %v4823 = vsub.f32 1.0, %v4822
        %v4824 = vmul.f32 %v4821, %v4823
        %v4825 = vadd.f32 %v4821, %v4824
        %vm4826 = vweird.f32 %v4775
        %vm4827 = vweird.f32 %v4821
        %vm4828 = vmor %vm4826, %vm4827
        %v4829 = vsel %vm4828, %v4821, %v4825
        %v4830 = vand.u32 2147483647, %v4775
        %vm4831 = vcmp.eq.f32.partialorder %v4830, 8.507059e+37
        %v4832 = vand.u32 %v4775, 2147483648
        %v4833 = vor.u32 1.1754944e-38, %v4832
        %v4834 = vsel %vm4831, %v4833, %v4829
        %v4835 = vmul.f32 %v4710, %v4834
        %v4836 = vmul.f32 %v4712, %v4834
        %v4837 = vrcp.pop %v4778
        %v4838 = vmul.f32 %v4778, %v4837
        %v4839 = vsub.f32 1.0, %v4838
        %v4840 = vmul.f32 %v4837, %v4839
        %v4841 = vadd.f32 %v4837, %v4840
        %vm4842 = vweird.f32 %v4778
        %vm4843 = vweird.f32 %v4837
        %vm4844 = vmor %vm4842, %vm4843
        %v4845 = vsel %vm4844, %v4837, %v4841
        %v4846 = vand.u32 2147483647, %v4778
        %vm4847 = vcmp.eq.f32.partialorder %v4846, 8.507059e+37
        %v4848 = vand.u32 %v4778, 2147483648
        %v4849 = vor.u32 1.1754944e-38, %v4848
        %v4850 = vsel %vm4847, %v4849, %v4845
        %v4851 = vmul.f32 %v4714, %v4850
        %v4852 = vmul.f32 %v4716, %v4850
        %v4853 = vrcp.pop %v4781
        %v4854 = vmul.f32 %v4781, %v4853
        %v4855 = vsub.f32 1.0, %v4854
        %v4856 = vmul.f32 %v4853, %v4855
        %v4857 = vadd.f32 %v4853, %v4856
        %vm4858 = vweird.f32 %v4781
        %vm4859 = vweird.f32 %v4853
        %vm4860 = vmor %vm4858, %vm4859
        %v4861 = vsel %vm4860, %v4853, %v4857
        %v4862 = vand.u32 2147483647, %v4781
        %vm4863 = vcmp.eq.f32.partialorder %v4862, 8.507059e+37
        %v4864 = vand.u32 %v4781, 2147483648
        %v4865 = vor.u32 1.1754944e-38, %v4864
        %v4866 = vsel %vm4863, %v4865, %v4861
        %v4867 = vmul.f32 %v4718, %v4866
        %v4868 = vmul.f32 %v4720, %v4866
        %v4869 = vrcp.pop %v4784
        %v4870 = vmul.f32 %v4784, %v4869
        %v4871 = vsub.f32 1.0, %v4870
        %v4872 = vmul.f32 %v4869, %v4871
        %v4873 = vadd.f32 %v4869, %v4872
        %vm4874 = vweird.f32 %v4784
        %vm4875 = vweird.f32 %v4869
        %vm4876 = vmor %vm4874, %vm4875
        %v4877 = vsel %vm4876, %v4869, %v4873
        %v4878 = vand.u32 2147483647, %v4784
        %vm4879 = vcmp.eq.f32.partialorder %v4878, 8.507059e+37
        %v4880 = vand.u32 %v4784, 2147483648
        %v4881 = vor.u32 1.1754944e-38, %v4880
        %v4882 = vsel %vm4879, %v4881, %v4877
        %v4883 = vmul.f32 %v4722, %v4882
        %v4884 = vmul.f32 %v4724, %v4882
        %v4885 = vrcp.pop %v4787
        %v4886 = vmul.f32 %v4787, %v4885
        %v4887 = vsub.f32 1.0, %v4886
        %v4888 = vmul.f32 %v4885, %v4887
        %v4889 = vadd.f32 %v4885, %v4888
        %vm4890 = vweird.f32 %v4787
        %vm4891 = vweird.f32 %v4885
        %vm4892 = vmor %vm4890, %vm4891
        %v4893 = vsel %vm4892, %v4885, %v4889
        %v4894 = vand.u32 2147483647, %v4787
        %vm4895 = vcmp.eq.f32.partialorder %v4894, 8.507059e+37
        %v4896 = vand.u32 %v4787, 2147483648
        %v4897 = vor.u32 1.1754944e-38, %v4896
        %v4898 = vsel %vm4895, %v4897, %v4893
        %v4899 = vmul.f32 %v4726, %v4898
        %v4900 = vmul.f32 %v4728, %v4898
        %v4901 = vrcp.pop %v4790
        %v4902 = vmul.f32 %v4790, %v4901
        %v4903 = vsub.f32 1.0, %v4902
        %v4904 = vmul.f32 %v4901, %v4903
        %v4905 = vadd.f32 %v4901, %v4904
        %vm4906 = vweird.f32 %v4790
        %vm4907 = vweird.f32 %v4901
        %vm4908 = vmor %vm4906, %vm4907
        %v4909 = vsel %vm4908, %v4901, %v4905
        %v4910 = vand.u32 2147483647, %v4790
        %vm4911 = vcmp.eq.f32.partialorder %v4910, 8.507059e+37
        %v4912 = vand.u32 %v4790, 2147483648
        %v4913 = vor.u32 1.1754944e-38, %v4912
        %v4914 = vsel %vm4911, %v4913, %v4909
        %v4915 = vmul.f32 %v4730, %v4914
        %v4916 = vmul.f32 %v4732, %v4914
        %v4917 = vrcp.pop %v4793
        %v4918 = vmul.f32 %v4793, %v4917
        %v4919 = vsub.f32 1.0, %v4918
        %v4920 = vmul.f32 %v4917, %v4919
        %v4921 = vadd.f32 %v4917, %v4920
        %vm4922 = vweird.f32 %v4793
        %vm4923 = vweird.f32 %v4917
        %vm4924 = vmor %vm4922, %vm4923
        %v4925 = vsel %vm4924, %v4917, %v4921
        %v4926 = vand.u32 2147483647, %v4793
        %vm4927 = vcmp.eq.f32.partialorder %v4926, 8.507059e+37
        %v4928 = vand.u32 %v4793, 2147483648
        %v4929 = vor.u32 1.1754944e-38, %v4928
        %v4930 = vsel %vm4927, %v4929, %v4925
        %v4931 = vmul.f32 %v4734, %v4930
        %v4932 = vmul.f32 %v4736, %v4930
        %v4933 = vrcp.pop %v4796
        %v4934 = vmul.f32 %v4796, %v4933
        %v4935 = vsub.f32 1.0, %v4934
        %v4936 = vmul.f32 %v4933, %v4935
        %v4937 = vadd.f32 %v4933, %v4936
        %vm4938 = vweird.f32 %v4796
        %vm4939 = vweird.f32 %v4933
        %vm4940 = vmor %vm4938, %vm4939
        %v4941 = vsel %vm4940, %v4933, %v4937
        %v4942 = vand.u32 2147483647, %v4796
        %vm4943 = vcmp.eq.f32.partialorder %v4942, 8.507059e+37
        %v4944 = vand.u32 %v4796, 2147483648
        %v4945 = vor.u32 1.1754944e-38, %v4944
        %v4946 = vsel %vm4943, %v4945, %v4941
        %v4947 = vmul.f32 %v4738, %v4946
        %v4948 = vmul.f32 %v4740, %v4946
        %v4949 = vrcp.pop %v4799
        %v4950 = vmul.f32 %v4799, %v4949
        %v4951 = vsub.f32 1.0, %v4950
        %v4952 = vmul.f32 %v4949, %v4951
        %v4953 = vadd.f32 %v4949, %v4952
        %vm4954 = vweird.f32 %v4799
        %vm4955 = vweird.f32 %v4949
        %vm4956 = vmor %vm4954, %vm4955
        %v4957 = vsel %vm4956, %v4949, %v4953
        %v4958 = vand.u32 2147483647, %v4799
        %vm4959 = vcmp.eq.f32.partialorder %v4958, 8.507059e+37
        %v4960 = vand.u32 %v4799, 2147483648
        %v4961 = vor.u32 1.1754944e-38, %v4960
        %v4962 = vsel %vm4959, %v4961, %v4957
        %v4963 = vmul.f32 %v4742, %v4962
        %v4964 = vmul.f32 %v4744, %v4962
        %v4965 = vrcp.pop %v4802
        %v4966 = vmul.f32 %v4802, %v4965
        %v4967 = vsub.f32 1.0, %v4966
        %v4968 = vmul.f32 %v4965, %v4967
        %v4969 = vadd.f32 %v4965, %v4968
        %vm4970 = vweird.f32 %v4802
        %vm4971 = vweird.f32 %v4965
        %vm4972 = vmor %vm4970, %vm4971
        %v4973 = vsel %vm4972, %v4965, %v4969
        %v4974 = vand.u32 2147483647, %v4802
        %vm4975 = vcmp.eq.f32.partialorder %v4974, 8.507059e+37
        %v4976 = vand.u32 %v4802, 2147483648
        %v4977 = vor.u32 1.1754944e-38, %v4976
        %v4978 = vsel %vm4975, %v4977, %v4973
        %v4979 = vmul.f32 %v4746, %v4978
        %v4980 = vmul.f32 %v4748, %v4978
        %v4981 = vrcp.pop %v4805
        %v4982 = vmul.f32 %v4805, %v4981
        %v4983 = vsub.f32 1.0, %v4982
        %v4984 = vmul.f32 %v4981, %v4983
        %v4985 = vadd.f32 %v4981, %v4984
        %vm4986 = vweird.f32 %v4805
        %vm4987 = vweird.f32 %v4981
        %vm4988 = vmor %vm4986, %vm4987
        %v4989 = vsel %vm4988, %v4981, %v4985
        %v4990 = vand.u32 2147483647, %v4805
        %vm4991 = vcmp.eq.f32.partialorder %v4990, 8.507059e+37
        %v4992 = vand.u32 %v4805, 2147483648
        %v4993 = vor.u32 1.1754944e-38, %v4992
        %v4994 = vsel %vm4991, %v4993, %v4989
        %v4995 = vmul.f32 %v4750, %v4994
        %v4996 = vmul.f32 %v4752, %v4994
        %v4997 = vrcp.pop %v4808
        %v4998 = vmul.f32 %v4808, %v4997
        %v4999 = vsub.f32 1.0, %v4998
        %v5000 = vmul.f32 %v4997, %v4999
        %v5001 = vadd.f32 %v4997, %v5000
        %vm5002 = vweird.f32 %v4808
        %vm5003 = vweird.f32 %v4997
        %vm5004 = vmor %vm5002, %vm5003
        %v5005 = vsel %vm5004, %v4997, %v5001
        %v5006 = vand.u32 2147483647, %v4808
        %vm5007 = vcmp.eq.f32.partialorder %v5006, 8.507059e+37
        %v5008 = vand.u32 %v4808, 2147483648
        %v5009 = vor.u32 1.1754944e-38, %v5008
        %v5010 = vsel %vm5007, %v5009, %v5005
        %v5011 = vmul.f32 %v4754, %v5010
        %v5012 = vmul.f32 %v4756, %v5010
        %v5013 = vrcp.pop %v4811
        %v5014 = vmul.f32 %v4811, %v5013
        %v5015 = vsub.f32 1.0, %v5014
        %v5016 = vmul.f32 %v5013, %v5015
        %v5017 = vadd.f32 %v5013, %v5016
        %vm5018 = vweird.f32 %v4811
        %vm5019 = vweird.f32 %v5013
        %vm5020 = vmor %vm5018, %vm5019
        %v5021 = vsel %vm5020, %v5013, %v5017
        %v5022 = vand.u32 2147483647, %v4811
        %vm5023 = vcmp.eq.f32.partialorder %v5022, 8.507059e+37
        %v5024 = vand.u32 %v4811, 2147483648
        %v5025 = vor.u32 1.1754944e-38, %v5024
        %v5026 = vsel %vm5023, %v5025, %v5021
        %v5027 = vmul.f32 %v4758, %v5026
        %v5028 = vmul.f32 %v4760, %v5026
        %v5029 = vrcp.pop %v4814
        %v5030 = vmul.f32 %v4814, %v5029
        %v5031 = vsub.f32 1.0, %v5030
        %v5032 = vmul.f32 %v5029, %v5031
        %v5033 = vadd.f32 %v5029, %v5032
        %vm5034 = vweird.f32 %v4814
        %vm5035 = vweird.f32 %v5029
        %vm5036 = vmor %vm5034, %vm5035
        %v5037 = vsel %vm5036, %v5029, %v5033
        %v5038 = vand.u32 2147483647, %v4814
        %vm5039 = vcmp.eq.f32.partialorder %v5038, 8.507059e+37
        %v5040 = vand.u32 %v4814, 2147483648
        %v5041 = vor.u32 1.1754944e-38, %v5040
        %v5042 = vsel %vm5039, %v5041, %v5037
        %v5043 = vmul.f32 %v4762, %v5042
        %v5044 = vmul.f32 %v4764, %v5042
        %v5045 = vrcp.pop %v4817
        %v5046 = vmul.f32 %v4817, %v5045
        %v5047 = vsub.f32 1.0, %v5046
        %v5048 = vmul.f32 %v5045, %v5047
        %v5049 = vadd.f32 %v5045, %v5048
        %vm5050 = vweird.f32 %v4817
        %vm5051 = vweird.f32 %v5045
        %vm5052 = vmor %vm5050, %vm5051
        %v5053 = vsel %vm5052, %v5045, %v5049
        %v5054 = vand.u32 2147483647, %v4817
        %vm5055 = vcmp.eq.f32.partialorder %v5054, 8.507059e+37
        %v5056 = vand.u32 %v4817, 2147483648
        %v5057 = vor.u32 1.1754944e-38, %v5056
        %v5058 = vsel %vm5055, %v5057, %v5053
        %v5059 = vmul.f32 %v4766, %v5058
        %v5060 = vmul.f32 %v4768, %v5058
        %v5061 = vrcp.pop %v4820
        %v5062 = vmul.f32 %v4820, %v5061
        %v5063 = vsub.f32 1.0, %v5062
        %v5064 = vmul.f32 %v5061, %v5063
        %v5065 = vadd.f32 %v5061, %v5064
        %vm5066 = vweird.f32 %v4820
        %vm5067 = vweird.f32 %v5061
        %vm5068 = vmor %vm5066, %vm5067
        %v5069 = vsel %vm5068, %v5061, %v5065
        %v5070 = vand.u32 2147483647, %v4820
        %vm5071 = vcmp.eq.f32.partialorder %v5070, 8.507059e+37
        %v5072 = vand.u32 %v4820, 2147483648
        %v5073 = vor.u32 1.1754944e-38, %v5072
        %v5074 = vsel %vm5071, %v5073, %v5069
        %v5075 = vmul.f32 %v4770, %v5074
        %v5076 = vmul.f32 %v4772, %v5074
        %5077 = vmatpush.xpose.msra.mxu0 %v5075
        %5078 = vmatpush.xpose.msra.mxu0 %v5059
        %5079 = vmatpush.xpose.msra.mxu0 %v5043
        %5080 = vmatpush.xpose.msra.mxu0 %v5027
        %5081 = vmatpush.xpose.msra.mxu0 %v5011
        %5082 = vmatpush.xpose.msra.mxu0 %v4995
        %5083 = vmatpush.xpose.msra.mxu0 %v4979
        %5084 = vmatpush.xpose.msra.mxu0 %v4963
        %5085 = vmatpush.xpose.msra.mxu0 %v4947
        %5086 = vmatpush.xpose.msra.mxu0 %v4931
        %5087 = vmatpush.xpose.msra.mxu0 %v4915
        %5088 = vmatpush.xpose.msra.mxu0 %v4899
        %5089 = vmatpush.xpose.msra.mxu0 %v4883
        %5090 = vmatpush.xpose.msra.mxu0 %v4867
        %5091 = vmatpush.xpose.msra.mxu0 %v4851
        %5092 = vmatpush.xpose.msra.mxu0 %v4835
        %5093 = vmatmul.f32.gmra.mxu0 %v1133
        %v5094 = vpop.f32.mrf.mxu0
        %v5095 = vadd.f32 0.0, %v5094
        %5096 = vmatmul.f32.gmra.mxu0 %v1136
        %v5097 = vpop.f32.mrf.mxu0
        %v5098 = vadd.f32 0.0, %v5097
        %5099 = vmatmul.f32.gmra.mxu0 %v1139
        %v5100 = vpop.f32.mrf.mxu0
        %v5101 = vadd.f32 0.0, %v5100
        %5102 = vmatmul.f32.gmra.mxu0 %v1142
        %v5103 = vpop.f32.mrf.mxu0
        %v5104 = vadd.f32 0.0, %v5103
        %5105 = vdwg.mxu0
        %5106 = vmatpush.xpose.msra.mxu0 %v5076
        %5107 = vmatpush.xpose.msra.mxu0 %v5060
        %5108 = vmatpush.xpose.msra.mxu0 %v5044
        %5109 = vmatpush.xpose.msra.mxu0 %v5028
        %5110 = vmatpush.xpose.msra.mxu0 %v5012
        %5111 = vmatpush.xpose.msra.mxu0 %v4996
        %5112 = vmatpush.xpose.msra.mxu0 %v4980
        %5113 = vmatpush.xpose.msra.mxu0 %v4964
        %5114 = vmatpush.xpose.msra.mxu0 %v4948
        %5115 = vmatpush.xpose.msra.mxu0 %v4932
        %5116 = vmatpush.xpose.msra.mxu0 %v4916
        %5117 = vmatpush.xpose.msra.mxu0 %v4900
        %5118 = vmatpush.xpose.msra.mxu0 %v4884
        %5119 = vmatpush.xpose.msra.mxu0 %v4868
        %5120 = vmatpush.xpose.msra.mxu0 %v4852
        %5121 = vmatpush.xpose.msra.mxu0 %v4836
        %5122 = vmatmul.f32.gmra.mxu0 %v1246
        %v5123 = vpop.f32.mrf.mxu0
        %v5124 = vadd.f32 %v5095, %v5123
        %5125 = vmatmul.f32.gmra.mxu0 %v1249
        %v5126 = vpop.f32.mrf.mxu0
        %v5127 = vadd.f32 %v5098, %v5126
        %5128 = vmatmul.f32.gmra.mxu0 %v1252
        %v5129 = vpop.f32.mrf.mxu0
        %v5130 = vadd.f32 %v5101, %v5129
        %5131 = vmatmul.f32.gmra.mxu0 %v1255
        %v5132 = vpop.f32.mrf.mxu0
        %v5133 = vadd.f32 %v5104, %v5132
        %5134 = vdwg.mxu0
        %s5135 = scalar_lea.vmem %s5, 16
        %v5136 = vld [vmem:[%s5135] sm:$0xf]
        %v5138 = vsel %vm1325, %v5136, 0
        %5140 = vmatpush.msra.mxu0 0.0
        %5141 = vmatpush.msra.mxu0 0.0
        %5142 = vmatpush.msra.mxu0 0.0
        %5143 = vmatpush.msra.mxu0 0.0
        %5144 = vmatpush.msra.mxu0 0.0
        %5145 = vmatpush.msra.mxu0 0.0
        %5146 = vmatpush.msra.mxu0 0.0
        %5147 = vmatpush.msra.mxu0 0.0
        %5148 = vmatpush.msra.mxu0 0.0
        %5149 = vmatpush.msra.mxu0 0.0
        %5150 = vmatpush.msra.mxu0 0.0
        %5151 = vmatpush.msra.mxu0 0.0
        %5152 = vmatpush.msra.mxu0 %v5133
        %5153 = vmatpush.msra.mxu0 %v5130
        %5154 = vmatpush.msra.mxu0 %v5127
        %5155 = vmatpush.msra.mxu0 %v5124
        %5156 = vmatmul.f32.gmra.mxu0 %v5138
        %v5157 = vpop.f32.mrf.mxu0
        %v5158 = vadd.f32 0.0, %v5157
        %5159 = vdwg.mxu0
        %v5160 = vadd.f32 %v4386, %v5158
        %5161 = vxpose.xlu0.b32.start [1/16] %v599, 128
        %5162 = vxpose.xlu0.b32.cont [2/16] %v602, 128
        %5163 = vxpose.xlu0.b32.cont [3/16] %v605, 128
        %5164 = vxpose.xlu0.b32.cont [4/16] %v608, 128
        %5165 = vxpose.xlu0.b32.cont [5/16] 0.0, 128
        %5166 = vxpose.xlu0.b32.cont [6/16] 0.0, 128
        %5167 = vxpose.xlu0.b32.cont [7/16] 0.0, 128
        %5168 = vxpose.xlu0.b32.cont [8/16] 0.0, 128
        %5169 = vxpose.xlu0.b32.cont [9/16] 0.0, 128
        %5170 = vxpose.xlu0.b32.cont [10/16] 0.0, 128
        %5171 = vxpose.xlu0.b32.cont [11/16] 0.0, 128
        %5172 = vxpose.xlu0.b32.cont [12/16] 0.0, 128
        %5173 = vxpose.xlu0.b32.cont [13/16] 0.0, 128
        %5174 = vxpose.xlu0.b32.cont [14/16] 0.0, 128
        %5175 = vxpose.xlu0.b32.cont [15/16] 0.0, 128
        %5176 = vxpose.xlu0.b32.end [16/16] 0.0, 128
        %v5177 = vpop.trf.xlu0
        %v5178 = vpop.trf.xlu0
        %v5179 = vpop.trf.xlu0
        %v5180 = vpop.trf.xlu0
        %v5181 = vpop.trf.xlu0
        %v5182 = vpop.trf.xlu0
        %v5183 = vpop.trf.xlu0
        %v5184 = vpop.trf.xlu0
        %v5185 = vpop.trf.xlu0
        %v5186 = vpop.trf.xlu0
        %v5187 = vpop.trf.xlu0
        %v5188 = vpop.trf.xlu0
        %v5189 = vpop.trf.xlu0
        %v5190 = vpop.trf.xlu0
        %v5191 = vpop.trf.xlu0
        %v5192 = vpop.trf.xlu0
        %v5194 = vsel %vm1325, %v5177, 0
        %v5197 = vsel %vm1325, %v5178, 0
        %v5200 = vsel %vm1325, %v5179, 0
        %v5203 = vsel %vm1325, %v5180, 0
        %v5206 = vsel %vm1325, %v5181, 0
        %v5209 = vsel %vm1325, %v5182, 0
        %v5212 = vsel %vm1325, %v5183, 0
        %v5215 = vsel %vm1325, %v5184, 0
        %v5218 = vsel %vm1325, %v5185, 0
        %v5221 = vsel %vm1325, %v5186, 0
        %v5224 = vsel %vm1325, %v5187, 0
        %v5227 = vsel %vm1325, %v5188, 0
        %v5230 = vsel %vm1325, %v5189, 0
        %v5233 = vsel %vm1325, %v5190, 0
        %v5236 = vsel %vm1325, %v5191, 0
        %v5239 = vsel %vm1325, %v5192, 0
        %5241 = vmatpush.msra.mxu0 0.0
        %5242 = vmatpush.msra.mxu0 0.0
        %5243 = vmatpush.msra.mxu0 0.0
        %5244 = vmatpush.msra.mxu0 0.0
        %5245 = vmatpush.msra.mxu0 0.0
        %5246 = vmatpush.msra.mxu0 0.0
        %5247 = vmatpush.msra.mxu0 0.0
        %5248 = vmatpush.msra.mxu0 0.0
        %5249 = vmatpush.msra.mxu0 0.0
        %5250 = vmatpush.msra.mxu0 0.0
        %5251 = vmatpush.msra.mxu0 0.0
        %5252 = vmatpush.msra.mxu0 0.0
        %5253 = vmatpush.msra.mxu0 %v825
        %5254 = vmatpush.msra.mxu0 %v822
        %5255 = vmatpush.msra.mxu0 %v819
        %5256 = vmatpush.msra.mxu0 %v816
        %5257 = vmatmul.f32.gmra.mxu0 %v5194
        %v5258 = vpop.f32.mrf.mxu0
        %v5259 = vadd.f32 0.0, %v5258
        %5260 = vmatmul.f32.gmra.mxu0 %v5197
        %v5261 = vpop.f32.mrf.mxu0
        %v5262 = vadd.f32 0.0, %v5261
        %5263 = vmatmul.f32.gmra.mxu0 %v5200
        %v5264 = vpop.f32.mrf.mxu0
        %v5265 = vadd.f32 0.0, %v5264
        %5266 = vmatmul.f32.gmra.mxu0 %v5203
        %v5267 = vpop.f32.mrf.mxu0
        %v5268 = vadd.f32 0.0, %v5267
        %5269 = vmatmul.f32.gmra.mxu0 %v5206
        %v5270 = vpop.f32.mrf.mxu0
        %v5271 = vadd.f32 0.0, %v5270
        %5272 = vmatmul.f32.gmra.mxu0 %v5209
        %v5273 = vpop.f32.mrf.mxu0
        %v5274 = vadd.f32 0.0, %v5273
        %5275 = vmatmul.f32.gmra.mxu0 %v5212
        %v5276 = vpop.f32.mrf.mxu0
        %v5277 = vadd.f32 0.0, %v5276
        %5278 = vmatmul.f32.gmra.mxu0 %v5215
        %v5279 = vpop.f32.mrf.mxu0
        %v5280 = vadd.f32 0.0, %v5279
        %5281 = vmatmul.f32.gmra.mxu0 %v5218
        %v5282 = vpop.f32.mrf.mxu0
        %v5283 = vadd.f32 0.0, %v5282
        %5284 = vmatmul.f32.gmra.mxu0 %v5221
        %v5285 = vpop.f32.mrf.mxu0
        %v5286 = vadd.f32 0.0, %v5285
        %5287 = vmatmul.f32.gmra.mxu0 %v5224
        %v5288 = vpop.f32.mrf.mxu0
        %v5289 = vadd.f32 0.0, %v5288
        %5290 = vmatmul.f32.gmra.mxu0 %v5227
        %v5291 = vpop.f32.mrf.mxu0
        %v5292 = vadd.f32 0.0, %v5291
        %5293 = vmatmul.f32.gmra.mxu0 %v5230
        %v5294 = vpop.f32.mrf.mxu0
        %v5295 = vadd.f32 0.0, %v5294
        %5296 = vmatmul.f32.gmra.mxu0 %v5233
        %v5297 = vpop.f32.mrf.mxu0
        %v5298 = vadd.f32 0.0, %v5297
        %5299 = vmatmul.f32.gmra.mxu0 %v5236
        %v5300 = vpop.f32.mrf.mxu0
        %v5301 = vadd.f32 0.0, %v5300
        %5302 = vmatmul.f32.gmra.mxu0 %v5239
        %v5303 = vpop.f32.mrf.mxu0
        %v5304 = vadd.f32 0.0, %v5303
        %5305 = vdwg.mxu0
        %5306 = vmatpush.msra.mxu0 0.0
        %5307 = vmatpush.msra.mxu0 0.0
        %5308 = vmatpush.msra.mxu0 0.0
        %5309 = vmatpush.msra.mxu0 0.0
        %5310 = vmatpush.msra.mxu0 0.0
        %5311 = vmatpush.msra.mxu0 0.0
        %5312 = vmatpush.msra.mxu0 0.0
        %5313 = vmatpush.msra.mxu0 0.0
        %5314 = vmatpush.msra.mxu0 0.0
        %5315 = vmatpush.msra.mxu0 0.0
        %5316 = vmatpush.msra.mxu0 0.0
        %5317 = vmatpush.msra.mxu0 0.0
        %5318 = vmatpush.msra.mxu0 %v938
        %5319 = vmatpush.msra.mxu0 %v935
        %5320 = vmatpush.msra.mxu0 %v932
        %5321 = vmatpush.msra.mxu0 %v929
        %5322 = vmatmul.f32.gmra.mxu0 %v5194
        %v5323 = vpop.f32.mrf.mxu0
        %v5324 = vadd.f32 0.0, %v5323
        %5325 = vmatmul.f32.gmra.mxu0 %v5197
        %v5326 = vpop.f32.mrf.mxu0
        %v5327 = vadd.f32 0.0, %v5326
        %5328 = vmatmul.f32.gmra.mxu0 %v5200
        %v5329 = vpop.f32.mrf.mxu0
        %v5330 = vadd.f32 0.0, %v5329
        %5331 = vmatmul.f32.gmra.mxu0 %v5203
        %v5332 = vpop.f32.mrf.mxu0
        %v5333 = vadd.f32 0.0, %v5332
        %5334 = vmatmul.f32.gmra.mxu0 %v5206
        %v5335 = vpop.f32.mrf.mxu0
        %v5336 = vadd.f32 0.0, %v5335
        %5337 = vmatmul.f32.gmra.mxu0 %v5209
        %v5338 = vpop.f32.mrf.mxu0
        %v5339 = vadd.f32 0.0, %v5338
        %5340 = vmatmul.f32.gmra.mxu0 %v5212
        %v5341 = vpop.f32.mrf.mxu0
        %v5342 = vadd.f32 0.0, %v5341
        %5343 = vmatmul.f32.gmra.mxu0 %v5215
        %v5344 = vpop.f32.mrf.mxu0
        %v5345 = vadd.f32 0.0, %v5344
        %5346 = vmatmul.f32.gmra.mxu0 %v5218
        %v5347 = vpop.f32.mrf.mxu0
        %v5348 = vadd.f32 0.0, %v5347
        %5349 = vmatmul.f32.gmra.mxu0 %v5221
        %v5350 = vpop.f32.mrf.mxu0
        %v5351 = vadd.f32 0.0, %v5350
        %5352 = vmatmul.f32.gmra.mxu0 %v5224
        %v5353 = vpop.f32.mrf.mxu0
        %v5354 = vadd.f32 0.0, %v5353
        %5355 = vmatmul.f32.gmra.mxu0 %v5227
        %v5356 = vpop.f32.mrf.mxu0
        %v5357 = vadd.f32 0.0, %v5356
        %5358 = vmatmul.f32.gmra.mxu0 %v5230
        %v5359 = vpop.f32.mrf.mxu0
        %v5360 = vadd.f32 0.0, %v5359
        %5361 = vmatmul.f32.gmra.mxu0 %v5233
        %v5362 = vpop.f32.mrf.mxu0
        %v5363 = vadd.f32 0.0, %v5362
        %5364 = vmatmul.f32.gmra.mxu0 %v5236
        %v5365 = vpop.f32.mrf.mxu0
        %v5366 = vadd.f32 0.0, %v5365
        %5367 = vmatmul.f32.gmra.mxu0 %v5239
        %v5368 = vpop.f32.mrf.mxu0
        %v5369 = vadd.f32 0.0, %v5368
        %5370 = vdwg.mxu0
        %v5371 = vmul.f32 %v5259, 0.17677669
        %v5372 = vmul.f32 %v5324, 0.17677669
        %v5373 = vmul.f32 %v5262, 0.17677669
        %v5374 = vmul.f32 %v5327, 0.17677669
        %v5375 = vmul.f32 %v5265, 0.17677669
        %v5376 = vmul.f32 %v5330, 0.17677669
        %v5377 = vmul.f32 %v5268, 0.17677669
        %v5378 = vmul.f32 %v5333, 0.17677669
        %v5379 = vmul.f32 %v5271, 0.17677669
        %v5380 = vmul.f32 %v5336, 0.17677669
        %v5381 = vmul.f32 %v5274, 0.17677669
        %v5382 = vmul.f32 %v5339, 0.17677669
        %v5383 = vmul.f32 %v5277, 0.17677669
        %v5384 = vmul.f32 %v5342, 0.17677669
        %v5385 = vmul.f32 %v5280, 0.17677669
        %v5386 = vmul.f32 %v5345, 0.17677669
        %v5387 = vmul.f32 %v5283, 0.17677669
        %v5388 = vmul.f32 %v5348, 0.17677669
        %v5389 = vmul.f32 %v5286, 0.17677669
        %v5390 = vmul.f32 %v5351, 0.17677669
        %v5391 = vmul.f32 %v5289, 0.17677669
        %v5392 = vmul.f32 %v5354, 0.17677669
        %v5393 = vmul.f32 %v5292, 0.17677669
        %v5394 = vmul.f32 %v5357, 0.17677669
        %v5395 = vmul.f32 %v5295, 0.17677669
        %v5396 = vmul.f32 %v5360, 0.17677669
        %v5397 = vmul.f32 %v5298, 0.17677669
        %v5398 = vmul.f32 %v5363, 0.17677669
        %v5399 = vmul.f32 %v5301, 0.17677669
        %v5400 = vmul.f32 %v5366, 0.17677669
        %v5401 = vmul.f32 %v5304, 0.17677669
        %v5402 = vmul.f32 %v5369, 0.17677669
        %v5403 = vmax.f32 %v5371, %v5372
        %5404 = vmax.xlane.f32.xlu0 %v5403
        %v5405 = vpop.xlane.xlu0 %5404
        %v5406 = vmax.f32 %v5373, %v5374
        %5407 = vmax.xlane.f32.xlu0 %v5406
        %v5408 = vpop.xlane.xlu0 %5407
        %v5409 = vmax.f32 %v5375, %v5376
        %5410 = vmax.xlane.f32.xlu0 %v5409
        %v5411 = vpop.xlane.xlu0 %5410
        %v5412 = vmax.f32 %v5377, %v5378
        %5413 = vmax.xlane.f32.xlu0 %v5412
        %v5414 = vpop.xlane.xlu0 %5413
        %v5415 = vmax.f32 %v5379, %v5380
        %5416 = vmax.xlane.f32.xlu0 %v5415
        %v5417 = vpop.xlane.xlu0 %5416
        %v5418 = vmax.f32 %v5381, %v5382
        %5419 = vmax.xlane.f32.xlu0 %v5418
        %v5420 = vpop.xlane.xlu0 %5419
        %v5421 = vmax.f32 %v5383, %v5384
        %5422 = vmax.xlane.f32.xlu0 %v5421
        %v5423 = vpop.xlane.xlu0 %5422
        %v5424 = vmax.f32 %v5385, %v5386
        %5425 = vmax.xlane.f32.xlu0 %v5424
        %v5426 = vpop.xlane.xlu0 %5425
        %v5427 = vmax.f32 %v5387, %v5388
        %5428 = vmax.xlane.f32.xlu0 %v5427
        %v5429 = vpop.xlane.xlu0 %5428
        %v5430 = vmax.f32 %v5389, %v5390
        %5431 = vmax.xlane.f32.xlu0 %v5430
        %v5432 = vpop.xlane.xlu0 %5431
        %v5433 = vmax.f32 %v5391, %v5392
        %5434 = vmax.xlane.f32.xlu0 %v5433
        %v5435 = vpop.xlane.xlu0 %5434
        %v5436 = vmax.f32 %v5393, %v5394
        %5437 = vmax.xlane.f32.xlu0 %v5436
        %v5438 = vpop.xlane.xlu0 %5437
        %v5439 = vmax.f32 %v5395, %v5396
        %5440 = vmax.xlane.f32.xlu0 %v5439
        %v5441 = vpop.xlane.xlu0 %5440
        %v5442 = vmax.f32 %v5397, %v5398
        %5443 = vmax.xlane.f32.xlu0 %v5442
        %v5444 = vpop.xlane.xlu0 %5443
        %v5445 = vmax.f32 %v5399, %v5400
        %5446 = vmax.xlane.f32.xlu0 %v5445
        %v5447 = vpop.xlane.xlu0 %5446
        %v5448 = vmax.f32 %v5401, %v5402
        %5449 = vmax.xlane.f32.xlu0 %v5448
        %v5450 = vpop.xlane.xlu0 %5449
        %v5451 = vsub.f32 %v5371, %v5405
        %v5452 = vsub.f32 %v5372, %v5405
        %v5453 = vsub.f32 %v5373, %v5408
        %v5454 = vsub.f32 %v5374, %v5408
        %v5455 = vsub.f32 %v5375, %v5411
        %v5456 = vsub.f32 %v5376, %v5411
        %v5457 = vsub.f32 %v5377, %v5414
        %v5458 = vsub.f32 %v5378, %v5414
        %v5459 = vsub.f32 %v5379, %v5417
        %v5460 = vsub.f32 %v5380, %v5417
        %v5461 = vsub.f32 %v5381, %v5420
        %v5462 = vsub.f32 %v5382, %v5420
        %v5463 = vsub.f32 %v5383, %v5423
        %v5464 = vsub.f32 %v5384, %v5423
        %v5465 = vsub.f32 %v5385, %v5426
        %v5466 = vsub.f32 %v5386, %v5426
        %v5467 = vsub.f32 %v5387, %v5429
        %v5468 = vsub.f32 %v5388, %v5429
        %v5469 = vsub.f32 %v5389, %v5432
        %v5470 = vsub.f32 %v5390, %v5432
        %v5471 = vsub.f32 %v5391, %v5435
        %v5472 = vsub.f32 %v5392, %v5435
        %v5473 = vsub.f32 %v5393, %v5438
        %v5474 = vsub.f32 %v5394, %v5438
        %v5475 = vsub.f32 %v5395, %v5441
        %v5476 = vsub.f32 %v5396, %v5441
        %v5477 = vsub.f32 %v5397, %v5444
        %v5478 = vsub.f32 %v5398, %v5444
        %v5479 = vsub.f32 %v5399, %v5447
        %v5480 = vsub.f32 %v5400, %v5447
        %v5481 = vsub.f32 %v5401, %v5450
        %v5482 = vsub.f32 %v5402, %v5450
        %v5483 = vmul.f32 %v5451, 1.442695
        %v5484 = vpow.pop %v5483
        %v5485 = vmul.f32 %v5452, 1.442695
        %v5486 = vpow.pop %v5485
        %v5487 = vmul.f32 %v5453, 1.442695
        %v5488 = vpow.pop %v5487
        %v5489 = vmul.f32 %v5454, 1.442695
        %v5490 = vpow.pop %v5489
        %v5491 = vmul.f32 %v5455, 1.442695
        %v5492 = vpow.pop %v5491
        %v5493 = vmul.f32 %v5456, 1.442695
        %v5494 = vpow.pop %v5493
        %v5495 = vmul.f32 %v5457, 1.442695
        %v5496 = vpow.pop %v5495
        %v5497 = vmul.f32 %v5458, 1.442695
        %v5498 = vpow.pop %v5497
        %v5499 = vmul.f32 %v5459, 1.442695
        %v5500 = vpow.pop %v5499
        %v5501 = vmul.f32 %v5460, 1.442695
        %v5502 = vpow.pop %v5501
        %v5503 = vmul.f32 %v5461, 1.442695
        %v5504 = vpow.pop %v5503
        %v5505 = vmul.f32 %v5462, 1.442695
        %v5506 = vpow.pop %v5505
        %v5507 = vmul.f32 %v5463, 1.442695
        %v5508 = vpow.pop %v5507
        %v5509 = vmul.f32 %v5464, 1.442695
        %v5510 = vpow.pop %v5509
        %v5511 = vmul.f32 %v5465, 1.442695
        %v5512 = vpow.pop %v5511
        %v5513 = vmul.f32 %v5466, 1.442695
        %v5514 = vpow.pop %v5513
        %v5515 = vmul.f32 %v5467, 1.442695
        %v5516 = vpow.pop %v5515
        %v5517 = vmul.f32 %v5468, 1.442695
        %v5518 = vpow.pop %v5517
        %v5519 = vmul.f32 %v5469, 1.442695
        %v5520 = vpow.pop %v5519
        %v5521 = vmul.f32 %v5470, 1.442695
        %v5522 = vpow.pop %v5521
        %v5523 = vmul.f32 %v5471, 1.442695
        %v5524 = vpow.pop %v5523
        %v5525 = vmul.f32 %v5472, 1.442695
        %v5526 = vpow.pop %v5525
        %v5527 = vmul.f32 %v5473, 1.442695
        %v5528 = vpow.pop %v5527
        %v5529 = vmul.f32 %v5474, 1.442695
        %v5530 = vpow.pop %v5529
        %v5531 = vmul.f32 %v5475, 1.442695
        %v5532 = vpow.pop %v5531
        %v5533 = vmul.f32 %v5476, 1.442695
        %v5534 = vpow.pop %v5533
        %v5535 = vmul.f32 %v5477, 1.442695
        %v5536 = vpow.pop %v5535
        %v5537 = vmul.f32 %v5478, 1.442695
        %v5538 = vpow.pop %v5537
        %v5539 = vmul.f32 %v5479, 1.442695
        %v5540 = vpow.pop %v5539
        %v5541 = vmul.f32 %v5480, 1.442695
        %v5542 = vpow.pop %v5541
        %v5543 = vmul.f32 %v5481, 1.442695
        %v5544 = vpow.pop %v5543
        %v5545 = vmul.f32 %v5482, 1.442695
        %v5546 = vpow.pop %v5545
        %v5547 = vadd.f32 %v5484, %v5486
        %5548 = vadd.xlane.f32.xlu0 %v5547
        %v5549 = vpop.xlane.xlu0 %5548
        %v5550 = vadd.f32 %v5488, %v5490
        %5551 = vadd.xlane.f32.xlu0 %v5550
        %v5552 = vpop.xlane.xlu0 %5551
        %v5553 = vadd.f32 %v5492, %v5494
        %5554 = vadd.xlane.f32.xlu0 %v5553
        %v5555 = vpop.xlane.xlu0 %5554
        %v5556 = vadd.f32 %v5496, %v5498
        %5557 = vadd.xlane.f32.xlu0 %v5556
        %v5558 = vpop.xlane.xlu0 %5557
        %v5559 = vadd.f32 %v5500, %v5502
        %5560 = vadd.xlane.f32.xlu0 %v5559
        %v5561 = vpop.xlane.xlu0 %5560
        %v5562 = vadd.f32 %v5504, %v5506
        %5563 = vadd.xlane.f32.xlu0 %v5562
        %v5564 = vpop.xlane.xlu0 %5563
        %v5565 = vadd.f32 %v5508, %v5510
        %5566 = vadd.xlane.f32.xlu0 %v5565
        %v5567 = vpop.xlane.xlu0 %5566
        %v5568 = vadd.f32 %v5512, %v5514
        %5569 = vadd.xlane.f32.xlu0 %v5568
        %v5570 = vpop.xlane.xlu0 %5569
        %v5571 = vadd.f32 %v5516, %v5518
        %5572 = vadd.xlane.f32.xlu0 %v5571
        %v5573 = vpop.xlane.xlu0 %5572
        %v5574 = vadd.f32 %v5520, %v5522
        %5575 = vadd.xlane.f32.xlu0 %v5574
        %v5576 = vpop.xlane.xlu0 %5575
        %v5577 = vadd.f32 %v5524, %v5526
        %5578 = vadd.xlane.f32.xlu0 %v5577
        %v5579 = vpop.xlane.xlu0 %5578
        %v5580 = vadd.f32 %v5528, %v5530
        %5581 = vadd.xlane.f32.xlu0 %v5580
        %v5582 = vpop.xlane.xlu0 %5581
        %v5583 = vadd.f32 %v5532, %v5534
        %5584 = vadd.xlane.f32.xlu0 %v5583
        %v5585 = vpop.xlane.xlu0 %5584
        %v5586 = vadd.f32 %v5536, %v5538
        %5587 = vadd.xlane.f32.xlu0 %v5586
        %v5588 = vpop.xlane.xlu0 %5587
        %v5589 = vadd.f32 %v5540, %v5542
        %5590 = vadd.xlane.f32.xlu0 %v5589
        %v5591 = vpop.xlane.xlu0 %5590
        %v5592 = vadd.f32 %v5544, %v5546
        %5593 = vadd.xlane.f32.xlu0 %v5592
        %v5594 = vpop.xlane.xlu0 %5593
        %v5595 = vrcp.pop %v5549
        %v5596 = vmul.f32 %v5549, %v5595
        %v5597 = vsub.f32 1.0, %v5596
        %v5598 = vmul.f32 %v5595, %v5597
        %v5599 = vadd.f32 %v5595, %v5598
        %vm5600 = vweird.f32 %v5549
        %vm5601 = vweird.f32 %v5595
        %vm5602 = vmor %vm5600, %vm5601
        %v5603 = vsel %vm5602, %v5595, %v5599
        %v5604 = vand.u32 2147483647, %v5549
        %vm5605 = vcmp.eq.f32.partialorder %v5604, 8.507059e+37
        %v5606 = vand.u32 %v5549, 2147483648
        %v5607 = vor.u32 1.1754944e-38, %v5606
        %v5608 = vsel %vm5605, %v5607, %v5603
        %v5609 = vmul.f32 %v5484, %v5608
        %v5610 = vmul.f32 %v5486, %v5608
        %v5611 = vrcp.pop %v5552
        %v5612 = vmul.f32 %v5552, %v5611
        %v5613 = vsub.f32 1.0, %v5612
        %v5614 = vmul.f32 %v5611, %v5613
        %v5615 = vadd.f32 %v5611, %v5614
        %vm5616 = vweird.f32 %v5552
        %vm5617 = vweird.f32 %v5611
        %vm5618 = vmor %vm5616, %vm5617
        %v5619 = vsel %vm5618, %v5611, %v5615
        %v5620 = vand.u32 2147483647, %v5552
        %vm5621 = vcmp.eq.f32.partialorder %v5620, 8.507059e+37
        %v5622 = vand.u32 %v5552, 2147483648
        %v5623 = vor.u32 1.1754944e-38, %v5622
        %v5624 = vsel %vm5621, %v5623, %v5619
        %v5625 = vmul.f32 %v5488, %v5624
        %v5626 = vmul.f32 %v5490, %v5624
        %v5627 = vrcp.pop %v5555
        %v5628 = vmul.f32 %v5555, %v5627
        %v5629 = vsub.f32 1.0, %v5628
        %v5630 = vmul.f32 %v5627, %v5629
        %v5631 = vadd.f32 %v5627, %v5630
        %vm5632 = vweird.f32 %v5555
        %vm5633 = vweird.f32 %v5627
        %vm5634 = vmor %vm5632, %vm5633
        %v5635 = vsel %vm5634, %v5627, %v5631
        %v5636 = vand.u32 2147483647, %v5555
        %vm5637 = vcmp.eq.f32.partialorder %v5636, 8.507059e+37
        %v5638 = vand.u32 %v5555, 2147483648
        %v5639 = vor.u32 1.1754944e-38, %v5638
        %v5640 = vsel %vm5637, %v5639, %v5635
        %v5641 = vmul.f32 %v5492, %v5640
        %v5642 = vmul.f32 %v5494, %v5640
        %v5643 = vrcp.pop %v5558
        %v5644 = vmul.f32 %v5558, %v5643
        %v5645 = vsub.f32 1.0, %v5644
        %v5646 = vmul.f32 %v5643, %v5645
        %v5647 = vadd.f32 %v5643, %v5646
        %vm5648 = vweird.f32 %v5558
        %vm5649 = vweird.f32 %v5643
        %vm5650 = vmor %vm5648, %vm5649
        %v5651 = vsel %vm5650, %v5643, %v5647
        %v5652 = vand.u32 2147483647, %v5558
        %vm5653 = vcmp.eq.f32.partialorder %v5652, 8.507059e+37
        %v5654 = vand.u32 %v5558, 2147483648
        %v5655 = vor.u32 1.1754944e-38, %v5654
        %v5656 = vsel %vm5653, %v5655, %v5651
        %v5657 = vmul.f32 %v5496, %v5656
        %v5658 = vmul.f32 %v5498, %v5656
        %v5659 = vrcp.pop %v5561
        %v5660 = vmul.f32 %v5561, %v5659
        %v5661 = vsub.f32 1.0, %v5660
        %v5662 = vmul.f32 %v5659, %v5661
        %v5663 = vadd.f32 %v5659, %v5662
        %vm5664 = vweird.f32 %v5561
        %vm5665 = vweird.f32 %v5659
        %vm5666 = vmor %vm5664, %vm5665
        %v5667 = vsel %vm5666, %v5659, %v5663
        %v5668 = vand.u32 2147483647, %v5561
        %vm5669 = vcmp.eq.f32.partialorder %v5668, 8.507059e+37
        %v5670 = vand.u32 %v5561, 2147483648
        %v5671 = vor.u32 1.1754944e-38, %v5670
        %v5672 = vsel %vm5669, %v5671, %v5667
        %v5673 = vmul.f32 %v5500, %v5672
        %v5674 = vmul.f32 %v5502, %v5672
        %v5675 = vrcp.pop %v5564
        %v5676 = vmul.f32 %v5564, %v5675
        %v5677 = vsub.f32 1.0, %v5676
        %v5678 = vmul.f32 %v5675, %v5677
        %v5679 = vadd.f32 %v5675, %v5678
        %vm5680 = vweird.f32 %v5564
        %vm5681 = vweird.f32 %v5675
        %vm5682 = vmor %vm5680, %vm5681
        %v5683 = vsel %vm5682, %v5675, %v5679
        %v5684 = vand.u32 2147483647, %v5564
        %vm5685 = vcmp.eq.f32.partialorder %v5684, 8.507059e+37
        %v5686 = vand.u32 %v5564, 2147483648
        %v5687 = vor.u32 1.1754944e-38, %v5686
        %v5688 = vsel %vm5685, %v5687, %v5683
        %v5689 = vmul.f32 %v5504, %v5688
        %v5690 = vmul.f32 %v5506, %v5688
        %v5691 = vrcp.pop %v5567
        %v5692 = vmul.f32 %v5567, %v5691
        %v5693 = vsub.f32 1.0, %v5692
        %v5694 = vmul.f32 %v5691, %v5693
        %v5695 = vadd.f32 %v5691, %v5694
        %vm5696 = vweird.f32 %v5567
        %vm5697 = vweird.f32 %v5691
        %vm5698 = vmor %vm5696, %vm5697
        %v5699 = vsel %vm5698, %v5691, %v5695
        %v5700 = vand.u32 2147483647, %v5567
        %vm5701 = vcmp.eq.f32.partialorder %v5700, 8.507059e+37
        %v5702 = vand.u32 %v5567, 2147483648
        %v5703 = vor.u32 1.1754944e-38, %v5702
        %v5704 = vsel %vm5701, %v5703, %v5699
        %v5705 = vmul.f32 %v5508, %v5704
        %v5706 = vmul.f32 %v5510, %v5704
        %v5707 = vrcp.pop %v5570
        %v5708 = vmul.f32 %v5570, %v5707
        %v5709 = vsub.f32 1.0, %v5708
        %v5710 = vmul.f32 %v5707, %v5709
        %v5711 = vadd.f32 %v5707, %v5710
        %vm5712 = vweird.f32 %v5570
        %vm5713 = vweird.f32 %v5707
        %vm5714 = vmor %vm5712, %vm5713
        %v5715 = vsel %vm5714, %v5707, %v5711
        %v5716 = vand.u32 2147483647, %v5570
        %vm5717 = vcmp.eq.f32.partialorder %v5716, 8.507059e+37
        %v5718 = vand.u32 %v5570, 2147483648
        %v5719 = vor.u32 1.1754944e-38, %v5718
        %v5720 = vsel %vm5717, %v5719, %v5715
        %v5721 = vmul.f32 %v5512, %v5720
        %v5722 = vmul.f32 %v5514, %v5720
        %v5723 = vrcp.pop %v5573
        %v5724 = vmul.f32 %v5573, %v5723
        %v5725 = vsub.f32 1.0, %v5724
        %v5726 = vmul.f32 %v5723, %v5725
        %v5727 = vadd.f32 %v5723, %v5726
        %vm5728 = vweird.f32 %v5573
        %vm5729 = vweird.f32 %v5723
        %vm5730 = vmor %vm5728, %vm5729
        %v5731 = vsel %vm5730, %v5723, %v5727
        %v5732 = vand.u32 2147483647, %v5573
        %vm5733 = vcmp.eq.f32.partialorder %v5732, 8.507059e+37
        %v5734 = vand.u32 %v5573, 2147483648
        %v5735 = vor.u32 1.1754944e-38, %v5734
        %v5736 = vsel %vm5733, %v5735, %v5731
        %v5737 = vmul.f32 %v5516, %v5736
        %v5738 = vmul.f32 %v5518, %v5736
        %v5739 = vrcp.pop %v5576
        %v5740 = vmul.f32 %v5576, %v5739
        %v5741 = vsub.f32 1.0, %v5740
        %v5742 = vmul.f32 %v5739, %v5741
        %v5743 = vadd.f32 %v5739, %v5742
        %vm5744 = vweird.f32 %v5576
        %vm5745 = vweird.f32 %v5739
        %vm5746 = vmor %vm5744, %vm5745
        %v5747 = vsel %vm5746, %v5739, %v5743
        %v5748 = vand.u32 2147483647, %v5576
        %vm5749 = vcmp.eq.f32.partialorder %v5748, 8.507059e+37
        %v5750 = vand.u32 %v5576, 2147483648
        %v5751 = vor.u32 1.1754944e-38, %v5750
        %v5752 = vsel %vm5749, %v5751, %v5747
        %v5753 = vmul.f32 %v5520, %v5752
        %v5754 = vmul.f32 %v5522, %v5752
        %v5755 = vrcp.pop %v5579
        %v5756 = vmul.f32 %v5579, %v5755
        %v5757 = vsub.f32 1.0, %v5756
        %v5758 = vmul.f32 %v5755, %v5757
        %v5759 = vadd.f32 %v5755, %v5758
        %vm5760 = vweird.f32 %v5579
        %vm5761 = vweird.f32 %v5755
        %vm5762 = vmor %vm5760, %vm5761
        %v5763 = vsel %vm5762, %v5755, %v5759
        %v5764 = vand.u32 2147483647, %v5579
        %vm5765 = vcmp.eq.f32.partialorder %v5764, 8.507059e+37
        %v5766 = vand.u32 %v5579, 2147483648
        %v5767 = vor.u32 1.1754944e-38, %v5766
        %v5768 = vsel %vm5765, %v5767, %v5763
        %v5769 = vmul.f32 %v5524, %v5768
        %v5770 = vmul.f32 %v5526, %v5768
        %v5771 = vrcp.pop %v5582
        %v5772 = vmul.f32 %v5582, %v5771
        %v5773 = vsub.f32 1.0, %v5772
        %v5774 = vmul.f32 %v5771, %v5773
        %v5775 = vadd.f32 %v5771, %v5774
        %vm5776 = vweird.f32 %v5582
        %vm5777 = vweird.f32 %v5771
        %vm5778 = vmor %vm5776, %vm5777
        %v5779 = vsel %vm5778, %v5771, %v5775
        %v5780 = vand.u32 2147483647, %v5582
        %vm5781 = vcmp.eq.f32.partialorder %v5780, 8.507059e+37
        %v5782 = vand.u32 %v5582, 2147483648
        %v5783 = vor.u32 1.1754944e-38, %v5782
        %v5784 = vsel %vm5781, %v5783, %v5779
        %v5785 = vmul.f32 %v5528, %v5784
        %v5786 = vmul.f32 %v5530, %v5784
        %v5787 = vrcp.pop %v5585
        %v5788 = vmul.f32 %v5585, %v5787
        %v5789 = vsub.f32 1.0, %v5788
        %v5790 = vmul.f32 %v5787, %v5789
        %v5791 = vadd.f32 %v5787, %v5790
        %vm5792 = vweird.f32 %v5585
        %vm5793 = vweird.f32 %v5787
        %vm5794 = vmor %vm5792, %vm5793
        %v5795 = vsel %vm5794, %v5787, %v5791
        %v5796 = vand.u32 2147483647, %v5585
        %vm5797 = vcmp.eq.f32.partialorder %v5796, 8.507059e+37
        %v5798 = vand.u32 %v5585, 2147483648
        %v5799 = vor.u32 1.1754944e-38, %v5798
        %v5800 = vsel %vm5797, %v5799, %v5795
        %v5801 = vmul.f32 %v5532, %v5800
        %v5802 = vmul.f32 %v5534, %v5800
        %v5803 = vrcp.pop %v5588
        %v5804 = vmul.f32 %v5588, %v5803
        %v5805 = vsub.f32 1.0, %v5804
        %v5806 = vmul.f32 %v5803, %v5805
        %v5807 = vadd.f32 %v5803, %v5806
        %vm5808 = vweird.f32 %v5588
        %vm5809 = vweird.f32 %v5803
        %vm5810 = vmor %vm5808, %vm5809
        %v5811 = vsel %vm5810, %v5803, %v5807
        %v5812 = vand.u32 2147483647, %v5588
        %vm5813 = vcmp.eq.f32.partialorder %v5812, 8.507059e+37
        %v5814 = vand.u32 %v5588, 2147483648
        %v5815 = vor.u32 1.1754944e-38, %v5814
        %v5816 = vsel %vm5813, %v5815, %v5811
        %v5817 = vmul.f32 %v5536, %v5816
        %v5818 = vmul.f32 %v5538, %v5816
        %v5819 = vrcp.pop %v5591
        %v5820 = vmul.f32 %v5591, %v5819
        %v5821 = vsub.f32 1.0, %v5820
        %v5822 = vmul.f32 %v5819, %v5821
        %v5823 = vadd.f32 %v5819, %v5822
        %vm5824 = vweird.f32 %v5591
        %vm5825 = vweird.f32 %v5819
        %vm5826 = vmor %vm5824, %vm5825
        %v5827 = vsel %vm5826, %v5819, %v5823
        %v5828 = vand.u32 2147483647, %v5591
        %vm5829 = vcmp.eq.f32.partialorder %v5828, 8.507059e+37
        %v5830 = vand.u32 %v5591, 2147483648
        %v5831 = vor.u32 1.1754944e-38, %v5830
        %v5832 = vsel %vm5829, %v5831, %v5827
        %v5833 = vmul.f32 %v5540, %v5832
        %v5834 = vmul.f32 %v5542, %v5832
        %v5835 = vrcp.pop %v5594
        %v5836 = vmul.f32 %v5594, %v5835
        %v5837 = vsub.f32 1.0, %v5836
        %v5838 = vmul.f32 %v5835, %v5837
        %v5839 = vadd.f32 %v5835, %v5838
        %vm5840 = vweird.f32 %v5594
        %vm5841 = vweird.f32 %v5835
        %vm5842 = vmor %vm5840, %vm5841
        %v5843 = vsel %vm5842, %v5835, %v5839
        %v5844 = vand.u32 2147483647, %v5594
        %vm5845 = vcmp.eq.f32.partialorder %v5844, 8.507059e+37
        %v5846 = vand.u32 %v5594, 2147483648
        %v5847 = vor.u32 1.1754944e-38, %v5846
        %v5848 = vsel %vm5845, %v5847, %v5843
        %v5849 = vmul.f32 %v5544, %v5848
        %v5850 = vmul.f32 %v5546, %v5848
        %5851 = vmatpush.xpose.msra.mxu0 %v5849
        %5852 = vmatpush.xpose.msra.mxu0 %v5833
        %5853 = vmatpush.xpose.msra.mxu0 %v5817
        %5854 = vmatpush.xpose.msra.mxu0 %v5801
        %5855 = vmatpush.xpose.msra.mxu0 %v5785
        %5856 = vmatpush.xpose.msra.mxu0 %v5769
        %5857 = vmatpush.xpose.msra.mxu0 %v5753
        %5858 = vmatpush.xpose.msra.mxu0 %v5737
        %5859 = vmatpush.xpose.msra.mxu0 %v5721
        %5860 = vmatpush.xpose.msra.mxu0 %v5705
        %5861 = vmatpush.xpose.msra.mxu0 %v5689
        %5862 = vmatpush.xpose.msra.mxu0 %v5673
        %5863 = vmatpush.xpose.msra.mxu0 %v5657
        %5864 = vmatpush.xpose.msra.mxu0 %v5641
        %5865 = vmatpush.xpose.msra.mxu0 %v5625
        %5866 = vmatpush.xpose.msra.mxu0 %v5609
        %5867 = vmatmul.f32.gmra.mxu0 %v1145
        %v5868 = vpop.f32.mrf.mxu0
        %v5869 = vadd.f32 0.0, %v5868
        %5870 = vmatmul.f32.gmra.mxu0 %v1148
        %v5871 = vpop.f32.mrf.mxu0
        %v5872 = vadd.f32 0.0, %v5871
        %5873 = vmatmul.f32.gmra.mxu0 %v1151
        %v5874 = vpop.f32.mrf.mxu0
        %v5875 = vadd.f32 0.0, %v5874
        %5876 = vmatmul.f32.gmra.mxu0 %v1154
        %v5877 = vpop.f32.mrf.mxu0
        %v5878 = vadd.f32 0.0, %v5877
        %5879 = vdwg.mxu0
        %5880 = vmatpush.xpose.msra.mxu0 %v5850
        %5881 = vmatpush.xpose.msra.mxu0 %v5834
        %5882 = vmatpush.xpose.msra.mxu0 %v5818
        %5883 = vmatpush.xpose.msra.mxu0 %v5802
        %5884 = vmatpush.xpose.msra.mxu0 %v5786
        %5885 = vmatpush.xpose.msra.mxu0 %v5770
        %5886 = vmatpush.xpose.msra.mxu0 %v5754
        %5887 = vmatpush.xpose.msra.mxu0 %v5738
        %5888 = vmatpush.xpose.msra.mxu0 %v5722
        %5889 = vmatpush.xpose.msra.mxu0 %v5706
        %5890 = vmatpush.xpose.msra.mxu0 %v5690
        %5891 = vmatpush.xpose.msra.mxu0 %v5674
        %5892 = vmatpush.xpose.msra.mxu0 %v5658
        %5893 = vmatpush.xpose.msra.mxu0 %v5642
        %5894 = vmatpush.xpose.msra.mxu0 %v5626
        %5895 = vmatpush.xpose.msra.mxu0 %v5610
        %5896 = vmatmul.f32.gmra.mxu0 %v1258
        %v5897 = vpop.f32.mrf.mxu0
        %v5898 = vadd.f32 %v5869, %v5897
        %5899 = vmatmul.f32.gmra.mxu0 %v1261
        %v5900 = vpop.f32.mrf.mxu0
        %v5901 = vadd.f32 %v5872, %v5900
        %5902 = vmatmul.f32.gmra.mxu0 %v1264
        %v5903 = vpop.f32.mrf.mxu0
        %v5904 = vadd.f32 %v5875, %v5903
        %5905 = vmatmul.f32.gmra.mxu0 %v1267
        %v5906 = vpop.f32.mrf.mxu0
        %v5907 = vadd.f32 %v5878, %v5906
        %5908 = vdwg.mxu0
        %s5909 = scalar_lea.vmem %s5, 20
        %v5910 = vld [vmem:[%s5909] sm:$0xf]
        %v5912 = vsel %vm1325, %v5910, 0
        %5914 = vmatpush.msra.mxu0 0.0
        %5915 = vmatpush.msra.mxu0 0.0
        %5916 = vmatpush.msra.mxu0 0.0
        %5917 = vmatpush.msra.mxu0 0.0
        %5918 = vmatpush.msra.mxu0 0.0
        %5919 = vmatpush.msra.mxu0 0.0
        %5920 = vmatpush.msra.mxu0 0.0
        %5921 = vmatpush.msra.mxu0 0.0
        %5922 = vmatpush.msra.mxu0 0.0
        %5923 = vmatpush.msra.mxu0 0.0
        %5924 = vmatpush.msra.mxu0 0.0
        %5925 = vmatpush.msra.mxu0 0.0
        %5926 = vmatpush.msra.mxu0 %v5907
        %5927 = vmatpush.msra.mxu0 %v5904
        %5928 = vmatpush.msra.mxu0 %v5901
        %5929 = vmatpush.msra.mxu0 %v5898
        %5930 = vmatmul.f32.gmra.mxu0 %v5912
        %v5931 = vpop.f32.mrf.mxu0
        %v5932 = vadd.f32 0.0, %v5931
        %5933 = vdwg.mxu0
        %v5934 = vadd.f32 %v5160, %v5932
        %5935 = vxpose.xlu0.b32.start [1/16] %v611, 128
        %5936 = vxpose.xlu0.b32.cont [2/16] %v614, 128
        %5937 = vxpose.xlu0.b32.cont [3/16] %v617, 128
        %5938 = vxpose.xlu0.b32.cont [4/16] %v620, 128
        %5939 = vxpose.xlu0.b32.cont [5/16] 0.0, 128
        %5940 = vxpose.xlu0.b32.cont [6/16] 0.0, 128
        %5941 = vxpose.xlu0.b32.cont [7/16] 0.0, 128
        %5942 = vxpose.xlu0.b32.cont [8/16] 0.0, 128
        %5943 = vxpose.xlu0.b32.cont [9/16] 0.0, 128
        %5944 = vxpose.xlu0.b32.cont [10/16] 0.0, 128
        %5945 = vxpose.xlu0.b32.cont [11/16] 0.0, 128
        %5946 = vxpose.xlu0.b32.cont [12/16] 0.0, 128
        %5947 = vxpose.xlu0.b32.cont [13/16] 0.0, 128
        %5948 = vxpose.xlu0.b32.cont [14/16] 0.0, 128
        %5949 = vxpose.xlu0.b32.cont [15/16] 0.0, 128
        %5950 = vxpose.xlu0.b32.end [16/16] 0.0, 128
        %v5951 = vpop.trf.xlu0
        %v5952 = vpop.trf.xlu0
        %v5953 = vpop.trf.xlu0
        %v5954 = vpop.trf.xlu0
        %v5955 = vpop.trf.xlu0
        %v5956 = vpop.trf.xlu0
        %v5957 = vpop.trf.xlu0
        %v5958 = vpop.trf.xlu0
        %v5959 = vpop.trf.xlu0
        %v5960 = vpop.trf.xlu0
        %v5961 = vpop.trf.xlu0
        %v5962 = vpop.trf.xlu0
        %v5963 = vpop.trf.xlu0
        %v5964 = vpop.trf.xlu0
        %v5965 = vpop.trf.xlu0
        %v5966 = vpop.trf.xlu0
        %v5968 = vsel %vm1325, %v5951, 0
        %v5971 = vsel %vm1325, %v5952, 0
        %v5974 = vsel %vm1325, %v5953, 0
        %v5977 = vsel %vm1325, %v5954, 0
        %v5980 = vsel %vm1325, %v5955, 0
        %v5983 = vsel %vm1325, %v5956, 0
        %v5986 = vsel %vm1325, %v5957, 0
        %v5989 = vsel %vm1325, %v5958, 0
        %v5992 = vsel %vm1325, %v5959, 0
        %v5995 = vsel %vm1325, %v5960, 0
        %v5998 = vsel %vm1325, %v5961, 0
        %v6001 = vsel %vm1325, %v5962, 0
        %v6004 = vsel %vm1325, %v5963, 0
        %v6007 = vsel %vm1325, %v5964, 0
        %v6010 = vsel %vm1325, %v5965, 0
        %v6013 = vsel %vm1325, %v5966, 0
        %6015 = vmatpush.msra.mxu0 0.0
        %6016 = vmatpush.msra.mxu0 0.0
        %6017 = vmatpush.msra.mxu0 0.0
        %6018 = vmatpush.msra.mxu0 0.0
        %6019 = vmatpush.msra.mxu0 0.0
        %6020 = vmatpush.msra.mxu0 0.0
        %6021 = vmatpush.msra.mxu0 0.0
        %6022 = vmatpush.msra.mxu0 0.0
        %6023 = vmatpush.msra.mxu0 0.0
        %6024 = vmatpush.msra.mxu0 0.0
        %6025 = vmatpush.msra.mxu0 0.0
        %6026 = vmatpush.msra.mxu0 0.0
        %6027 = vmatpush.msra.mxu0 %v837
        %6028 = vmatpush.msra.mxu0 %v834
        %6029 = vmatpush.msra.mxu0 %v831
        %6030 = vmatpush.msra.mxu0 %v828
        %6031 = vmatmul.f32.gmra.mxu0 %v5968
        %v6032 = vpop.f32.mrf.mxu0
        %v6033 = vadd.f32 0.0, %v6032
        %6034 = vmatmul.f32.gmra.mxu0 %v5971
        %v6035 = vpop.f32.mrf.mxu0
        %v6036 = vadd.f32 0.0, %v6035
        %6037 = vmatmul.f32.gmra.mxu0 %v5974
        %v6038 = vpop.f32.mrf.mxu0
        %v6039 = vadd.f32 0.0, %v6038
        %6040 = vmatmul.f32.gmra.mxu0 %v5977
        %v6041 = vpop.f32.mrf.mxu0
        %v6042 = vadd.f32 0.0, %v6041
        %6043 = vmatmul.f32.gmra.mxu0 %v5980
        %v6044 = vpop.f32.mrf.mxu0
        %v6045 = vadd.f32 0.0, %v6044
        %6046 = vmatmul.f32.gmra.mxu0 %v5983
        %v6047 = vpop.f32.mrf.mxu0
        %v6048 = vadd.f32 0.0, %v6047
        %6049 = vmatmul.f32.gmra.mxu0 %v5986
        %v6050 = vpop.f32.mrf.mxu0
        %v6051 = vadd.f32 0.0, %v6050
        %6052 = vmatmul.f32.gmra.mxu0 %v5989
        %v6053 = vpop.f32.mrf.mxu0
        %v6054 = vadd.f32 0.0, %v6053
        %6055 = vmatmul.f32.gmra.mxu0 %v5992
        %v6056 = vpop.f32.mrf.mxu0
        %v6057 = vadd.f32 0.0, %v6056
        %6058 = vmatmul.f32.gmra.mxu0 %v5995
        %v6059 = vpop.f32.mrf.mxu0
        %v6060 = vadd.f32 0.0, %v6059
        %6061 = vmatmul.f32.gmra.mxu0 %v5998
        %v6062 = vpop.f32.mrf.mxu0
        %v6063 = vadd.f32 0.0, %v6062
        %6064 = vmatmul.f32.gmra.mxu0 %v6001
        %v6065 = vpop.f32.mrf.mxu0
        %v6066 = vadd.f32 0.0, %v6065
        %6067 = vmatmul.f32.gmra.mxu0 %v6004
        %v6068 = vpop.f32.mrf.mxu0
        %v6069 = vadd.f32 0.0, %v6068
        %6070 = vmatmul.f32.gmra.mxu0 %v6007
        %v6071 = vpop.f32.mrf.mxu0
        %v6072 = vadd.f32 0.0, %v6071
        %6073 = vmatmul.f32.gmra.mxu0 %v6010
        %v6074 = vpop.f32.mrf.mxu0
        %v6075 = vadd.f32 0.0, %v6074
        %6076 = vmatmul.f32.gmra.mxu0 %v6013
        %v6077 = vpop.f32.mrf.mxu0
        %v6078 = vadd.f32 0.0, %v6077
        %6079 = vdwg.mxu0
        %6080 = vmatpush.msra.mxu0 0.0
        %6081 = vmatpush.msra.mxu0 0.0
        %6082 = vmatpush.msra.mxu0 0.0
        %6083 = vmatpush.msra.mxu0 0.0
        %6084 = vmatpush.msra.mxu0 0.0
        %6085 = vmatpush.msra.mxu0 0.0
        %6086 = vmatpush.msra.mxu0 0.0
        %6087 = vmatpush.msra.mxu0 0.0
        %6088 = vmatpush.msra.mxu0 0.0
        %6089 = vmatpush.msra.mxu0 0.0
        %6090 = vmatpush.msra.mxu0 0.0
        %6091 = vmatpush.msra.mxu0 0.0
        %6092 = vmatpush.msra.mxu0 %v950
        %6093 = vmatpush.msra.mxu0 %v947
        %6094 = vmatpush.msra.mxu0 %v944
        %6095 = vmatpush.msra.mxu0 %v941
        %6096 = vmatmul.f32.gmra.mxu0 %v5968
        %v6097 = vpop.f32.mrf.mxu0
        %v6098 = vadd.f32 0.0, %v6097
        %6099 = vmatmul.f32.gmra.mxu0 %v5971
        %v6100 = vpop.f32.mrf.mxu0
        %v6101 = vadd.f32 0.0, %v6100
        %6102 = vmatmul.f32.gmra.mxu0 %v5974
        %v6103 = vpop.f32.mrf.mxu0
        %v6104 = vadd.f32 0.0, %v6103
        %6105 = vmatmul.f32.gmra.mxu0 %v5977
        %v6106 = vpop.f32.mrf.mxu0
        %v6107 = vadd.f32 0.0, %v6106
        %6108 = vmatmul.f32.gmra.mxu0 %v5980
        %v6109 = vpop.f32.mrf.mxu0
        %v6110 = vadd.f32 0.0, %v6109
        %6111 = vmatmul.f32.gmra.mxu0 %v5983
        %v6112 = vpop.f32.mrf.mxu0
        %v6113 = vadd.f32 0.0, %v6112
        %6114 = vmatmul.f32.gmra.mxu0 %v5986
        %v6115 = vpop.f32.mrf.mxu0
        %v6116 = vadd.f32 0.0, %v6115
        %6117 = vmatmul.f32.gmra.mxu0 %v5989
        %v6118 = vpop.f32.mrf.mxu0
        %v6119 = vadd.f32 0.0, %v6118
        %6120 = vmatmul.f32.gmra.mxu0 %v5992
        %v6121 = vpop.f32.mrf.mxu0
        %v6122 = vadd.f32 0.0, %v6121
        %6123 = vmatmul.f32.gmra.mxu0 %v5995
        %v6124 = vpop.f32.mrf.mxu0
        %v6125 = vadd.f32 0.0, %v6124
        %6126 = vmatmul.f32.gmra.mxu0 %v5998
        %v6127 = vpop.f32.mrf.mxu0
        %v6128 = vadd.f32 0.0, %v6127
        %6129 = vmatmul.f32.gmra.mxu0 %v6001
        %v6130 = vpop.f32.mrf.mxu0
        %v6131 = vadd.f32 0.0, %v6130
        %6132 = vmatmul.f32.gmra.mxu0 %v6004
        %v6133 = vpop.f32.mrf.mxu0
        %v6134 = vadd.f32 0.0, %v6133
        %6135 = vmatmul.f32.gmra.mxu0 %v6007
        %v6136 = vpop.f32.mrf.mxu0
        %v6137 = vadd.f32 0.0, %v6136
        %6138 = vmatmul.f32.gmra.mxu0 %v6010
        %v6139 = vpop.f32.mrf.mxu0
        %v6140 = vadd.f32 0.0, %v6139
        %6141 = vmatmul.f32.gmra.mxu0 %v6013
        %v6142 = vpop.f32.mrf.mxu0
        %v6143 = vadd.f32 0.0, %v6142
        %6144 = vdwg.mxu0
        %v6145 = vmul.f32 %v6033, 0.17677669
        %v6146 = vmul.f32 %v6098, 0.17677669
        %v6147 = vmul.f32 %v6036, 0.17677669
        %v6148 = vmul.f32 %v6101, 0.17677669
        %v6149 = vmul.f32 %v6039, 0.17677669
        %v6150 = vmul.f32 %v6104, 0.17677669
        %v6151 = vmul.f32 %v6042, 0.17677669
        %v6152 = vmul.f32 %v6107, 0.17677669
        %v6153 = vmul.f32 %v6045, 0.17677669
        %v6154 = vmul.f32 %v6110, 0.17677669
        %v6155 = vmul.f32 %v6048, 0.17677669
        %v6156 = vmul.f32 %v6113, 0.17677669
        %v6157 = vmul.f32 %v6051, 0.17677669
        %v6158 = vmul.f32 %v6116, 0.17677669
        %v6159 = vmul.f32 %v6054, 0.17677669
        %v6160 = vmul.f32 %v6119, 0.17677669
        %v6161 = vmul.f32 %v6057, 0.17677669
        %v6162 = vmul.f32 %v6122, 0.17677669
        %v6163 = vmul.f32 %v6060, 0.17677669
        %v6164 = vmul.f32 %v6125, 0.17677669
        %v6165 = vmul.f32 %v6063, 0.17677669
        %v6166 = vmul.f32 %v6128, 0.17677669
        %v6167 = vmul.f32 %v6066, 0.17677669
        %v6168 = vmul.f32 %v6131, 0.17677669
        %v6169 = vmul.f32 %v6069, 0.17677669
        %v6170 = vmul.f32 %v6134, 0.17677669
        %v6171 = vmul.f32 %v6072, 0.17677669
        %v6172 = vmul.f32 %v6137, 0.17677669
        %v6173 = vmul.f32 %v6075, 0.17677669
        %v6174 = vmul.f32 %v6140, 0.17677669
        %v6175 = vmul.f32 %v6078, 0.17677669
        %v6176 = vmul.f32 %v6143, 0.17677669
        %v6177 = vmax.f32 %v6145, %v6146
        %6178 = vmax.xlane.f32.xlu0 %v6177
        %v6179 = vpop.xlane.xlu0 %6178
        %v6180 = vmax.f32 %v6147, %v6148
        %6181 = vmax.xlane.f32.xlu0 %v6180
        %v6182 = vpop.xlane.xlu0 %6181
        %v6183 = vmax.f32 %v6149, %v6150
        %6184 = vmax.xlane.f32.xlu0 %v6183
        %v6185 = vpop.xlane.xlu0 %6184
        %v6186 = vmax.f32 %v6151, %v6152
        %6187 = vmax.xlane.f32.xlu0 %v6186
        %v6188 = vpop.xlane.xlu0 %6187
        %v6189 = vmax.f32 %v6153, %v6154
        %6190 = vmax.xlane.f32.xlu0 %v6189
        %v6191 = vpop.xlane.xlu0 %6190
        %v6192 = vmax.f32 %v6155, %v6156
        %6193 = vmax.xlane.f32.xlu0 %v6192
        %v6194 = vpop.xlane.xlu0 %6193
        %v6195 = vmax.f32 %v6157, %v6158
        %6196 = vmax.xlane.f32.xlu0 %v6195
        %v6197 = vpop.xlane.xlu0 %6196
        %v6198 = vmax.f32 %v6159, %v6160
        %6199 = vmax.xlane.f32.xlu0 %v6198
        %v6200 = vpop.xlane.xlu0 %6199
        %v6201 = vmax.f32 %v6161, %v6162
        %6202 = vmax.xlane.f32.xlu0 %v6201
        %v6203 = vpop.xlane.xlu0 %6202
        %v6204 = vmax.f32 %v6163, %v6164
        %6205 = vmax.xlane.f32.xlu0 %v6204
        %v6206 = vpop.xlane.xlu0 %6205
        %v6207 = vmax.f32 %v6165, %v6166
        %6208 = vmax.xlane.f32.xlu0 %v6207
        %v6209 = vpop.xlane.xlu0 %6208
        %v6210 = vmax.f32 %v6167, %v6168
        %6211 = vmax.xlane.f32.xlu0 %v6210
        %v6212 = vpop.xlane.xlu0 %6211
        %v6213 = vmax.f32 %v6169, %v6170
        %6214 = vmax.xlane.f32.xlu0 %v6213
        %v6215 = vpop.xlane.xlu0 %6214
        %v6216 = vmax.f32 %v6171, %v6172
        %6217 = vmax.xlane.f32.xlu0 %v6216
        %v6218 = vpop.xlane.xlu0 %6217
        %v6219 = vmax.f32 %v6173, %v6174
        %6220 = vmax.xlane.f32.xlu0 %v6219
        %v6221 = vpop.xlane.xlu0 %6220
        %v6222 = vmax.f32 %v6175, %v6176
        %6223 = vmax.xlane.f32.xlu0 %v6222
        %v6224 = vpop.xlane.xlu0 %6223
        %v6225 = vsub.f32 %v6145, %v6179
        %v6226 = vsub.f32 %v6146, %v6179
        %v6227 = vsub.f32 %v6147, %v6182
        %v6228 = vsub.f32 %v6148, %v6182
        %v6229 = vsub.f32 %v6149, %v6185
        %v6230 = vsub.f32 %v6150, %v6185
        %v6231 = vsub.f32 %v6151, %v6188
        %v6232 = vsub.f32 %v6152, %v6188
        %v6233 = vsub.f32 %v6153, %v6191
        %v6234 = vsub.f32 %v6154, %v6191
        %v6235 = vsub.f32 %v6155, %v6194
        %v6236 = vsub.f32 %v6156, %v6194
        %v6237 = vsub.f32 %v6157, %v6197
        %v6238 = vsub.f32 %v6158, %v6197
        %v6239 = vsub.f32 %v6159, %v6200
        %v6240 = vsub.f32 %v6160, %v6200
        %v6241 = vsub.f32 %v6161, %v6203
        %v6242 = vsub.f32 %v6162, %v6203
        %v6243 = vsub.f32 %v6163, %v6206
        %v6244 = vsub.f32 %v6164, %v6206
        %v6245 = vsub.f32 %v6165, %v6209
        %v6246 = vsub.f32 %v6166, %v6209
        %v6247 = vsub.f32 %v6167, %v6212
        %v6248 = vsub.f32 %v6168, %v6212
        %v6249 = vsub.f32 %v6169, %v6215
        %v6250 = vsub.f32 %v6170, %v6215
        %v6251 = vsub.f32 %v6171, %v6218
        %v6252 = vsub.f32 %v6172, %v6218
        %v6253 = vsub.f32 %v6173, %v6221
        %v6254 = vsub.f32 %v6174, %v6221
        %v6255 = vsub.f32 %v6175, %v6224
        %v6256 = vsub.f32 %v6176, %v6224
        %v6257 = vmul.f32 %v6225, 1.442695
        %v6258 = vpow.pop %v6257
        %v6259 = vmul.f32 %v6226, 1.442695
        %v6260 = vpow.pop %v6259
        %v6261 = vmul.f32 %v6227, 1.442695
        %v6262 = vpow.pop %v6261
        %v6263 = vmul.f32 %v6228, 1.442695
        %v6264 = vpow.pop %v6263
        %v6265 = vmul.f32 %v6229, 1.442695
        %v6266 = vpow.pop %v6265
        %v6267 = vmul.f32 %v6230, 1.442695
        %v6268 = vpow.pop %v6267
        %v6269 = vmul.f32 %v6231, 1.442695
        %v6270 = vpow.pop %v6269
        %v6271 = vmul.f32 %v6232, 1.442695
        %v6272 = vpow.pop %v6271
        %v6273 = vmul.f32 %v6233, 1.442695
        %v6274 = vpow.pop %v6273
        %v6275 = vmul.f32 %v6234, 1.442695
        %v6276 = vpow.pop %v6275
        %v6277 = vmul.f32 %v6235, 1.442695
        %v6278 = vpow.pop %v6277
        %v6279 = vmul.f32 %v6236, 1.442695
        %v6280 = vpow.pop %v6279
        %v6281 = vmul.f32 %v6237, 1.442695
        %v6282 = vpow.pop %v6281
        %v6283 = vmul.f32 %v6238, 1.442695
        %v6284 = vpow.pop %v6283
        %v6285 = vmul.f32 %v6239, 1.442695
        %v6286 = vpow.pop %v6285
        %v6287 = vmul.f32 %v6240, 1.442695
        %v6288 = vpow.pop %v6287
        %v6289 = vmul.f32 %v6241, 1.442695
        %v6290 = vpow.pop %v6289
        %v6291 = vmul.f32 %v6242, 1.442695
        %v6292 = vpow.pop %v6291
        %v6293 = vmul.f32 %v6243, 1.442695
        %v6294 = vpow.pop %v6293
        %v6295 = vmul.f32 %v6244, 1.442695
        %v6296 = vpow.pop %v6295
        %v6297 = vmul.f32 %v6245, 1.442695
        %v6298 = vpow.pop %v6297
        %v6299 = vmul.f32 %v6246, 1.442695
        %v6300 = vpow.pop %v6299
        %v6301 = vmul.f32 %v6247, 1.442695
        %v6302 = vpow.pop %v6301
        %v6303 = vmul.f32 %v6248, 1.442695
        %v6304 = vpow.pop %v6303
        %v6305 = vmul.f32 %v6249, 1.442695
        %v6306 = vpow.pop %v6305
        %v6307 = vmul.f32 %v6250, 1.442695
        %v6308 = vpow.pop %v6307
        %v6309 = vmul.f32 %v6251, 1.442695
        %v6310 = vpow.pop %v6309
        %v6311 = vmul.f32 %v6252, 1.442695
        %v6312 = vpow.pop %v6311
        %v6313 = vmul.f32 %v6253, 1.442695
        %v6314 = vpow.pop %v6313
        %v6315 = vmul.f32 %v6254, 1.442695
        %v6316 = vpow.pop %v6315
        %v6317 = vmul.f32 %v6255, 1.442695
        %v6318 = vpow.pop %v6317
        %v6319 = vmul.f32 %v6256, 1.442695
        %v6320 = vpow.pop %v6319
        %v6321 = vadd.f32 %v6258, %v6260
        %6322 = vadd.xlane.f32.xlu0 %v6321
        %v6323 = vpop.xlane.xlu0 %6322
        %v6324 = vadd.f32 %v6262, %v6264
        %6325 = vadd.xlane.f32.xlu0 %v6324
        %v6326 = vpop.xlane.xlu0 %6325
        %v6327 = vadd.f32 %v6266, %v6268
        %6328 = vadd.xlane.f32.xlu0 %v6327
        %v6329 = vpop.xlane.xlu0 %6328
        %v6330 = vadd.f32 %v6270, %v6272
        %6331 = vadd.xlane.f32.xlu0 %v6330
        %v6332 = vpop.xlane.xlu0 %6331
        %v6333 = vadd.f32 %v6274, %v6276
        %6334 = vadd.xlane.f32.xlu0 %v6333
        %v6335 = vpop.xlane.xlu0 %6334
        %v6336 = vadd.f32 %v6278, %v6280
        %6337 = vadd.xlane.f32.xlu0 %v6336
        %v6338 = vpop.xlane.xlu0 %6337
        %v6339 = vadd.f32 %v6282, %v6284
        %6340 = vadd.xlane.f32.xlu0 %v6339
        %v6341 = vpop.xlane.xlu0 %6340
        %v6342 = vadd.f32 %v6286, %v6288
        %6343 = vadd.xlane.f32.xlu0 %v6342
        %v6344 = vpop.xlane.xlu0 %6343
        %v6345 = vadd.f32 %v6290, %v6292
        %6346 = vadd.xlane.f32.xlu0 %v6345
        %v6347 = vpop.xlane.xlu0 %6346
        %v6348 = vadd.f32 %v6294, %v6296
        %6349 = vadd.xlane.f32.xlu0 %v6348
        %v6350 = vpop.xlane.xlu0 %6349
        %v6351 = vadd.f32 %v6298, %v6300
        %6352 = vadd.xlane.f32.xlu0 %v6351
        %v6353 = vpop.xlane.xlu0 %6352
        %v6354 = vadd.f32 %v6302, %v6304
        %6355 = vadd.xlane.f32.xlu0 %v6354
        %v6356 = vpop.xlane.xlu0 %6355
        %v6357 = vadd.f32 %v6306, %v6308
        %6358 = vadd.xlane.f32.xlu0 %v6357
        %v6359 = vpop.xlane.xlu0 %6358
        %v6360 = vadd.f32 %v6310, %v6312
        %6361 = vadd.xlane.f32.xlu0 %v6360
        %v6362 = vpop.xlane.xlu0 %6361
        %v6363 = vadd.f32 %v6314, %v6316
        %6364 = vadd.xlane.f32.xlu0 %v6363
        %v6365 = vpop.xlane.xlu0 %6364
        %v6366 = vadd.f32 %v6318, %v6320
        %6367 = vadd.xlane.f32.xlu0 %v6366
        %v6368 = vpop.xlane.xlu0 %6367
        %v6369 = vrcp.pop %v6323
        %v6370 = vmul.f32 %v6323, %v6369
        %v6371 = vsub.f32 1.0, %v6370
        %v6372 = vmul.f32 %v6369, %v6371
        %v6373 = vadd.f32 %v6369, %v6372
        %vm6374 = vweird.f32 %v6323
        %vm6375 = vweird.f32 %v6369
        %vm6376 = vmor %vm6374, %vm6375
        %v6377 = vsel %vm6376, %v6369, %v6373
        %v6378 = vand.u32 2147483647, %v6323
        %vm6379 = vcmp.eq.f32.partialorder %v6378, 8.507059e+37
        %v6380 = vand.u32 %v6323, 2147483648
        %v6381 = vor.u32 1.1754944e-38, %v6380
        %v6382 = vsel %vm6379, %v6381, %v6377
        %v6383 = vmul.f32 %v6258, %v6382
        %v6384 = vmul.f32 %v6260, %v6382
        %v6385 = vrcp.pop %v6326
        %v6386 = vmul.f32 %v6326, %v6385
        %v6387 = vsub.f32 1.0, %v6386
        %v6388 = vmul.f32 %v6385, %v6387
        %v6389 = vadd.f32 %v6385, %v6388
        %vm6390 = vweird.f32 %v6326
        %vm6391 = vweird.f32 %v6385
        %vm6392 = vmor %vm6390, %vm6391
        %v6393 = vsel %vm6392, %v6385, %v6389
        %v6394 = vand.u32 2147483647, %v6326
        %vm6395 = vcmp.eq.f32.partialorder %v6394, 8.507059e+37
        %v6396 = vand.u32 %v6326, 2147483648
        %v6397 = vor.u32 1.1754944e-38, %v6396
        %v6398 = vsel %vm6395, %v6397, %v6393
        %v6399 = vmul.f32 %v6262, %v6398
        %v6400 = vmul.f32 %v6264, %v6398
        %v6401 = vrcp.pop %v6329
        %v6402 = vmul.f32 %v6329, %v6401
        %v6403 = vsub.f32 1.0, %v6402
        %v6404 = vmul.f32 %v6401, %v6403
        %v6405 = vadd.f32 %v6401, %v6404
        %vm6406 = vweird.f32 %v6329
        %vm6407 = vweird.f32 %v6401
        %vm6408 = vmor %vm6406, %vm6407
        %v6409 = vsel %vm6408, %v6401, %v6405
        %v6410 = vand.u32 2147483647, %v6329
        %vm6411 = vcmp.eq.f32.partialorder %v6410, 8.507059e+37
        %v6412 = vand.u32 %v6329, 2147483648
        %v6413 = vor.u32 1.1754944e-38, %v6412
        %v6414 = vsel %vm6411, %v6413, %v6409
        %v6415 = vmul.f32 %v6266, %v6414
        %v6416 = vmul.f32 %v6268, %v6414
        %v6417 = vrcp.pop %v6332
        %v6418 = vmul.f32 %v6332, %v6417
        %v6419 = vsub.f32 1.0, %v6418
        %v6420 = vmul.f32 %v6417, %v6419
        %v6421 = vadd.f32 %v6417, %v6420
        %vm6422 = vweird.f32 %v6332
        %vm6423 = vweird.f32 %v6417
        %vm6424 = vmor %vm6422, %vm6423
        %v6425 = vsel %vm6424, %v6417, %v6421
        %v6426 = vand.u32 2147483647, %v6332
        %vm6427 = vcmp.eq.f32.partialorder %v6426, 8.507059e+37
        %v6428 = vand.u32 %v6332, 2147483648
        %v6429 = vor.u32 1.1754944e-38, %v6428
        %v6430 = vsel %vm6427, %v6429, %v6425
        %v6431 = vmul.f32 %v6270, %v6430
        %v6432 = vmul.f32 %v6272, %v6430
        %v6433 = vrcp.pop %v6335
        %v6434 = vmul.f32 %v6335, %v6433
        %v6435 = vsub.f32 1.0, %v6434
        %v6436 = vmul.f32 %v6433, %v6435
        %v6437 = vadd.f32 %v6433, %v6436
        %vm6438 = vweird.f32 %v6335
        %vm6439 = vweird.f32 %v6433
        %vm6440 = vmor %vm6438, %vm6439
        %v6441 = vsel %vm6440, %v6433, %v6437
        %v6442 = vand.u32 2147483647, %v6335
        %vm6443 = vcmp.eq.f32.partialorder %v6442, 8.507059e+37
        %v6444 = vand.u32 %v6335, 2147483648
        %v6445 = vor.u32 1.1754944e-38, %v6444
        %v6446 = vsel %vm6443, %v6445, %v6441
        %v6447 = vmul.f32 %v6274, %v6446
        %v6448 = vmul.f32 %v6276, %v6446
        %v6449 = vrcp.pop %v6338
        %v6450 = vmul.f32 %v6338, %v6449
        %v6451 = vsub.f32 1.0, %v6450
        %v6452 = vmul.f32 %v6449, %v6451
        %v6453 = vadd.f32 %v6449, %v6452
        %vm6454 = vweird.f32 %v6338
        %vm6455 = vweird.f32 %v6449
        %vm6456 = vmor %vm6454, %vm6455
        %v6457 = vsel %vm6456, %v6449, %v6453
        %v6458 = vand.u32 2147483647, %v6338
        %vm6459 = vcmp.eq.f32.partialorder %v6458, 8.507059e+37
        %v6460 = vand.u32 %v6338, 2147483648
        %v6461 = vor.u32 1.1754944e-38, %v6460
        %v6462 = vsel %vm6459, %v6461, %v6457
        %v6463 = vmul.f32 %v6278, %v6462
        %v6464 = vmul.f32 %v6280, %v6462
        %v6465 = vrcp.pop %v6341
        %v6466 = vmul.f32 %v6341, %v6465
        %v6467 = vsub.f32 1.0, %v6466
        %v6468 = vmul.f32 %v6465, %v6467
        %v6469 = vadd.f32 %v6465, %v6468
        %vm6470 = vweird.f32 %v6341
        %vm6471 = vweird.f32 %v6465
        %vm6472 = vmor %vm6470, %vm6471
        %v6473 = vsel %vm6472, %v6465, %v6469
        %v6474 = vand.u32 2147483647, %v6341
        %vm6475 = vcmp.eq.f32.partialorder %v6474, 8.507059e+37
        %v6476 = vand.u32 %v6341, 2147483648
        %v6477 = vor.u32 1.1754944e-38, %v6476
        %v6478 = vsel %vm6475, %v6477, %v6473
        %v6479 = vmul.f32 %v6282, %v6478
        %v6480 = vmul.f32 %v6284, %v6478
        %v6481 = vrcp.pop %v6344
        %v6482 = vmul.f32 %v6344, %v6481
        %v6483 = vsub.f32 1.0, %v6482
        %v6484 = vmul.f32 %v6481, %v6483
        %v6485 = vadd.f32 %v6481, %v6484
        %vm6486 = vweird.f32 %v6344
        %vm6487 = vweird.f32 %v6481
        %vm6488 = vmor %vm6486, %vm6487
        %v6489 = vsel %vm6488, %v6481, %v6485
        %v6490 = vand.u32 2147483647, %v6344
        %vm6491 = vcmp.eq.f32.partialorder %v6490, 8.507059e+37
        %v6492 = vand.u32 %v6344, 2147483648
        %v6493 = vor.u32 1.1754944e-38, %v6492
        %v6494 = vsel %vm6491, %v6493, %v6489
        %v6495 = vmul.f32 %v6286, %v6494
        %v6496 = vmul.f32 %v6288, %v6494
        %v6497 = vrcp.pop %v6347
        %v6498 = vmul.f32 %v6347, %v6497
        %v6499 = vsub.f32 1.0, %v6498
        %v6500 = vmul.f32 %v6497, %v6499
        %v6501 = vadd.f32 %v6497, %v6500
        %vm6502 = vweird.f32 %v6347
        %vm6503 = vweird.f32 %v6497
        %vm6504 = vmor %vm6502, %vm6503
        %v6505 = vsel %vm6504, %v6497, %v6501
        %v6506 = vand.u32 2147483647, %v6347
        %vm6507 = vcmp.eq.f32.partialorder %v6506, 8.507059e+37
        %v6508 = vand.u32 %v6347, 2147483648
        %v6509 = vor.u32 1.1754944e-38, %v6508
        %v6510 = vsel %vm6507, %v6509, %v6505
        %v6511 = vmul.f32 %v6290, %v6510
        %v6512 = vmul.f32 %v6292, %v6510
        %v6513 = vrcp.pop %v6350
        %v6514 = vmul.f32 %v6350, %v6513
        %v6515 = vsub.f32 1.0, %v6514
        %v6516 = vmul.f32 %v6513, %v6515
        %v6517 = vadd.f32 %v6513, %v6516
        %vm6518 = vweird.f32 %v6350
        %vm6519 = vweird.f32 %v6513
        %vm6520 = vmor %vm6518, %vm6519
        %v6521 = vsel %vm6520, %v6513, %v6517
        %v6522 = vand.u32 2147483647, %v6350
        %vm6523 = vcmp.eq.f32.partialorder %v6522, 8.507059e+37
        %v6524 = vand.u32 %v6350, 2147483648
        %v6525 = vor.u32 1.1754944e-38, %v6524
        %v6526 = vsel %vm6523, %v6525, %v6521
        %v6527 = vmul.f32 %v6294, %v6526
        %v6528 = vmul.f32 %v6296, %v6526
        %v6529 = vrcp.pop %v6353
        %v6530 = vmul.f32 %v6353, %v6529
        %v6531 = vsub.f32 1.0, %v6530
        %v6532 = vmul.f32 %v6529, %v6531
        %v6533 = vadd.f32 %v6529, %v6532
        %vm6534 = vweird.f32 %v6353
        %vm6535 = vweird.f32 %v6529
        %vm6536 = vmor %vm6534, %vm6535
        %v6537 = vsel %vm6536, %v6529, %v6533
        %v6538 = vand.u32 2147483647, %v6353
        %vm6539 = vcmp.eq.f32.partialorder %v6538, 8.507059e+37
        %v6540 = vand.u32 %v6353, 2147483648
        %v6541 = vor.u32 1.1754944e-38, %v6540
        %v6542 = vsel %vm6539, %v6541, %v6537
        %v6543 = vmul.f32 %v6298, %v6542
        %v6544 = vmul.f32 %v6300, %v6542
        %v6545 = vrcp.pop %v6356
        %v6546 = vmul.f32 %v6356, %v6545
        %v6547 = vsub.f32 1.0, %v6546
        %v6548 = vmul.f32 %v6545, %v6547
        %v6549 = vadd.f32 %v6545, %v6548
        %vm6550 = vweird.f32 %v6356
        %vm6551 = vweird.f32 %v6545
        %vm6552 = vmor %vm6550, %vm6551
        %v6553 = vsel %vm6552, %v6545, %v6549
        %v6554 = vand.u32 2147483647, %v6356
        %vm6555 = vcmp.eq.f32.partialorder %v6554, 8.507059e+37
        %v6556 = vand.u32 %v6356, 2147483648
        %v6557 = vor.u32 1.1754944e-38, %v6556
        %v6558 = vsel %vm6555, %v6557, %v6553
        %v6559 = vmul.f32 %v6302, %v6558
        %v6560 = vmul.f32 %v6304, %v6558
        %v6561 = vrcp.pop %v6359
        %v6562 = vmul.f32 %v6359, %v6561
        %v6563 = vsub.f32 1.0, %v6562
        %v6564 = vmul.f32 %v6561, %v6563
        %v6565 = vadd.f32 %v6561, %v6564
        %vm6566 = vweird.f32 %v6359
        %vm6567 = vweird.f32 %v6561
        %vm6568 = vmor %vm6566, %vm6567
        %v6569 = vsel %vm6568, %v6561, %v6565
        %v6570 = vand.u32 2147483647, %v6359
        %vm6571 = vcmp.eq.f32.partialorder %v6570, 8.507059e+37
        %v6572 = vand.u32 %v6359, 2147483648
        %v6573 = vor.u32 1.1754944e-38, %v6572
        %v6574 = vsel %vm6571, %v6573, %v6569
        %v6575 = vmul.f32 %v6306, %v6574
        %v6576 = vmul.f32 %v6308, %v6574
        %v6577 = vrcp.pop %v6362
        %v6578 = vmul.f32 %v6362, %v6577
        %v6579 = vsub.f32 1.0, %v6578
        %v6580 = vmul.f32 %v6577, %v6579
        %v6581 = vadd.f32 %v6577, %v6580
        %vm6582 = vweird.f32 %v6362
        %vm6583 = vweird.f32 %v6577
        %vm6584 = vmor %vm6582, %vm6583
        %v6585 = vsel %vm6584, %v6577, %v6581
        %v6586 = vand.u32 2147483647, %v6362
        %vm6587 = vcmp.eq.f32.partialorder %v6586, 8.507059e+37
        %v6588 = vand.u32 %v6362, 2147483648
        %v6589 = vor.u32 1.1754944e-38, %v6588
        %v6590 = vsel %vm6587, %v6589, %v6585
        %v6591 = vmul.f32 %v6310, %v6590
        %v6592 = vmul.f32 %v6312, %v6590
        %v6593 = vrcp.pop %v6365
        %v6594 = vmul.f32 %v6365, %v6593
        %v6595 = vsub.f32 1.0, %v6594
        %v6596 = vmul.f32 %v6593, %v6595
        %v6597 = vadd.f32 %v6593, %v6596
        %vm6598 = vweird.f32 %v6365
        %vm6599 = vweird.f32 %v6593
        %vm6600 = vmor %vm6598, %vm6599
        %v6601 = vsel %vm6600, %v6593, %v6597
        %v6602 = vand.u32 2147483647, %v6365
        %vm6603 = vcmp.eq.f32.partialorder %v6602, 8.507059e+37
        %v6604 = vand.u32 %v6365, 2147483648
        %v6605 = vor.u32 1.1754944e-38, %v6604
        %v6606 = vsel %vm6603, %v6605, %v6601
        %v6607 = vmul.f32 %v6314, %v6606
        %v6608 = vmul.f32 %v6316, %v6606
        %v6609 = vrcp.pop %v6368
        %v6610 = vmul.f32 %v6368, %v6609
        %v6611 = vsub.f32 1.0, %v6610
        %v6612 = vmul.f32 %v6609, %v6611
        %v6613 = vadd.f32 %v6609, %v6612
        %vm6614 = vweird.f32 %v6368
        %vm6615 = vweird.f32 %v6609
        %vm6616 = vmor %vm6614, %vm6615
        %v6617 = vsel %vm6616, %v6609, %v6613
        %v6618 = vand.u32 2147483647, %v6368
        %vm6619 = vcmp.eq.f32.partialorder %v6618, 8.507059e+37
        %v6620 = vand.u32 %v6368, 2147483648
        %v6621 = vor.u32 1.1754944e-38, %v6620
        %v6622 = vsel %vm6619, %v6621, %v6617
        %v6623 = vmul.f32 %v6318, %v6622
        %v6624 = vmul.f32 %v6320, %v6622
        %6625 = vmatpush.xpose.msra.mxu0 %v6623
        %6626 = vmatpush.xpose.msra.mxu0 %v6607
        %6627 = vmatpush.xpose.msra.mxu0 %v6591
        %6628 = vmatpush.xpose.msra.mxu0 %v6575
        %6629 = vmatpush.xpose.msra.mxu0 %v6559
        %6630 = vmatpush.xpose.msra.mxu0 %v6543
        %6631 = vmatpush.xpose.msra.mxu0 %v6527
        %6632 = vmatpush.xpose.msra.mxu0 %v6511
        %6633 = vmatpush.xpose.msra.mxu0 %v6495
        %6634 = vmatpush.xpose.msra.mxu0 %v6479
        %6635 = vmatpush.xpose.msra.mxu0 %v6463
        %6636 = vmatpush.xpose.msra.mxu0 %v6447
        %6637 = vmatpush.xpose.msra.mxu0 %v6431
        %6638 = vmatpush.xpose.msra.mxu0 %v6415
        %6639 = vmatpush.xpose.msra.mxu0 %v6399
        %6640 = vmatpush.xpose.msra.mxu0 %v6383
        %6641 = vmatmul.f32.gmra.mxu0 %v1157
        %v6642 = vpop.f32.mrf.mxu0
        %v6643 = vadd.f32 0.0, %v6642
        %6644 = vmatmul.f32.gmra.mxu0 %v1160
        %v6645 = vpop.f32.mrf.mxu0
        %v6646 = vadd.f32 0.0, %v6645
        %6647 = vmatmul.f32.gmra.mxu0 %v1163
        %v6648 = vpop.f32.mrf.mxu0
        %v6649 = vadd.f32 0.0, %v6648
        %6650 = vmatmul.f32.gmra.mxu0 %v1166
        %v6651 = vpop.f32.mrf.mxu0
        %v6652 = vadd.f32 0.0, %v6651
        %6653 = vdwg.mxu0
        %6654 = vmatpush.xpose.msra.mxu0 %v6624
        %6655 = vmatpush.xpose.msra.mxu0 %v6608
        %6656 = vmatpush.xpose.msra.mxu0 %v6592
        %6657 = vmatpush.xpose.msra.mxu0 %v6576
        %6658 = vmatpush.xpose.msra.mxu0 %v6560
        %6659 = vmatpush.xpose.msra.mxu0 %v6544
        %6660 = vmatpush.xpose.msra.mxu0 %v6528
        %6661 = vmatpush.xpose.msra.mxu0 %v6512
        %6662 = vmatpush.xpose.msra.mxu0 %v6496
        %6663 = vmatpush.xpose.msra.mxu0 %v6480
        %6664 = vmatpush.xpose.msra.mxu0 %v6464
        %6665 = vmatpush.xpose.msra.mxu0 %v6448
        %6666 = vmatpush.xpose.msra.mxu0 %v6432
        %6667 = vmatpush.xpose.msra.mxu0 %v6416
        %6668 = vmatpush.xpose.msra.mxu0 %v6400
        %6669 = vmatpush.xpose.msra.mxu0 %v6384
        %6670 = vmatmul.f32.gmra.mxu0 %v1270
        %v6671 = vpop.f32.mrf.mxu0
        %v6672 = vadd.f32 %v6643, %v6671
        %6673 = vmatmul.f32.gmra.mxu0 %v1273
        %v6674 = vpop.f32.mrf.mxu0
        %v6675 = vadd.f32 %v6646, %v6674
        %6676 = vmatmul.f32.gmra.mxu0 %v1276
        %v6677 = vpop.f32.mrf.mxu0
        %v6678 = vadd.f32 %v6649, %v6677
        %6679 = vmatmul.f32.gmra.mxu0 %v1279
        %v6680 = vpop.f32.mrf.mxu0
        %v6681 = vadd.f32 %v6652, %v6680
        %6682 = vdwg.mxu0
        %s6683 = scalar_lea.vmem %s5, 24
        %v6684 = vld [vmem:[%s6683] sm:$0xf]
        %v6686 = vsel %vm1325, %v6684, 0
        %6688 = vmatpush.msra.mxu0 0.0
        %6689 = vmatpush.msra.mxu0 0.0
        %6690 = vmatpush.msra.mxu0 0.0
        %6691 = vmatpush.msra.mxu0 0.0
        %6692 = vmatpush.msra.mxu0 0.0
        %6693 = vmatpush.msra.mxu0 0.0
        %6694 = vmatpush.msra.mxu0 0.0
        %6695 = vmatpush.msra.mxu0 0.0
        %6696 = vmatpush.msra.mxu0 0.0
        %6697 = vmatpush.msra.mxu0 0.0
        %6698 = vmatpush.msra.mxu0 0.0
        %6699 = vmatpush.msra.mxu0 0.0
        %6700 = vmatpush.msra.mxu0 %v6681
        %6701 = vmatpush.msra.mxu0 %v6678
        %6702 = vmatpush.msra.mxu0 %v6675
        %6703 = vmatpush.msra.mxu0 %v6672
        %6704 = vmatmul.f32.gmra.mxu0 %v6686
        %v6705 = vpop.f32.mrf.mxu0
        %v6706 = vadd.f32 0.0, %v6705
        %6707 = vdwg.mxu0
        %v6708 = vadd.f32 %v5934, %v6706
        %6709 = vxpose.xlu0.b32.start [1/16] %v623, 128
        %6710 = vxpose.xlu0.b32.cont [2/16] %v626, 128
        %6711 = vxpose.xlu0.b32.cont [3/16] %v629, 128
        %6712 = vxpose.xlu0.b32.cont [4/16] %v632, 128
        %6713 = vxpose.xlu0.b32.cont [5/16] 0.0, 128
        %6714 = vxpose.xlu0.b32.cont [6/16] 0.0, 128
        %6715 = vxpose.xlu0.b32.cont [7/16] 0.0, 128
        %6716 = vxpose.xlu0.b32.cont [8/16] 0.0, 128
        %6717 = vxpose.xlu0.b32.cont [9/16] 0.0, 128
        %6718 = vxpose.xlu0.b32.cont [10/16] 0.0, 128
        %6719 = vxpose.xlu0.b32.cont [11/16] 0.0, 128
        %6720 = vxpose.xlu0.b32.cont [12/16] 0.0, 128
        %6721 = vxpose.xlu0.b32.cont [13/16] 0.0, 128
        %6722 = vxpose.xlu0.b32.cont [14/16] 0.0, 128
        %6723 = vxpose.xlu0.b32.cont [15/16] 0.0, 128
        %6724 = vxpose.xlu0.b32.end [16/16] 0.0, 128
        %v6725 = vpop.trf.xlu0
        %v6726 = vpop.trf.xlu0
        %v6727 = vpop.trf.xlu0
        %v6728 = vpop.trf.xlu0
        %v6729 = vpop.trf.xlu0
        %v6730 = vpop.trf.xlu0
        %v6731 = vpop.trf.xlu0
        %v6732 = vpop.trf.xlu0
        %v6733 = vpop.trf.xlu0
        %v6734 = vpop.trf.xlu0
        %v6735 = vpop.trf.xlu0
        %v6736 = vpop.trf.xlu0
        %v6737 = vpop.trf.xlu0
        %v6738 = vpop.trf.xlu0
        %v6739 = vpop.trf.xlu0
        %v6740 = vpop.trf.xlu0
        %v6742 = vsel %vm1325, %v6725, 0
        %v6745 = vsel %vm1325, %v6726, 0
        %v6748 = vsel %vm1325, %v6727, 0
        %v6751 = vsel %vm1325, %v6728, 0
        %v6754 = vsel %vm1325, %v6729, 0
        %v6757 = vsel %vm1325, %v6730, 0
        %v6760 = vsel %vm1325, %v6731, 0
        %v6763 = vsel %vm1325, %v6732, 0
        %v6766 = vsel %vm1325, %v6733, 0
        %v6769 = vsel %vm1325, %v6734, 0
        %v6772 = vsel %vm1325, %v6735, 0
        %v6775 = vsel %vm1325, %v6736, 0
        %v6778 = vsel %vm1325, %v6737, 0
        %v6781 = vsel %vm1325, %v6738, 0
        %v6784 = vsel %vm1325, %v6739, 0
        %v6787 = vsel %vm1325, %v6740, 0
        %6789 = vmatpush.msra.mxu0 0.0
        %6790 = vmatpush.msra.mxu0 0.0
        %6791 = vmatpush.msra.mxu0 0.0
        %6792 = vmatpush.msra.mxu0 0.0
        %6793 = vmatpush.msra.mxu0 0.0
        %6794 = vmatpush.msra.mxu0 0.0
        %6795 = vmatpush.msra.mxu0 0.0
        %6796 = vmatpush.msra.mxu0 0.0
        %6797 = vmatpush.msra.mxu0 0.0
        %6798 = vmatpush.msra.mxu0 0.0
        %6799 = vmatpush.msra.mxu0 0.0
        %6800 = vmatpush.msra.mxu0 0.0
        %6801 = vmatpush.msra.mxu0 %v849
        %6802 = vmatpush.msra.mxu0 %v846
        %6803 = vmatpush.msra.mxu0 %v843
        %6804 = vmatpush.msra.mxu0 %v840
        %6805 = vmatmul.f32.gmra.mxu0 %v6742
        %v6806 = vpop.f32.mrf.mxu0
        %v6807 = vadd.f32 0.0, %v6806
        %6808 = vmatmul.f32.gmra.mxu0 %v6745
        %v6809 = vpop.f32.mrf.mxu0
        %v6810 = vadd.f32 0.0, %v6809
        %6811 = vmatmul.f32.gmra.mxu0 %v6748
        %v6812 = vpop.f32.mrf.mxu0
        %v6813 = vadd.f32 0.0, %v6812
        %6814 = vmatmul.f32.gmra.mxu0 %v6751
        %v6815 = vpop.f32.mrf.mxu0
        %v6816 = vadd.f32 0.0, %v6815
        %6817 = vmatmul.f32.gmra.mxu0 %v6754
        %v6818 = vpop.f32.mrf.mxu0
        %v6819 = vadd.f32 0.0, %v6818
        %6820 = vmatmul.f32.gmra.mxu0 %v6757
        %v6821 = vpop.f32.mrf.mxu0
        %v6822 = vadd.f32 0.0, %v6821
        %6823 = vmatmul.f32.gmra.mxu0 %v6760
        %v6824 = vpop.f32.mrf.mxu0
        %v6825 = vadd.f32 0.0, %v6824
        %6826 = vmatmul.f32.gmra.mxu0 %v6763
        %v6827 = vpop.f32.mrf.mxu0
        %v6828 = vadd.f32 0.0, %v6827
        %6829 = vmatmul.f32.gmra.mxu0 %v6766
        %v6830 = vpop.f32.mrf.mxu0
        %v6831 = vadd.f32 0.0, %v6830
        %6832 = vmatmul.f32.gmra.mxu0 %v6769
        %v6833 = vpop.f32.mrf.mxu0
        %v6834 = vadd.f32 0.0, %v6833
        %6835 = vmatmul.f32.gmra.mxu0 %v6772
        %v6836 = vpop.f32.mrf.mxu0
        %v6837 = vadd.f32 0.0, %v6836
        %6838 = vmatmul.f32.gmra.mxu0 %v6775
        %v6839 = vpop.f32.mrf.mxu0
        %v6840 = vadd.f32 0.0, %v6839
        %6841 = vmatmul.f32.gmra.mxu0 %v6778
        %v6842 = vpop.f32.mrf.mxu0
        %v6843 = vadd.f32 0.0, %v6842
        %6844 = vmatmul.f32.gmra.mxu0 %v6781
        %v6845 = vpop.f32.mrf.mxu0
        %v6846 = vadd.f32 0.0, %v6845
        %6847 = vmatmul.f32.gmra.mxu0 %v6784
        %v6848 = vpop.f32.mrf.mxu0
        %v6849 = vadd.f32 0.0, %v6848
        %6850 = vmatmul.f32.gmra.mxu0 %v6787
        %v6851 = vpop.f32.mrf.mxu0
        %v6852 = vadd.f32 0.0, %v6851
        %6853 = vdwg.mxu0
        %6854 = vmatpush.msra.mxu0 0.0
        %6855 = vmatpush.msra.mxu0 0.0
        %6856 = vmatpush.msra.mxu0 0.0
        %6857 = vmatpush.msra.mxu0 0.0
        %6858 = vmatpush.msra.mxu0 0.0
        %6859 = vmatpush.msra.mxu0 0.0
        %6860 = vmatpush.msra.mxu0 0.0
        %6861 = vmatpush.msra.mxu0 0.0
        %6862 = vmatpush.msra.mxu0 0.0
        %6863 = vmatpush.msra.mxu0 0.0
        %6864 = vmatpush.msra.mxu0 0.0
        %6865 = vmatpush.msra.mxu0 0.0
        %6866 = vmatpush.msra.mxu0 %v962
        %6867 = vmatpush.msra.mxu0 %v959
        %6868 = vmatpush.msra.mxu0 %v956
        %6869 = vmatpush.msra.mxu0 %v953
        %6870 = vmatmul.f32.gmra.mxu0 %v6742
        %v6871 = vpop.f32.mrf.mxu0
        %v6872 = vadd.f32 0.0, %v6871
        %6873 = vmatmul.f32.gmra.mxu0 %v6745
        %v6874 = vpop.f32.mrf.mxu0
        %v6875 = vadd.f32 0.0, %v6874
        %6876 = vmatmul.f32.gmra.mxu0 %v6748
        %v6877 = vpop.f32.mrf.mxu0
        %v6878 = vadd.f32 0.0, %v6877
        %6879 = vmatmul.f32.gmra.mxu0 %v6751
        %v6880 = vpop.f32.mrf.mxu0
        %v6881 = vadd.f32 0.0, %v6880
        %6882 = vmatmul.f32.gmra.mxu0 %v6754
        %v6883 = vpop.f32.mrf.mxu0
        %v6884 = vadd.f32 0.0, %v6883
        %6885 = vmatmul.f32.gmra.mxu0 %v6757
        %v6886 = vpop.f32.mrf.mxu0
        %v6887 = vadd.f32 0.0, %v6886
        %6888 = vmatmul.f32.gmra.mxu0 %v6760
        %v6889 = vpop.f32.mrf.mxu0
        %v6890 = vadd.f32 0.0, %v6889
        %6891 = vmatmul.f32.gmra.mxu0 %v6763
        %v6892 = vpop.f32.mrf.mxu0
        %v6893 = vadd.f32 0.0, %v6892
        %6894 = vmatmul.f32.gmra.mxu0 %v6766
        %v6895 = vpop.f32.mrf.mxu0
        %v6896 = vadd.f32 0.0, %v6895
        %6897 = vmatmul.f32.gmra.mxu0 %v6769
        %v6898 = vpop.f32.mrf.mxu0
        %v6899 = vadd.f32 0.0, %v6898
        %6900 = vmatmul.f32.gmra.mxu0 %v6772
        %v6901 = vpop.f32.mrf.mxu0
        %v6902 = vadd.f32 0.0, %v6901
        %6903 = vmatmul.f32.gmra.mxu0 %v6775
        %v6904 = vpop.f32.mrf.mxu0
        %v6905 = vadd.f32 0.0, %v6904
        %6906 = vmatmul.f32.gmra.mxu0 %v6778
        %v6907 = vpop.f32.mrf.mxu0
        %v6908 = vadd.f32 0.0, %v6907
        %6909 = vmatmul.f32.gmra.mxu0 %v6781
        %v6910 = vpop.f32.mrf.mxu0
        %v6911 = vadd.f32 0.0, %v6910
        %6912 = vmatmul.f32.gmra.mxu0 %v6784
        %v6913 = vpop.f32.mrf.mxu0
        %v6914 = vadd.f32 0.0, %v6913
        %6915 = vmatmul.f32.gmra.mxu0 %v6787
        %v6916 = vpop.f32.mrf.mxu0
        %v6917 = vadd.f32 0.0, %v6916
        %6918 = vdwg.mxu0
        %v6919 = vmul.f32 %v6807, 0.17677669
        %v6920 = vmul.f32 %v6872, 0.17677669
        %v6921 = vmul.f32 %v6810, 0.17677669
        %v6922 = vmul.f32 %v6875, 0.17677669
        %v6923 = vmul.f32 %v6813, 0.17677669
        %v6924 = vmul.f32 %v6878, 0.17677669
        %v6925 = vmul.f32 %v6816, 0.17677669
        %v6926 = vmul.f32 %v6881, 0.17677669
        %v6927 = vmul.f32 %v6819, 0.17677669
        %v6928 = vmul.f32 %v6884, 0.17677669
        %v6929 = vmul.f32 %v6822, 0.17677669
        %v6930 = vmul.f32 %v6887, 0.17677669
        %v6931 = vmul.f32 %v6825, 0.17677669
        %v6932 = vmul.f32 %v6890, 0.17677669
        %v6933 = vmul.f32 %v6828, 0.17677669
        %v6934 = vmul.f32 %v6893, 0.17677669
        %v6935 = vmul.f32 %v6831, 0.17677669
        %v6936 = vmul.f32 %v6896, 0.17677669
        %v6937 = vmul.f32 %v6834, 0.17677669
        %v6938 = vmul.f32 %v6899, 0.17677669
        %v6939 = vmul.f32 %v6837, 0.17677669
        %v6940 = vmul.f32 %v6902, 0.17677669
        %v6941 = vmul.f32 %v6840, 0.17677669
        %v6942 = vmul.f32 %v6905, 0.17677669
        %v6943 = vmul.f32 %v6843, 0.17677669
        %v6944 = vmul.f32 %v6908, 0.17677669
        %v6945 = vmul.f32 %v6846, 0.17677669
        %v6946 = vmul.f32 %v6911, 0.17677669
        %v6947 = vmul.f32 %v6849, 0.17677669
        %v6948 = vmul.f32 %v6914, 0.17677669
        %v6949 = vmul.f32 %v6852, 0.17677669
        %v6950 = vmul.f32 %v6917, 0.17677669
        %v6951 = vmax.f32 %v6919, %v6920
        %6952 = vmax.xlane.f32.xlu0 %v6951
        %v6953 = vpop.xlane.xlu0 %6952
        %v6954 = vmax.f32 %v6921, %v6922
        %6955 = vmax.xlane.f32.xlu0 %v6954
        %v6956 = vpop.xlane.xlu0 %6955
        %v6957 = vmax.f32 %v6923, %v6924
        %6958 = vmax.xlane.f32.xlu0 %v6957
        %v6959 = vpop.xlane.xlu0 %6958
        %v6960 = vmax.f32 %v6925, %v6926
        %6961 = vmax.xlane.f32.xlu0 %v6960
        %v6962 = vpop.xlane.xlu0 %6961
        %v6963 = vmax.f32 %v6927, %v6928
        %6964 = vmax.xlane.f32.xlu0 %v6963
        %v6965 = vpop.xlane.xlu0 %6964
        %v6966 = vmax.f32 %v6929, %v6930
        %6967 = vmax.xlane.f32.xlu0 %v6966
        %v6968 = vpop.xlane.xlu0 %6967
        %v6969 = vmax.f32 %v6931, %v6932
        %6970 = vmax.xlane.f32.xlu0 %v6969
        %v6971 = vpop.xlane.xlu0 %6970
        %v6972 = vmax.f32 %v6933, %v6934
        %6973 = vmax.xlane.f32.xlu0 %v6972
        %v6974 = vpop.xlane.xlu0 %6973
        %v6975 = vmax.f32 %v6935, %v6936
        %6976 = vmax.xlane.f32.xlu0 %v6975
        %v6977 = vpop.xlane.xlu0 %6976
        %v6978 = vmax.f32 %v6937, %v6938
        %6979 = vmax.xlane.f32.xlu0 %v6978
        %v6980 = vpop.xlane.xlu0 %6979
        %v6981 = vmax.f32 %v6939, %v6940
        %6982 = vmax.xlane.f32.xlu0 %v6981
        %v6983 = vpop.xlane.xlu0 %6982
        %v6984 = vmax.f32 %v6941, %v6942
        %6985 = vmax.xlane.f32.xlu0 %v6984
        %v6986 = vpop.xlane.xlu0 %6985
        %v6987 = vmax.f32 %v6943, %v6944
        %6988 = vmax.xlane.f32.xlu0 %v6987
        %v6989 = vpop.xlane.xlu0 %6988
        %v6990 = vmax.f32 %v6945, %v6946
        %6991 = vmax.xlane.f32.xlu0 %v6990
        %v6992 = vpop.xlane.xlu0 %6991
        %v6993 = vmax.f32 %v6947, %v6948
        %6994 = vmax.xlane.f32.xlu0 %v6993
        %v6995 = vpop.xlane.xlu0 %6994
        %v6996 = vmax.f32 %v6949, %v6950
        %6997 = vmax.xlane.f32.xlu0 %v6996
        %v6998 = vpop.xlane.xlu0 %6997
        %v6999 = vsub.f32 %v6919, %v6953
        %v7000 = vsub.f32 %v6920, %v6953
        %v7001 = vsub.f32 %v6921, %v6956
        %v7002 = vsub.f32 %v6922, %v6956
        %v7003 = vsub.f32 %v6923, %v6959
        %v7004 = vsub.f32 %v6924, %v6959
        %v7005 = vsub.f32 %v6925, %v6962
        %v7006 = vsub.f32 %v6926, %v6962
        %v7007 = vsub.f32 %v6927, %v6965
        %v7008 = vsub.f32 %v6928, %v6965
        %v7009 = vsub.f32 %v6929, %v6968
        %v7010 = vsub.f32 %v6930, %v6968
        %v7011 = vsub.f32 %v6931, %v6971
        %v7012 = vsub.f32 %v6932, %v6971
        %v7013 = vsub.f32 %v6933, %v6974
        %v7014 = vsub.f32 %v6934, %v6974
        %v7015 = vsub.f32 %v6935, %v6977
        %v7016 = vsub.f32 %v6936, %v6977
        %v7017 = vsub.f32 %v6937, %v6980
        %v7018 = vsub.f32 %v6938, %v6980
        %v7019 = vsub.f32 %v6939, %v6983
        %v7020 = vsub.f32 %v6940, %v6983
        %v7021 = vsub.f32 %v6941, %v6986
        %v7022 = vsub.f32 %v6942, %v6986
        %v7023 = vsub.f32 %v6943, %v6989
        %v7024 = vsub.f32 %v6944, %v6989
        %v7025 = vsub.f32 %v6945, %v6992
        %v7026 = vsub.f32 %v6946, %v6992
        %v7027 = vsub.f32 %v6947, %v6995
        %v7028 = vsub.f32 %v6948, %v6995
        %v7029 = vsub.f32 %v6949, %v6998
        %v7030 = vsub.f32 %v6950, %v6998
        %v7031 = vmul.f32 %v6999, 1.442695
        %v7032 = vpow.pop %v7031
        %v7033 = vmul.f32 %v7000, 1.442695
        %v7034 = vpow.pop %v7033
        %v7035 = vmul.f32 %v7001, 1.442695
        %v7036 = vpow.pop %v7035
        %v7037 = vmul.f32 %v7002, 1.442695
        %v7038 = vpow.pop %v7037
        %v7039 = vmul.f32 %v7003, 1.442695
        %v7040 = vpow.pop %v7039
        %v7041 = vmul.f32 %v7004, 1.442695
        %v7042 = vpow.pop %v7041
        %v7043 = vmul.f32 %v7005, 1.442695
        %v7044 = vpow.pop %v7043
        %v7045 = vmul.f32 %v7006, 1.442695
        %v7046 = vpow.pop %v7045
        %v7047 = vmul.f32 %v7007, 1.442695
        %v7048 = vpow.pop %v7047
        %v7049 = vmul.f32 %v7008, 1.442695
        %v7050 = vpow.pop %v7049
        %v7051 = vmul.f32 %v7009, 1.442695
        %v7052 = vpow.pop %v7051
        %v7053 = vmul.f32 %v7010, 1.442695
        %v7054 = vpow.pop %v7053
        %v7055 = vmul.f32 %v7011, 1.442695
        %v7056 = vpow.pop %v7055
        %v7057 = vmul.f32 %v7012, 1.442695
        %v7058 = vpow.pop %v7057
        %v7059 = vmul.f32 %v7013, 1.442695
        %v7060 = vpow.pop %v7059
        %v7061 = vmul.f32 %v7014, 1.442695
        %v7062 = vpow.pop %v7061
        %v7063 = vmul.f32 %v7015, 1.442695
        %v7064 = vpow.pop %v7063
        %v7065 = vmul.f32 %v7016, 1.442695
        %v7066 = vpow.pop %v7065
        %v7067 = vmul.f32 %v7017, 1.442695
        %v7068 = vpow.pop %v7067
        %v7069 = vmul.f32 %v7018, 1.442695
        %v7070 = vpow.pop %v7069
        %v7071 = vmul.f32 %v7019, 1.442695
        %v7072 = vpow.pop %v7071
        %v7073 = vmul.f32 %v7020, 1.442695
        %v7074 = vpow.pop %v7073
        %v7075 = vmul.f32 %v7021, 1.442695
        %v7076 = vpow.pop %v7075
        %v7077 = vmul.f32 %v7022, 1.442695
        %v7078 = vpow.pop %v7077
        %v7079 = vmul.f32 %v7023, 1.442695
        %v7080 = vpow.pop %v7079
        %v7081 = vmul.f32 %v7024, 1.442695
        %v7082 = vpow.pop %v7081
        %v7083 = vmul.f32 %v7025, 1.442695
        %v7084 = vpow.pop %v7083
        %v7085 = vmul.f32 %v7026, 1.442695
        %v7086 = vpow.pop %v7085
        %v7087 = vmul.f32 %v7027, 1.442695
        %v7088 = vpow.pop %v7087
        %v7089 = vmul.f32 %v7028, 1.442695
        %v7090 = vpow.pop %v7089
        %v7091 = vmul.f32 %v7029, 1.442695
        %v7092 = vpow.pop %v7091
        %v7093 = vmul.f32 %v7030, 1.442695
        %v7094 = vpow.pop %v7093
        %v7095 = vadd.f32 %v7032, %v7034
        %7096 = vadd.xlane.f32.xlu0 %v7095
        %v7097 = vpop.xlane.xlu0 %7096
        %v7098 = vadd.f32 %v7036, %v7038
        %7099 = vadd.xlane.f32.xlu0 %v7098
        %v7100 = vpop.xlane.xlu0 %7099
        %v7101 = vadd.f32 %v7040, %v7042
        %7102 = vadd.xlane.f32.xlu0 %v7101
        %v7103 = vpop.xlane.xlu0 %7102
        %v7104 = vadd.f32 %v7044, %v7046
        %7105 = vadd.xlane.f32.xlu0 %v7104
        %v7106 = vpop.xlane.xlu0 %7105
        %v7107 = vadd.f32 %v7048, %v7050
        %7108 = vadd.xlane.f32.xlu0 %v7107
        %v7109 = vpop.xlane.xlu0 %7108
        %v7110 = vadd.f32 %v7052, %v7054
        %7111 = vadd.xlane.f32.xlu0 %v7110
        %v7112 = vpop.xlane.xlu0 %7111
        %v7113 = vadd.f32 %v7056, %v7058
        %7114 = vadd.xlane.f32.xlu0 %v7113
        %v7115 = vpop.xlane.xlu0 %7114
        %v7116 = vadd.f32 %v7060, %v7062
        %7117 = vadd.xlane.f32.xlu0 %v7116
        %v7118 = vpop.xlane.xlu0 %7117
        %v7119 = vadd.f32 %v7064, %v7066
        %7120 = vadd.xlane.f32.xlu0 %v7119
        %v7121 = vpop.xlane.xlu0 %7120
        %v7122 = vadd.f32 %v7068, %v7070
        %7123 = vadd.xlane.f32.xlu0 %v7122
        %v7124 = vpop.xlane.xlu0 %7123
        %v7125 = vadd.f32 %v7072, %v7074
        %7126 = vadd.xlane.f32.xlu0 %v7125
        %v7127 = vpop.xlane.xlu0 %7126
        %v7128 = vadd.f32 %v7076, %v7078
        %7129 = vadd.xlane.f32.xlu0 %v7128
        %v7130 = vpop.xlane.xlu0 %7129
        %v7131 = vadd.f32 %v7080, %v7082
        %7132 = vadd.xlane.f32.xlu0 %v7131
        %v7133 = vpop.xlane.xlu0 %7132
        %v7134 = vadd.f32 %v7084, %v7086
        %7135 = vadd.xlane.f32.xlu0 %v7134
        %v7136 = vpop.xlane.xlu0 %7135
        %v7137 = vadd.f32 %v7088, %v7090
        %7138 = vadd.xlane.f32.xlu0 %v7137
        %v7139 = vpop.xlane.xlu0 %7138
        %v7140 = vadd.f32 %v7092, %v7094
        %7141 = vadd.xlane.f32.xlu0 %v7140
        %v7142 = vpop.xlane.xlu0 %7141
        %v7143 = vrcp.pop %v7097
        %v7144 = vmul.f32 %v7097, %v7143
        %v7145 = vsub.f32 1.0, %v7144
        %v7146 = vmul.f32 %v7143, %v7145
        %v7147 = vadd.f32 %v7143, %v7146
        %vm7148 = vweird.f32 %v7097
        %vm7149 = vweird.f32 %v7143
        %vm7150 = vmor %vm7148, %vm7149
        %v7151 = vsel %vm7150, %v7143, %v7147
        %v7152 = vand.u32 2147483647, %v7097
        %vm7153 = vcmp.eq.f32.partialorder %v7152, 8.507059e+37
        %v7154 = vand.u32 %v7097, 2147483648
        %v7155 = vor.u32 1.1754944e-38, %v7154
        %v7156 = vsel %vm7153, %v7155, %v7151
        %v7157 = vmul.f32 %v7032, %v7156
        %v7158 = vmul.f32 %v7034, %v7156
        %v7159 = vrcp.pop %v7100
        %v7160 = vmul.f32 %v7100, %v7159
        %v7161 = vsub.f32 1.0, %v7160
        %v7162 = vmul.f32 %v7159, %v7161
        %v7163 = vadd.f32 %v7159, %v7162
        %vm7164 = vweird.f32 %v7100
        %vm7165 = vweird.f32 %v7159
        %vm7166 = vmor %vm7164, %vm7165
        %v7167 = vsel %vm7166, %v7159, %v7163
        %v7168 = vand.u32 2147483647, %v7100
        %vm7169 = vcmp.eq.f32.partialorder %v7168, 8.507059e+37
        %v7170 = vand.u32 %v7100, 2147483648
        %v7171 = vor.u32 1.1754944e-38, %v7170
        %v7172 = vsel %vm7169, %v7171, %v7167
        %v7173 = vmul.f32 %v7036, %v7172
        %v7174 = vmul.f32 %v7038, %v7172
        %v7175 = vrcp.pop %v7103
        %v7176 = vmul.f32 %v7103, %v7175
        %v7177 = vsub.f32 1.0, %v7176
        %v7178 = vmul.f32 %v7175, %v7177
        %v7179 = vadd.f32 %v7175, %v7178
        %vm7180 = vweird.f32 %v7103
        %vm7181 = vweird.f32 %v7175
        %vm7182 = vmor %vm7180, %vm7181
        %v7183 = vsel %vm7182, %v7175, %v7179
        %v7184 = vand.u32 2147483647, %v7103
        %vm7185 = vcmp.eq.f32.partialorder %v7184, 8.507059e+37
        %v7186 = vand.u32 %v7103, 2147483648
        %v7187 = vor.u32 1.1754944e-38, %v7186
        %v7188 = vsel %vm7185, %v7187, %v7183
        %v7189 = vmul.f32 %v7040, %v7188
        %v7190 = vmul.f32 %v7042, %v7188
        %v7191 = vrcp.pop %v7106
        %v7192 = vmul.f32 %v7106, %v7191
        %v7193 = vsub.f32 1.0, %v7192
        %v7194 = vmul.f32 %v7191, %v7193
        %v7195 = vadd.f32 %v7191, %v7194
        %vm7196 = vweird.f32 %v7106
        %vm7197 = vweird.f32 %v7191
        %vm7198 = vmor %vm7196, %vm7197
        %v7199 = vsel %vm7198, %v7191, %v7195
        %v7200 = vand.u32 2147483647, %v7106
        %vm7201 = vcmp.eq.f32.partialorder %v7200, 8.507059e+37
        %v7202 = vand.u32 %v7106, 2147483648
        %v7203 = vor.u32 1.1754944e-38, %v7202
        %v7204 = vsel %vm7201, %v7203, %v7199
        %v7205 = vmul.f32 %v7044, %v7204
        %v7206 = vmul.f32 %v7046, %v7204
        %v7207 = vrcp.pop %v7109
        %v7208 = vmul.f32 %v7109, %v7207
        %v7209 = vsub.f32 1.0, %v7208
        %v7210 = vmul.f32 %v7207, %v7209
        %v7211 = vadd.f32 %v7207, %v7210
        %vm7212 = vweird.f32 %v7109
        %vm7213 = vweird.f32 %v7207
        %vm7214 = vmor %vm7212, %vm7213
        %v7215 = vsel %vm7214, %v7207, %v7211
        %v7216 = vand.u32 2147483647, %v7109
        %vm7217 = vcmp.eq.f32.partialorder %v7216, 8.507059e+37
        %v7218 = vand.u32 %v7109, 2147483648
        %v7219 = vor.u32 1.1754944e-38, %v7218
        %v7220 = vsel %vm7217, %v7219, %v7215
        %v7221 = vmul.f32 %v7048, %v7220
        %v7222 = vmul.f32 %v7050, %v7220
        %v7223 = vrcp.pop %v7112
        %v7224 = vmul.f32 %v7112, %v7223
        %v7225 = vsub.f32 1.0, %v7224
        %v7226 = vmul.f32 %v7223, %v7225
        %v7227 = vadd.f32 %v7223, %v7226
        %vm7228 = vweird.f32 %v7112
        %vm7229 = vweird.f32 %v7223
        %vm7230 = vmor %vm7228, %vm7229
        %v7231 = vsel %vm7230, %v7223, %v7227
        %v7232 = vand.u32 2147483647, %v7112
        %vm7233 = vcmp.eq.f32.partialorder %v7232, 8.507059e+37
        %v7234 = vand.u32 %v7112, 2147483648
        %v7235 = vor.u32 1.1754944e-38, %v7234
        %v7236 = vsel %vm7233, %v7235, %v7231
        %v7237 = vmul.f32 %v7052, %v7236
        %v7238 = vmul.f32 %v7054, %v7236
        %v7239 = vrcp.pop %v7115
        %v7240 = vmul.f32 %v7115, %v7239
        %v7241 = vsub.f32 1.0, %v7240
        %v7242 = vmul.f32 %v7239, %v7241
        %v7243 = vadd.f32 %v7239, %v7242
        %vm7244 = vweird.f32 %v7115
        %vm7245 = vweird.f32 %v7239
        %vm7246 = vmor %vm7244, %vm7245
        %v7247 = vsel %vm7246, %v7239, %v7243
        %v7248 = vand.u32 2147483647, %v7115
        %vm7249 = vcmp.eq.f32.partialorder %v7248, 8.507059e+37
        %v7250 = vand.u32 %v7115, 2147483648
        %v7251 = vor.u32 1.1754944e-38, %v7250
        %v7252 = vsel %vm7249, %v7251, %v7247
        %v7253 = vmul.f32 %v7056, %v7252
        %v7254 = vmul.f32 %v7058, %v7252
        %v7255 = vrcp.pop %v7118
        %v7256 = vmul.f32 %v7118, %v7255
        %v7257 = vsub.f32 1.0, %v7256
        %v7258 = vmul.f32 %v7255, %v7257
        %v7259 = vadd.f32 %v7255, %v7258
        %vm7260 = vweird.f32 %v7118
        %vm7261 = vweird.f32 %v7255
        %vm7262 = vmor %vm7260, %vm7261
        %v7263 = vsel %vm7262, %v7255, %v7259
        %v7264 = vand.u32 2147483647, %v7118
        %vm7265 = vcmp.eq.f32.partialorder %v7264, 8.507059e+37
        %v7266 = vand.u32 %v7118, 2147483648
        %v7267 = vor.u32 1.1754944e-38, %v7266
        %v7268 = vsel %vm7265, %v7267, %v7263
        %v7269 = vmul.f32 %v7060, %v7268
        %v7270 = vmul.f32 %v7062, %v7268
        %v7271 = vrcp.pop %v7121
        %v7272 = vmul.f32 %v7121, %v7271
        %v7273 = vsub.f32 1.0, %v7272
        %v7274 = vmul.f32 %v7271, %v7273
        %v7275 = vadd.f32 %v7271, %v7274
        %vm7276 = vweird.f32 %v7121
        %vm7277 = vweird.f32 %v7271
        %vm7278 = vmor %vm7276, %vm7277
        %v7279 = vsel %vm7278, %v7271, %v7275
        %v7280 = vand.u32 2147483647, %v7121
        %vm7281 = vcmp.eq.f32.partialorder %v7280, 8.507059e+37
        %v7282 = vand.u32 %v7121, 2147483648
        %v7283 = vor.u32 1.1754944e-38, %v7282
        %v7284 = vsel %vm7281, %v7283, %v7279
        %v7285 = vmul.f32 %v7064, %v7284
        %v7286 = vmul.f32 %v7066, %v7284
        %v7287 = vrcp.pop %v7124
        %v7288 = vmul.f32 %v7124, %v7287
        %v7289 = vsub.f32 1.0, %v7288
        %v7290 = vmul.f32 %v7287, %v7289
        %v7291 = vadd.f32 %v7287, %v7290
        %vm7292 = vweird.f32 %v7124
        %vm7293 = vweird.f32 %v7287
        %vm7294 = vmor %vm7292, %vm7293
        %v7295 = vsel %vm7294, %v7287, %v7291
        %v7296 = vand.u32 2147483647, %v7124
        %vm7297 = vcmp.eq.f32.partialorder %v7296, 8.507059e+37
        %v7298 = vand.u32 %v7124, 2147483648
        %v7299 = vor.u32 1.1754944e-38, %v7298
        %v7300 = vsel %vm7297, %v7299, %v7295
        %v7301 = vmul.f32 %v7068, %v7300
        %v7302 = vmul.f32 %v7070, %v7300
        %v7303 = vrcp.pop %v7127
        %v7304 = vmul.f32 %v7127, %v7303
        %v7305 = vsub.f32 1.0, %v7304
        %v7306 = vmul.f32 %v7303, %v7305
        %v7307 = vadd.f32 %v7303, %v7306
        %vm7308 = vweird.f32 %v7127
        %vm7309 = vweird.f32 %v7303
        %vm7310 = vmor %vm7308, %vm7309
        %v7311 = vsel %vm7310, %v7303, %v7307
        %v7312 = vand.u32 2147483647, %v7127
        %vm7313 = vcmp.eq.f32.partialorder %v7312, 8.507059e+37
        %v7314 = vand.u32 %v7127, 2147483648
        %v7315 = vor.u32 1.1754944e-38, %v7314
        %v7316 = vsel %vm7313, %v7315, %v7311
        %v7317 = vmul.f32 %v7072, %v7316
        %v7318 = vmul.f32 %v7074, %v7316
        %v7319 = vrcp.pop %v7130
        %v7320 = vmul.f32 %v7130, %v7319
        %v7321 = vsub.f32 1.0, %v7320
        %v7322 = vmul.f32 %v7319, %v7321
        %v7323 = vadd.f32 %v7319, %v7322
        %vm7324 = vweird.f32 %v7130
        %vm7325 = vweird.f32 %v7319
        %vm7326 = vmor %vm7324, %vm7325
        %v7327 = vsel %vm7326, %v7319, %v7323
        %v7328 = vand.u32 2147483647, %v7130
        %vm7329 = vcmp.eq.f32.partialorder %v7328, 8.507059e+37
        %v7330 = vand.u32 %v7130, 2147483648
        %v7331 = vor.u32 1.1754944e-38, %v7330
        %v7332 = vsel %vm7329, %v7331, %v7327
        %v7333 = vmul.f32 %v7076, %v7332
        %v7334 = vmul.f32 %v7078, %v7332
        %v7335 = vrcp.pop %v7133
        %v7336 = vmul.f32 %v7133, %v7335
        %v7337 = vsub.f32 1.0, %v7336
        %v7338 = vmul.f32 %v7335, %v7337
        %v7339 = vadd.f32 %v7335, %v7338
        %vm7340 = vweird.f32 %v7133
        %vm7341 = vweird.f32 %v7335
        %vm7342 = vmor %vm7340, %vm7341
        %v7343 = vsel %vm7342, %v7335, %v7339
        %v7344 = vand.u32 2147483647, %v7133
        %vm7345 = vcmp.eq.f32.partialorder %v7344, 8.507059e+37
        %v7346 = vand.u32 %v7133, 2147483648
        %v7347 = vor.u32 1.1754944e-38, %v7346
        %v7348 = vsel %vm7345, %v7347, %v7343
        %v7349 = vmul.f32 %v7080, %v7348
        %v7350 = vmul.f32 %v7082, %v7348
        %v7351 = vrcp.pop %v7136
        %v7352 = vmul.f32 %v7136, %v7351
        %v7353 = vsub.f32 1.0, %v7352
        %v7354 = vmul.f32 %v7351, %v7353
        %v7355 = vadd.f32 %v7351, %v7354
        %vm7356 = vweird.f32 %v7136
        %vm7357 = vweird.f32 %v7351
        %vm7358 = vmor %vm7356, %vm7357
        %v7359 = vsel %vm7358, %v7351, %v7355
        %v7360 = vand.u32 2147483647, %v7136
        %vm7361 = vcmp.eq.f32.partialorder %v7360, 8.507059e+37
        %v7362 = vand.u32 %v7136, 2147483648
        %v7363 = vor.u32 1.1754944e-38, %v7362
        %v7364 = vsel %vm7361, %v7363, %v7359
        %v7365 = vmul.f32 %v7084, %v7364
        %v7366 = vmul.f32 %v7086, %v7364
        %v7367 = vrcp.pop %v7139
        %v7368 = vmul.f32 %v7139, %v7367
        %v7369 = vsub.f32 1.0, %v7368
        %v7370 = vmul.f32 %v7367, %v7369
        %v7371 = vadd.f32 %v7367, %v7370
        %vm7372 = vweird.f32 %v7139
        %vm7373 = vweird.f32 %v7367
        %vm7374 = vmor %vm7372, %vm7373
        %v7375 = vsel %vm7374, %v7367, %v7371
        %v7376 = vand.u32 2147483647, %v7139
        %vm7377 = vcmp.eq.f32.partialorder %v7376, 8.507059e+37
        %v7378 = vand.u32 %v7139, 2147483648
        %v7379 = vor.u32 1.1754944e-38, %v7378
        %v7380 = vsel %vm7377, %v7379, %v7375
        %v7381 = vmul.f32 %v7088, %v7380
        %v7382 = vmul.f32 %v7090, %v7380
        %v7383 = vrcp.pop %v7142
        %v7384 = vmul.f32 %v7142, %v7383
        %v7385 = vsub.f32 1.0, %v7384
        %v7386 = vmul.f32 %v7383, %v7385
        %v7387 = vadd.f32 %v7383, %v7386
        %vm7388 = vweird.f32 %v7142
        %vm7389 = vweird.f32 %v7383
        %vm7390 = vmor %vm7388, %vm7389
        %v7391 = vsel %vm7390, %v7383, %v7387
        %v7392 = vand.u32 2147483647, %v7142
        %vm7393 = vcmp.eq.f32.partialorder %v7392, 8.507059e+37
        %v7394 = vand.u32 %v7142, 2147483648
        %v7395 = vor.u32 1.1754944e-38, %v7394
        %v7396 = vsel %vm7393, %v7395, %v7391
        %v7397 = vmul.f32 %v7092, %v7396
        %v7398 = vmul.f32 %v7094, %v7396
        %7399 = vmatpush.xpose.msra.mxu0 %v7397
        %7400 = vmatpush.xpose.msra.mxu0 %v7381
        %7401 = vmatpush.xpose.msra.mxu0 %v7365
        %7402 = vmatpush.xpose.msra.mxu0 %v7349
        %7403 = vmatpush.xpose.msra.mxu0 %v7333
        %7404 = vmatpush.xpose.msra.mxu0 %v7317
        %7405 = vmatpush.xpose.msra.mxu0 %v7301
        %7406 = vmatpush.xpose.msra.mxu0 %v7285
        %7407 = vmatpush.xpose.msra.mxu0 %v7269
        %7408 = vmatpush.xpose.msra.mxu0 %v7253
        %7409 = vmatpush.xpose.msra.mxu0 %v7237
        %7410 = vmatpush.xpose.msra.mxu0 %v7221
        %7411 = vmatpush.xpose.msra.mxu0 %v7205
        %7412 = vmatpush.xpose.msra.mxu0 %v7189
        %7413 = vmatpush.xpose.msra.mxu0 %v7173
        %7414 = vmatpush.xpose.msra.mxu0 %v7157
        %7415 = vmatmul.f32.gmra.mxu0 %v1169
        %v7416 = vpop.f32.mrf.mxu0
        %v7417 = vadd.f32 0.0, %v7416
        %7418 = vmatmul.f32.gmra.mxu0 %v1172
        %v7419 = vpop.f32.mrf.mxu0
        %v7420 = vadd.f32 0.0, %v7419
        %7421 = vmatmul.f32.gmra.mxu0 %v1175
        %v7422 = vpop.f32.mrf.mxu0
        %v7423 = vadd.f32 0.0, %v7422
        %7424 = vmatmul.f32.gmra.mxu0 %v1178
        %v7425 = vpop.f32.mrf.mxu0
        %v7426 = vadd.f32 0.0, %v7425
        %7427 = vdwg.mxu0
        %7428 = vmatpush.xpose.msra.mxu0 %v7398
        %7429 = vmatpush.xpose.msra.mxu0 %v7382
        %7430 = vmatpush.xpose.msra.mxu0 %v7366
        %7431 = vmatpush.xpose.msra.mxu0 %v7350
        %7432 = vmatpush.xpose.msra.mxu0 %v7334
        %7433 = vmatpush.xpose.msra.mxu0 %v7318
        %7434 = vmatpush.xpose.msra.mxu0 %v7302
        %7435 = vmatpush.xpose.msra.mxu0 %v7286
        %7436 = vmatpush.xpose.msra.mxu0 %v7270
        %7437 = vmatpush.xpose.msra.mxu0 %v7254
        %7438 = vmatpush.xpose.msra.mxu0 %v7238
        %7439 = vmatpush.xpose.msra.mxu0 %v7222
        %7440 = vmatpush.xpose.msra.mxu0 %v7206
        %7441 = vmatpush.xpose.msra.mxu0 %v7190
        %7442 = vmatpush.xpose.msra.mxu0 %v7174
        %7443 = vmatpush.xpose.msra.mxu0 %v7158
        %7444 = vmatmul.f32.gmra.mxu0 %v1282
        %v7445 = vpop.f32.mrf.mxu0
        %v7446 = vadd.f32 %v7417, %v7445
        %7447 = vmatmul.f32.gmra.mxu0 %v1285
        %v7448 = vpop.f32.mrf.mxu0
        %v7449 = vadd.f32 %v7420, %v7448
        %7450 = vmatmul.f32.gmra.mxu0 %v1288
        %v7451 = vpop.f32.mrf.mxu0
        %v7452 = vadd.f32 %v7423, %v7451
        %7453 = vmatmul.f32.gmra.mxu0 %v1291
        %v7454 = vpop.f32.mrf.mxu0
        %v7455 = vadd.f32 %v7426, %v7454
        %7456 = vdwg.mxu0
        %s7457 = scalar_lea.vmem %s5, 28
        %v7458 = vld [vmem:[%s7457] sm:$0xf]
        %v7460 = vsel %vm1325, %v7458, 0
        %7462 = vmatpush.msra.mxu0 0.0
        %7463 = vmatpush.msra.mxu0 0.0
        %7464 = vmatpush.msra.mxu0 0.0
        %7465 = vmatpush.msra.mxu0 0.0
        %7466 = vmatpush.msra.mxu0 0.0
        %7467 = vmatpush.msra.mxu0 0.0
        %7468 = vmatpush.msra.mxu0 0.0
        %7469 = vmatpush.msra.mxu0 0.0
        %7470 = vmatpush.msra.mxu0 0.0
        %7471 = vmatpush.msra.mxu0 0.0
        %7472 = vmatpush.msra.mxu0 0.0
        %7473 = vmatpush.msra.mxu0 0.0
        %7474 = vmatpush.msra.mxu0 %v7455
        %7475 = vmatpush.msra.mxu0 %v7452
        %7476 = vmatpush.msra.mxu0 %v7449
        %7477 = vmatpush.msra.mxu0 %v7446
        %7478 = vmatmul.f32.gmra.mxu0 %v7460
        %v7479 = vpop.f32.mrf.mxu0
        %v7480 = vadd.f32 0.0, %v7479
        %7481 = vdwg.mxu0
        %v7482 = vadd.f32 %v6708, %v7480
        %v7483 = vld [vmem:[%s6] sm:$0xf]
        %7485 = vset.pattern.permute.xlu0 0
        %7486 = vperm.xlu0 %7485, %v7483
        %v7487 = vpop.permute.xlu0 %7486
        %v7489 = vadd.f32 %v7482, %v7487
        %7490 = vst [vmem:[%s308] sm:$0xf] %v7489
        %s7491 = sand.u32 %s202, 1
        %s7492 = scalar_lea.sflag [#allocation3], %s7491
        %s7493 = sand.u32 %s202, 1
        %s7494 = smul.addr %s7493, 4
        %s7495 = scalar_lea.vmem [#allocation2], %s7494
        // Predicated region
        $region49: #{tpu_custom_call.1} parent=47 // pred_check
          %p7496 = pneg %p212
        $region50: #{tpu_custom_call.1} parent=47 // pred_check_branch
          %7498 = sbr.rel (%p7496) target = $region52
        $region51: #{tpu_custom_call.1} parent=47 // pred_region
          %7500 = vsyncadd %s7492, 0
          %s7501 = smul.addr %s25, 2
          %s7502 = sadd.s32 %s26, %s7501
          %s7503 = smul.addr %s7502, 4
          %s7504 = scalar_lea.hbm %s7, %s7503
          %s7506 = sshll.u32 %s7495, 4
          %s7507 = int_to_ptr.vmem [resolvable:$true] %s7506
          %s7508 = sshll.u32 %s7504, 4
          %s7509 = int_to_ptr.hbm [resolvable:$true] %s7508
          %7511 = dma.vmem_to_hbm [thread:$0]  %s7507, 64, %s7509, %s7492
        $region52: #{tpu_custom_call.1} parent=47 // pred_fallthru
          _
      $region48: #{tpu_custom_call.1} parent=5 // pred_fallthru
        _
      %p7512 = scmp.le.s32.totalorder 2, %s16
      // Predicated region
      $region53: #{tpu_custom_call.1} parent=5 // pred_check
        %p7513 = pneg %p7512
      $region54: #{tpu_custom_call.1} parent=5 // pred_check_branch
        %7515 = sbr.rel (%p7513) target = $region56
      $region55: #{tpu_custom_call.1} parent=5 // pred_region
        %s7516 = ssub.s32 %s16, 2
        // Predicated region
        $region57: #{tpu_custom_call.1} parent=55 // pred_check
          %p7517 = pneg %p218
        $region58: #{tpu_custom_call.1} parent=55 // pred_check_branch
          %7519 = sbr.rel (%p7517) target = $region60
        $region59: #{tpu_custom_call.1} parent=55 // pred_region
          %s7520 = sand.u32 %s203, 1
          %s7521 = scalar_lea.sflag [#allocation3], %s7520
          %s7522 = sand.u32 %s203, 1
          %s7523 = smul.addr %s7522, 4
          %s7524 = scalar_lea.vmem [#allocation2], %s7523
          %7526 = dma.done %s7521, 64
        $region60: #{tpu_custom_call.1} parent=55 // pred_fallthru
          _
      $region56: #{tpu_custom_call.1} parent=5 // pred_fallthru
        _
    $region6: #{tpu_custom_call.1} parent=1 // loop_footer
      %s20 = sadd.s32 1, %s16
    $region7: #{tpu_custom_call.1} parent=1 // loop_footer_branch
      %15 = sbr.rel target = $region3
    $region8: #{tpu_custom_call.1} parent=1 // loop_exit
      _
    %7527 = vsyncpa [#allocation3], 1
    %s7528 = scalar_lea.sflag [#allocation3], 1
    %7529 = vsyncpa %s7528, 1

</llo_original>
